<compile_context>
chip_gen: v5e
topology: v5e:2x2
jax: 0.10.0
libtpu: 0.0.40
codegen_flags: <defaults>
</compile_context>

<pallas_src>
import jax
import jax.numpy as jnp
from jax.experimental import pallas as pl
from jax.experimental.pallas import tpu as pltpu

HIDDEN = 122          # real hidden size (PyTorch model)
NUM_LAYERS = 4
HP = 128              # padded hidden size (lane-dense)


def _round_up(x, m):
    return ((x + m - 1) // m) * m


# --------------------------- fused forward kernel ----------------------------
def _fused_kernel(tok_ref, h0_ref, c0_ref, embed_ref, wx_ref, wh_ref, b_ref,
                  wlin_ref, blin_ref,
                  logits_ref, hn_ref, cn_ref,
                  x_scr, gates_scr):
    """Everything resident in VMEM.

    tok_ref   : (T*BP, 1)  int32 token ids, time-major / batch-minor
    h0/c0_ref : (L, BP, HP) f32 initial state (padded lanes/rows zero)
    embed_ref : (VPAD, HP)  bf16 embedding table (rows>=V, cols>=E zero)
    wx_ref    : (L, HP, 4*HP) bf16 fused input->gates weights, order (i,f,o,g)
    wh_ref    : (L, HP, 4*HP) bf16 fused hidden->gates weights
    b_ref     : (L, 1, 4*HP)  f32  b_ih + b_hh (padded lanes zero)
    wlin_ref  : (HP, VPAD)    bf16 output projection
    blin_ref  : (1, VPAD)     f32
    logits_ref: (T*BP, VPAD)  f32 time-major logits (single bulk store)
    hn/cn_ref : (L, BP, HP)   f32
    x_scr     : (T*BP, HP)    f32 current layer's input / output sequence
    gates_scr : (T*BP, 4*HP)  f32 hoisted input-projection gates
    """
    TB = tok_ref.shape[0]
    vpad = embed_ref.shape[0]
    BP = h0_ref.shape[1]
    T = TB // BP

    # ---- embedding lookup, hoisted: ONE (TB,VPAD) x (VPAD,HP) matmul --------
    ids = tok_ref[...]                                               # (TB, 1)
    iota = jax.lax.broadcasted_iota(jnp.int32, (TB, vpad), 1)        # (TB, VPAD)
    onehot = (ids == iota).astype(jnp.bfloat16)
    x_scr[...] = jnp.dot(onehot, embed_ref[...],
                         preferred_element_type=jnp.float32)         # (TB, HP)

    # ---- layer-outer / time-inner LSTM stack --------------------------------
    for l in range(NUM_LAYERS):
        # hoisted non-recurrent projection (bias folded in): ONE big matmul
        gates_scr[...] = (
            jnp.dot(x_scr[...].astype(jnp.bfloat16), wx_ref[l],
                    preferred_element_type=jnp.float32)
            + b_ref[l])                                              # (TB, 4*HP)
        wh_l = wh_ref[l][...]                                        # (HP, 4*HP) bf16

        def step(t, carry):
            h_prev, c_prev = carry                                   # (BP, HP) f32
            row = pl.multiple_of(t * BP, BP)
            gates = (gates_scr[pl.ds(row, BP), :]
                     + jnp.dot(h_prev.astype(jnp.bfloat16), wh_l,
                               preferred_element_type=jnp.float32))  # (BP, 4*HP)
            # gate order (i, f, o, g): sigmoid on one contiguous 3*HP block,
            # tanh on the last HP block. sigmoid(x) = 0.5*tanh(0.5*x) + 0.5.
            sig = 0.5 * jnp.tanh(0.5 * gates[:, :3 * HP]) + 0.5
            g_g = jnp.tanh(gates[:, 3 * HP:])
            i_g = sig[:, :HP]
            f_g = sig[:, HP:2 * HP]
            o_g = sig[:, 2 * HP:3 * HP]

            c_new = f_g * c_prev + i_g * g_g
            h_new = o_g * jnp.tanh(c_new)
            # this layer's output -> next layer's input (gates_in for this
            # layer were already computed, so overwriting x_scr is safe)
            x_scr[pl.ds(row, BP), :] = h_new
            return (h_new, c_new)

        # static trip count T: fully unrolled so independent wavefront cells
        # can be overlapped by the VLIW scheduler
        h_fin, c_fin = jax.lax.fori_loop(0, T, step,
                                         (h0_ref[l], c0_ref[l]),
                                         unroll=True)
        hn_ref[l] = h_fin
        cn_ref[l] = c_fin
        # TODO(synk): nn.LSTM inter-layer dropout (p=0.55) is train-mode only
        # (stochastic); identity here (eval semantics).

    # ---- final Linear, hoisted: ONE (TB,HP) x (HP,VPAD) matmul + bulk store -
    logits_ref[...] = (
        jnp.dot(x_scr[...].astype(jnp.bfloat16), wlin_ref[...],
                preferred_element_type=jnp.float32)
        + blin_ref[...])


def _fused_forward(tok, h0p, c0p, embed_p, wx, wh, b, wlin, blin):
    TB = tok.shape[0]
    BP = h0p.shape[1]
    vpad = embed_p.shape[0]
    return pl.pallas_call(
        _fused_kernel,
        out_shape=(
            jax.ShapeDtypeStruct((TB, vpad), jnp.float32),            # logits (time-major)
            jax.ShapeDtypeStruct((NUM_LAYERS, BP, HP), jnp.float32),  # h_n (padded)
            jax.ShapeDtypeStruct((NUM_LAYERS, BP, HP), jnp.float32),  # c_n (padded)
        ),
        scratch_shapes=[pltpu.VMEM((TB, HP), jnp.float32),            # x_scr
                        pltpu.VMEM((TB, 4 * HP), jnp.float32)],       # gates_scr
    )(tok, h0p, c0p, embed_p, wx, wh, b, wlin, blin)


# ------------------------------ Params / forward ------------------------------
def init_params(key, vocab_size, embed_size):
    """PyTorch-equivalent init, packed into the padded / bf16 kernel layout."""
    assert embed_size <= HP, "kernel packs the embedding into the padded hidden width"
    vpad = _round_up(vocab_size, 128)
    H = HIDDEN
    keys = jax.random.split(key, 2 + 4 * NUM_LAYERS)

    # nn.Embedding / nn.Linear init (per model1.init_weights)
    embed = jax.random.uniform(keys[0], (vocab_size, embed_size), jnp.float32, -0.1, 0.1)
    lin_w = jax.random.uniform(keys[1], (vocab_size, H), jnp.float32, -0.1, 0.1)
    lin_b = jnp.zeros((vocab_size,), jnp.float32)

    # nn.LSTM default init
    stdv = 1.0 / float(H) ** 0.5
    wx_all = jnp.zeros((NUM_LAYERS, HP, 4 * HP), jnp.float32)
    wh_all = jnp.zeros((NUM_LAYERS, HP, 4 * HP), jnp.float32)
    b_all = jnp.zeros((NUM_LAYERS, 1, 4 * HP), jnp.float32)

    # PyTorch gate row-order is (i, f, g, o); kernel gate order is (i, f, o, g)
    reorder = (0, 1, 3, 2)   # dest gate -> source gate
    kidx = 2
    for layer in range(NUM_LAYERS):
        din = embed_size if layer == 0 else H
        w_ih = jax.random.uniform(keys[kidx], (4 * H, din), jnp.float32, -stdv, stdv); kidx += 1
        w_hh = jax.random.uniform(keys[kidx], (4 * H, H), jnp.float32, -stdv, stdv); kidx += 1
        b_ih = jax.random.uniform(keys[kidx], (4 * H,), jnp.float32, -stdv, stdv); kidx += 1
        b_hh = jax.random.uniform(keys[kidx], (4 * H,), jnp.float32, -stdv, stdv); kidx += 1
        b_sum = b_ih + b_hh
        for g_dst, g_src in enumerate(reorder):
            wi = w_ih[g_src * H:(g_src + 1) * H]        # (H, din)
            whg = w_hh[g_src * H:(g_src + 1) * H]       # (H, H)
            bg = b_sum[g_src * H:(g_src + 1) * H]       # (H,)
            col = g_dst * HP
            wx_all = wx_all.at[layer, :din, col:col + H].set(wi.T)
            wh_all = wh_all.at[layer, :H, col:col + H].set(whg.T)
            b_all = b_all.at[layer, 0, col:col + H].set(bg)

    embed_p = jnp.zeros((vpad, HP), jnp.float32).at[:vocab_size, :embed_size].set(embed)
    wlin_p = jnp.zeros((HP, vpad), jnp.float32).at[:H, :vocab_size].set(lin_w.T)
    blin_p = jnp.zeros((1, vpad), jnp.float32).at[0, :vocab_size].set(lin_b)

    return {
        "embed": embed_p.astype(jnp.bfloat16),
        "wx": wx_all.astype(jnp.bfloat16),
        "wh": wh_all.astype(jnp.bfloat16),
        "b": b_all,                                   # f32 (added in f32)
        "lin_w": wlin_p.astype(jnp.bfloat16),
        "lin_b": blin_p,                              # f32
        "vocab": vocab_size,                          # python int (boundary slicing)
    }


def forward(params, x_tokens, h):
    """x_tokens: (B, T) int32; h = (h0, c0), each (NUM_LAYERS, B, HIDDEN)."""
    h0, c0 = h
    B, T = x_tokens.shape
    vocab = params["vocab"]
    vpad = params["embed"].shape[0]
    BP = _round_up(max(B, 8), 8)          # pad batch to a full sublane tile
    pad_b = BP - B
    pad_h = HP - HIDDEN

    # boundary-only glue: pad batch, time-major / batch-minor tokens,
    # zero-pad hidden state to (BP, HP)
    tok = jnp.pad(x_tokens.astype(jnp.int32), ((0, pad_b), (0, 0)))       # (BP, T)
    tok = jnp.transpose(tok, (1, 0)).reshape(T * BP, 1)                   # (T*BP, 1)
    h0p = jnp.pad(h0.astype(jnp.float32), ((0, 0), (0, pad_b), (0, pad_h)))
    c0p = jnp.pad(c0.astype(jnp.float32), ((0, 0), (0, pad_b), (0, pad_h)))

    logits_p, hnp, cnp = _fused_forward(
        tok, h0p, c0p, params["embed"], params["wx"], params["wh"],
        params["b"], params["lin_w"], params["lin_b"])

    # (T*BP, VPAD) -> (B*T, vocab), matching out.contiguous().view(B*T, H) order
    logits = logits_p.reshape(T, BP, vpad)
    logits = jnp.transpose(logits, (1, 0, 2))[:B, :, :vocab].reshape(B * T, vocab)
    hn = hnp[:, :B, :HIDDEN]
    cn = cnp[:, :B, :HIDDEN]
    return logits, (hn, cn)


if __name__ == "__main__":
    VOCAB, EMBED, B, T = 50, 32, 2, 8
    key = jax.random.PRNGKey(0)
    k_param, k_tok, k_h, k_c = jax.random.split(key, 4)

    params = init_params(k_param, VOCAB, EMBED)
    x = jax.random.randint(k_tok, (B, T), 0, VOCAB, dtype=jnp.int32)
    h0 = 0.1 * jax.random.normal(k_h, (NUM_LAYERS, B, HIDDEN), jnp.float32)
    c0 = 0.1 * jax.random.normal(k_c, (NUM_LAYERS, B, HIDDEN), jnp.float32)

    logits, (hn, cn) = forward(params, x, (h0, c0))
    jax.block_until_ready((logits, hn, cn))

    assert logits.shape == (B * T, VOCAB)
    assert hn.shape == (NUM_LAYERS, B, HIDDEN) and cn.shape == (NUM_LAYERS, B, HIDDEN)
    assert bool(jnp.all(jnp.isfinite(logits)))
    print("KERNEL_OK")
</pallas_src>

<mosaic_0001>
module attributes {stable_mosaic.version = 11 : i64} {
  func.func @_fused_kernel(%arg0: memref<64x1xi32, #tpu.memory_space<vmem>>, %arg1: memref<4x8x128xf32, #tpu.memory_space<vmem>>, %arg2: memref<4x8x128xf32, #tpu.memory_space<vmem>>, %arg3: memref<128x128xbf16, #tpu.memory_space<vmem>>, %arg4: memref<4x128x512xbf16, #tpu.memory_space<vmem>>, %arg5: memref<4x128x512xbf16, #tpu.memory_space<vmem>>, %arg6: memref<4x1x512xf32, #tpu.memory_space<vmem>>, %arg7: memref<128x128xbf16, #tpu.memory_space<vmem>>, %arg8: memref<1x128xf32, #tpu.memory_space<vmem>>, %arg9: memref<64x128xf32, #tpu.memory_space<vmem>>, %arg10: memref<4x8x128xf32, #tpu.memory_space<vmem>>, %arg11: memref<4x8x128xf32, #tpu.memory_space<vmem>>, %arg12: memref<64x128xf32, #tpu.memory_space<vmem>>, %arg13: memref<64x512xf32, #tpu.memory_space<vmem>>) attributes {dimension_semantics = [], scalar_prefetch = 0 : i64, scratch_operands = 2 : i64, tpu.core_type = #tpu.core_type<tc>} {
    %c0 = arith.constant 0 : index
    %c0_0 = arith.constant 0 : index
    %0 = vector.load %arg0[%c0, %c0_0] : memref<64x1xi32, #tpu.memory_space<vmem>>, vector<64x1xi32>
    %1 = tpu.iota {dimensions = array<i32: 1>} : vector<64x128xi32>
    %2 = vector.broadcast %0 : vector<64x1xi32> to vector<64x128xi32>
    %3 = arith.cmpi eq, %2, %1 : vector<64x128xi32>
    %4 = arith.extui %3 : vector<64x128xi1> to vector<64x128xi32>
    %5 = arith.sitofp %4 : vector<64x128xi32> to vector<64x128xf32>
    %6 = arith.truncf %5 : vector<64x128xf32> to vector<64x128xbf16>
    %c0_1 = arith.constant 0 : index
    %c0_2 = arith.constant 0 : index
    %7 = vector.load %arg3[%c0_1, %c0_2] : memref<128x128xbf16, #tpu.memory_space<vmem>>, vector<128x128xbf16>
    %cst = arith.constant dense<0.000000e+00> : vector<64x128xf32>
    %8 = tpu.matmul %6, %7, %cst {dimension_numbers = #tpu.dot_dimension_numbers<[1], [0], [0], [1], [0, 0, 1, 1], [], []>} : vector<64x128xbf16>, vector<128x128xbf16>, vector<64x128xf32> -> vector<64x128xf32>
    %c0_3 = arith.constant 0 : index
    %c0_4 = arith.constant 0 : index
    %9 = vector.load %arg12[%c0_3, %c0_4] : memref<64x128xf32, #tpu.memory_space<vmem>>, vector<64x128xf32>
    tpu.vector_store %arg12[%c0_3, %c0_4], %8 {strides = array<i32>} : memref<64x128xf32, #tpu.memory_space<vmem>>, vector<64x128xf32>,
    %c0_5 = arith.constant 0 : index
    %c0_6 = arith.constant 0 : index
    %10 = vector.load %arg12[%c0_5, %c0_6] : memref<64x128xf32, #tpu.memory_space<vmem>>, vector<64x128xf32>
    %11 = arith.truncf %10 : vector<64x128xf32> to vector<64x128xbf16>
    %c0_7 = arith.constant 0 : index
    %c0_8 = arith.constant 0 : index
    %c0_9 = arith.constant 0 : index
    %12 = vector.load %arg4[%c0_7, %c0_8, %c0_9] : memref<4x128x512xbf16, #tpu.memory_space<vmem>>, vector<1x128x512xbf16>
    %13 = vector.shape_cast %12 : vector<1x128x512xbf16> to vector<128x512xbf16>
    %cst_10 = arith.constant dense<0.000000e+00> : vector<64x512xf32>
    %14 = tpu.matmul %11, %13, %cst_10 {dimension_numbers = #tpu.dot_dimension_numbers<[1], [0], [0], [1], [0, 0, 1, 1], [], []>} : vector<64x128xbf16>, vector<128x512xbf16>, vector<64x512xf32> -> vector<64x512xf32>
    %c0_11 = arith.constant 0 : index
    %c0_12 = arith.constant 0 : index
    %c0_13 = arith.constant 0 : index
    %15 = vector.load %arg6[%c0_11, %c0_12, %c0_13] : memref<4x1x512xf32, #tpu.memory_space<vmem>>, vector<1x1x512xf32>
    %16 = vector.shape_cast %15 : vector<1x1x512xf32> to vector<1x512xf32>
    %17 = vector.broadcast %16 : vector<1x512xf32> to vector<64x512xf32>
    %18 = arith.addf %14, %17 : vector<64x512xf32>
    %c0_14 = arith.constant 0 : index
    %c0_15 = arith.constant 0 : index
    %19 = vector.load %arg13[%c0_14, %c0_15] : memref<64x512xf32, #tpu.memory_space<vmem>>, vector<64x512xf32>
    tpu.vector_store %arg13[%c0_14, %c0_15], %18 {strides = array<i32>} : memref<64x512xf32, #tpu.memory_space<vmem>>, vector<64x512xf32>,
    %c0_16 = arith.constant 0 : index
    %c0_17 = arith.constant 0 : index
    %c0_18 = arith.constant 0 : index
    %20 = vector.load %arg5[%c0_16, %c0_17, %c0_18] : memref<4x128x512xbf16, #tpu.memory_space<vmem>>, vector<1x128x512xbf16>
    %21 = vector.shape_cast %20 : vector<1x128x512xbf16> to vector<128x512xbf16>
    %c0_19 = arith.constant 0 : index
    %c0_20 = arith.constant 0 : index
    %c0_21 = arith.constant 0 : index
    %22 = vector.load %arg1[%c0_19, %c0_20, %c0_21] : memref<4x8x128xf32, #tpu.memory_space<vmem>>, vector<1x8x128xf32>
    %23 = vector.shape_cast %22 : vector<1x8x128xf32> to vector<8x128xf32>
    %c0_22 = arith.constant 0 : index
    %c0_23 = arith.constant 0 : index
    %c0_24 = arith.constant 0 : index
    %24 = vector.load %arg2[%c0_22, %c0_23, %c0_24] : memref<4x8x128xf32, #tpu.memory_space<vmem>>, vector<1x8x128xf32>
    %25 = vector.shape_cast %24 : vector<1x8x128xf32> to vector<8x128xf32>
    %c0_i32 = arith.constant 0 : i32
    %c8_i32 = arith.constant 8 : i32
    %26 = arith.muli %c0_i32, %c8_i32 : i32
    %27 = tpu.assume_multiple %26, 8 : i32
    %28 = arith.index_cast %27 : i32 to index
    %c0_25 = arith.constant 0 : index
    %29 = vector.load %arg13[%28, %c0_25] : memref<64x512xf32, #tpu.memory_space<vmem>>, vector<8x512xf32>
    %30 = arith.truncf %23 : vector<8x128xf32> to vector<8x128xbf16>
    %cst_26 = arith.constant dense<0.000000e+00> : vector<8x512xf32>
    %31 = tpu.matmul %30, %21, %cst_26 {dimension_numbers = #tpu.dot_dimension_numbers<[1], [0], [0], [1], [0, 0, 1, 1], [], []>} : vector<8x128xbf16>, vector<128x512xbf16>, vector<8x512xf32> -> vector<8x512xf32>
    %32 = arith.addf %29, %31 : vector<8x512xf32>
    %33 = vector.extract_strided_slice %32 {offsets = [0, 0], sizes = [8, 384], strides = [1, 1]} : vector<8x512xf32> to vector<8x384xf32>
    %cst_27 = arith.constant 5.000000e-01 : f32
    %34 = vector.broadcast %cst_27 : f32 to vector<8x384xf32>
    %35 = arith.mulf %34, %33 : vector<8x384xf32>
    %36 = math.tanh %35 : vector<8x384xf32>
    %cst_28 = arith.constant 5.000000e-01 : f32
    %37 = vector.broadcast %cst_28 : f32 to vector<8x384xf32>
    %38 = arith.mulf %37, %36 : vector<8x384xf32>
    %cst_29 = arith.constant 5.000000e-01 : f32
    %39 = vector.broadcast %cst_29 : f32 to vector<8x384xf32>
    %40 = arith.addf %38, %39 : vector<8x384xf32>
    %41 = vector.extract_strided_slice %32 {offsets = [0, 384], sizes = [8, 128], strides = [1, 1]} : vector<8x512xf32> to vector<8x128xf32>
    %42 = math.tanh %41 : vector<8x128xf32>
    %43 = vector.extract_strided_slice %40 {offsets = [0, 0], sizes = [8, 128], strides = [1, 1]} : vector<8x384xf32> to vector<8x128xf32>
    %44 = vector.extract_strided_slice %40 {offsets = [0, 128], sizes = [8, 128], strides = [1, 1]} : vector<8x384xf32> to vector<8x128xf32>
    %45 = vector.extract_strided_slice %40 {offsets = [0, 256], sizes = [8, 128], strides = [1, 1]} : vector<8x384xf32> to vector<8x128xf32>
    %46 = arith.mulf %44, %25 : vector<8x128xf32>
    %47 = arith.mulf %43, %42 : vector<8x128xf32>
    %48 = arith.addf %46, %47 : vector<8x128xf32>
    %49 = math.tanh %48 : vector<8x128xf32>
    %50 = arith.mulf %45, %49 : vector<8x128xf32>
    %51 = arith.index_cast %27 : i32 to index
    %c0_30 = arith.constant 0 : index
    %52 = vector.load %arg12[%51, %c0_30] : memref<64x128xf32, #tpu.memory_space<vmem>>, vector<8x128xf32>
    tpu.vector_store %arg12[%51, %c0_30], %50 {strides = array<i32>} : memref<64x128xf32, #tpu.memory_space<vmem>>, vector<8x128xf32>,
    %c1_i32 = arith.constant 1 : i32
    %c8_i32_31 = arith.constant 8 : i32
    %53 = arith.muli %c1_i32, %c8_i32_31 : i32
    %54 = tpu.assume_multiple %53, 8 : i32
    %55 = arith.index_cast %54 : i32 to index
    %c0_32 = arith.constant 0 : index
    %56 = vector.load %arg13[%55, %c0_32] : memref<64x512xf32, #tpu.memory_space<vmem>>, vector<8x512xf32>
    %57 = arith.truncf %50 : vector<8x128xf32> to vector<8x128xbf16>
    %cst_33 = arith.constant dense<0.000000e+00> : vector<8x512xf32>
    %58 = tpu.matmul %57, %21, %cst_33 {dimension_numbers = #tpu.dot_dimension_numbers<[1], [0], [0], [1], [0, 0, 1, 1], [], []>} : vector<8x128xbf16>, vector<128x512xbf16>, vector<8x512xf32> -> vector<8x512xf32>
    %59 = arith.addf %56, %58 : vector<8x512xf32>
    %60 = vector.extract_strided_slice %59 {offsets = [0, 0], sizes = [8, 384], strides = [1, 1]} : vector<8x512xf32> to vector<8x384xf32>
    %cst_34 = arith.constant 5.000000e-01 : f32
    %61 = vector.broadcast %cst_34 : f32 to vector<8x384xf32>
    %62 = arith.mulf %61, %60 : vector<8x384xf32>
    %63 = math.tanh %62 : vector<8x384xf32>
    %cst_35 = arith.constant 5.000000e-01 : f32
    %64 = vector.broadcast %cst_35 : f32 to vector<8x384xf32>
    %65 = arith.mulf %64, %63 : vector<8x384xf32>
    %cst_36 = arith.constant 5.000000e-01 : f32
    %66 = vector.broadcast %cst_36 : f32 to vector<8x384xf32>
    %67 = arith.addf %65, %66 : vector<8x384xf32>
    %68 = vector.extract_strided_slice %59 {offsets = [0, 384], sizes = [8, 128], strides = [1, 1]} : vector<8x512xf32> to vector<8x128xf32>
    %69 = math.tanh %68 : vector<8x128xf32>
    %70 = vector.extract_strided_slice %67 {offsets = [0, 0], sizes = [8, 128], strides = [1, 1]} : vector<8x384xf32> to vector<8x128xf32>
    %71 = vector.extract_strided_slice %67 {offsets = [0, 128], sizes = [8, 128], strides = [1, 1]} : vector<8x384xf32> to vector<8x128xf32>
    %72 = vector.extract_strided_slice %67 {offsets = [0, 256], sizes = [8, 128], strides = [1, 1]} : vector<8x384xf32> to vector<8x128xf32>
    %73 = arith.mulf %71, %48 : vector<8x128xf32>
    %74 = arith.mulf %70, %69 : vector<8x128xf32>
    %75 = arith.addf %73, %74 : vector<8x128xf32>
    %76 = math.tanh %75 : vector<8x128xf32>
    %77 = arith.mulf %72, %76 : vector<8x128xf32>
    %78 = arith.index_cast %54 : i32 to index
    %c0_37 = arith.constant 0 : index
    %79 = vector.load %arg12[%78, %c0_37] : memref<64x128xf32, #tpu.memory_space<vmem>>, vector<8x128xf32>
    tpu.vector_store %arg12[%78, %c0_37], %77 {strides = array<i32>} : memref<64x128xf32, #tpu.memory_space<vmem>>, vector<8x128xf32>,
    %c2_i32 = arith.constant 2 : i32
    %c8_i32_38 = arith.constant 8 : i32
    %80 = arith.muli %c2_i32, %c8_i32_38 : i32
    %81 = tpu.assume_multiple %80, 8 : i32
    %82 = arith.index_cast %81 : i32 to index
    %c0_39 = arith.constant 0 : index
    %83 = vector.load %arg13[%82, %c0_39] : memref<64x512xf32, #tpu.memory_space<vmem>>, vector<8x512xf32>
    %84 = arith.truncf %77 : vector<8x128xf32> to vector<8x128xbf16>
    %cst_40 = arith.constant dense<0.000000e+00> : vector<8x512xf32>
    %85 = tpu.matmul %84, %21, %cst_40 {dimension_numbers = #tpu.dot_dimension_numbers<[1], [0], [0], [1], [0, 0, 1, 1], [], []>} : vector<8x128xbf16>, vector<128x512xbf16>, vector<8x512xf32> -> vector<8x512xf32>
    %86 = arith.addf %83, %85 : vector<8x512xf32>
    %87 = vector.extract_strided_slice %86 {offsets = [0, 0], sizes = [8, 384], strides = [1, 1]} : vector<8x512xf32> to vector<8x384xf32>
    %cst_41 = arith.constant 5.000000e-01 : f32
    %88 = vector.broadcast %cst_41 : f32 to vector<8x384xf32>
    %89 = arith.mulf %88, %87 : vector<8x384xf32>
    %90 = math.tanh %89 : vector<8x384xf32>
    %cst_42 = arith.constant 5.000000e-01 : f32
    %91 = vector.broadcast %cst_42 : f32 to vector<8x384xf32>
    %92 = arith.mulf %91, %90 : vector<8x384xf32>
    %cst_43 = arith.constant 5.000000e-01 : f32
    %93 = vector.broadcast %cst_43 : f32 to vector<8x384xf32>
    %94 = arith.addf %92, %93 : vector<8x384xf32>
    %95 = vector.extract_strided_slice %86 {offsets = [0, 384], sizes = [8, 128], strides = [1, 1]} : vector<8x512xf32> to vector<8x128xf32>
    %96 = math.tanh %95 : vector<8x128xf32>
    %97 = vector.extract_strided_slice %94 {offsets = [0, 0], sizes = [8, 128], strides = [1, 1]} : vector<8x384xf32> to vector<8x128xf32>
    %98 = vector.extract_strided_slice %94 {offsets = [0, 128], sizes = [8, 128], strides = [1, 1]} : vector<8x384xf32> to vector<8x128xf32>
    %99 = vector.extract_strided_slice %94 {offsets = [0, 256], sizes = [8, 128], strides = [1, 1]} : vector<8x384xf32> to vector<8x128xf32>
    %100 = arith.mulf %98, %75 : vector<8x128xf32>
    %101 = arith.mulf %97, %96 : vector<8x128xf32>
    %102 = arith.addf %100, %101 : vector<8x128xf32>
    %103 = math.tanh %102 : vector<8x128xf32>
    %104 = arith.mulf %99, %103 : vector<8x128xf32>
    %105 = arith.index_cast %81 : i32 to index
    %c0_44 = arith.constant 0 : index
    %106 = vector.load %arg12[%105, %c0_44] : memref<64x128xf32, #tpu.memory_space<vmem>>, vector<8x128xf32>
    tpu.vector_store %arg12[%105, %c0_44], %104 {strides = array<i32>} : memref<64x128xf32, #tpu.memory_space<vmem>>, vector<8x128xf32>,
    %c3_i32 = arith.constant 3 : i32
    %c8_i32_45 = arith.constant 8 : i32
    %107 = arith.muli %c3_i32, %c8_i32_45 : i32
    %108 = tpu.assume_multiple %107, 8 : i32
    %109 = arith.index_cast %108 : i32 to index
    %c0_46 = arith.constant 0 : index
    %110 = vector.load %arg13[%109, %c0_46] : memref<64x512xf32, #tpu.memory_space<vmem>>, vector<8x512xf32>
    %111 = arith.truncf %104 : vector<8x128xf32> to vector<8x128xbf16>
    %cst_47 = arith.constant dense<0.000000e+00> : vector<8x512xf32>
    %112 = tpu.matmul %111, %21, %cst_47 {dimension_numbers = #tpu.dot_dimension_numbers<[1], [0], [0], [1], [0, 0, 1, 1], [], []>} : vector<8x128xbf16>, vector<128x512xbf16>, vector<8x512xf32> -> vector<8x512xf32>
    %113 = arith.addf %110, %112 : vector<8x512xf32>
    %114 = vector.extract_strided_slice %113 {offsets = [0, 0], sizes = [8, 384], strides = [1, 1]} : vector<8x512xf32> to vector<8x384xf32>
    %cst_48 = arith.constant 5.000000e-01 : f32
    %115 = vector.broadcast %cst_48 : f32 to vector<8x384xf32>
    %116 = arith.mulf %115, %114 : vector<8x384xf32>
    %117 = math.tanh %116 : vector<8x384xf32>
    %cst_49 = arith.constant 5.000000e-01 : f32
    %118 = vector.broadcast %cst_49 : f32 to vector<8x384xf32>
    %119 = arith.mulf %118, %117 : vector<8x384xf32>
    %cst_50 = arith.constant 5.000000e-01 : f32
    %120 = vector.broadcast %cst_50 : f32 to vector<8x384xf32>
    %121 = arith.addf %119, %120 : vector<8x384xf32>
    %122 = vector.extract_strided_slice %113 {offsets = [0, 384], sizes = [8, 128], strides = [1, 1]} : vector<8x512xf32> to vector<8x128xf32>
    %123 = math.tanh %122 : vector<8x128xf32>
    %124 = vector.extract_strided_slice %121 {offsets = [0, 0], sizes = [8, 128], strides = [1, 1]} : vector<8x384xf32> to vector<8x128xf32>
    %125 = vector.extract_strided_slice %121 {offsets = [0, 128], sizes = [8, 128], strides = [1, 1]} : vector<8x384xf32> to vector<8x128xf32>
    %126 = vector.extract_strided_slice %121 {offsets = [0, 256], sizes = [8, 128], strides = [1, 1]} : vector<8x384xf32> to vector<8x128xf32>
    %127 = arith.mulf %125, %102 : vector<8x128xf32>
    %128 = arith.mulf %124, %123 : vector<8x128xf32>
    %129 = arith.addf %127, %128 : vector<8x128xf32>
    %130 = math.tanh %129 : vector<8x128xf32>
    %131 = arith.mulf %126, %130 : vector<8x128xf32>
    %132 = arith.index_cast %108 : i32 to index
    %c0_51 = arith.constant 0 : index
    %133 = vector.load %arg12[%132, %c0_51] : memref<64x128xf32, #tpu.memory_space<vmem>>, vector<8x128xf32>
    tpu.vector_store %arg12[%132, %c0_51], %131 {strides = array<i32>} : memref<64x128xf32, #tpu.memory_space<vmem>>, vector<8x128xf32>,
    %c4_i32 = arith.constant 4 : i32
    %c8_i32_52 = arith.constant 8 : i32
    %134 = arith.muli %c4_i32, %c8_i32_52 : i32
    %135 = tpu.assume_multiple %134, 8 : i32
    %136 = arith.index_cast %135 : i32 to index
    %c0_53 = arith.constant 0 : index
    %137 = vector.load %arg13[%136, %c0_53] : memref<64x512xf32, #tpu.memory_space<vmem>>, vector<8x512xf32>
    %138 = arith.truncf %131 : vector<8x128xf32> to vector<8x128xbf16>
    %cst_54 = arith.constant dense<0.000000e+00> : vector<8x512xf32>
    %139 = tpu.matmul %138, %21, %cst_54 {dimension_numbers = #tpu.dot_dimension_numbers<[1], [0], [0], [1], [0, 0, 1, 1], [], []>} : vector<8x128xbf16>, vector<128x512xbf16>, vector<8x512xf32> -> vector<8x512xf32>
    %140 = arith.addf %137, %139 : vector<8x512xf32>
    %141 = vector.extract_strided_slice %140 {offsets = [0, 0], sizes = [8, 384], strides = [1, 1]} : vector<8x512xf32> to vector<8x384xf32>
    %cst_55 = arith.constant 5.000000e-01 : f32
    %142 = vector.broadcast %cst_55 : f32 to vector<8x384xf32>
    %143 = arith.mulf %142, %141 : vector<8x384xf32>
    %144 = math.tanh %143 : vector<8x384xf32>
    %cst_56 = arith.constant 5.000000e-01 : f32
    %145 = vector.broadcast %cst_56 : f32 to vector<8x384xf32>
    %146 = arith.mulf %145, %144 : vector<8x384xf32>
    %cst_57 = arith.constant 5.000000e-01 : f32
    %147 = vector.broadcast %cst_57 : f32 to vector<8x384xf32>
    %148 = arith.addf %146, %147 : vector<8x384xf32>
    %149 = vector.extract_strided_slice %140 {offsets = [0, 384], sizes = [8, 128], strides = [1, 1]} : vector<8x512xf32> to vector<8x128xf32>
    %150 = math.tanh %149 : vector<8x128xf32>
    %151 = vector.extract_strided_slice %148 {offsets = [0, 0], sizes = [8, 128], strides = [1, 1]} : vector<8x384xf32> to vector<8x128xf32>
    %152 = vector.extract_strided_slice %148 {offsets = [0, 128], sizes = [8, 128], strides = [1, 1]} : vector<8x384xf32> to vector<8x128xf32>
    %153 = vector.extract_strided_slice %148 {offsets = [0, 256], sizes = [8, 128], strides = [1, 1]} : vector<8x384xf32> to vector<8x128xf32>
    %154 = arith.mulf %152, %129 : vector<8x128xf32>
    %155 = arith.mulf %151, %150 : vector<8x128xf32>
    %156 = arith.addf %154, %155 : vector<8x128xf32>
    %157 = math.tanh %156 : vector<8x128xf32>
    %158 = arith.mulf %153, %157 : vector<8x128xf32>
    %159 = arith.index_cast %135 : i32 to index
    %c0_58 = arith.constant 0 : index
    %160 = vector.load %arg12[%159, %c0_58] : memref<64x128xf32, #tpu.memory_space<vmem>>, vector<8x128xf32>
    tpu.vector_store %arg12[%159, %c0_58], %158 {strides = array<i32>} : memref<64x128xf32, #tpu.memory_space<vmem>>, vector<8x128xf32>,
    %c5_i32 = arith.constant 5 : i32
    %c8_i32_59 = arith.constant 8 : i32
    %161 = arith.muli %c5_i32, %c8_i32_59 : i32
    %162 = tpu.assume_multiple %161, 8 : i32
    %163 = arith.index_cast %162 : i32 to index
    %c0_60 = arith.constant 0 : index
    %164 = vector.load %arg13[%163, %c0_60] : memref<64x512xf32, #tpu.memory_space<vmem>>, vector<8x512xf32>
    %165 = arith.truncf %158 : vector<8x128xf32> to vector<8x128xbf16>
    %cst_61 = arith.constant dense<0.000000e+00> : vector<8x512xf32>
    %166 = tpu.matmul %165, %21, %cst_61 {dimension_numbers = #tpu.dot_dimension_numbers<[1], [0], [0], [1], [0, 0, 1, 1], [], []>} : vector<8x128xbf16>, vector<128x512xbf16>, vector<8x512xf32> -> vector<8x512xf32>
    %167 = arith.addf %164, %166 : vector<8x512xf32>
    %168 = vector.extract_strided_slice %167 {offsets = [0, 0], sizes = [8, 384], strides = [1, 1]} : vector<8x512xf32> to vector<8x384xf32>
    %cst_62 = arith.constant 5.000000e-01 : f32
    %169 = vector.broadcast %cst_62 : f32 to vector<8x384xf32>
    %170 = arith.mulf %169, %168 : vector<8x384xf32>
    %171 = math.tanh %170 : vector<8x384xf32>
    %cst_63 = arith.constant 5.000000e-01 : f32
    %172 = vector.broadcast %cst_63 : f32 to vector<8x384xf32>
    %173 = arith.mulf %172, %171 : vector<8x384xf32>
    %cst_64 = arith.constant 5.000000e-01 : f32
    %174 = vector.broadcast %cst_64 : f32 to vector<8x384xf32>
    %175 = arith.addf %173, %174 : vector<8x384xf32>
    %176 = vector.extract_strided_slice %167 {offsets = [0, 384], sizes = [8, 128], strides = [1, 1]} : vector<8x512xf32> to vector<8x128xf32>
    %177 = math.tanh %176 : vector<8x128xf32>
    %178 = vector.extract_strided_slice %175 {offsets = [0, 0], sizes = [8, 128], strides = [1, 1]} : vector<8x384xf32> to vector<8x128xf32>
    %179 = vector.extract_strided_slice %175 {offsets = [0, 128], sizes = [8, 128], strides = [1, 1]} : vector<8x384xf32> to vector<8x128xf32>
    %180 = vector.extract_strided_slice %175 {offsets = [0, 256], sizes = [8, 128], strides = [1, 1]} : vector<8x384xf32> to vector<8x128xf32>
    %181 = arith.mulf %179, %156 : vector<8x128xf32>
    %182 = arith.mulf %178, %177 : vector<8x128xf32>
    %183 = arith.addf %181, %182 : vector<8x128xf32>
    %184 = math.tanh %183 : vector<8x128xf32>
    %185 = arith.mulf %180, %184 : vector<8x128xf32>
    %186 = arith.index_cast %162 : i32 to index
    %c0_65 = arith.constant 0 : index
    %187 = vector.load %arg12[%186, %c0_65] : memref<64x128xf32, #tpu.memory_space<vmem>>, vector<8x128xf32>
    tpu.vector_store %arg12[%186, %c0_65], %185 {strides = array<i32>} : memref<64x128xf32, #tpu.memory_space<vmem>>, vector<8x128xf32>,
    %c6_i32 = arith.constant 6 : i32
    %c8_i32_66 = arith.constant 8 : i32
    %188 = arith.muli %c6_i32, %c8_i32_66 : i32
    %189 = tpu.assume_multiple %188, 8 : i32
    %190 = arith.index_cast %189 : i32 to index
    %c0_67 = arith.constant 0 : index
    %191 = vector.load %arg13[%190, %c0_67] : memref<64x512xf32, #tpu.memory_space<vmem>>, vector<8x512xf32>
    %192 = arith.truncf %185 : vector<8x128xf32> to vector<8x128xbf16>
    %cst_68 = arith.constant dense<0.000000e+00> : vector<8x512xf32>
    %193 = tpu.matmul %192, %21, %cst_68 {dimension_numbers = #tpu.dot_dimension_numbers<[1], [0], [0], [1], [0, 0, 1, 1], [], []>} : vector<8x128xbf16>, vector<128x512xbf16>, vector<8x512xf32> -> vector<8x512xf32>
    %194 = arith.addf %191, %193 : vector<8x512xf32>
    %195 = vector.extract_strided_slice %194 {offsets = [0, 0], sizes = [8, 384], strides = [1, 1]} : vector<8x512xf32> to vector<8x384xf32>
    %cst_69 = arith.constant 5.000000e-01 : f32
    %196 = vector.broadcast %cst_69 : f32 to vector<8x384xf32>
    %197 = arith.mulf %196, %195 : vector<8x384xf32>
    %198 = math.tanh %197 : vector<8x384xf32>
    %cst_70 = arith.constant 5.000000e-01 : f32
    %199 = vector.broadcast %cst_70 : f32 to vector<8x384xf32>
    %200 = arith.mulf %199, %198 : vector<8x384xf32>
    %cst_71 = arith.constant 5.000000e-01 : f32
    %201 = vector.broadcast %cst_71 : f32 to vector<8x384xf32>
    %202 = arith.addf %200, %201 : vector<8x384xf32>
    %203 = vector.extract_strided_slice %194 {offsets = [0, 384], sizes = [8, 128], strides = [1, 1]} : vector<8x512xf32> to vector<8x128xf32>
    %204 = math.tanh %203 : vector<8x128xf32>
    %205 = vector.extract_strided_slice %202 {offsets = [0, 0], sizes = [8, 128], strides = [1, 1]} : vector<8x384xf32> to vector<8x128xf32>
    %206 = vector.extract_strided_slice %202 {offsets = [0, 128], sizes = [8, 128], strides = [1, 1]} : vector<8x384xf32> to vector<8x128xf32>
    %207 = vector.extract_strided_slice %202 {offsets = [0, 256], sizes = [8, 128], strides = [1, 1]} : vector<8x384xf32> to vector<8x128xf32>
    %208 = arith.mulf %206, %183 : vector<8x128xf32>
    %209 = arith.mulf %205, %204 : vector<8x128xf32>
    %210 = arith.addf %208, %209 : vector<8x128xf32>
    %211 = math.tanh %210 : vector<8x128xf32>
    %212 = arith.mulf %207, %211 : vector<8x128xf32>
    %213 = arith.index_cast %189 : i32 to index
    %c0_72 = arith.constant 0 : index
    %214 = vector.load %arg12[%213, %c0_72] : memref<64x128xf32, #tpu.memory_space<vmem>>, vector<8x128xf32>
    tpu.vector_store %arg12[%213, %c0_72], %212 {strides = array<i32>} : memref<64x128xf32, #tpu.memory_space<vmem>>, vector<8x128xf32>,
    %c7_i32 = arith.constant 7 : i32
    %c8_i32_73 = arith.constant 8 : i32
    %215 = arith.muli %c7_i32, %c8_i32_73 : i32
    %216 = tpu.assume_multiple %215, 8 : i32
    %217 = arith.index_cast %216 : i32 to index
    %c0_74 = arith.constant 0 : index
    %218 = vector.load %arg13[%217, %c0_74] : memref<64x512xf32, #tpu.memory_space<vmem>>, vector<8x512xf32>
    %219 = arith.truncf %212 : vector<8x128xf32> to vector<8x128xbf16>
    %cst_75 = arith.constant dense<0.000000e+00> : vector<8x512xf32>
    %220 = tpu.matmul %219, %21, %cst_75 {dimension_numbers = #tpu.dot_dimension_numbers<[1], [0], [0], [1], [0, 0, 1, 1], [], []>} : vector<8x128xbf16>, vector<128x512xbf16>, vector<8x512xf32> -> vector<8x512xf32>
    %221 = arith.addf %218, %220 : vector<8x512xf32>
    %222 = vector.extract_strided_slice %221 {offsets = [0, 0], sizes = [8, 384], strides = [1, 1]} : vector<8x512xf32> to vector<8x384xf32>
    %cst_76 = arith.constant 5.000000e-01 : f32
    %223 = vector.broadcast %cst_76 : f32 to vector<8x384xf32>
    %224 = arith.mulf %223, %222 : vector<8x384xf32>
    %225 = math.tanh %224 : vector<8x384xf32>
    %cst_77 = arith.constant 5.000000e-01 : f32
    %226 = vector.broadcast %cst_77 : f32 to vector<8x384xf32>
    %227 = arith.mulf %226, %225 : vector<8x384xf32>
    %cst_78 = arith.constant 5.000000e-01 : f32
    %228 = vector.broadcast %cst_78 : f32 to vector<8x384xf32>
    %229 = arith.addf %227, %228 : vector<8x384xf32>
    %230 = vector.extract_strided_slice %221 {offsets = [0, 384], sizes = [8, 128], strides = [1, 1]} : vector<8x512xf32> to vector<8x128xf32>
    %231 = math.tanh %230 : vector<8x128xf32>
    %232 = vector.extract_strided_slice %229 {offsets = [0, 0], sizes = [8, 128], strides = [1, 1]} : vector<8x384xf32> to vector<8x128xf32>
    %233 = vector.extract_strided_slice %229 {offsets = [0, 128], sizes = [8, 128], strides = [1, 1]} : vector<8x384xf32> to vector<8x128xf32>
    %234 = vector.extract_strided_slice %229 {offsets = [0, 256], sizes = [8, 128], strides = [1, 1]} : vector<8x384xf32> to vector<8x128xf32>
    %235 = arith.mulf %233, %210 : vector<8x128xf32>
    %236 = arith.mulf %232, %231 : vector<8x128xf32>
    %237 = arith.addf %235, %236 : vector<8x128xf32>
    %238 = math.tanh %237 : vector<8x128xf32>
    %239 = arith.mulf %234, %238 : vector<8x128xf32>
    %240 = arith.index_cast %216 : i32 to index
    %c0_79 = arith.constant 0 : index
    %241 = vector.load %arg12[%240, %c0_79] : memref<64x128xf32, #tpu.memory_space<vmem>>, vector<8x128xf32>
    tpu.vector_store %arg12[%240, %c0_79], %239 {strides = array<i32>} : memref<64x128xf32, #tpu.memory_space<vmem>>, vector<8x128xf32>,
    %c8_i32_80 = arith.constant 8 : i32
    %c0_81 = arith.constant 0 : index
    %c0_82 = arith.constant 0 : index
    %c0_83 = arith.constant 0 : index
    %242 = vector.load %arg10[%c0_81, %c0_82, %c0_83] : memref<4x8x128xf32, #tpu.memory_space<vmem>>, vector<1x8x128xf32>
    %243 = vector.shape_cast %242 : vector<1x8x128xf32> to vector<8x128xf32>
    %244 = vector.shape_cast %239 : vector<8x128xf32> to vector<1x8x128xf32>
    tpu.vector_store %arg10[%c0_81, %c0_82, %c0_83], %244 {strides = array<i32>} : memref<4x8x128xf32, #tpu.memory_space<vmem>>, vector<1x8x128xf32>,
    %c0_84 = arith.constant 0 : index
    %c0_85 = arith.constant 0 : index
    %c0_86 = arith.constant 0 : index
    %245 = vector.load %arg11[%c0_84, %c0_85, %c0_86] : memref<4x8x128xf32, #tpu.memory_space<vmem>>, vector<1x8x128xf32>
    %246 = vector.shape_cast %245 : vector<1x8x128xf32> to vector<8x128xf32>
    %247 = vector.shape_cast %237 : vector<8x128xf32> to vector<1x8x128xf32>
    tpu.vector_store %arg11[%c0_84, %c0_85, %c0_86], %247 {strides = array<i32>} : memref<4x8x128xf32, #tpu.memory_space<vmem>>, vector<1x8x128xf32>,
    %c0_87 = arith.constant 0 : index
    %c0_88 = arith.constant 0 : index
    %248 = vector.load %arg12[%c0_87, %c0_88] : memref<64x128xf32, #tpu.memory_space<vmem>>, vector<64x128xf32>
    %249 = arith.truncf %248 : vector<64x128xf32> to vector<64x128xbf16>
    %c1 = arith.constant 1 : index
    %c0_89 = arith.constant 0 : index
    %c0_90 = arith.constant 0 : index
    %250 = vector.load %arg4[%c1, %c0_89, %c0_90] : memref<4x128x512xbf16, #tpu.memory_space<vmem>>, vector<1x128x512xbf16>
    %251 = vector.shape_cast %250 : vector<1x128x512xbf16> to vector<128x512xbf16>
    %cst_91 = arith.constant dense<0.000000e+00> : vector<64x512xf32>
    %252 = tpu.matmul %249, %251, %cst_91 {dimension_numbers = #tpu.dot_dimension_numbers<[1], [0], [0], [1], [0, 0, 1, 1], [], []>} : vector<64x128xbf16>, vector<128x512xbf16>, vector<64x512xf32> -> vector<64x512xf32>
    %c1_92 = arith.constant 1 : index
    %c0_93 = arith.constant 0 : index
    %c0_94 = arith.constant 0 : index
    %253 = vector.load %arg6[%c1_92, %c0_93, %c0_94] : memref<4x1x512xf32, #tpu.memory_space<vmem>>, vector<1x1x512xf32>
    %254 = vector.shape_cast %253 : vector<1x1x512xf32> to vector<1x512xf32>
    %255 = vector.broadcast %254 : vector<1x512xf32> to vector<64x512xf32>
    %256 = arith.addf %252, %255 : vector<64x512xf32>
    %c0_95 = arith.constant 0 : index
    %c0_96 = arith.constant 0 : index
    %257 = vector.load %arg13[%c0_95, %c0_96] : memref<64x512xf32, #tpu.memory_space<vmem>>, vector<64x512xf32>
    tpu.vector_store %arg13[%c0_95, %c0_96], %256 {strides = array<i32>} : memref<64x512xf32, #tpu.memory_space<vmem>>, vector<64x512xf32>,
    %c1_97 = arith.constant 1 : index
    %c0_98 = arith.constant 0 : index
    %c0_99 = arith.constant 0 : index
    %258 = vector.load %arg5[%c1_97, %c0_98, %c0_99] : memref<4x128x512xbf16, #tpu.memory_space<vmem>>, vector<1x128x512xbf16>
    %259 = vector.shape_cast %258 : vector<1x128x512xbf16> to vector<128x512xbf16>
    %c1_100 = arith.constant 1 : index
    %c0_101 = arith.constant 0 : index
    %c0_102 = arith.constant 0 : index
    %260 = vector.load %arg1[%c1_100, %c0_101, %c0_102] : memref<4x8x128xf32, #tpu.memory_space<vmem>>, vector<1x8x128xf32>
    %261 = vector.shape_cast %260 : vector<1x8x128xf32> to vector<8x128xf32>
    %c1_103 = arith.constant 1 : index
    %c0_104 = arith.constant 0 : index
    %c0_105 = arith.constant 0 : index
    %262 = vector.load %arg2[%c1_103, %c0_104, %c0_105] : memref<4x8x128xf32, #tpu.memory_space<vmem>>, vector<1x8x128xf32>
    %263 = vector.shape_cast %262 : vector<1x8x128xf32> to vector<8x128xf32>
    %c0_i32_106 = arith.constant 0 : i32
    %c8_i32_107 = arith.constant 8 : i32
    %264 = arith.muli %c0_i32_106, %c8_i32_107 : i32
    %265 = tpu.assume_multiple %264, 8 : i32
    %266 = arith.index_cast %265 : i32 to index
    %c0_108 = arith.constant 0 : index
    %267 = vector.load %arg13[%266, %c0_108] : memref<64x512xf32, #tpu.memory_space<vmem>>, vector<8x512xf32>
    %268 = arith.truncf %261 : vector<8x128xf32> to vector<8x128xbf16>
    %cst_109 = arith.constant dense<0.000000e+00> : vector<8x512xf32>
    %269 = tpu.matmul %268, %259, %cst_109 {dimension_numbers = #tpu.dot_dimension_numbers<[1], [0], [0], [1], [0, 0, 1, 1], [], []>} : vector<8x128xbf16>, vector<128x512xbf16>, vector<8x512xf32> -> vector<8x512xf32>
    %270 = arith.addf %267, %269 : vector<8x512xf32>
    %271 = vector.extract_strided_slice %270 {offsets = [0, 0], sizes = [8, 384], strides = [1, 1]} : vector<8x512xf32> to vector<8x384xf32>
    %cst_110 = arith.constant 5.000000e-01 : f32
    %272 = vector.broadcast %cst_110 : f32 to vector<8x384xf32>
    %273 = arith.mulf %272, %271 : vector<8x384xf32>
    %274 = math.tanh %273 : vector<8x384xf32>
    %cst_111 = arith.constant 5.000000e-01 : f32
    %275 = vector.broadcast %cst_111 : f32 to vector<8x384xf32>
    %276 = arith.mulf %275, %274 : vector<8x384xf32>
    %cst_112 = arith.constant 5.000000e-01 : f32
    %277 = vector.broadcast %cst_112 : f32 to vector<8x384xf32>
    %278 = arith.addf %276, %277 : vector<8x384xf32>
    %279 = vector.extract_strided_slice %270 {offsets = [0, 384], sizes = [8, 128], strides = [1, 1]} : vector<8x512xf32> to vector<8x128xf32>
    %280 = math.tanh %279 : vector<8x128xf32>
    %281 = vector.extract_strided_slice %278 {offsets = [0, 0], sizes = [8, 128], strides = [1, 1]} : vector<8x384xf32> to vector<8x128xf32>
    %282 = vector.extract_strided_slice %278 {offsets = [0, 128], sizes = [8, 128], strides = [1, 1]} : vector<8x384xf32> to vector<8x128xf32>
    %283 = vector.extract_strided_slice %278 {offsets = [0, 256], sizes = [8, 128], strides = [1, 1]} : vector<8x384xf32> to vector<8x128xf32>
    %284 = arith.mulf %282, %263 : vector<8x128xf32>
    %285 = arith.mulf %281, %280 : vector<8x128xf32>
    %286 = arith.addf %284, %285 : vector<8x128xf32>
    %287 = math.tanh %286 : vector<8x128xf32>
    %288 = arith.mulf %283, %287 : vector<8x128xf32>
    %289 = arith.index_cast %265 : i32 to index
    %c0_113 = arith.constant 0 : index
    %290 = vector.load %arg12[%289, %c0_113] : memref<64x128xf32, #tpu.memory_space<vmem>>, vector<8x128xf32>
    tpu.vector_store %arg12[%289, %c0_113], %288 {strides = array<i32>} : memref<64x128xf32, #tpu.memory_space<vmem>>, vector<8x128xf32>,
    %c1_i32_114 = arith.constant 1 : i32
    %c8_i32_115 = arith.constant 8 : i32
    %291 = arith.muli %c1_i32_114, %c8_i32_115 : i32
    %292 = tpu.assume_multiple %291, 8 : i32
    %293 = arith.index_cast %292 : i32 to index
    %c0_116 = arith.constant 0 : index
    %294 = vector.load %arg13[%293, %c0_116] : memref<64x512xf32, #tpu.memory_space<vmem>>, vector<8x512xf32>
    %295 = arith.truncf %288 : vector<8x128xf32> to vector<8x128xbf16>
    %cst_117 = arith.constant dense<0.000000e+00> : vector<8x512xf32>
    %296 = tpu.matmul %295, %259, %cst_117 {dimension_numbers = #tpu.dot_dimension_numbers<[1], [0], [0], [1], [0, 0, 1, 1], [], []>} : vector<8x128xbf16>, vector<128x512xbf16>, vector<8x512xf32> -> vector<8x512xf32>
    %297 = arith.addf %294, %296 : vector<8x512xf32>
    %298 = vector.extract_strided_slice %297 {offsets = [0, 0], sizes = [8, 384], strides = [1, 1]} : vector<8x512xf32> to vector<8x384xf32>
    %cst_118 = arith.constant 5.000000e-01 : f32
    %299 = vector.broadcast %cst_118 : f32 to vector<8x384xf32>
    %300 = arith.mulf %299, %298 : vector<8x384xf32>
    %301 = math.tanh %300 : vector<8x384xf32>
    %cst_119 = arith.constant 5.000000e-01 : f32
    %302 = vector.broadcast %cst_119 : f32 to vector<8x384xf32>
    %303 = arith.mulf %302, %301 : vector<8x384xf32>
    %cst_120 = arith.constant 5.000000e-01 : f32
    %304 = vector.broadcast %cst_120 : f32 to vector<8x384xf32>
    %305 = arith.addf %303, %304 : vector<8x384xf32>
    %306 = vector.extract_strided_slice %297 {offsets = [0, 384], sizes = [8, 128], strides = [1, 1]} : vector<8x512xf32> to vector<8x128xf32>
    %307 = math.tanh %306 : vector<8x128xf32>
    %308 = vector.extract_strided_slice %305 {offsets = [0, 0], sizes = [8, 128], strides = [1, 1]} : vector<8x384xf32> to vector<8x128xf32>
    %309 = vector.extract_strided_slice %305 {offsets = [0, 128], sizes = [8, 128], strides = [1, 1]} : vector<8x384xf32> to vector<8x128xf32>
    %310 = vector.extract_strided_slice %305 {offsets = [0, 256], sizes = [8, 128], strides = [1, 1]} : vector<8x384xf32> to vector<8x128xf32>
    %311 = arith.mulf %309, %286 : vector<8x128xf32>
    %312 = arith.mulf %308, %307 : vector<8x128xf32>
    %313 = arith.addf %311, %312 : vector<8x128xf32>
    %314 = math.tanh %313 : vector<8x128xf32>
    %315 = arith.mulf %310, %314 : vector<8x128xf32>
    %316 = arith.index_cast %292 : i32 to index
    %c0_121 = arith.constant 0 : index
    %317 = vector.load %arg12[%316, %c0_121] : memref<64x128xf32, #tpu.memory_space<vmem>>, vector<8x128xf32>
    tpu.vector_store %arg12[%316, %c0_121], %315 {strides = array<i32>} : memref<64x128xf32, #tpu.memory_space<vmem>>, vector<8x128xf32>,
    %c2_i32_122 = arith.constant 2 : i32
    %c8_i32_123 = arith.constant 8 : i32
    %318 = arith.muli %c2_i32_122, %c8_i32_123 : i32
    %319 = tpu.assume_multiple %318, 8 : i32
    %320 = arith.index_cast %319 : i32 to index
    %c0_124 = arith.constant 0 : index
    %321 = vector.load %arg13[%320, %c0_124] : memref<64x512xf32, #tpu.memory_space<vmem>>, vector<8x512xf32>
    %322 = arith.truncf %315 : vector<8x128xf32> to vector<8x128xbf16>
    %cst_125 = arith.constant dense<0.000000e+00> : vector<8x512xf32>
    %323 = tpu.matmul %322, %259, %cst_125 {dimension_numbers = #tpu.dot_dimension_numbers<[1], [0], [0], [1], [0, 0, 1, 1], [], []>} : vector<8x128xbf16>, vector<128x512xbf16>, vector<8x512xf32> -> vector<8x512xf32>
    %324 = arith.addf %321, %323 : vector<8x512xf32>
    %325 = vector.extract_strided_slice %324 {offsets = [0, 0], sizes = [8, 384], strides = [1, 1]} : vector<8x512xf32> to vector<8x384xf32>
    %cst_126 = arith.constant 5.000000e-01 : f32
    %326 = vector.broadcast %cst_126 : f32 to vector<8x384xf32>
    %327 = arith.mulf %326, %325 : vector<8x384xf32>
    %328 = math.tanh %327 : vector<8x384xf32>
    %cst_127 = arith.constant 5.000000e-01 : f32
    %329 = vector.broadcast %cst_127 : f32 to vector<8x384xf32>
    %330 = arith.mulf %329, %328 : vector<8x384xf32>
    %cst_128 = arith.constant 5.000000e-01 : f32
    %331 = vector.broadcast %cst_128 : f32 to vector<8x384xf32>
    %332 = arith.addf %330, %331 : vector<8x384xf32>
    %333 = vector.extract_strided_slice %324 {offsets = [0, 384], sizes = [8, 128], strides = [1, 1]} : vector<8x512xf32> to vector<8x128xf32>
    %334 = math.tanh %333 : vector<8x128xf32>
    %335 = vector.extract_strided_slice %332 {offsets = [0, 0], sizes = [8, 128], strides = [1, 1]} : vector<8x384xf32> to vector<8x128xf32>
    %336 = vector.extract_strided_slice %332 {offsets = [0, 128], sizes = [8, 128], strides = [1, 1]} : vector<8x384xf32> to vector<8x128xf32>
    %337 = vector.extract_strided_slice %332 {offsets = [0, 256], sizes = [8, 128], strides = [1, 1]} : vector<8x384xf32> to vector<8x128xf32>
    %338 = arith.mulf %336, %313 : vector<8x128xf32>
    %339 = arith.mulf %335, %334 : vector<8x128xf32>
    %340 = arith.addf %338, %339 : vector<8x128xf32>
    %341 = math.tanh %340 : vector<8x128xf32>
    %342 = arith.mulf %337, %341 : vector<8x128xf32>
    %343 = arith.index_cast %319 : i32 to index
    %c0_129 = arith.constant 0 : index
    %344 = vector.load %arg12[%343, %c0_129] : memref<64x128xf32, #tpu.memory_space<vmem>>, vector<8x128xf32>
    tpu.vector_store %arg12[%343, %c0_129], %342 {strides = array<i32>} : memref<64x128xf32, #tpu.memory_space<vmem>>, vector<8x128xf32>,
    %c3_i32_130 = arith.constant 3 : i32
    %c8_i32_131 = arith.constant 8 : i32
    %345 = arith.muli %c3_i32_130, %c8_i32_131 : i32
    %346 = tpu.assume_multiple %345, 8 : i32
    %347 = arith.index_cast %346 : i32 to index
    %c0_132 = arith.constant 0 : index
    %348 = vector.load %arg13[%347, %c0_132] : memref<64x512xf32, #tpu.memory_space<vmem>>, vector<8x512xf32>
    %349 = arith.truncf %342 : vector<8x128xf32> to vector<8x128xbf16>
    %cst_133 = arith.constant dense<0.000000e+00> : vector<8x512xf32>
    %350 = tpu.matmul %349, %259, %cst_133 {dimension_numbers = #tpu.dot_dimension_numbers<[1], [0], [0], [1], [0, 0, 1, 1], [], []>} : vector<8x128xbf16>, vector<128x512xbf16>, vector<8x512xf32> -> vector<8x512xf32>
    %351 = arith.addf %348, %350 : vector<8x512xf32>
    %352 = vector.extract_strided_slice %351 {offsets = [0, 0], sizes = [8, 384], strides = [1, 1]} : vector<8x512xf32> to vector<8x384xf32>
    %cst_134 = arith.constant 5.000000e-01 : f32
    %353 = vector.broadcast %cst_134 : f32 to vector<8x384xf32>
    %354 = arith.mulf %353, %352 : vector<8x384xf32>
    %355 = math.tanh %354 : vector<8x384xf32>
    %cst_135 = arith.constant 5.000000e-01 : f32
    %356 = vector.broadcast %cst_135 : f32 to vector<8x384xf32>
    %357 = arith.mulf %356, %355 : vector<8x384xf32>
    %cst_136 = arith.constant 5.000000e-01 : f32
    %358 = vector.broadcast %cst_136 : f32 to vector<8x384xf32>
    %359 = arith.addf %357, %358 : vector<8x384xf32>
    %360 = vector.extract_strided_slice %351 {offsets = [0, 384], sizes = [8, 128], strides = [1, 1]} : vector<8x512xf32> to vector<8x128xf32>
    %361 = math.tanh %360 : vector<8x128xf32>
    %362 = vector.extract_strided_slice %359 {offsets = [0, 0], sizes = [8, 128], strides = [1, 1]} : vector<8x384xf32> to vector<8x128xf32>
    %363 = vector.extract_strided_slice %359 {offsets = [0, 128], sizes = [8, 128], strides = [1, 1]} : vector<8x384xf32> to vector<8x128xf32>
    %364 = vector.extract_strided_slice %359 {offsets = [0, 256], sizes = [8, 128], strides = [1, 1]} : vector<8x384xf32> to vector<8x128xf32>
    %365 = arith.mulf %363, %340 : vector<8x128xf32>
    %366 = arith.mulf %362, %361 : vector<8x128xf32>
    %367 = arith.addf %365, %366 : vector<8x128xf32>
    %368 = math.tanh %367 : vector<8x128xf32>
    %369 = arith.mulf %364, %368 : vector<8x128xf32>
    %370 = arith.index_cast %346 : i32 to index
    %c0_137 = arith.constant 0 : index
    %371 = vector.load %arg12[%370, %c0_137] : memref<64x128xf32, #tpu.memory_space<vmem>>, vector<8x128xf32>
    tpu.vector_store %arg12[%370, %c0_137], %369 {strides = array<i32>} : memref<64x128xf32, #tpu.memory_space<vmem>>, vector<8x128xf32>,
    %c4_i32_138 = arith.constant 4 : i32
    %c8_i32_139 = arith.constant 8 : i32
    %372 = arith.muli %c4_i32_138, %c8_i32_139 : i32
    %373 = tpu.assume_multiple %372, 8 : i32
    %374 = arith.index_cast %373 : i32 to index
    %c0_140 = arith.constant 0 : index
    %375 = vector.load %arg13[%374, %c0_140] : memref<64x512xf32, #tpu.memory_space<vmem>>, vector<8x512xf32>
    %376 = arith.truncf %369 : vector<8x128xf32> to vector<8x128xbf16>
    %cst_141 = arith.constant dense<0.000000e+00> : vector<8x512xf32>
    %377 = tpu.matmul %376, %259, %cst_141 {dimension_numbers = #tpu.dot_dimension_numbers<[1], [0], [0], [1], [0, 0, 1, 1], [], []>} : vector<8x128xbf16>, vector<128x512xbf16>, vector<8x512xf32> -> vector<8x512xf32>
    %378 = arith.addf %375, %377 : vector<8x512xf32>
    %379 = vector.extract_strided_slice %378 {offsets = [0, 0], sizes = [8, 384], strides = [1, 1]} : vector<8x512xf32> to vector<8x384xf32>
    %cst_142 = arith.constant 5.000000e-01 : f32
    %380 = vector.broadcast %cst_142 : f32 to vector<8x384xf32>
    %381 = arith.mulf %380, %379 : vector<8x384xf32>
    %382 = math.tanh %381 : vector<8x384xf32>
    %cst_143 = arith.constant 5.000000e-01 : f32
    %383 = vector.broadcast %cst_143 : f32 to vector<8x384xf32>
    %384 = arith.mulf %383, %382 : vector<8x384xf32>
    %cst_144 = arith.constant 5.000000e-01 : f32
    %385 = vector.broadcast %cst_144 : f32 to vector<8x384xf32>
    %386 = arith.addf %384, %385 : vector<8x384xf32>
    %387 = vector.extract_strided_slice %378 {offsets = [0, 384], sizes = [8, 128], strides = [1, 1]} : vector<8x512xf32> to vector<8x128xf32>
    %388 = math.tanh %387 : vector<8x128xf32>
    %389 = vector.extract_strided_slice %386 {offsets = [0, 0], sizes = [8, 128], strides = [1, 1]} : vector<8x384xf32> to vector<8x128xf32>
    %390 = vector.extract_strided_slice %386 {offsets = [0, 128], sizes = [8, 128], strides = [1, 1]} : vector<8x384xf32> to vector<8x128xf32>
    %391 = vector.extract_strided_slice %386 {offsets = [0, 256], sizes = [8, 128], strides = [1, 1]} : vector<8x384xf32> to vector<8x128xf32>
    %392 = arith.mulf %390, %367 : vector<8x128xf32>
    %393 = arith.mulf %389, %388 : vector<8x128xf32>
    %394 = arith.addf %392, %393 : vector<8x128xf32>
    %395 = math.tanh %394 : vector<8x128xf32>
    %396 = arith.mulf %391, %395 : vector<8x128xf32>
    %397 = arith.index_cast %373 : i32 to index
    %c0_145 = arith.constant 0 : index
    %398 = vector.load %arg12[%397, %c0_145] : memref<64x128xf32, #tpu.memory_space<vmem>>, vector<8x128xf32>
    tpu.vector_store %arg12[%397, %c0_145], %396 {strides = array<i32>} : memref<64x128xf32, #tpu.memory_space<vmem>>, vector<8x128xf32>,
    %c5_i32_146 = arith.constant 5 : i32
    %c8_i32_147 = arith.constant 8 : i32
    %399 = arith.muli %c5_i32_146, %c8_i32_147 : i32
    %400 = tpu.assume_multiple %399, 8 : i32
    %401 = arith.index_cast %400 : i32 to index
    %c0_148 = arith.constant 0 : index
    %402 = vector.load %arg13[%401, %c0_148] : memref<64x512xf32, #tpu.memory_space<vmem>>, vector<8x512xf32>
    %403 = arith.truncf %396 : vector<8x128xf32> to vector<8x128xbf16>
    %cst_149 = arith.constant dense<0.000000e+00> : vector<8x512xf32>
    %404 = tpu.matmul %403, %259, %cst_149 {dimension_numbers = #tpu.dot_dimension_numbers<[1], [0], [0], [1], [0, 0, 1, 1], [], []>} : vector<8x128xbf16>, vector<128x512xbf16>, vector<8x512xf32> -> vector<8x512xf32>
    %405 = arith.addf %402, %404 : vector<8x512xf32>
    %406 = vector.extract_strided_slice %405 {offsets = [0, 0], sizes = [8, 384], strides = [1, 1]} : vector<8x512xf32> to vector<8x384xf32>
    %cst_150 = arith.constant 5.000000e-01 : f32
    %407 = vector.broadcast %cst_150 : f32 to vector<8x384xf32>
    %408 = arith.mulf %407, %406 : vector<8x384xf32>
    %409 = math.tanh %408 : vector<8x384xf32>
    %cst_151 = arith.constant 5.000000e-01 : f32
    %410 = vector.broadcast %cst_151 : f32 to vector<8x384xf32>
    %411 = arith.mulf %410, %409 : vector<8x384xf32>
    %cst_152 = arith.constant 5.000000e-01 : f32
    %412 = vector.broadcast %cst_152 : f32 to vector<8x384xf32>
    %413 = arith.addf %411, %412 : vector<8x384xf32>
    %414 = vector.extract_strided_slice %405 {offsets = [0, 384], sizes = [8, 128], strides = [1, 1]} : vector<8x512xf32> to vector<8x128xf32>
    %415 = math.tanh %414 : vector<8x128xf32>
    %416 = vector.extract_strided_slice %413 {offsets = [0, 0], sizes = [8, 128], strides = [1, 1]} : vector<8x384xf32> to vector<8x128xf32>
    %417 = vector.extract_strided_slice %413 {offsets = [0, 128], sizes = [8, 128], strides = [1, 1]} : vector<8x384xf32> to vector<8x128xf32>
    %418 = vector.extract_strided_slice %413 {offsets = [0, 256], sizes = [8, 128], strides = [1, 1]} : vector<8x384xf32> to vector<8x128xf32>
    %419 = arith.mulf %417, %394 : vector<8x128xf32>
    %420 = arith.mulf %416, %415 : vector<8x128xf32>
    %421 = arith.addf %419, %420 : vector<8x128xf32>
    %422 = math.tanh %421 : vector<8x128xf32>
    %423 = arith.mulf %418, %422 : vector<8x128xf32>
    %424 = arith.index_cast %400 : i32 to index
    %c0_153 = arith.constant 0 : index
    %425 = vector.load %arg12[%424, %c0_153] : memref<64x128xf32, #tpu.memory_space<vmem>>, vector<8x128xf32>
    tpu.vector_store %arg12[%424, %c0_153], %423 {strides = array<i32>} : memref<64x128xf32, #tpu.memory_space<vmem>>, vector<8x128xf32>,
    %c6_i32_154 = arith.constant 6 : i32
    %c8_i32_155 = arith.constant 8 : i32
    %426 = arith.muli %c6_i32_154, %c8_i32_155 : i32
    %427 = tpu.assume_multiple %426, 8 : i32
    %428 = arith.index_cast %427 : i32 to index
    %c0_156 = arith.constant 0 : index
    %429 = vector.load %arg13[%428, %c0_156] : memref<64x512xf32, #tpu.memory_space<vmem>>, vector<8x512xf32>
    %430 = arith.truncf %423 : vector<8x128xf32> to vector<8x128xbf16>
    %cst_157 = arith.constant dense<0.000000e+00> : vector<8x512xf32>
    %431 = tpu.matmul %430, %259, %cst_157 {dimension_numbers = #tpu.dot_dimension_numbers<[1], [0], [0], [1], [0, 0, 1, 1], [], []>} : vector<8x128xbf16>, vector<128x512xbf16>, vector<8x512xf32> -> vector<8x512xf32>
    %432 = arith.addf %429, %431 : vector<8x512xf32>
    %433 = vector.extract_strided_slice %432 {offsets = [0, 0], sizes = [8, 384], strides = [1, 1]} : vector<8x512xf32> to vector<8x384xf32>
    %cst_158 = arith.constant 5.000000e-01 : f32
    %434 = vector.broadcast %cst_158 : f32 to vector<8x384xf32>
    %435 = arith.mulf %434, %433 : vector<8x384xf32>
    %436 = math.tanh %435 : vector<8x384xf32>
    %cst_159 = arith.constant 5.000000e-01 : f32
    %437 = vector.broadcast %cst_159 : f32 to vector<8x384xf32>
    %438 = arith.mulf %437, %436 : vector<8x384xf32>
    %cst_160 = arith.constant 5.000000e-01 : f32
    %439 = vector.broadcast %cst_160 : f32 to vector<8x384xf32>
    %440 = arith.addf %438, %439 : vector<8x384xf32>
    %441 = vector.extract_strided_slice %432 {offsets = [0, 384], sizes = [8, 128], strides = [1, 1]} : vector<8x512xf32> to vector<8x128xf32>
    %442 = math.tanh %441 : vector<8x128xf32>
    %443 = vector.extract_strided_slice %440 {offsets = [0, 0], sizes = [8, 128], strides = [1, 1]} : vector<8x384xf32> to vector<8x128xf32>
    %444 = vector.extract_strided_slice %440 {offsets = [0, 128], sizes = [8, 128], strides = [1, 1]} : vector<8x384xf32> to vector<8x128xf32>
    %445 = vector.extract_strided_slice %440 {offsets = [0, 256], sizes = [8, 128], strides = [1, 1]} : vector<8x384xf32> to vector<8x128xf32>
    %446 = arith.mulf %444, %421 : vector<8x128xf32>
    %447 = arith.mulf %443, %442 : vector<8x128xf32>
    %448 = arith.addf %446, %447 : vector<8x128xf32>
    %449 = math.tanh %448 : vector<8x128xf32>
    %450 = arith.mulf %445, %449 : vector<8x128xf32>
    %451 = arith.index_cast %427 : i32 to index
    %c0_161 = arith.constant 0 : index
    %452 = vector.load %arg12[%451, %c0_161] : memref<64x128xf32, #tpu.memory_space<vmem>>, vector<8x128xf32>
    tpu.vector_store %arg12[%451, %c0_161], %450 {strides = array<i32>} : memref<64x128xf32, #tpu.memory_space<vmem>>, vector<8x128xf32>,
    %c7_i32_162 = arith.constant 7 : i32
    %c8_i32_163 = arith.constant 8 : i32
    %453 = arith.muli %c7_i32_162, %c8_i32_163 : i32
    %454 = tpu.assume_multiple %453, 8 : i32
    %455 = arith.index_cast %454 : i32 to index
    %c0_164 = arith.constant 0 : index
    %456 = vector.load %arg13[%455, %c0_164] : memref<64x512xf32, #tpu.memory_space<vmem>>, vector<8x512xf32>
    %457 = arith.truncf %450 : vector<8x128xf32> to vector<8x128xbf16>
    %cst_165 = arith.constant dense<0.000000e+00> : vector<8x512xf32>
    %458 = tpu.matmul %457, %259, %cst_165 {dimension_numbers = #tpu.dot_dimension_numbers<[1], [0], [0], [1], [0, 0, 1, 1], [], []>} : vector<8x128xbf16>, vector<128x512xbf16>, vector<8x512xf32> -> vector<8x512xf32>
    %459 = arith.addf %456, %458 : vector<8x512xf32>
    %460 = vector.extract_strided_slice %459 {offsets = [0, 0], sizes = [8, 384], strides = [1, 1]} : vector<8x512xf32> to vector<8x384xf32>
    %cst_166 = arith.constant 5.000000e-01 : f32
    %461 = vector.broadcast %cst_166 : f32 to vector<8x384xf32>
    %462 = arith.mulf %461, %460 : vector<8x384xf32>
    %463 = math.tanh %462 : vector<8x384xf32>
    %cst_167 = arith.constant 5.000000e-01 : f32
    %464 = vector.broadcast %cst_167 : f32 to vector<8x384xf32>
    %465 = arith.mulf %464, %463 : vector<8x384xf32>
    %cst_168 = arith.constant 5.000000e-01 : f32
    %466 = vector.broadcast %cst_168 : f32 to vector<8x384xf32>
    %467 = arith.addf %465, %466 : vector<8x384xf32>
    %468 = vector.extract_strided_slice %459 {offsets = [0, 384], sizes = [8, 128], strides = [1, 1]} : vector<8x512xf32> to vector<8x128xf32>
    %469 = math.tanh %468 : vector<8x128xf32>
    %470 = vector.extract_strided_slice %467 {offsets = [0, 0], sizes = [8, 128], strides = [1, 1]} : vector<8x384xf32> to vector<8x128xf32>
    %471 = vector.extract_strided_slice %467 {offsets = [0, 128], sizes = [8, 128], strides = [1, 1]} : vector<8x384xf32> to vector<8x128xf32>
    %472 = vector.extract_strided_slice %467 {offsets = [0, 256], sizes = [8, 128], strides = [1, 1]} : vector<8x384xf32> to vector<8x128xf32>
    %473 = arith.mulf %471, %448 : vector<8x128xf32>
    %474 = arith.mulf %470, %469 : vector<8x128xf32>
    %475 = arith.addf %473, %474 : vector<8x128xf32>
    %476 = math.tanh %475 : vector<8x128xf32>
    %477 = arith.mulf %472, %476 : vector<8x128xf32>
    %478 = arith.index_cast %454 : i32 to index
    %c0_169 = arith.constant 0 : index
    %479 = vector.load %arg12[%478, %c0_169] : memref<64x128xf32, #tpu.memory_space<vmem>>, vector<8x128xf32>
    tpu.vector_store %arg12[%478, %c0_169], %477 {strides = array<i32>} : memref<64x128xf32, #tpu.memory_space<vmem>>, vector<8x128xf32>,
    %c8_i32_170 = arith.constant 8 : i32
    %c1_171 = arith.constant 1 : index
    %c0_172 = arith.constant 0 : index
    %c0_173 = arith.constant 0 : index
    %480 = vector.load %arg10[%c1_171, %c0_172, %c0_173] : memref<4x8x128xf32, #tpu.memory_space<vmem>>, vector<1x8x128xf32>
    %481 = vector.shape_cast %480 : vector<1x8x128xf32> to vector<8x128xf32>
    %482 = vector.shape_cast %477 : vector<8x128xf32> to vector<1x8x128xf32>
    tpu.vector_store %arg10[%c1_171, %c0_172, %c0_173], %482 {strides = array<i32>} : memref<4x8x128xf32, #tpu.memory_space<vmem>>, vector<1x8x128xf32>,
    %c1_174 = arith.constant 1 : index
    %c0_175 = arith.constant 0 : index
    %c0_176 = arith.constant 0 : index
    %483 = vector.load %arg11[%c1_174, %c0_175, %c0_176] : memref<4x8x128xf32, #tpu.memory_space<vmem>>, vector<1x8x128xf32>
    %484 = vector.shape_cast %483 : vector<1x8x128xf32> to vector<8x128xf32>
    %485 = vector.shape_cast %475 : vector<8x128xf32> to vector<1x8x128xf32>
    tpu.vector_store %arg11[%c1_174, %c0_175, %c0_176], %485 {strides = array<i32>} : memref<4x8x128xf32, #tpu.memory_space<vmem>>, vector<1x8x128xf32>,
    %c0_177 = arith.constant 0 : index
    %c0_178 = arith.constant 0 : index
    %486 = vector.load %arg12[%c0_177, %c0_178] : memref<64x128xf32, #tpu.memory_space<vmem>>, vector<64x128xf32>
    %487 = arith.truncf %486 : vector<64x128xf32> to vector<64x128xbf16>
    %c2 = arith.constant 2 : index
    %c0_179 = arith.constant 0 : index
    %c0_180 = arith.constant 0 : index
    %488 = vector.load %arg4[%c2, %c0_179, %c0_180] : memref<4x128x512xbf16, #tpu.memory_space<vmem>>, vector<1x128x512xbf16>
    %489 = vector.shape_cast %488 : vector<1x128x512xbf16> to vector<128x512xbf16>
    %cst_181 = arith.constant dense<0.000000e+00> : vector<64x512xf32>
    %490 = tpu.matmul %487, %489, %cst_181 {dimension_numbers = #tpu.dot_dimension_numbers<[1], [0], [0], [1], [0, 0, 1, 1], [], []>} : vector<64x128xbf16>, vector<128x512xbf16>, vector<64x512xf32> -> vector<64x512xf32>
    %c2_182 = arith.constant 2 : index
    %c0_183 = arith.constant 0 : index
    %c0_184 = arith.constant 0 : index
    %491 = vector.load %arg6[%c2_182, %c0_183, %c0_184] : memref<4x1x512xf32, #tpu.memory_space<vmem>>, vector<1x1x512xf32>
    %492 = vector.shape_cast %491 : vector<1x1x512xf32> to vector<1x512xf32>
    %493 = vector.broadcast %492 : vector<1x512xf32> to vector<64x512xf32>
    %494 = arith.addf %490, %493 : vector<64x512xf32>
    %c0_185 = arith.constant 0 : index
    %c0_186 = arith.constant 0 : index
    %495 = vector.load %arg13[%c0_185, %c0_186] : memref<64x512xf32, #tpu.memory_space<vmem>>, vector<64x512xf32>
    tpu.vector_store %arg13[%c0_185, %c0_186], %494 {strides = array<i32>} : memref<64x512xf32, #tpu.memory_space<vmem>>, vector<64x512xf32>,
    %c2_187 = arith.constant 2 : index
    %c0_188 = arith.constant 0 : index
    %c0_189 = arith.constant 0 : index
    %496 = vector.load %arg5[%c2_187, %c0_188, %c0_189] : memref<4x128x512xbf16, #tpu.memory_space<vmem>>, vector<1x128x512xbf16>
    %497 = vector.shape_cast %496 : vector<1x128x512xbf16> to vector<128x512xbf16>
    %c2_190 = arith.constant 2 : index
    %c0_191 = arith.constant 0 : index
    %c0_192 = arith.constant 0 : index
    %498 = vector.load %arg1[%c2_190, %c0_191, %c0_192] : memref<4x8x128xf32, #tpu.memory_space<vmem>>, vector<1x8x128xf32>
    %499 = vector.shape_cast %498 : vector<1x8x128xf32> to vector<8x128xf32>
    %c2_193 = arith.constant 2 : index
    %c0_194 = arith.constant 0 : index
    %c0_195 = arith.constant 0 : index
    %500 = vector.load %arg2[%c2_193, %c0_194, %c0_195] : memref<4x8x128xf32, #tpu.memory_space<vmem>>, vector<1x8x128xf32>
    %501 = vector.shape_cast %500 : vector<1x8x128xf32> to vector<8x128xf32>
    %c0_i32_196 = arith.constant 0 : i32
    %c8_i32_197 = arith.constant 8 : i32
    %502 = arith.muli %c0_i32_196, %c8_i32_197 : i32
    %503 = tpu.assume_multiple %502, 8 : i32
    %504 = arith.index_cast %503 : i32 to index
    %c0_198 = arith.constant 0 : index
    %505 = vector.load %arg13[%504, %c0_198] : memref<64x512xf32, #tpu.memory_space<vmem>>, vector<8x512xf32>
    %506 = arith.truncf %499 : vector<8x128xf32> to vector<8x128xbf16>
    %cst_199 = arith.constant dense<0.000000e+00> : vector<8x512xf32>
    %507 = tpu.matmul %506, %497, %cst_199 {dimension_numbers = #tpu.dot_dimension_numbers<[1], [0], [0], [1], [0, 0, 1, 1], [], []>} : vector<8x128xbf16>, vector<128x512xbf16>, vector<8x512xf32> -> vector<8x512xf32>
    %508 = arith.addf %505, %507 : vector<8x512xf32>
    %509 = vector.extract_strided_slice %508 {offsets = [0, 0], sizes = [8, 384], strides = [1, 1]} : vector<8x512xf32> to vector<8x384xf32>
    %cst_200 = arith.constant 5.000000e-01 : f32
    %510 = vector.broadcast %cst_200 : f32 to vector<8x384xf32>
    %511 = arith.mulf %510, %509 : vector<8x384xf32>
    %512 = math.tanh %511 : vector<8x384xf32>
    %cst_201 = arith.constant 5.000000e-01 : f32
    %513 = vector.broadcast %cst_201 : f32 to vector<8x384xf32>
    %514 = arith.mulf %513, %512 : vector<8x384xf32>
    %cst_202 = arith.constant 5.000000e-01 : f32
    %515 = vector.broadcast %cst_202 : f32 to vector<8x384xf32>
    %516 = arith.addf %514, %515 : vector<8x384xf32>
    %517 = vector.extract_strided_slice %508 {offsets = [0, 384], sizes = [8, 128], strides = [1, 1]} : vector<8x512xf32> to vector<8x128xf32>
    %518 = math.tanh %517 : vector<8x128xf32>
    %519 = vector.extract_strided_slice %516 {offsets = [0, 0], sizes = [8, 128], strides = [1, 1]} : vector<8x384xf32> to vector<8x128xf32>
    %520 = vector.extract_strided_slice %516 {offsets = [0, 128], sizes = [8, 128], strides = [1, 1]} : vector<8x384xf32> to vector<8x128xf32>
    %521 = vector.extract_strided_slice %516 {offsets = [0, 256], sizes = [8, 128], strides = [1, 1]} : vector<8x384xf32> to vector<8x128xf32>
    %522 = arith.mulf %520, %501 : vector<8x128xf32>
    %523 = arith.mulf %519, %518 : vector<8x128xf32>
    %524 = arith.addf %522, %523 : vector<8x128xf32>
    %525 = math.tanh %524 : vector<8x128xf32>
    %526 = arith.mulf %521, %525 : vector<8x128xf32>
    %527 = arith.index_cast %503 : i32 to index
    %c0_203 = arith.constant 0 : index
    %528 = vector.load %arg12[%527, %c0_203] : memref<64x128xf32, #tpu.memory_space<vmem>>, vector<8x128xf32>
    tpu.vector_store %arg12[%527, %c0_203], %526 {strides = array<i32>} : memref<64x128xf32, #tpu.memory_space<vmem>>, vector<8x128xf32>,
    %c1_i32_204 = arith.constant 1 : i32
    %c8_i32_205 = arith.constant 8 : i32
    %529 = arith.muli %c1_i32_204, %c8_i32_205 : i32
    %530 = tpu.assume_multiple %529, 8 : i32
    %531 = arith.index_cast %530 : i32 to index
    %c0_206 = arith.constant 0 : index
    %532 = vector.load %arg13[%531, %c0_206] : memref<64x512xf32, #tpu.memory_space<vmem>>, vector<8x512xf32>
    %533 = arith.truncf %526 : vector<8x128xf32> to vector<8x128xbf16>
    %cst_207 = arith.constant dense<0.000000e+00> : vector<8x512xf32>
    %534 = tpu.matmul %533, %497, %cst_207 {dimension_numbers = #tpu.dot_dimension_numbers<[1], [0], [0], [1], [0, 0, 1, 1], [], []>} : vector<8x128xbf16>, vector<128x512xbf16>, vector<8x512xf32> -> vector<8x512xf32>
    %535 = arith.addf %532, %534 : vector<8x512xf32>
    %536 = vector.extract_strided_slice %535 {offsets = [0, 0], sizes = [8, 384], strides = [1, 1]} : vector<8x512xf32> to vector<8x384xf32>
    %cst_208 = arith.constant 5.000000e-01 : f32
    %537 = vector.broadcast %cst_208 : f32 to vector<8x384xf32>
    %538 = arith.mulf %537, %536 : vector<8x384xf32>
    %539 = math.tanh %538 : vector<8x384xf32>
    %cst_209 = arith.constant 5.000000e-01 : f32
    %540 = vector.broadcast %cst_209 : f32 to vector<8x384xf32>
    %541 = arith.mulf %540, %539 : vector<8x384xf32>
    %cst_210 = arith.constant 5.000000e-01 : f32
    %542 = vector.broadcast %cst_210 : f32 to vector<8x384xf32>
    %543 = arith.addf %541, %542 : vector<8x384xf32>
    %544 = vector.extract_strided_slice %535 {offsets = [0, 384], sizes = [8, 128], strides = [1, 1]} : vector<8x512xf32> to vector<8x128xf32>
    %545 = math.tanh %544 : vector<8x128xf32>
    %546 = vector.extract_strided_slice %543 {offsets = [0, 0], sizes = [8, 128], strides = [1, 1]} : vector<8x384xf32> to vector<8x128xf32>
    %547 = vector.extract_strided_slice %543 {offsets = [0, 128], sizes = [8, 128], strides = [1, 1]} : vector<8x384xf32> to vector<8x128xf32>
    %548 = vector.extract_strided_slice %543 {offsets = [0, 256], sizes = [8, 128], strides = [1, 1]} : vector<8x384xf32> to vector<8x128xf32>
    %549 = arith.mulf %547, %524 : vector<8x128xf32>
    %550 = arith.mulf %546, %545 : vector<8x128xf32>
    %551 = arith.addf %549, %550 : vector<8x128xf32>
    %552 = math.tanh %551 : vector<8x128xf32>
    %553 = arith.mulf %548, %552 : vector<8x128xf32>
    %554 = arith.index_cast %530 : i32 to index
    %c0_211 = arith.constant 0 : index
    %555 = vector.load %arg12[%554, %c0_211] : memref<64x128xf32, #tpu.memory_space<vmem>>, vector<8x128xf32>
    tpu.vector_store %arg12[%554, %c0_211], %553 {strides = array<i32>} : memref<64x128xf32, #tpu.memory_space<vmem>>, vector<8x128xf32>,
    %c2_i32_212 = arith.constant 2 : i32
    %c8_i32_213 = arith.constant 8 : i32
    %556 = arith.muli %c2_i32_212, %c8_i32_213 : i32
    %557 = tpu.assume_multiple %556, 8 : i32
    %558 = arith.index_cast %557 : i32 to index
    %c0_214 = arith.constant 0 : index
    %559 = vector.load %arg13[%558, %c0_214] : memref<64x512xf32, #tpu.memory_space<vmem>>, vector<8x512xf32>
    %560 = arith.truncf %553 : vector<8x128xf32> to vector<8x128xbf16>
    %cst_215 = arith.constant dense<0.000000e+00> : vector<8x512xf32>
    %561 = tpu.matmul %560, %497, %cst_215 {dimension_numbers = #tpu.dot_dimension_numbers<[1], [0], [0], [1], [0, 0, 1, 1], [], []>} : vector<8x128xbf16>, vector<128x512xbf16>, vector<8x512xf32> -> vector<8x512xf32>
    %562 = arith.addf %559, %561 : vector<8x512xf32>
    %563 = vector.extract_strided_slice %562 {offsets = [0, 0], sizes = [8, 384], strides = [1, 1]} : vector<8x512xf32> to vector<8x384xf32>
    %cst_216 = arith.constant 5.000000e-01 : f32
    %564 = vector.broadcast %cst_216 : f32 to vector<8x384xf32>
    %565 = arith.mulf %564, %563 : vector<8x384xf32>
    %566 = math.tanh %565 : vector<8x384xf32>
    %cst_217 = arith.constant 5.000000e-01 : f32
    %567 = vector.broadcast %cst_217 : f32 to vector<8x384xf32>
    %568 = arith.mulf %567, %566 : vector<8x384xf32>
    %cst_218 = arith.constant 5.000000e-01 : f32
    %569 = vector.broadcast %cst_218 : f32 to vector<8x384xf32>
    %570 = arith.addf %568, %569 : vector<8x384xf32>
    %571 = vector.extract_strided_slice %562 {offsets = [0, 384], sizes = [8, 128], strides = [1, 1]} : vector<8x512xf32> to vector<8x128xf32>
    %572 = math.tanh %571 : vector<8x128xf32>
    %573 = vector.extract_strided_slice %570 {offsets = [0, 0], sizes = [8, 128], strides = [1, 1]} : vector<8x384xf32> to vector<8x128xf32>
    %574 = vector.extract_strided_slice %570 {offsets = [0, 128], sizes = [8, 128], strides = [1, 1]} : vector<8x384xf32> to vector<8x128xf32>
    %575 = vector.extract_strided_slice %570 {offsets = [0, 256], sizes = [8, 128], strides = [1, 1]} : vector<8x384xf32> to vector<8x128xf32>
    %576 = arith.mulf %574, %551 : vector<8x128xf32>
    %577 = arith.mulf %573, %572 : vector<8x128xf32>
    %578 = arith.addf %576, %577 : vector<8x128xf32>
    %579 = math.tanh %578 : vector<8x128xf32>
    %580 = arith.mulf %575, %579 : vector<8x128xf32>
    %581 = arith.index_cast %557 : i32 to index
    %c0_219 = arith.constant 0 : index
    %582 = vector.load %arg12[%581, %c0_219] : memref<64x128xf32, #tpu.memory_space<vmem>>, vector<8x128xf32>
    tpu.vector_store %arg12[%581, %c0_219], %580 {strides = array<i32>} : memref<64x128xf32, #tpu.memory_space<vmem>>, vector<8x128xf32>,
    %c3_i32_220 = arith.constant 3 : i32
    %c8_i32_221 = arith.constant 8 : i32
    %583 = arith.muli %c3_i32_220, %c8_i32_221 : i32
    %584 = tpu.assume_multiple %583, 8 : i32
    %585 = arith.index_cast %584 : i32 to index
    %c0_222 = arith.constant 0 : index
    %586 = vector.load %arg13[%585, %c0_222] : memref<64x512xf32, #tpu.memory_space<vmem>>, vector<8x512xf32>
    %587 = arith.truncf %580 : vector<8x128xf32> to vector<8x128xbf16>
    %cst_223 = arith.constant dense<0.000000e+00> : vector<8x512xf32>
    %588 = tpu.matmul %587, %497, %cst_223 {dimension_numbers = #tpu.dot_dimension_numbers<[1], [0], [0], [1], [0, 0, 1, 1], [], []>} : vector<8x128xbf16>, vector<128x512xbf16>, vector<8x512xf32> -> vector<8x512xf32>
    %589 = arith.addf %586, %588 : vector<8x512xf32>
    %590 = vector.extract_strided_slice %589 {offsets = [0, 0], sizes = [8, 384], strides = [1, 1]} : vector<8x512xf32> to vector<8x384xf32>
    %cst_224 = arith.constant 5.000000e-01 : f32
    %591 = vector.broadcast %cst_224 : f32 to vector<8x384xf32>
    %592 = arith.mulf %591, %590 : vector<8x384xf32>
    %593 = math.tanh %592 : vector<8x384xf32>
    %cst_225 = arith.constant 5.000000e-01 : f32
    %594 = vector.broadcast %cst_225 : f32 to vector<8x384xf32>
    %595 = arith.mulf %594, %593 : vector<8x384xf32>
    %cst_226 = arith.constant 5.000000e-01 : f32
    %596 = vector.broadcast %cst_226 : f32 to vector<8x384xf32>
    %597 = arith.addf %595, %596 : vector<8x384xf32>
    %598 = vector.extract_strided_slice %589 {offsets = [0, 384], sizes = [8, 128], strides = [1, 1]} : vector<8x512xf32> to vector<8x128xf32>
    %599 = math.tanh %598 : vector<8x128xf32>
    %600 = vector.extract_strided_slice %597 {offsets = [0, 0], sizes = [8, 128], strides = [1, 1]} : vector<8x384xf32> to vector<8x128xf32>
    %601 = vector.extract_strided_slice %597 {offsets = [0, 128], sizes = [8, 128], strides = [1, 1]} : vector<8x384xf32> to vector<8x128xf32>
    %602 = vector.extract_strided_slice %597 {offsets = [0, 256], sizes = [8, 128], strides = [1, 1]} : vector<8x384xf32> to vector<8x128xf32>
    %603 = arith.mulf %601, %578 : vector<8x128xf32>
    %604 = arith.mulf %600, %599 : vector<8x128xf32>
    %605 = arith.addf %603, %604 : vector<8x128xf32>
    %606 = math.tanh %605 : vector<8x128xf32>
    %607 = arith.mulf %602, %606 : vector<8x128xf32>
    %608 = arith.index_cast %584 : i32 to index
    %c0_227 = arith.constant 0 : index
    %609 = vector.load %arg12[%608, %c0_227] : memref<64x128xf32, #tpu.memory_space<vmem>>, vector<8x128xf32>
    tpu.vector_store %arg12[%608, %c0_227], %607 {strides = array<i32>} : memref<64x128xf32, #tpu.memory_space<vmem>>, vector<8x128xf32>,
    %c4_i32_228 = arith.constant 4 : i32
    %c8_i32_229 = arith.constant 8 : i32
    %610 = arith.muli %c4_i32_228, %c8_i32_229 : i32
    %611 = tpu.assume_multiple %610, 8 : i32
    %612 = arith.index_cast %611 : i32 to index
    %c0_230 = arith.constant 0 : index
    %613 = vector.load %arg13[%612, %c0_230] : memref<64x512xf32, #tpu.memory_space<vmem>>, vector<8x512xf32>
    %614 = arith.truncf %607 : vector<8x128xf32> to vector<8x128xbf16>
    %cst_231 = arith.constant dense<0.000000e+00> : vector<8x512xf32>
    %615 = tpu.matmul %614, %497, %cst_231 {dimension_numbers = #tpu.dot_dimension_numbers<[1], [0], [0], [1], [0, 0, 1, 1], [], []>} : vector<8x128xbf16>, vector<128x512xbf16>, vector<8x512xf32> -> vector<8x512xf32>
    %616 = arith.addf %613, %615 : vector<8x512xf32>
    %617 = vector.extract_strided_slice %616 {offsets = [0, 0], sizes = [8, 384], strides = [1, 1]} : vector<8x512xf32> to vector<8x384xf32>
    %cst_232 = arith.constant 5.000000e-01 : f32
    %618 = vector.broadcast %cst_232 : f32 to vector<8x384xf32>
    %619 = arith.mulf %618, %617 : vector<8x384xf32>
    %620 = math.tanh %619 : vector<8x384xf32>
    %cst_233 = arith.constant 5.000000e-01 : f32
    %621 = vector.broadcast %cst_233 : f32 to vector<8x384xf32>
    %622 = arith.mulf %621, %620 : vector<8x384xf32>
    %cst_234 = arith.constant 5.000000e-01 : f32
    %623 = vector.broadcast %cst_234 : f32 to vector<8x384xf32>
    %624 = arith.addf %622, %623 : vector<8x384xf32>
    %625 = vector.extract_strided_slice %616 {offsets = [0, 384], sizes = [8, 128], strides = [1, 1]} : vector<8x512xf32> to vector<8x128xf32>
    %626 = math.tanh %625 : vector<8x128xf32>
    %627 = vector.extract_strided_slice %624 {offsets = [0, 0], sizes = [8, 128], strides = [1, 1]} : vector<8x384xf32> to vector<8x128xf32>
    %628 = vector.extract_strided_slice %624 {offsets = [0, 128], sizes = [8, 128], strides = [1, 1]} : vector<8x384xf32> to vector<8x128xf32>
    %629 = vector.extract_strided_slice %624 {offsets = [0, 256], sizes = [8, 128], strides = [1, 1]} : vector<8x384xf32> to vector<8x128xf32>
    %630 = arith.mulf %628, %605 : vector<8x128xf32>
    %631 = arith.mulf %627, %626 : vector<8x128xf32>
    %632 = arith.addf %630, %631 : vector<8x128xf32>
    %633 = math.tanh %632 : vector<8x128xf32>
    %634 = arith.mulf %629, %633 : vector<8x128xf32>
    %635 = arith.index_cast %611 : i32 to index
    %c0_235 = arith.constant 0 : index
    %636 = vector.load %arg12[%635, %c0_235] : memref<64x128xf32, #tpu.memory_space<vmem>>, vector<8x128xf32>
    tpu.vector_store %arg12[%635, %c0_235], %634 {strides = array<i32>} : memref<64x128xf32, #tpu.memory_space<vmem>>, vector<8x128xf32>,
    %c5_i32_236 = arith.constant 5 : i32
    %c8_i32_237 = arith.constant 8 : i32
    %637 = arith.muli %c5_i32_236, %c8_i32_237 : i32
    %638 = tpu.assume_multiple %637, 8 : i32
    %639 = arith.index_cast %638 : i32 to index
    %c0_238 = arith.constant 0 : index
    %640 = vector.load %arg13[%639, %c0_238] : memref<64x512xf32, #tpu.memory_space<vmem>>, vector<8x512xf32>
    %641 = arith.truncf %634 : vector<8x128xf32> to vector<8x128xbf16>
    %cst_239 = arith.constant dense<0.000000e+00> : vector<8x512xf32>
    %642 = tpu.matmul %641, %497, %cst_239 {dimension_numbers = #tpu.dot_dimension_numbers<[1], [0], [0], [1], [0, 0, 1, 1], [], []>} : vector<8x128xbf16>, vector<128x512xbf16>, vector<8x512xf32> -> vector<8x512xf32>
    %643 = arith.addf %640, %642 : vector<8x512xf32>
    %644 = vector.extract_strided_slice %643 {offsets = [0, 0], sizes = [8, 384], strides = [1, 1]} : vector<8x512xf32> to vector<8x384xf32>
    %cst_240 = arith.constant 5.000000e-01 : f32
    %645 = vector.broadcast %cst_240 : f32 to vector<8x384xf32>
    %646 = arith.mulf %645, %644 : vector<8x384xf32>
    %647 = math.tanh %646 : vector<8x384xf32>
    %cst_241 = arith.constant 5.000000e-01 : f32
    %648 = vector.broadcast %cst_241 : f32 to vector<8x384xf32>
    %649 = arith.mulf %648, %647 : vector<8x384xf32>
    %cst_242 = arith.constant 5.000000e-01 : f32
    %650 = vector.broadcast %cst_242 : f32 to vector<8x384xf32>
    %651 = arith.addf %649, %650 : vector<8x384xf32>
    %652 = vector.extract_strided_slice %643 {offsets = [0, 384], sizes = [8, 128], strides = [1, 1]} : vector<8x512xf32> to vector<8x128xf32>
    %653 = math.tanh %652 : vector<8x128xf32>
    %654 = vector.extract_strided_slice %651 {offsets = [0, 0], sizes = [8, 128], strides = [1, 1]} : vector<8x384xf32> to vector<8x128xf32>
    %655 = vector.extract_strided_slice %651 {offsets = [0, 128], sizes = [8, 128], strides = [1, 1]} : vector<8x384xf32> to vector<8x128xf32>
    %656 = vector.extract_strided_slice %651 {offsets = [0, 256], sizes = [8, 128], strides = [1, 1]} : vector<8x384xf32> to vector<8x128xf32>
    %657 = arith.mulf %655, %632 : vector<8x128xf32>
    %658 = arith.mulf %654, %653 : vector<8x128xf32>
    %659 = arith.addf %657, %658 : vector<8x128xf32>
    %660 = math.tanh %659 : vector<8x128xf32>
    %661 = arith.mulf %656, %660 : vector<8x128xf32>
    %662 = arith.index_cast %638 : i32 to index
    %c0_243 = arith.constant 0 : index
    %663 = vector.load %arg12[%662, %c0_243] : memref<64x128xf32, #tpu.memory_space<vmem>>, vector<8x128xf32>
    tpu.vector_store %arg12[%662, %c0_243], %661 {strides = array<i32>} : memref<64x128xf32, #tpu.memory_space<vmem>>, vector<8x128xf32>,
    %c6_i32_244 = arith.constant 6 : i32
    %c8_i32_245 = arith.constant 8 : i32
    %664 = arith.muli %c6_i32_244, %c8_i32_245 : i32
    %665 = tpu.assume_multiple %664, 8 : i32
    %666 = arith.index_cast %665 : i32 to index
    %c0_246 = arith.constant 0 : index
    %667 = vector.load %arg13[%666, %c0_246] : memref<64x512xf32, #tpu.memory_space<vmem>>, vector<8x512xf32>
    %668 = arith.truncf %661 : vector<8x128xf32> to vector<8x128xbf16>
    %cst_247 = arith.constant dense<0.000000e+00> : vector<8x512xf32>
    %669 = tpu.matmul %668, %497, %cst_247 {dimension_numbers = #tpu.dot_dimension_numbers<[1], [0], [0], [1], [0, 0, 1, 1], [], []>} : vector<8x128xbf16>, vector<128x512xbf16>, vector<8x512xf32> -> vector<8x512xf32>
    %670 = arith.addf %667, %669 : vector<8x512xf32>
    %671 = vector.extract_strided_slice %670 {offsets = [0, 0], sizes = [8, 384], strides = [1, 1]} : vector<8x512xf32> to vector<8x384xf32>
    %cst_248 = arith.constant 5.000000e-01 : f32
    %672 = vector.broadcast %cst_248 : f32 to vector<8x384xf32>
    %673 = arith.mulf %672, %671 : vector<8x384xf32>
    %674 = math.tanh %673 : vector<8x384xf32>
    %cst_249 = arith.constant 5.000000e-01 : f32
    %675 = vector.broadcast %cst_249 : f32 to vector<8x384xf32>
    %676 = arith.mulf %675, %674 : vector<8x384xf32>
    %cst_250 = arith.constant 5.000000e-01 : f32
    %677 = vector.broadcast %cst_250 : f32 to vector<8x384xf32>
    %678 = arith.addf %676, %677 : vector<8x384xf32>
    %679 = vector.extract_strided_slice %670 {offsets = [0, 384], sizes = [8, 128], strides = [1, 1]} : vector<8x512xf32> to vector<8x128xf32>
    %680 = math.tanh %679 : vector<8x128xf32>
    %681 = vector.extract_strided_slice %678 {offsets = [0, 0], sizes = [8, 128], strides = [1, 1]} : vector<8x384xf32> to vector<8x128xf32>
    %682 = vector.extract_strided_slice %678 {offsets = [0, 128], sizes = [8, 128], strides = [1, 1]} : vector<8x384xf32> to vector<8x128xf32>
    %683 = vector.extract_strided_slice %678 {offsets = [0, 256], sizes = [8, 128], strides = [1, 1]} : vector<8x384xf32> to vector<8x128xf32>
    %684 = arith.mulf %682, %659 : vector<8x128xf32>
    %685 = arith.mulf %681, %680 : vector<8x128xf32>
    %686 = arith.addf %684, %685 : vector<8x128xf32>
    %687 = math.tanh %686 : vector<8x128xf32>
    %688 = arith.mulf %683, %687 : vector<8x128xf32>
    %689 = arith.index_cast %665 : i32 to index
    %c0_251 = arith.constant 0 : index
    %690 = vector.load %arg12[%689, %c0_251] : memref<64x128xf32, #tpu.memory_space<vmem>>, vector<8x128xf32>
    tpu.vector_store %arg12[%689, %c0_251], %688 {strides = array<i32>} : memref<64x128xf32, #tpu.memory_space<vmem>>, vector<8x128xf32>,
    %c7_i32_252 = arith.constant 7 : i32
    %c8_i32_253 = arith.constant 8 : i32
    %691 = arith.muli %c7_i32_252, %c8_i32_253 : i32
    %692 = tpu.assume_multiple %691, 8 : i32
    %693 = arith.index_cast %692 : i32 to index
    %c0_254 = arith.constant 0 : index
    %694 = vector.load %arg13[%693, %c0_254] : memref<64x512xf32, #tpu.memory_space<vmem>>, vector<8x512xf32>
    %695 = arith.truncf %688 : vector<8x128xf32> to vector<8x128xbf16>
    %cst_255 = arith.constant dense<0.000000e+00> : vector<8x512xf32>
    %696 = tpu.matmul %695, %497, %cst_255 {dimension_numbers = #tpu.dot_dimension_numbers<[1], [0], [0], [1], [0, 0, 1, 1], [], []>} : vector<8x128xbf16>, vector<128x512xbf16>, vector<8x512xf32> -> vector<8x512xf32>
    %697 = arith.addf %694, %696 : vector<8x512xf32>
    %698 = vector.extract_strided_slice %697 {offsets = [0, 0], sizes = [8, 384], strides = [1, 1]} : vector<8x512xf32> to vector<8x384xf32>
    %cst_256 = arith.constant 5.000000e-01 : f32
    %699 = vector.broadcast %cst_256 : f32 to vector<8x384xf32>
    %700 = arith.mulf %699, %698 : vector<8x384xf32>
    %701 = math.tanh %700 : vector<8x384xf32>
    %cst_257 = arith.constant 5.000000e-01 : f32
    %702 = vector.broadcast %cst_257 : f32 to vector<8x384xf32>
    %703 = arith.mulf %702, %701 : vector<8x384xf32>
    %cst_258 = arith.constant 5.000000e-01 : f32
    %704 = vector.broadcast %cst_258 : f32 to vector<8x384xf32>
    %705 = arith.addf %703, %704 : vector<8x384xf32>
    %706 = vector.extract_strided_slice %697 {offsets = [0, 384], sizes = [8, 128], strides = [1, 1]} : vector<8x512xf32> to vector<8x128xf32>
    %707 = math.tanh %706 : vector<8x128xf32>
    %708 = vector.extract_strided_slice %705 {offsets = [0, 0], sizes = [8, 128], strides = [1, 1]} : vector<8x384xf32> to vector<8x128xf32>
    %709 = vector.extract_strided_slice %705 {offsets = [0, 128], sizes = [8, 128], strides = [1, 1]} : vector<8x384xf32> to vector<8x128xf32>
    %710 = vector.extract_strided_slice %705 {offsets = [0, 256], sizes = [8, 128], strides = [1, 1]} : vector<8x384xf32> to vector<8x128xf32>
    %711 = arith.mulf %709, %686 : vector<8x128xf32>
    %712 = arith.mulf %708, %707 : vector<8x128xf32>
    %713 = arith.addf %711, %712 : vector<8x128xf32>
    %714 = math.tanh %713 : vector<8x128xf32>
    %715 = arith.mulf %710, %714 : vector<8x128xf32>
    %716 = arith.index_cast %692 : i32 to index
    %c0_259 = arith.constant 0 : index
    %717 = vector.load %arg12[%716, %c0_259] : memref<64x128xf32, #tpu.memory_space<vmem>>, vector<8x128xf32>
    tpu.vector_store %arg12[%716, %c0_259], %715 {strides = array<i32>} : memref<64x128xf32, #tpu.memory_space<vmem>>, vector<8x128xf32>,
    %c8_i32_260 = arith.constant 8 : i32
    %c2_261 = arith.constant 2 : index
    %c0_262 = arith.constant 0 : index
    %c0_263 = arith.constant 0 : index
    %718 = vector.load %arg10[%c2_261, %c0_262, %c0_263] : memref<4x8x128xf32, #tpu.memory_space<vmem>>, vector<1x8x128xf32>
    %719 = vector.shape_cast %718 : vector<1x8x128xf32> to vector<8x128xf32>
    %720 = vector.shape_cast %715 : vector<8x128xf32> to vector<1x8x128xf32>
    tpu.vector_store %arg10[%c2_261, %c0_262, %c0_263], %720 {strides = array<i32>} : memref<4x8x128xf32, #tpu.memory_space<vmem>>, vector<1x8x128xf32>,
    %c2_264 = arith.constant 2 : index
    %c0_265 = arith.constant 0 : index
    %c0_266 = arith.constant 0 : index
    %721 = vector.load %arg11[%c2_264, %c0_265, %c0_266] : memref<4x8x128xf32, #tpu.memory_space<vmem>>, vector<1x8x128xf32>
    %722 = vector.shape_cast %721 : vector<1x8x128xf32> to vector<8x128xf32>
    %723 = vector.shape_cast %713 : vector<8x128xf32> to vector<1x8x128xf32>
    tpu.vector_store %arg11[%c2_264, %c0_265, %c0_266], %723 {strides = array<i32>} : memref<4x8x128xf32, #tpu.memory_space<vmem>>, vector<1x8x128xf32>,
    %c0_267 = arith.constant 0 : index
    %c0_268 = arith.constant 0 : index
    %724 = vector.load %arg12[%c0_267, %c0_268] : memref<64x128xf32, #tpu.memory_space<vmem>>, vector<64x128xf32>
    %725 = arith.truncf %724 : vector<64x128xf32> to vector<64x128xbf16>
    %c3 = arith.constant 3 : index
    %c0_269 = arith.constant 0 : index
    %c0_270 = arith.constant 0 : index
    %726 = vector.load %arg4[%c3, %c0_269, %c0_270] : memref<4x128x512xbf16, #tpu.memory_space<vmem>>, vector<1x128x512xbf16>
    %727 = vector.shape_cast %726 : vector<1x128x512xbf16> to vector<128x512xbf16>
    %cst_271 = arith.constant dense<0.000000e+00> : vector<64x512xf32>
    %728 = tpu.matmul %725, %727, %cst_271 {dimension_numbers = #tpu.dot_dimension_numbers<[1], [0], [0], [1], [0, 0, 1, 1], [], []>} : vector<64x128xbf16>, vector<128x512xbf16>, vector<64x512xf32> -> vector<64x512xf32>
    %c3_272 = arith.constant 3 : index
    %c0_273 = arith.constant 0 : index
    %c0_274 = arith.constant 0 : index
    %729 = vector.load %arg6[%c3_272, %c0_273, %c0_274] : memref<4x1x512xf32, #tpu.memory_space<vmem>>, vector<1x1x512xf32>
    %730 = vector.shape_cast %729 : vector<1x1x512xf32> to vector<1x512xf32>
    %731 = vector.broadcast %730 : vector<1x512xf32> to vector<64x512xf32>
    %732 = arith.addf %728, %731 : vector<64x512xf32>
    %c0_275 = arith.constant 0 : index
    %c0_276 = arith.constant 0 : index
    %733 = vector.load %arg13[%c0_275, %c0_276] : memref<64x512xf32, #tpu.memory_space<vmem>>, vector<64x512xf32>
    tpu.vector_store %arg13[%c0_275, %c0_276], %732 {strides = array<i32>} : memref<64x512xf32, #tpu.memory_space<vmem>>, vector<64x512xf32>,
    %c3_277 = arith.constant 3 : index
    %c0_278 = arith.constant 0 : index
    %c0_279 = arith.constant 0 : index
    %734 = vector.load %arg5[%c3_277, %c0_278, %c0_279] : memref<4x128x512xbf16, #tpu.memory_space<vmem>>, vector<1x128x512xbf16>
    %735 = vector.shape_cast %734 : vector<1x128x512xbf16> to vector<128x512xbf16>
    %c3_280 = arith.constant 3 : index
    %c0_281 = arith.constant 0 : index
    %c0_282 = arith.constant 0 : index
    %736 = vector.load %arg1[%c3_280, %c0_281, %c0_282] : memref<4x8x128xf32, #tpu.memory_space<vmem>>, vector<1x8x128xf32>
    %737 = vector.shape_cast %736 : vector<1x8x128xf32> to vector<8x128xf32>
    %c3_283 = arith.constant 3 : index
    %c0_284 = arith.constant 0 : index
    %c0_285 = arith.constant 0 : index
    %738 = vector.load %arg2[%c3_283, %c0_284, %c0_285] : memref<4x8x128xf32, #tpu.memory_space<vmem>>, vector<1x8x128xf32>
    %739 = vector.shape_cast %738 : vector<1x8x128xf32> to vector<8x128xf32>
    %c0_i32_286 = arith.constant 0 : i32
    %c8_i32_287 = arith.constant 8 : i32
    %740 = arith.muli %c0_i32_286, %c8_i32_287 : i32
    %741 = tpu.assume_multiple %740, 8 : i32
    %742 = arith.index_cast %741 : i32 to index
    %c0_288 = arith.constant 0 : index
    %743 = vector.load %arg13[%742, %c0_288] : memref<64x512xf32, #tpu.memory_space<vmem>>, vector<8x512xf32>
    %744 = arith.truncf %737 : vector<8x128xf32> to vector<8x128xbf16>
    %cst_289 = arith.constant dense<0.000000e+00> : vector<8x512xf32>
    %745 = tpu.matmul %744, %735, %cst_289 {dimension_numbers = #tpu.dot_dimension_numbers<[1], [0], [0], [1], [0, 0, 1, 1], [], []>} : vector<8x128xbf16>, vector<128x512xbf16>, vector<8x512xf32> -> vector<8x512xf32>
    %746 = arith.addf %743, %745 : vector<8x512xf32>
    %747 = vector.extract_strided_slice %746 {offsets = [0, 0], sizes = [8, 384], strides = [1, 1]} : vector<8x512xf32> to vector<8x384xf32>
    %cst_290 = arith.constant 5.000000e-01 : f32
    %748 = vector.broadcast %cst_290 : f32 to vector<8x384xf32>
    %749 = arith.mulf %748, %747 : vector<8x384xf32>
    %750 = math.tanh %749 : vector<8x384xf32>
    %cst_291 = arith.constant 5.000000e-01 : f32
    %751 = vector.broadcast %cst_291 : f32 to vector<8x384xf32>
    %752 = arith.mulf %751, %750 : vector<8x384xf32>
    %cst_292 = arith.constant 5.000000e-01 : f32
    %753 = vector.broadcast %cst_292 : f32 to vector<8x384xf32>
    %754 = arith.addf %752, %753 : vector<8x384xf32>
    %755 = vector.extract_strided_slice %746 {offsets = [0, 384], sizes = [8, 128], strides = [1, 1]} : vector<8x512xf32> to vector<8x128xf32>
    %756 = math.tanh %755 : vector<8x128xf32>
    %757 = vector.extract_strided_slice %754 {offsets = [0, 0], sizes = [8, 128], strides = [1, 1]} : vector<8x384xf32> to vector<8x128xf32>
    %758 = vector.extract_strided_slice %754 {offsets = [0, 128], sizes = [8, 128], strides = [1, 1]} : vector<8x384xf32> to vector<8x128xf32>
    %759 = vector.extract_strided_slice %754 {offsets = [0, 256], sizes = [8, 128], strides = [1, 1]} : vector<8x384xf32> to vector<8x128xf32>
    %760 = arith.mulf %758, %739 : vector<8x128xf32>
    %761 = arith.mulf %757, %756 : vector<8x128xf32>
    %762 = arith.addf %760, %761 : vector<8x128xf32>
    %763 = math.tanh %762 : vector<8x128xf32>
    %764 = arith.mulf %759, %763 : vector<8x128xf32>
    %765 = arith.index_cast %741 : i32 to index
    %c0_293 = arith.constant 0 : index
    %766 = vector.load %arg12[%765, %c0_293] : memref<64x128xf32, #tpu.memory_space<vmem>>, vector<8x128xf32>
    tpu.vector_store %arg12[%765, %c0_293], %764 {strides = array<i32>} : memref<64x128xf32, #tpu.memory_space<vmem>>, vector<8x128xf32>,
    %c1_i32_294 = arith.constant 1 : i32
    %c8_i32_295 = arith.constant 8 : i32
    %767 = arith.muli %c1_i32_294, %c8_i32_295 : i32
    %768 = tpu.assume_multiple %767, 8 : i32
    %769 = arith.index_cast %768 : i32 to index
    %c0_296 = arith.constant 0 : index
    %770 = vector.load %arg13[%769, %c0_296] : memref<64x512xf32, #tpu.memory_space<vmem>>, vector<8x512xf32>
    %771 = arith.truncf %764 : vector<8x128xf32> to vector<8x128xbf16>
    %cst_297 = arith.constant dense<0.000000e+00> : vector<8x512xf32>
    %772 = tpu.matmul %771, %735, %cst_297 {dimension_numbers = #tpu.dot_dimension_numbers<[1], [0], [0], [1], [0, 0, 1, 1], [], []>} : vector<8x128xbf16>, vector<128x512xbf16>, vector<8x512xf32> -> vector<8x512xf32>
    %773 = arith.addf %770, %772 : vector<8x512xf32>
    %774 = vector.extract_strided_slice %773 {offsets = [0, 0], sizes = [8, 384], strides = [1, 1]} : vector<8x512xf32> to vector<8x384xf32>
    %cst_298 = arith.constant 5.000000e-01 : f32
    %775 = vector.broadcast %cst_298 : f32 to vector<8x384xf32>
    %776 = arith.mulf %775, %774 : vector<8x384xf32>
    %777 = math.tanh %776 : vector<8x384xf32>
    %cst_299 = arith.constant 5.000000e-01 : f32
    %778 = vector.broadcast %cst_299 : f32 to vector<8x384xf32>
    %779 = arith.mulf %778, %777 : vector<8x384xf32>
    %cst_300 = arith.constant 5.000000e-01 : f32
    %780 = vector.broadcast %cst_300 : f32 to vector<8x384xf32>
    %781 = arith.addf %779, %780 : vector<8x384xf32>
    %782 = vector.extract_strided_slice %773 {offsets = [0, 384], sizes = [8, 128], strides = [1, 1]} : vector<8x512xf32> to vector<8x128xf32>
    %783 = math.tanh %782 : vector<8x128xf32>
    %784 = vector.extract_strided_slice %781 {offsets = [0, 0], sizes = [8, 128], strides = [1, 1]} : vector<8x384xf32> to vector<8x128xf32>
    %785 = vector.extract_strided_slice %781 {offsets = [0, 128], sizes = [8, 128], strides = [1, 1]} : vector<8x384xf32> to vector<8x128xf32>
    %786 = vector.extract_strided_slice %781 {offsets = [0, 256], sizes = [8, 128], strides = [1, 1]} : vector<8x384xf32> to vector<8x128xf32>
    %787 = arith.mulf %785, %762 : vector<8x128xf32>
    %788 = arith.mulf %784, %783 : vector<8x128xf32>
    %789 = arith.addf %787, %788 : vector<8x128xf32>
    %790 = math.tanh %789 : vector<8x128xf32>
    %791 = arith.mulf %786, %790 : vector<8x128xf32>
    %792 = arith.index_cast %768 : i32 to index
    %c0_301 = arith.constant 0 : index
    %793 = vector.load %arg12[%792, %c0_301] : memref<64x128xf32, #tpu.memory_space<vmem>>, vector<8x128xf32>
    tpu.vector_store %arg12[%792, %c0_301], %791 {strides = array<i32>} : memref<64x128xf32, #tpu.memory_space<vmem>>, vector<8x128xf32>,
    %c2_i32_302 = arith.constant 2 : i32
    %c8_i32_303 = arith.constant 8 : i32
    %794 = arith.muli %c2_i32_302, %c8_i32_303 : i32
    %795 = tpu.assume_multiple %794, 8 : i32
    %796 = arith.index_cast %795 : i32 to index
    %c0_304 = arith.constant 0 : index
    %797 = vector.load %arg13[%796, %c0_304] : memref<64x512xf32, #tpu.memory_space<vmem>>, vector<8x512xf32>
    %798 = arith.truncf %791 : vector<8x128xf32> to vector<8x128xbf16>
    %cst_305 = arith.constant dense<0.000000e+00> : vector<8x512xf32>
    %799 = tpu.matmul %798, %735, %cst_305 {dimension_numbers = #tpu.dot_dimension_numbers<[1], [0], [0], [1], [0, 0, 1, 1], [], []>} : vector<8x128xbf16>, vector<128x512xbf16>, vector<8x512xf32> -> vector<8x512xf32>
    %800 = arith.addf %797, %799 : vector<8x512xf32>
    %801 = vector.extract_strided_slice %800 {offsets = [0, 0], sizes = [8, 384], strides = [1, 1]} : vector<8x512xf32> to vector<8x384xf32>
    %cst_306 = arith.constant 5.000000e-01 : f32
    %802 = vector.broadcast %cst_306 : f32 to vector<8x384xf32>
    %803 = arith.mulf %802, %801 : vector<8x384xf32>
    %804 = math.tanh %803 : vector<8x384xf32>
    %cst_307 = arith.constant 5.000000e-01 : f32
    %805 = vector.broadcast %cst_307 : f32 to vector<8x384xf32>
    %806 = arith.mulf %805, %804 : vector<8x384xf32>
    %cst_308 = arith.constant 5.000000e-01 : f32
    %807 = vector.broadcast %cst_308 : f32 to vector<8x384xf32>
    %808 = arith.addf %806, %807 : vector<8x384xf32>
    %809 = vector.extract_strided_slice %800 {offsets = [0, 384], sizes = [8, 128], strides = [1, 1]} : vector<8x512xf32> to vector<8x128xf32>
    %810 = math.tanh %809 : vector<8x128xf32>
    %811 = vector.extract_strided_slice %808 {offsets = [0, 0], sizes = [8, 128], strides = [1, 1]} : vector<8x384xf32> to vector<8x128xf32>
    %812 = vector.extract_strided_slice %808 {offsets = [0, 128], sizes = [8, 128], strides = [1, 1]} : vector<8x384xf32> to vector<8x128xf32>
    %813 = vector.extract_strided_slice %808 {offsets = [0, 256], sizes = [8, 128], strides = [1, 1]} : vector<8x384xf32> to vector<8x128xf32>
    %814 = arith.mulf %812, %789 : vector<8x128xf32>
    %815 = arith.mulf %811, %810 : vector<8x128xf32>
    %816 = arith.addf %814, %815 : vector<8x128xf32>
    %817 = math.tanh %816 : vector<8x128xf32>
    %818 = arith.mulf %813, %817 : vector<8x128xf32>
    %819 = arith.index_cast %795 : i32 to index
    %c0_309 = arith.constant 0 : index
    %820 = vector.load %arg12[%819, %c0_309] : memref<64x128xf32, #tpu.memory_space<vmem>>, vector<8x128xf32>
    tpu.vector_store %arg12[%819, %c0_309], %818 {strides = array<i32>} : memref<64x128xf32, #tpu.memory_space<vmem>>, vector<8x128xf32>,
    %c3_i32_310 = arith.constant 3 : i32
    %c8_i32_311 = arith.constant 8 : i32
    %821 = arith.muli %c3_i32_310, %c8_i32_311 : i32
    %822 = tpu.assume_multiple %821, 8 : i32
    %823 = arith.index_cast %822 : i32 to index
    %c0_312 = arith.constant 0 : index
    %824 = vector.load %arg13[%823, %c0_312] : memref<64x512xf32, #tpu.memory_space<vmem>>, vector<8x512xf32>
    %825 = arith.truncf %818 : vector<8x128xf32> to vector<8x128xbf16>
    %cst_313 = arith.constant dense<0.000000e+00> : vector<8x512xf32>
    %826 = tpu.matmul %825, %735, %cst_313 {dimension_numbers = #tpu.dot_dimension_numbers<[1], [0], [0], [1], [0, 0, 1, 1], [], []>} : vector<8x128xbf16>, vector<128x512xbf16>, vector<8x512xf32> -> vector<8x512xf32>
    %827 = arith.addf %824, %826 : vector<8x512xf32>
    %828 = vector.extract_strided_slice %827 {offsets = [0, 0], sizes = [8, 384], strides = [1, 1]} : vector<8x512xf32> to vector<8x384xf32>
    %cst_314 = arith.constant 5.000000e-01 : f32
    %829 = vector.broadcast %cst_314 : f32 to vector<8x384xf32>
    %830 = arith.mulf %829, %828 : vector<8x384xf32>
    %831 = math.tanh %830 : vector<8x384xf32>
    %cst_315 = arith.constant 5.000000e-01 : f32
    %832 = vector.broadcast %cst_315 : f32 to vector<8x384xf32>
    %833 = arith.mulf %832, %831 : vector<8x384xf32>
    %cst_316 = arith.constant 5.000000e-01 : f32
    %834 = vector.broadcast %cst_316 : f32 to vector<8x384xf32>
    %835 = arith.addf %833, %834 : vector<8x384xf32>
    %836 = vector.extract_strided_slice %827 {offsets = [0, 384], sizes = [8, 128], strides = [1, 1]} : vector<8x512xf32> to vector<8x128xf32>
    %837 = math.tanh %836 : vector<8x128xf32>
    %838 = vector.extract_strided_slice %835 {offsets = [0, 0], sizes = [8, 128], strides = [1, 1]} : vector<8x384xf32> to vector<8x128xf32>
    %839 = vector.extract_strided_slice %835 {offsets = [0, 128], sizes = [8, 128], strides = [1, 1]} : vector<8x384xf32> to vector<8x128xf32>
    %840 = vector.extract_strided_slice %835 {offsets = [0, 256], sizes = [8, 128], strides = [1, 1]} : vector<8x384xf32> to vector<8x128xf32>
    %841 = arith.mulf %839, %816 : vector<8x128xf32>
    %842 = arith.mulf %838, %837 : vector<8x128xf32>
    %843 = arith.addf %841, %842 : vector<8x128xf32>
    %844 = math.tanh %843 : vector<8x128xf32>
    %845 = arith.mulf %840, %844 : vector<8x128xf32>
    %846 = arith.index_cast %822 : i32 to index
    %c0_317 = arith.constant 0 : index
    %847 = vector.load %arg12[%846, %c0_317] : memref<64x128xf32, #tpu.memory_space<vmem>>, vector<8x128xf32>
    tpu.vector_store %arg12[%846, %c0_317], %845 {strides = array<i32>} : memref<64x128xf32, #tpu.memory_space<vmem>>, vector<8x128xf32>,
    %c4_i32_318 = arith.constant 4 : i32
    %c8_i32_319 = arith.constant 8 : i32
    %848 = arith.muli %c4_i32_318, %c8_i32_319 : i32
    %849 = tpu.assume_multiple %848, 8 : i32
    %850 = arith.index_cast %849 : i32 to index
    %c0_320 = arith.constant 0 : index
    %851 = vector.load %arg13[%850, %c0_320] : memref<64x512xf32, #tpu.memory_space<vmem>>, vector<8x512xf32>
    %852 = arith.truncf %845 : vector<8x128xf32> to vector<8x128xbf16>
    %cst_321 = arith.constant dense<0.000000e+00> : vector<8x512xf32>
    %853 = tpu.matmul %852, %735, %cst_321 {dimension_numbers = #tpu.dot_dimension_numbers<[1], [0], [0], [1], [0, 0, 1, 1], [], []>} : vector<8x128xbf16>, vector<128x512xbf16>, vector<8x512xf32> -> vector<8x512xf32>
    %854 = arith.addf %851, %853 : vector<8x512xf32>
    %855 = vector.extract_strided_slice %854 {offsets = [0, 0], sizes = [8, 384], strides = [1, 1]} : vector<8x512xf32> to vector<8x384xf32>
    %cst_322 = arith.constant 5.000000e-01 : f32
    %856 = vector.broadcast %cst_322 : f32 to vector<8x384xf32>
    %857 = arith.mulf %856, %855 : vector<8x384xf32>
    %858 = math.tanh %857 : vector<8x384xf32>
    %cst_323 = arith.constant 5.000000e-01 : f32
    %859 = vector.broadcast %cst_323 : f32 to vector<8x384xf32>
    %860 = arith.mulf %859, %858 : vector<8x384xf32>
    %cst_324 = arith.constant 5.000000e-01 : f32
    %861 = vector.broadcast %cst_324 : f32 to vector<8x384xf32>
    %862 = arith.addf %860, %861 : vector<8x384xf32>
    %863 = vector.extract_strided_slice %854 {offsets = [0, 384], sizes = [8, 128], strides = [1, 1]} : vector<8x512xf32> to vector<8x128xf32>
    %864 = math.tanh %863 : vector<8x128xf32>
    %865 = vector.extract_strided_slice %862 {offsets = [0, 0], sizes = [8, 128], strides = [1, 1]} : vector<8x384xf32> to vector<8x128xf32>
    %866 = vector.extract_strided_slice %862 {offsets = [0, 128], sizes = [8, 128], strides = [1, 1]} : vector<8x384xf32> to vector<8x128xf32>
    %867 = vector.extract_strided_slice %862 {offsets = [0, 256], sizes = [8, 128], strides = [1, 1]} : vector<8x384xf32> to vector<8x128xf32>
    %868 = arith.mulf %866, %843 : vector<8x128xf32>
    %869 = arith.mulf %865, %864 : vector<8x128xf32>
    %870 = arith.addf %868, %869 : vector<8x128xf32>
    %871 = math.tanh %870 : vector<8x128xf32>
    %872 = arith.mulf %867, %871 : vector<8x128xf32>
    %873 = arith.index_cast %849 : i32 to index
    %c0_325 = arith.constant 0 : index
    %874 = vector.load %arg12[%873, %c0_325] : memref<64x128xf32, #tpu.memory_space<vmem>>, vector<8x128xf32>
    tpu.vector_store %arg12[%873, %c0_325], %872 {strides = array<i32>} : memref<64x128xf32, #tpu.memory_space<vmem>>, vector<8x128xf32>,
    %c5_i32_326 = arith.constant 5 : i32
    %c8_i32_327 = arith.constant 8 : i32
    %875 = arith.muli %c5_i32_326, %c8_i32_327 : i32
    %876 = tpu.assume_multiple %875, 8 : i32
    %877 = arith.index_cast %876 : i32 to index
    %c0_328 = arith.constant 0 : index
    %878 = vector.load %arg13[%877, %c0_328] : memref<64x512xf32, #tpu.memory_space<vmem>>, vector<8x512xf32>
    %879 = arith.truncf %872 : vector<8x128xf32> to vector<8x128xbf16>
    %cst_329 = arith.constant dense<0.000000e+00> : vector<8x512xf32>
    %880 = tpu.matmul %879, %735, %cst_329 {dimension_numbers = #tpu.dot_dimension_numbers<[1], [0], [0], [1], [0, 0, 1, 1], [], []>} : vector<8x128xbf16>, vector<128x512xbf16>, vector<8x512xf32> -> vector<8x512xf32>
    %881 = arith.addf %878, %880 : vector<8x512xf32>
    %882 = vector.extract_strided_slice %881 {offsets = [0, 0], sizes = [8, 384], strides = [1, 1]} : vector<8x512xf32> to vector<8x384xf32>
    %cst_330 = arith.constant 5.000000e-01 : f32
    %883 = vector.broadcast %cst_330 : f32 to vector<8x384xf32>
    %884 = arith.mulf %883, %882 : vector<8x384xf32>
    %885 = math.tanh %884 : vector<8x384xf32>
    %cst_331 = arith.constant 5.000000e-01 : f32
    %886 = vector.broadcast %cst_331 : f32 to vector<8x384xf32>
    %887 = arith.mulf %886, %885 : vector<8x384xf32>
    %cst_332 = arith.constant 5.000000e-01 : f32
    %888 = vector.broadcast %cst_332 : f32 to vector<8x384xf32>
    %889 = arith.addf %887, %888 : vector<8x384xf32>
    %890 = vector.extract_strided_slice %881 {offsets = [0, 384], sizes = [8, 128], strides = [1, 1]} : vector<8x512xf32> to vector<8x128xf32>
    %891 = math.tanh %890 : vector<8x128xf32>
    %892 = vector.extract_strided_slice %889 {offsets = [0, 0], sizes = [8, 128], strides = [1, 1]} : vector<8x384xf32> to vector<8x128xf32>
    %893 = vector.extract_strided_slice %889 {offsets = [0, 128], sizes = [8, 128], strides = [1, 1]} : vector<8x384xf32> to vector<8x128xf32>
    %894 = vector.extract_strided_slice %889 {offsets = [0, 256], sizes = [8, 128], strides = [1, 1]} : vector<8x384xf32> to vector<8x128xf32>
    %895 = arith.mulf %893, %870 : vector<8x128xf32>
    %896 = arith.mulf %892, %891 : vector<8x128xf32>
    %897 = arith.addf %895, %896 : vector<8x128xf32>
    %898 = math.tanh %897 : vector<8x128xf32>
    %899 = arith.mulf %894, %898 : vector<8x128xf32>
    %900 = arith.index_cast %876 : i32 to index
    %c0_333 = arith.constant 0 : index
    %901 = vector.load %arg12[%900, %c0_333] : memref<64x128xf32, #tpu.memory_space<vmem>>, vector<8x128xf32>
    tpu.vector_store %arg12[%900, %c0_333], %899 {strides = array<i32>} : memref<64x128xf32, #tpu.memory_space<vmem>>, vector<8x128xf32>,
    %c6_i32_334 = arith.constant 6 : i32
    %c8_i32_335 = arith.constant 8 : i32
    %902 = arith.muli %c6_i32_334, %c8_i32_335 : i32
    %903 = tpu.assume_multiple %902, 8 : i32
    %904 = arith.index_cast %903 : i32 to index
    %c0_336 = arith.constant 0 : index
    %905 = vector.load %arg13[%904, %c0_336] : memref<64x512xf32, #tpu.memory_space<vmem>>, vector<8x512xf32>
    %906 = arith.truncf %899 : vector<8x128xf32> to vector<8x128xbf16>
    %cst_337 = arith.constant dense<0.000000e+00> : vector<8x512xf32>
    %907 = tpu.matmul %906, %735, %cst_337 {dimension_numbers = #tpu.dot_dimension_numbers<[1], [0], [0], [1], [0, 0, 1, 1], [], []>} : vector<8x128xbf16>, vector<128x512xbf16>, vector<8x512xf32> -> vector<8x512xf32>
    %908 = arith.addf %905, %907 : vector<8x512xf32>
    %909 = vector.extract_strided_slice %908 {offsets = [0, 0], sizes = [8, 384], strides = [1, 1]} : vector<8x512xf32> to vector<8x384xf32>
    %cst_338 = arith.constant 5.000000e-01 : f32
    %910 = vector.broadcast %cst_338 : f32 to vector<8x384xf32>
    %911 = arith.mulf %910, %909 : vector<8x384xf32>
    %912 = math.tanh %911 : vector<8x384xf32>
    %cst_339 = arith.constant 5.000000e-01 : f32
    %913 = vector.broadcast %cst_339 : f32 to vector<8x384xf32>
    %914 = arith.mulf %913, %912 : vector<8x384xf32>
    %cst_340 = arith.constant 5.000000e-01 : f32
    %915 = vector.broadcast %cst_340 : f32 to vector<8x384xf32>
    %916 = arith.addf %914, %915 : vector<8x384xf32>
    %917 = vector.extract_strided_slice %908 {offsets = [0, 384], sizes = [8, 128], strides = [1, 1]} : vector<8x512xf32> to vector<8x128xf32>
    %918 = math.tanh %917 : vector<8x128xf32>
    %919 = vector.extract_strided_slice %916 {offsets = [0, 0], sizes = [8, 128], strides = [1, 1]} : vector<8x384xf32> to vector<8x128xf32>
    %920 = vector.extract_strided_slice %916 {offsets = [0, 128], sizes = [8, 128], strides = [1, 1]} : vector<8x384xf32> to vector<8x128xf32>
    %921 = vector.extract_strided_slice %916 {offsets = [0, 256], sizes = [8, 128], strides = [1, 1]} : vector<8x384xf32> to vector<8x128xf32>
    %922 = arith.mulf %920, %897 : vector<8x128xf32>
    %923 = arith.mulf %919, %918 : vector<8x128xf32>
    %924 = arith.addf %922, %923 : vector<8x128xf32>
    %925 = math.tanh %924 : vector<8x128xf32>
    %926 = arith.mulf %921, %925 : vector<8x128xf32>
    %927 = arith.index_cast %903 : i32 to index
    %c0_341 = arith.constant 0 : index
    %928 = vector.load %arg12[%927, %c0_341] : memref<64x128xf32, #tpu.memory_space<vmem>>, vector<8x128xf32>
    tpu.vector_store %arg12[%927, %c0_341], %926 {strides = array<i32>} : memref<64x128xf32, #tpu.memory_space<vmem>>, vector<8x128xf32>,
    %c7_i32_342 = arith.constant 7 : i32
    %c8_i32_343 = arith.constant 8 : i32
    %929 = arith.muli %c7_i32_342, %c8_i32_343 : i32
    %930 = tpu.assume_multiple %929, 8 : i32
    %931 = arith.index_cast %930 : i32 to index
    %c0_344 = arith.constant 0 : index
    %932 = vector.load %arg13[%931, %c0_344] : memref<64x512xf32, #tpu.memory_space<vmem>>, vector<8x512xf32>
    %933 = arith.truncf %926 : vector<8x128xf32> to vector<8x128xbf16>
    %cst_345 = arith.constant dense<0.000000e+00> : vector<8x512xf32>
    %934 = tpu.matmul %933, %735, %cst_345 {dimension_numbers = #tpu.dot_dimension_numbers<[1], [0], [0], [1], [0, 0, 1, 1], [], []>} : vector<8x128xbf16>, vector<128x512xbf16>, vector<8x512xf32> -> vector<8x512xf32>
    %935 = arith.addf %932, %934 : vector<8x512xf32>
    %936 = vector.extract_strided_slice %935 {offsets = [0, 0], sizes = [8, 384], strides = [1, 1]} : vector<8x512xf32> to vector<8x384xf32>
    %cst_346 = arith.constant 5.000000e-01 : f32
    %937 = vector.broadcast %cst_346 : f32 to vector<8x384xf32>
    %938 = arith.mulf %937, %936 : vector<8x384xf32>
    %939 = math.tanh %938 : vector<8x384xf32>
    %cst_347 = arith.constant 5.000000e-01 : f32
    %940 = vector.broadcast %cst_347 : f32 to vector<8x384xf32>
    %941 = arith.mulf %940, %939 : vector<8x384xf32>
    %cst_348 = arith.constant 5.000000e-01 : f32
    %942 = vector.broadcast %cst_348 : f32 to vector<8x384xf32>
    %943 = arith.addf %941, %942 : vector<8x384xf32>
    %944 = vector.extract_strided_slice %935 {offsets = [0, 384], sizes = [8, 128], strides = [1, 1]} : vector<8x512xf32> to vector<8x128xf32>
    %945 = math.tanh %944 : vector<8x128xf32>
    %946 = vector.extract_strided_slice %943 {offsets = [0, 0], sizes = [8, 128], strides = [1, 1]} : vector<8x384xf32> to vector<8x128xf32>
    %947 = vector.extract_strided_slice %943 {offsets = [0, 128], sizes = [8, 128], strides = [1, 1]} : vector<8x384xf32> to vector<8x128xf32>
    %948 = vector.extract_strided_slice %943 {offsets = [0, 256], sizes = [8, 128], strides = [1, 1]} : vector<8x384xf32> to vector<8x128xf32>
    %949 = arith.mulf %947, %924 : vector<8x128xf32>
    %950 = arith.mulf %946, %945 : vector<8x128xf32>
    %951 = arith.addf %949, %950 : vector<8x128xf32>
    %952 = math.tanh %951 : vector<8x128xf32>
    %953 = arith.mulf %948, %952 : vector<8x128xf32>
    %954 = arith.index_cast %930 : i32 to index
    %c0_349 = arith.constant 0 : index
    %955 = vector.load %arg12[%954, %c0_349] : memref<64x128xf32, #tpu.memory_space<vmem>>, vector<8x128xf32>
    tpu.vector_store %arg12[%954, %c0_349], %953 {strides = array<i32>} : memref<64x128xf32, #tpu.memory_space<vmem>>, vector<8x128xf32>,
    %c8_i32_350 = arith.constant 8 : i32
    %c3_351 = arith.constant 3 : index
    %c0_352 = arith.constant 0 : index
    %c0_353 = arith.constant 0 : index
    %956 = vector.load %arg10[%c3_351, %c0_352, %c0_353] : memref<4x8x128xf32, #tpu.memory_space<vmem>>, vector<1x8x128xf32>
    %957 = vector.shape_cast %956 : vector<1x8x128xf32> to vector<8x128xf32>
    %958 = vector.shape_cast %953 : vector<8x128xf32> to vector<1x8x128xf32>
    tpu.vector_store %arg10[%c3_351, %c0_352, %c0_353], %958 {strides = array<i32>} : memref<4x8x128xf32, #tpu.memory_space<vmem>>, vector<1x8x128xf32>,
    %c3_354 = arith.constant 3 : index
    %c0_355 = arith.constant 0 : index
    %c0_356 = arith.constant 0 : index
    %959 = vector.load %arg11[%c3_354, %c0_355, %c0_356] : memref<4x8x128xf32, #tpu.memory_space<vmem>>, vector<1x8x128xf32>
    %960 = vector.shape_cast %959 : vector<1x8x128xf32> to vector<8x128xf32>
    %961 = vector.shape_cast %951 : vector<8x128xf32> to vector<1x8x128xf32>
    tpu.vector_store %arg11[%c3_354, %c0_355, %c0_356], %961 {strides = array<i32>} : memref<4x8x128xf32, #tpu.memory_space<vmem>>, vector<1x8x128xf32>,
    %c0_357 = arith.constant 0 : index
    %c0_358 = arith.constant 0 : index
    %962 = vector.load %arg12[%c0_357, %c0_358] : memref<64x128xf32, #tpu.memory_space<vmem>>, vector<64x128xf32>
    %963 = arith.truncf %962 : vector<64x128xf32> to vector<64x128xbf16>
    %c0_359 = arith.constant 0 : index
    %c0_360 = arith.constant 0 : index
    %964 = vector.load %arg7[%c0_359, %c0_360] : memref<128x128xbf16, #tpu.memory_space<vmem>>, vector<128x128xbf16>
    %cst_361 = arith.constant dense<0.000000e+00> : vector<64x128xf32>
    %965 = tpu.matmul %963, %964, %cst_361 {dimension_numbers = #tpu.dot_dimension_numbers<[1], [0], [0], [1], [0, 0, 1, 1], [], []>} : vector<64x128xbf16>, vector<128x128xbf16>, vector<64x128xf32> -> vector<64x128xf32>
    %c0_362 = arith.constant 0 : index
    %c0_363 = arith.constant 0 : index
    %966 = vector.load %arg8[%c0_362, %c0_363] : memref<1x128xf32, #tpu.memory_space<vmem>>, vector<1x128xf32>
    %967 = vector.broadcast %966 : vector<1x128xf32> to vector<64x128xf32>
    %968 = arith.addf %965, %967 : vector<64x128xf32>
    %c0_364 = arith.constant 0 : index
    %c0_365 = arith.constant 0 : index
    %969 = vector.load %arg9[%c0_364, %c0_365] : memref<64x128xf32, #tpu.memory_space<vmem>>, vector<64x128xf32>
    tpu.vector_store %arg9[%c0_364, %c0_365], %968 {strides = array<i32>} : memref<64x128xf32, #tpu.memory_space<vmem>>, vector<64x128xf32>,
    return
  }
}

</mosaic_0001>

<llo_original>
// kernel: tpu_custom_call.1
$region0: #{tpu_custom_call.1}
  #allocation0 [shape = 'u32[]', space=smem, size = 0x4, offset = 0x4, fixed_abs, tag = 'smem constant byte address 0x4 - core index']
  #allocation1 [shape = 'u32[72,128]{1,0:T(1,128)}', space=vmem, size = 0x9000, scoped, tag = 'internal scratch']
  #allocation2 [shape = 'f32[64,128]{1,0:T(8,128)}', space=vmem, size = 0x8000, scoped, tag = 'scratch operand']
  #allocation3 [shape = 'f32[64,512]{1,0:T(8,128)}', space=vmem, size = 0x20000, scoped, tag = 'scratch operand']
  %s0 = inlined_call_operand.vmem [shape: s32[64,1], index: 0, kind: input, shape index: {}]
  %s1 = inlined_call_operand.hbm [shape: f32[4,8,128], index: 1, kind: input, shape index: {}]
  %s2 = inlined_call_operand.hbm [shape: f32[4,8,128], index: 2, kind: input, shape index: {}]
  %s3 = inlined_call_operand.vmem [shape: bf16[128,128], index: 3, kind: input, shape index: {}]
  %s4 = inlined_call_operand.hbm [shape: bf16[4,128,512], index: 4, kind: input, shape index: {}]
  %s5 = inlined_call_operand.hbm [shape: bf16[4,128,512], index: 5, kind: input, shape index: {}]
  %s6 = inlined_call_operand.hbm [shape: f32[4,1,512], index: 6, kind: input, shape index: {}]
  %s7 = inlined_call_operand.hbm [shape: bf16[128,128], index: 7, kind: input, shape index: {}]
  %s8 = inlined_call_operand.vmem [shape: f32[1,128], index: 8, kind: input, shape index: {}]
  %s9 = inlined_call_operand.hbm [shape: f32[64,128], index: 9, kind: output, shape index: {0}]
  %s10 = inlined_call_operand.hbm [shape: f32[4,8,128], index: 10, kind: output, shape index: {1}]
  %s11 = inlined_call_operand.hbm [shape: f32[4,8,128], index: 11, kind: output, shape index: {2}]
  %12 = xla_tuple %s9, %s10, %s11
  %s13 = sld [smem:[#allocation0]]
  $region86: #{tpu_custom_call.1} parent=0
    _
  %s15 = ssub.s32 1, %s13
  %s16 = scalar_select 0, %s15, %s13
  $region1: #{tpu_custom_call.1} parent=0
    #allocation4 [shape = 'u8[16384]{0}', space=vmem, size = 0x4000, scoped, tag = 'input window, operand 1, single buffered']
    #allocation5 [shape = 's32[1]{0}', space=sflag, size = 0x4, scoped, tag = 'scoped memory for tpu_custom_call.1']
    #allocation6 [shape = 's32[1]{0}', space=sflag, size = 0x4, scoped, tag = 'scoped memory for tpu_custom_call.1']
    #allocation7 [shape = 'u8[16384]{0}', space=vmem, size = 0x4000, scoped, tag = 'input window, operand 2, single buffered']
    #allocation8 [shape = 's32[1]{0}', space=sflag, size = 0x4, scoped, tag = 'scoped memory for tpu_custom_call.1']
    #allocation9 [shape = 'u8[524288]{0}', space=vmem, size = 0x80000, scoped, tag = 'input window, operand 4, single buffered']
    #allocation10 [shape = 'u8[524288]{0}', space=vmem, size = 0x80000, scoped, tag = 'input window, operand 5, single buffered']
    #allocation11 [shape = 's32[1]{0}', space=sflag, size = 0x4, scoped, tag = 'scoped memory for tpu_custom_call.1']
    #allocation12 [shape = 'u8[8192]{0}', space=vmem, size = 0x2000, scoped, tag = 'input window, operand 6, single buffered']
    #allocation13 [shape = 'u8[32768]{0}', space=vmem, size = 0x8000, scoped, tag = 'input window, operand 7, single buffered']
    #allocation14 [shape = 's32[1]{0}', space=sflag, size = 0x4, scoped, tag = 'scoped memory for tpu_custom_call.1']
    #allocation15 [shape = 'u8[32768]{0}', space=vmem, size = 0x8000, scoped, tag = 'output window, operand 0, single buffered']
    #allocation16 [shape = 'u8[16384]{0}', space=vmem, size = 0x4000, scoped, tag = 'output window, operand 1, single buffered']
    #allocation17 [shape = 's32[1]{0}', space=sflag, size = 0x4, scoped, tag = 'scoped memory for tpu_custom_call.1']
    #allocation18 [shape = 'u8[16384]{0}', space=vmem, size = 0x4000, scoped, tag = 'output window, operand 2, single buffered']
    %17 = vsyncpa [#allocation5], 0
    %18 = vsyncpa [#allocation8], 0
    %19 = vsyncpa [#allocation11], 0
    %20 = vsyncpa [#allocation14], 0
    %21 = vsyncpa [#allocation6], 0
    %22 = vsyncpa [#allocation17], 0
    // Predicated region
    $region2: #{tpu_custom_call.1} parent=1 // pred_check
      _
    $region3: #{tpu_custom_call.1} parent=1 // pred_check_branch
      %24 = sbr.rel (0) target = $region5
    $region4: #{tpu_custom_call.1} parent=1 // pred_region
      _
    $region5: #{tpu_custom_call.1} parent=1 // pred_fallthru
      _
    // Predicated region
    $region6: #{tpu_custom_call.1} parent=1 // pred_check
      _
    $region7: #{tpu_custom_call.1} parent=1 // pred_check_branch
      %26 = sbr.rel (0) target = $region9
    $region8: #{tpu_custom_call.1} parent=1 // pred_region
      %28 = vsyncadd [#allocation5], 0
      %s29 = sshll.u32 %s1, 4
      %s30 = int_to_ptr.hbm [resolvable:$true] %s29
      %s31 = sshll.u32 [#allocation4], 4
      %s32 = int_to_ptr.vmem [resolvable:$true] %s31
      %37 = dma.hbm_to_vmem [thread:$0]  %s30, 512, %s32, [#allocation5], 128, 128, 8
    $region9: #{tpu_custom_call.1} parent=1 // pred_fallthru
      _
    // Predicated region
    $region10: #{tpu_custom_call.1} parent=1 // pred_check
      _
    $region11: #{tpu_custom_call.1} parent=1 // pred_check_branch
      %39 = sbr.rel (0) target = $region13
    $region12: #{tpu_custom_call.1} parent=1 // pred_region
      %41 = vsyncadd [#allocation8], 0
      %s42 = sshll.u32 %s2, 4
      %s43 = int_to_ptr.hbm [resolvable:$true] %s42
      %s44 = sshll.u32 [#allocation7], 4
      %s45 = int_to_ptr.vmem [resolvable:$true] %s44
      %50 = dma.hbm_to_vmem [thread:$0]  %s43, 512, %s45, [#allocation8], 128, 128, 8
    $region13: #{tpu_custom_call.1} parent=1 // pred_fallthru
      _
    // Predicated region
    $region14: #{tpu_custom_call.1} parent=1 // pred_check
      _
    $region15: #{tpu_custom_call.1} parent=1 // pred_check_branch
      %52 = sbr.rel (0) target = $region17
    $region16: #{tpu_custom_call.1} parent=1 // pred_region
      _
    $region17: #{tpu_custom_call.1} parent=1 // pred_fallthru
      _
    // Predicated region
    $region18: #{tpu_custom_call.1} parent=1 // pred_check
      _
    $region19: #{tpu_custom_call.1} parent=1 // pred_check_branch
      %54 = sbr.rel (0) target = $region21
    $region20: #{tpu_custom_call.1} parent=1 // pred_region
      %56 = vsyncadd [#allocation8], 0
      %s57 = sshll.u32 %s4, 4
      %s58 = int_to_ptr.hbm [resolvable:$true] %s57
      %s59 = sshll.u32 [#allocation9], 4
      %s60 = int_to_ptr.vmem [resolvable:$true] %s59
      %65 = dma.hbm_to_vmem [thread:$0]  %s58, 16384, %s60, [#allocation8], 256, 256, 16
    $region21: #{tpu_custom_call.1} parent=1 // pred_fallthru
      _
    // Predicated region
    $region22: #{tpu_custom_call.1} parent=1 // pred_check
      _
    $region23: #{tpu_custom_call.1} parent=1 // pred_check_branch
      %67 = sbr.rel (0) target = $region25
    $region24: #{tpu_custom_call.1} parent=1 // pred_region
      %69 = vsyncadd [#allocation11], 0
      %s70 = sshll.u32 %s5, 4
      %s71 = int_to_ptr.hbm [resolvable:$true] %s70
      %s72 = sshll.u32 [#allocation10], 4
      %s73 = int_to_ptr.vmem [resolvable:$true] %s72
      %78 = dma.hbm_to_vmem [thread:$0]  %s71, 16384, %s73, [#allocation11], 256, 256, 16
    $region25: #{tpu_custom_call.1} parent=1 // pred_fallthru
      _
    // Predicated region
    $region26: #{tpu_custom_call.1} parent=1 // pred_check
      _
    $region27: #{tpu_custom_call.1} parent=1 // pred_check_branch
      %80 = sbr.rel (0) target = $region29
    $region28: #{tpu_custom_call.1} parent=1 // pred_region
      %82 = vsyncadd [#allocation11], 0
      %s83 = sshll.u32 %s6, 4
      %s84 = int_to_ptr.hbm [resolvable:$true] %s83
      %s85 = sshll.u32 [#allocation12], 4
      %s86 = int_to_ptr.vmem [resolvable:$true] %s85
      %91 = dma.hbm_to_vmem [thread:$0]  %s84, 256, %s86, [#allocation11], 64, 64, 4
    $region29: #{tpu_custom_call.1} parent=1 // pred_fallthru
      _
    // Predicated region
    $region30: #{tpu_custom_call.1} parent=1 // pred_check
      _
    $region31: #{tpu_custom_call.1} parent=1 // pred_check_branch
      %93 = sbr.rel (0) target = $region33
    $region32: #{tpu_custom_call.1} parent=1 // pred_region
      %95 = vsyncadd [#allocation14], 0
      %s96 = sshll.u32 %s7, 4
      %s97 = int_to_ptr.hbm [resolvable:$true] %s96
      %s98 = sshll.u32 [#allocation13], 4
      %s99 = int_to_ptr.vmem [resolvable:$true] %s98
      %104 = dma.hbm_to_vmem [thread:$0]  %s97, 1024, %s99, [#allocation14], 64, 64, 4
    $region33: #{tpu_custom_call.1} parent=1 // pred_fallthru
      _
    // Predicated region
    $region34: #{tpu_custom_call.1} parent=1 // pred_check
      _
    $region35: #{tpu_custom_call.1} parent=1 // pred_check_branch
      %106 = sbr.rel (0) target = $region37
    $region36: #{tpu_custom_call.1} parent=1 // pred_region
      _
    $region37: #{tpu_custom_call.1} parent=1 // pred_fallthru
      _
    // Predicated region
    $region38: #{tpu_custom_call.1} parent=1 // pred_check
      _
    $region39: #{tpu_custom_call.1} parent=1 // pred_check_branch
      %108 = sbr.rel (0) target = $region41
    $region40: #{tpu_custom_call.1} parent=1 // pred_region
      %110 = dma.done [#allocation5], 512
    $region41: #{tpu_custom_call.1} parent=1 // pred_fallthru
      _
    // Predicated region
    $region42: #{tpu_custom_call.1} parent=1 // pred_check
      _
    $region43: #{tpu_custom_call.1} parent=1 // pred_check_branch
      %112 = sbr.rel (0) target = $region45
    $region44: #{tpu_custom_call.1} parent=1 // pred_region
      %114 = dma.done [#allocation8], 512
    $region45: #{tpu_custom_call.1} parent=1 // pred_fallthru
      _
    // Predicated region
    $region46: #{tpu_custom_call.1} parent=1 // pred_check
      _
    $region47: #{tpu_custom_call.1} parent=1 // pred_check_branch
      %116 = sbr.rel (0) target = $region49
    $region48: #{tpu_custom_call.1} parent=1 // pred_region
      %118 = dma.done [#allocation8], 16384
    $region49: #{tpu_custom_call.1} parent=1 // pred_fallthru
      _
    // Predicated region
    $region50: #{tpu_custom_call.1} parent=1 // pred_check
      _
    $region51: #{tpu_custom_call.1} parent=1 // pred_check_branch
      %120 = sbr.rel (0) target = $region53
    $region52: #{tpu_custom_call.1} parent=1 // pred_region
      %122 = dma.done [#allocation11], 16384
    $region53: #{tpu_custom_call.1} parent=1 // pred_fallthru
      _
    // Predicated region
    $region54: #{tpu_custom_call.1} parent=1 // pred_check
      _
    $region55: #{tpu_custom_call.1} parent=1 // pred_check_branch
      %124 = sbr.rel (0) target = $region57
    $region56: #{tpu_custom_call.1} parent=1 // pred_region
      %126 = dma.done [#allocation11], 256
    $region57: #{tpu_custom_call.1} parent=1 // pred_fallthru
      _
    // Predicated region
    $region58: #{tpu_custom_call.1} parent=1 // pred_check
      _
    $region59: #{tpu_custom_call.1} parent=1 // pred_check_branch
      %128 = sbr.rel (0) target = $region61
    $region60: #{tpu_custom_call.1} parent=1 // pred_region
      %130 = dma.done [#allocation14], 1024
    $region61: #{tpu_custom_call.1} parent=1 // pred_fallthru
      _
    %v131 = vld [vmem:[%s0] sm:$0xff]
    %v132 = vld [vmem:[%s0 + $0x8] sm:$0xff]
    %v133 = vld [vmem:[%s0 + $0x10] sm:$0xff]
    %v134 = vld [vmem:[%s0 + $0x18] sm:$0xff]
    %v135 = vld [vmem:[%s0 + $0x20] sm:$0xff]
    %v136 = vld [vmem:[%s0 + $0x28] sm:$0xff]
    %v137 = vld [vmem:[%s0 + $0x30] sm:$0xff]
    %v138 = vld [vmem:[%s0 + $0x38] sm:$0xff]
    %v139 = vlaneseq
    %v140 = vand.u32 %v139, 127
    %141 = vset.pattern.permute.xlu0 0
    %142 = vperm.xlu0 %141, %v131
    %v143 = vpop.permute.xlu0 %142
    %144 = vset.pattern.permute.xlu0 0
    %145 = vperm.xlu0 %144, %v132
    %v146 = vpop.permute.xlu0 %145
    %147 = vset.pattern.permute.xlu0 0
    %148 = vperm.xlu0 %147, %v133
    %v149 = vpop.permute.xlu0 %148
    %150 = vset.pattern.permute.xlu0 0
    %151 = vperm.xlu0 %150, %v134
    %v152 = vpop.permute.xlu0 %151
    %153 = vset.pattern.permute.xlu0 0
    %154 = vperm.xlu0 %153, %v135
    %v155 = vpop.permute.xlu0 %154
    %156 = vset.pattern.permute.xlu0 0
    %157 = vperm.xlu0 %156, %v136
    %v158 = vpop.permute.xlu0 %157
    %159 = vset.pattern.permute.xlu0 0
    %160 = vperm.xlu0 %159, %v137
    %v161 = vpop.permute.xlu0 %160
    %162 = vset.pattern.permute.xlu0 0
    %163 = vperm.xlu0 %162, %v138
    %v164 = vpop.permute.xlu0 %163
    %vm165 = vcmp.eq.s32.totalorder %v143, %v140
    %vm166 = vcmp.eq.s32.totalorder %v146, %v140
    %vm167 = vcmp.eq.s32.totalorder %v149, %v140
    %vm168 = vcmp.eq.s32.totalorder %v152, %v140
    %vm169 = vcmp.eq.s32.totalorder %v155, %v140
    %vm170 = vcmp.eq.s32.totalorder %v158, %v140
    %vm171 = vcmp.eq.s32.totalorder %v161, %v140
    %vm172 = vcmp.eq.s32.totalorder %v164, %v140
    %v173 = vsel %vm165, 1, 0
    %v174 = vsel %vm166, 1, 0
    %v175 = vsel %vm167, 1, 0
    %v176 = vsel %vm168, 1, 0
    %v177 = vsel %vm169, 1, 0
    %v178 = vsel %vm170, 1, 0
    %v179 = vsel %vm171, 1, 0
    %v180 = vsel %vm172, 1, 0
    %v181 = vcvt.s32.f32 %v173
    %v182 = vcvt.s32.f32 %v174
    %v183 = vcvt.s32.f32 %v175
    %v184 = vcvt.s32.f32 %v176
    %v185 = vcvt.s32.f32 %v177
    %v186 = vcvt.s32.f32 %v178
    %v187 = vcvt.s32.f32 %v179
    %v188 = vcvt.s32.f32 %v180
    %v189 = vpack.c.bf16 %v182, %v181
    %v190 = vpack.c.bf16 %v184, %v183
    %v191 = vpack.c.bf16 %v186, %v185
    %v192 = vpack.c.bf16 %v188, %v187
    %v193 = vld [vmem:[%s3] sm:$0xf]
    %v194 = vld [vmem:[%s3 + $0x4] sm:$0xf]
    %v195 = vld [vmem:[%s3 + $0x8] sm:$0xf]
    %v196 = vld [vmem:[%s3 + $0xc] sm:$0xf]
    %v197 = vld [vmem:[%s3 + $0x10] sm:$0xf]
    %v198 = vld [vmem:[%s3 + $0x14] sm:$0xf]
    %v199 = vld [vmem:[%s3 + $0x18] sm:$0xf]
    %v200 = vld [vmem:[%s3 + $0x1c] sm:$0xf]
    %v201 = vld [vmem:[%s3 + $0x20] sm:$0xf]
    %v202 = vld [vmem:[%s3 + $0x24] sm:$0xf]
    %v203 = vld [vmem:[%s3 + $0x28] sm:$0xf]
    %v204 = vld [vmem:[%s3 + $0x2c] sm:$0xf]
    %v205 = vld [vmem:[%s3 + $0x30] sm:$0xf]
    %v206 = vld [vmem:[%s3 + $0x34] sm:$0xf]
    %v207 = vld [vmem:[%s3 + $0x38] sm:$0xf]
    %v208 = vld [vmem:[%s3 + $0x3c] sm:$0xf]
    %v225 = vunpack.c.l.b16 %v193
    %v226 = vunpack.c.l.b16 %v194
    %v227 = vunpack.c.l.b16 %v195
    %v228 = vunpack.c.l.b16 %v196
    %v229 = vunpack.c.l.b16 %v197
    %v230 = vunpack.c.l.b16 %v198
    %v231 = vunpack.c.l.b16 %v199
    %v232 = vunpack.c.l.b16 %v200
    %v233 = vunpack.c.l.b16 %v201
    %v234 = vunpack.c.l.b16 %v202
    %v235 = vunpack.c.l.b16 %v203
    %v236 = vunpack.c.l.b16 %v204
    %v237 = vunpack.c.l.b16 %v205
    %v238 = vunpack.c.l.b16 %v206
    %v239 = vunpack.c.l.b16 %v207
    %v240 = vunpack.c.l.b16 %v208
    %v241 = vpack.c.b16 %v226, %v225
    %v242 = vpack.c.b16 %v228, %v227
    %v243 = vpack.c.b16 %v230, %v229
    %v244 = vpack.c.b16 %v232, %v231
    %v245 = vpack.c.b16 %v234, %v233
    %v246 = vpack.c.b16 %v236, %v235
    %v247 = vpack.c.b16 %v238, %v237
    %v248 = vpack.c.b16 %v240, %v239
    %257 = vmatpush.bf16.msra.mxu0 %v248
    %258 = vmatpush.bf16.msra.mxu0 %v247
    %259 = vmatpush.bf16.msra.mxu0 %v246
    %260 = vmatpush.bf16.msra.mxu0 %v245
    %261 = vmatpush.bf16.msra.mxu0 %v244
    %262 = vmatpush.bf16.msra.mxu0 %v243
    %263 = vmatpush.bf16.msra.mxu0 %v242
    %264 = vmatpush.bf16.msra.mxu0 %v241
    %265 = vmatmul.bf16.gmra.mxu0 %v189
    %v266 = vpop.f32.mrf.mxu0
    %v267 = vadd.f32 0.0, %v266
    %v268 = vpop.f32.mrf.mxu0
    %v269 = vadd.f32 0.0, %v268
    %270 = vmatmul.bf16.gmra.mxu0 %v190
    %v271 = vpop.f32.mrf.mxu0
    %v272 = vadd.f32 0.0, %v271
    %v273 = vpop.f32.mrf.mxu0
    %v274 = vadd.f32 0.0, %v273
    %275 = vmatmul.bf16.gmra.mxu0 %v191
    %v276 = vpop.f32.mrf.mxu0
    %v277 = vadd.f32 0.0, %v276
    %v278 = vpop.f32.mrf.mxu0
    %v279 = vadd.f32 0.0, %v278
    %280 = vmatmul.bf16.gmra.mxu0 %v192
    %v281 = vpop.f32.mrf.mxu0
    %v282 = vadd.f32 0.0, %v281
    %v283 = vpop.f32.mrf.mxu0
    %v284 = vadd.f32 0.0, %v283
    %285 = vdwg.mxu0
    %286 = vst [vmem:[#allocation2] sm:$0xff] %v267
    %287 = vst [vmem:[#allocation2 + $0x8] sm:$0xff] %v269
    %288 = vst [vmem:[#allocation2 + $0x10] sm:$0xff] %v272
    %289 = vst [vmem:[#allocation2 + $0x18] sm:$0xff] %v274
    %290 = vst [vmem:[#allocation2 + $0x20] sm:$0xff] %v277
    %291 = vst [vmem:[#allocation2 + $0x28] sm:$0xff] %v279
    %292 = vst [vmem:[#allocation2 + $0x30] sm:$0xff] %v282
    %293 = vst [vmem:[#allocation2 + $0x38] sm:$0xff] %v284
    %v294 = vld [vmem:[#allocation2] sm:$0xff]
    %v295 = vld [vmem:[#allocation2 + $0x8] sm:$0xff]
    %v296 = vld [vmem:[#allocation2 + $0x10] sm:$0xff]
    %v297 = vld [vmem:[#allocation2 + $0x18] sm:$0xff]
    %v298 = vld [vmem:[#allocation2 + $0x20] sm:$0xff]
    %v299 = vld [vmem:[#allocation2 + $0x28] sm:$0xff]
    %v300 = vld [vmem:[#allocation2 + $0x30] sm:$0xff]
    %v301 = vld [vmem:[#allocation2 + $0x38] sm:$0xff]
    %v302 = vpack.c.bf16 %v295, %v294
    %v303 = vpack.c.bf16 %v297, %v296
    %v304 = vpack.c.bf16 %v299, %v298
    %v305 = vpack.c.bf16 %v301, %v300
    %v306 = vld [vmem:[#allocation9] sm:$0xff]
    %v307 = vld [vmem:[#allocation9 + $0x8] sm:$0xff]
    %v308 = vld [vmem:[#allocation9 + $0x10] sm:$0xff]
    %v309 = vld [vmem:[#allocation9 + $0x18] sm:$0xff]
    %v310 = vld [vmem:[#allocation9 + $0x20] sm:$0xff]
    %v311 = vld [vmem:[#allocation9 + $0x28] sm:$0xff]
    %v312 = vld [vmem:[#allocation9 + $0x30] sm:$0xff]
    %v313 = vld [vmem:[#allocation9 + $0x38] sm:$0xff]
    %v314 = vld [vmem:[#allocation9 + $0x40] sm:$0xff]
    %v315 = vld [vmem:[#allocation9 + $0x48] sm:$0xff]
    %v316 = vld [vmem:[#allocation9 + $0x50] sm:$0xff]
    %v317 = vld [vmem:[#allocation9 + $0x58] sm:$0xff]
    %v318 = vld [vmem:[#allocation9 + $0x60] sm:$0xff]
    %v319 = vld [vmem:[#allocation9 + $0x68] sm:$0xff]
    %v320 = vld [vmem:[#allocation9 + $0x70] sm:$0xff]
    %v321 = vld [vmem:[#allocation9 + $0x78] sm:$0xff]
    %v322 = vld [vmem:[#allocation9 + $0x80] sm:$0xff]
    %v323 = vld [vmem:[#allocation9 + $0x88] sm:$0xff]
    %v324 = vld [vmem:[#allocation9 + $0x90] sm:$0xff]
    %v325 = vld [vmem:[#allocation9 + $0x98] sm:$0xff]
    %v326 = vld [vmem:[#allocation9 + $0xa0] sm:$0xff]
    %v327 = vld [vmem:[#allocation9 + $0xa8] sm:$0xff]
    %v328 = vld [vmem:[#allocation9 + $0xb0] sm:$0xff]
    %v329 = vld [vmem:[#allocation9 + $0xb8] sm:$0xff]
    %v330 = vld [vmem:[#allocation9 + $0xc0] sm:$0xff]
    %v331 = vld [vmem:[#allocation9 + $0xc8] sm:$0xff]
    %v332 = vld [vmem:[#allocation9 + $0xd0] sm:$0xff]
    %v333 = vld [vmem:[#allocation9 + $0xd8] sm:$0xff]
    %v334 = vld [vmem:[#allocation9 + $0xe0] sm:$0xff]
    %v335 = vld [vmem:[#allocation9 + $0xe8] sm:$0xff]
    %v336 = vld [vmem:[#allocation9 + $0xf0] sm:$0xff]
    %v337 = vld [vmem:[#allocation9 + $0xf8] sm:$0xff]
    %v338 = vld [vmem:[#allocation12] sm:$0xf]
    %v340 = vperm.slane %v338, 0
    %v341 = vperm.slane %v338, 1
    %v342 = vperm.slane %v338, 2
    %v343 = vperm.slane %v338, 3
    %v380 = vunpack.c.l.b16 %v306
    %v381 = vunpack.c.h.b16 %v306
    %v382 = vunpack.c.l.b16 %v307
    %v383 = vunpack.c.h.b16 %v307
    %v384 = vunpack.c.l.b16 %v308
    %v385 = vunpack.c.h.b16 %v308
    %v386 = vunpack.c.l.b16 %v309
    %v387 = vunpack.c.h.b16 %v309
    %v388 = vunpack.c.l.b16 %v310
    %v389 = vunpack.c.h.b16 %v310
    %v390 = vunpack.c.l.b16 %v311
    %v391 = vunpack.c.h.b16 %v311
    %v392 = vunpack.c.l.b16 %v312
    %v393 = vunpack.c.h.b16 %v312
    %v394 = vunpack.c.l.b16 %v313
    %v395 = vunpack.c.h.b16 %v313
    %v396 = vunpack.c.l.b16 %v314
    %v397 = vunpack.c.h.b16 %v314
    %v398 = vunpack.c.l.b16 %v315
    %v399 = vunpack.c.h.b16 %v315
    %v400 = vunpack.c.l.b16 %v316
    %v401 = vunpack.c.h.b16 %v316
    %v402 = vunpack.c.l.b16 %v317
    %v403 = vunpack.c.h.b16 %v317
    %v404 = vunpack.c.l.b16 %v318
    %v405 = vunpack.c.h.b16 %v318
    %v406 = vunpack.c.l.b16 %v319
    %v407 = vunpack.c.h.b16 %v319
    %v408 = vunpack.c.l.b16 %v320
    %v409 = vunpack.c.h.b16 %v320
    %v410 = vunpack.c.l.b16 %v321
    %v411 = vunpack.c.h.b16 %v321
    %v412 = vunpack.c.l.b16 %v322
    %v413 = vunpack.c.h.b16 %v322
    %v414 = vunpack.c.l.b16 %v323
    %v415 = vunpack.c.h.b16 %v323
    %v416 = vunpack.c.l.b16 %v324
    %v417 = vunpack.c.h.b16 %v324
    %v418 = vunpack.c.l.b16 %v325
    %v419 = vunpack.c.h.b16 %v325
    %v420 = vunpack.c.l.b16 %v326
    %v421 = vunpack.c.h.b16 %v326
    %v422 = vunpack.c.l.b16 %v327
    %v423 = vunpack.c.h.b16 %v327
    %v424 = vunpack.c.l.b16 %v328
    %v425 = vunpack.c.h.b16 %v328
    %v426 = vunpack.c.l.b16 %v329
    %v427 = vunpack.c.h.b16 %v329
    %v428 = vunpack.c.l.b16 %v330
    %v429 = vunpack.c.h.b16 %v330
    %v430 = vunpack.c.l.b16 %v331
    %v431 = vunpack.c.h.b16 %v331
    %v432 = vunpack.c.l.b16 %v332
    %v433 = vunpack.c.h.b16 %v332
    %v434 = vunpack.c.l.b16 %v333
    %v435 = vunpack.c.h.b16 %v333
    %v436 = vunpack.c.l.b16 %v334
    %v437 = vunpack.c.h.b16 %v334
    %v438 = vunpack.c.l.b16 %v335
    %v439 = vunpack.c.h.b16 %v335
    %v440 = vunpack.c.l.b16 %v336
    %v441 = vunpack.c.h.b16 %v336
    %v442 = vunpack.c.l.b16 %v337
    %v443 = vunpack.c.h.b16 %v337
    %v444 = vpack.c.b16 %v384, %v380
    %v445 = vpack.c.b16 %v385, %v381
    %v446 = vpack.c.b16 %v386, %v382
    %v447 = vpack.c.b16 %v387, %v383
    %v448 = vpack.c.b16 %v392, %v388
    %v449 = vpack.c.b16 %v393, %v389
    %v450 = vpack.c.b16 %v394, %v390
    %v451 = vpack.c.b16 %v395, %v391
    %v452 = vpack.c.b16 %v400, %v396
    %v453 = vpack.c.b16 %v401, %v397
    %v454 = vpack.c.b16 %v402, %v398
    %v455 = vpack.c.b16 %v403, %v399
    %v456 = vpack.c.b16 %v408, %v404
    %v457 = vpack.c.b16 %v409, %v405
    %v458 = vpack.c.b16 %v410, %v406
    %v459 = vpack.c.b16 %v411, %v407
    %v460 = vpack.c.b16 %v416, %v412
    %v461 = vpack.c.b16 %v417, %v413
    %v462 = vpack.c.b16 %v418, %v414
    %v463 = vpack.c.b16 %v419, %v415
    %v464 = vpack.c.b16 %v424, %v420
    %v465 = vpack.c.b16 %v425, %v421
    %v466 = vpack.c.b16 %v426, %v422
    %v467 = vpack.c.b16 %v427, %v423
    %v468 = vpack.c.b16 %v432, %v428
    %v469 = vpack.c.b16 %v433, %v429
    %v470 = vpack.c.b16 %v434, %v430
    %v471 = vpack.c.b16 %v435, %v431
    %v472 = vpack.c.b16 %v440, %v436
    %v473 = vpack.c.b16 %v441, %v437
    %v474 = vpack.c.b16 %v442, %v438
    %v475 = vpack.c.b16 %v443, %v439
    %508 = vmatpush.bf16.msra.mxu0 %v472
    %509 = vmatpush.bf16.msra.mxu0 %v468
    %510 = vmatpush.bf16.msra.mxu0 %v464
    %511 = vmatpush.bf16.msra.mxu0 %v460
    %512 = vmatpush.bf16.msra.mxu0 %v456
    %513 = vmatpush.bf16.msra.mxu0 %v452
    %514 = vmatpush.bf16.msra.mxu0 %v448
    %515 = vmatpush.bf16.msra.mxu0 %v444
    %516 = vmatmul.bf16.gmra.mxu0 %v302
    %v517 = vpop.f32.mrf.mxu0
    %v518 = vadd.f32 %v340, %v517
    %v519 = vpop.f32.mrf.mxu0
    %v520 = vadd.f32 %v340, %v519
    %521 = vmatmul.bf16.gmra.mxu0 %v303
    %v522 = vpop.f32.mrf.mxu0
    %v523 = vadd.f32 %v340, %v522
    %v524 = vpop.f32.mrf.mxu0
    %v525 = vadd.f32 %v340, %v524
    %526 = vmatmul.bf16.gmra.mxu0 %v304
    %v527 = vpop.f32.mrf.mxu0
    %v528 = vadd.f32 %v340, %v527
    %v529 = vpop.f32.mrf.mxu0
    %v530 = vadd.f32 %v340, %v529
    %531 = vmatmul.bf16.gmra.mxu0 %v305
    %v532 = vpop.f32.mrf.mxu0
    %v533 = vadd.f32 %v340, %v532
    %v534 = vpop.f32.mrf.mxu0
    %v535 = vadd.f32 %v340, %v534
    %536 = vdwg.mxu0
    %537 = vmatpush.bf16.msra.mxu0 %v473
    %538 = vmatpush.bf16.msra.mxu0 %v469
    %539 = vmatpush.bf16.msra.mxu0 %v465
    %540 = vmatpush.bf16.msra.mxu0 %v461
    %541 = vmatpush.bf16.msra.mxu0 %v457
    %542 = vmatpush.bf16.msra.mxu0 %v453
    %543 = vmatpush.bf16.msra.mxu0 %v449
    %544 = vmatpush.bf16.msra.mxu0 %v445
    %545 = vmatmul.bf16.gmra.mxu0 %v302
    %v546 = vpop.f32.mrf.mxu0
    %v547 = vadd.f32 %v341, %v546
    %v548 = vpop.f32.mrf.mxu0
    %v549 = vadd.f32 %v341, %v548
    %550 = vmatmul.bf16.gmra.mxu0 %v303
    %v551 = vpop.f32.mrf.mxu0
    %v552 = vadd.f32 %v341, %v551
    %v553 = vpop.f32.mrf.mxu0
    %v554 = vadd.f32 %v341, %v553
    %555 = vmatmul.bf16.gmra.mxu0 %v304
    %v556 = vpop.f32.mrf.mxu0
    %v557 = vadd.f32 %v341, %v556
    %v558 = vpop.f32.mrf.mxu0
    %v559 = vadd.f32 %v341, %v558
    %560 = vmatmul.bf16.gmra.mxu0 %v305
    %v561 = vpop.f32.mrf.mxu0
    %v562 = vadd.f32 %v341, %v561
    %v563 = vpop.f32.mrf.mxu0
    %v564 = vadd.f32 %v341, %v563
    %565 = vdwg.mxu0
    %566 = vmatpush.bf16.msra.mxu0 %v474
    %567 = vmatpush.bf16.msra.mxu0 %v470
    %568 = vmatpush.bf16.msra.mxu0 %v466
    %569 = vmatpush.bf16.msra.mxu0 %v462
    %570 = vmatpush.bf16.msra.mxu0 %v458
    %571 = vmatpush.bf16.msra.mxu0 %v454
    %572 = vmatpush.bf16.msra.mxu0 %v450
    %573 = vmatpush.bf16.msra.mxu0 %v446
    %574 = vmatmul.bf16.gmra.mxu0 %v302
    %v575 = vpop.f32.mrf.mxu0
    %v576 = vadd.f32 %v342, %v575
    %v577 = vpop.f32.mrf.mxu0
    %v578 = vadd.f32 %v342, %v577
    %579 = vmatmul.bf16.gmra.mxu0 %v303
    %v580 = vpop.f32.mrf.mxu0
    %v581 = vadd.f32 %v342, %v580
    %v582 = vpop.f32.mrf.mxu0
    %v583 = vadd.f32 %v342, %v582
    %584 = vmatmul.bf16.gmra.mxu0 %v304
    %v585 = vpop.f32.mrf.mxu0
    %v586 = vadd.f32 %v342, %v585
    %v587 = vpop.f32.mrf.mxu0
    %v588 = vadd.f32 %v342, %v587
    %589 = vmatmul.bf16.gmra.mxu0 %v305
    %v590 = vpop.f32.mrf.mxu0
    %v591 = vadd.f32 %v342, %v590
    %v592 = vpop.f32.mrf.mxu0
    %v593 = vadd.f32 %v342, %v592
    %594 = vdwg.mxu0
    %595 = vmatpush.bf16.msra.mxu0 %v475
    %596 = vmatpush.bf16.msra.mxu0 %v471
    %597 = vmatpush.bf16.msra.mxu0 %v467
    %598 = vmatpush.bf16.msra.mxu0 %v463
    %599 = vmatpush.bf16.msra.mxu0 %v459
    %600 = vmatpush.bf16.msra.mxu0 %v455
    %601 = vmatpush.bf16.msra.mxu0 %v451
    %602 = vmatpush.bf16.msra.mxu0 %v447
    %603 = vmatmul.bf16.gmra.mxu0 %v302
    %v604 = vpop.f32.mrf.mxu0
    %v605 = vadd.f32 %v343, %v604
    %v606 = vpop.f32.mrf.mxu0
    %v607 = vadd.f32 %v343, %v606
    %608 = vmatmul.bf16.gmra.mxu0 %v303
    %v609 = vpop.f32.mrf.mxu0
    %v610 = vadd.f32 %v343, %v609
    %v611 = vpop.f32.mrf.mxu0
    %v612 = vadd.f32 %v343, %v611
    %613 = vmatmul.bf16.gmra.mxu0 %v304
    %v614 = vpop.f32.mrf.mxu0
    %v615 = vadd.f32 %v343, %v614
    %v616 = vpop.f32.mrf.mxu0
    %v617 = vadd.f32 %v343, %v616
    %618 = vmatmul.bf16.gmra.mxu0 %v305
    %v619 = vpop.f32.mrf.mxu0
    %v620 = vadd.f32 %v343, %v619
    %v621 = vpop.f32.mrf.mxu0
    %v622 = vadd.f32 %v343, %v621
    %623 = vdwg.mxu0
    %624 = vst [vmem:[#allocation3] sm:$0xff] %v518
    %625 = vst [vmem:[#allocation3 + $0x8] sm:$0xff] %v547
    %626 = vst [vmem:[#allocation3 + $0x10] sm:$0xff] %v576
    %627 = vst [vmem:[#allocation3 + $0x18] sm:$0xff] %v605
    %628 = vst [vmem:[#allocation3 + $0x20] sm:$0xff] %v520
    %629 = vst [vmem:[#allocation3 + $0x28] sm:$0xff] %v549
    %630 = vst [vmem:[#allocation3 + $0x30] sm:$0xff] %v578
    %631 = vst [vmem:[#allocation3 + $0x38] sm:$0xff] %v607
    %632 = vst [vmem:[#allocation3 + $0x40] sm:$0xff] %v523
    %633 = vst [vmem:[#allocation3 + $0x48] sm:$0xff] %v552
    %634 = vst [vmem:[#allocation3 + $0x50] sm:$0xff] %v581
    %635 = vst [vmem:[#allocation3 + $0x58] sm:$0xff] %v610
    %636 = vst [vmem:[#allocation3 + $0x60] sm:$0xff] %v525
    %637 = vst [vmem:[#allocation3 + $0x68] sm:$0xff] %v554
    %638 = vst [vmem:[#allocation3 + $0x70] sm:$0xff] %v583
    %639 = vst [vmem:[#allocation3 + $0x78] sm:$0xff] %v612
    %640 = vst [vmem:[#allocation3 + $0x80] sm:$0xff] %v528
    %641 = vst [vmem:[#allocation3 + $0x88] sm:$0xff] %v557
    %642 = vst [vmem:[#allocation3 + $0x90] sm:$0xff] %v586
    %643 = vst [vmem:[#allocation3 + $0x98] sm:$0xff] %v615
    %644 = vst [vmem:[#allocation3 + $0xa0] sm:$0xff] %v530
    %645 = vst [vmem:[#allocation3 + $0xa8] sm:$0xff] %v559
    %646 = vst [vmem:[#allocation3 + $0xb0] sm:$0xff] %v588
    %647 = vst [vmem:[#allocation3 + $0xb8] sm:$0xff] %v617
    %648 = vst [vmem:[#allocation3 + $0xc0] sm:$0xff] %v533
    %649 = vst [vmem:[#allocation3 + $0xc8] sm:$0xff] %v562
    %650 = vst [vmem:[#allocation3 + $0xd0] sm:$0xff] %v591
    %651 = vst [vmem:[#allocation3 + $0xd8] sm:$0xff] %v620
    %652 = vst [vmem:[#allocation3 + $0xe0] sm:$0xff] %v535
    %653 = vst [vmem:[#allocation3 + $0xe8] sm:$0xff] %v564
    %654 = vst [vmem:[#allocation3 + $0xf0] sm:$0xff] %v593
    %655 = vst [vmem:[#allocation3 + $0xf8] sm:$0xff] %v622
    %v656 = vld [vmem:[#allocation10] sm:$0xff]
    %v657 = vld [vmem:[#allocation10 + $0x8] sm:$0xff]
    %v658 = vld [vmem:[#allocation10 + $0x10] sm:$0xff]
    %v659 = vld [vmem:[#allocation10 + $0x18] sm:$0xff]
    %v660 = vld [vmem:[#allocation10 + $0x20] sm:$0xff]
    %v661 = vld [vmem:[#allocation10 + $0x28] sm:$0xff]
    %v662 = vld [vmem:[#allocation10 + $0x30] sm:$0xff]
    %v663 = vld [vmem:[#allocation10 + $0x38] sm:$0xff]
    %v664 = vld [vmem:[#allocation10 + $0x40] sm:$0xff]
    %v665 = vld [vmem:[#allocation10 + $0x48] sm:$0xff]
    %v666 = vld [vmem:[#allocation10 + $0x50] sm:$0xff]
    %v667 = vld [vmem:[#allocation10 + $0x58] sm:$0xff]
    %v668 = vld [vmem:[#allocation10 + $0x60] sm:$0xff]
    %v669 = vld [vmem:[#allocation10 + $0x68] sm:$0xff]
    %v670 = vld [vmem:[#allocation10 + $0x70] sm:$0xff]
    %v671 = vld [vmem:[#allocation10 + $0x78] sm:$0xff]
    %v672 = vld [vmem:[#allocation10 + $0x80] sm:$0xff]
    %v673 = vld [vmem:[#allocation10 + $0x88] sm:$0xff]
    %v674 = vld [vmem:[#allocation10 + $0x90] sm:$0xff]
    %v675 = vld [vmem:[#allocation10 + $0x98] sm:$0xff]
    %v676 = vld [vmem:[#allocation10 + $0xa0] sm:$0xff]
    %v677 = vld [vmem:[#allocation10 + $0xa8] sm:$0xff]
    %v678 = vld [vmem:[#allocation10 + $0xb0] sm:$0xff]
    %v679 = vld [vmem:[#allocation10 + $0xb8] sm:$0xff]
    %v680 = vld [vmem:[#allocation10 + $0xc0] sm:$0xff]
    %v681 = vld [vmem:[#allocation10 + $0xc8] sm:$0xff]
    %v682 = vld [vmem:[#allocation10 + $0xd0] sm:$0xff]
    %v683 = vld [vmem:[#allocation10 + $0xd8] sm:$0xff]
    %v684 = vld [vmem:[#allocation10 + $0xe0] sm:$0xff]
    %v685 = vld [vmem:[#allocation10 + $0xe8] sm:$0xff]
    %v686 = vld [vmem:[#allocation10 + $0xf0] sm:$0xff]
    %v687 = vld [vmem:[#allocation10 + $0xf8] sm:$0xff]
    %v688 = vld [vmem:[#allocation4] sm:$0xff]
    %v689 = vld [vmem:[#allocation7] sm:$0xff]
    %s690 = smul.u32 0, 4
    %s691 = smul.addr %s690, 8
    %s692 = scalar_lea.vmem [#allocation3], %s691
    %v693 = vld [vmem:[%s692] sm:$0xff]
    %v694 = vld [vmem:[%s692 + $0x8] sm:$0xff]
    %v695 = vld [vmem:[%s692 + $0x10] sm:$0xff]
    %v696 = vld [vmem:[%s692 + $0x18] sm:$0xff]
    %v697 = vpack.c.bf16 %v688, %v688
    %v730 = vunpack.c.l.b16 %v656
    %v731 = vunpack.c.h.b16 %v656
    %v732 = vunpack.c.l.b16 %v657
    %v733 = vunpack.c.h.b16 %v657
    %v734 = vunpack.c.l.b16 %v658
    %v735 = vunpack.c.h.b16 %v658
    %v736 = vunpack.c.l.b16 %v659
    %v737 = vunpack.c.h.b16 %v659
    %v738 = vunpack.c.l.b16 %v660
    %v739 = vunpack.c.h.b16 %v660
    %v740 = vunpack.c.l.b16 %v661
    %v741 = vunpack.c.h.b16 %v661
    %v742 = vunpack.c.l.b16 %v662
    %v743 = vunpack.c.h.b16 %v662
    %v744 = vunpack.c.l.b16 %v663
    %v745 = vunpack.c.h.b16 %v663
    %v746 = vunpack.c.l.b16 %v664
    %v747 = vunpack.c.h.b16 %v664
    %v748 = vunpack.c.l.b16 %v665
    %v749 = vunpack.c.h.b16 %v665
    %v750 = vunpack.c.l.b16 %v666
    %v751 = vunpack.c.h.b16 %v666
    %v752 = vunpack.c.l.b16 %v667
    %v753 = vunpack.c.h.b16 %v667
    %v754 = vunpack.c.l.b16 %v668
    %v755 = vunpack.c.h.b16 %v668
    %v756 = vunpack.c.l.b16 %v669
    %v757 = vunpack.c.h.b16 %v669
    %v758 = vunpack.c.l.b16 %v670
    %v759 = vunpack.c.h.b16 %v670
    %v760 = vunpack.c.l.b16 %v671
    %v761 = vunpack.c.h.b16 %v671
    %v762 = vunpack.c.l.b16 %v672
    %v763 = vunpack.c.h.b16 %v672
    %v764 = vunpack.c.l.b16 %v673
    %v765 = vunpack.c.h.b16 %v673
    %v766 = vunpack.c.l.b16 %v674
    %v767 = vunpack.c.h.b16 %v674
    %v768 = vunpack.c.l.b16 %v675
    %v769 = vunpack.c.h.b16 %v675
    %v770 = vunpack.c.l.b16 %v676
    %v771 = vunpack.c.h.b16 %v676
    %v772 = vunpack.c.l.b16 %v677
    %v773 = vunpack.c.h.b16 %v677
    %v774 = vunpack.c.l.b16 %v678
    %v775 = vunpack.c.h.b16 %v678
    %v776 = vunpack.c.l.b16 %v679
    %v777 = vunpack.c.h.b16 %v679
    %v778 = vunpack.c.l.b16 %v680
    %v779 = vunpack.c.h.b16 %v680
    %v780 = vunpack.c.l.b16 %v681
    %v781 = vunpack.c.h.b16 %v681
    %v782 = vunpack.c.l.b16 %v682
    %v783 = vunpack.c.h.b16 %v682
    %v784 = vunpack.c.l.b16 %v683
    %v785 = vunpack.c.h.b16 %v683
    %v786 = vunpack.c.l.b16 %v684
    %v787 = vunpack.c.h.b16 %v684
    %v788 = vunpack.c.l.b16 %v685
    %v789 = vunpack.c.h.b16 %v685
    %v790 = vunpack.c.l.b16 %v686
    %v791 = vunpack.c.h.b16 %v686
    %v792 = vunpack.c.l.b16 %v687
    %v793 = vunpack.c.h.b16 %v687
    %v794 = vpack.c.b16 %v734, %v730
    %v795 = vpack.c.b16 %v735, %v731
    %v796 = vpack.c.b16 %v736, %v732
    %v797 = vpack.c.b16 %v737, %v733
    %v798 = vpack.c.b16 %v742, %v738
    %v799 = vpack.c.b16 %v743, %v739
    %v800 = vpack.c.b16 %v744, %v740
    %v801 = vpack.c.b16 %v745, %v741
    %v802 = vpack.c.b16 %v750, %v746
    %v803 = vpack.c.b16 %v751, %v747
    %v804 = vpack.c.b16 %v752, %v748
    %v805 = vpack.c.b16 %v753, %v749
    %v806 = vpack.c.b16 %v758, %v754
    %v807 = vpack.c.b16 %v759, %v755
    %v808 = vpack.c.b16 %v760, %v756
    %v809 = vpack.c.b16 %v761, %v757
    %v810 = vpack.c.b16 %v766, %v762
    %v811 = vpack.c.b16 %v767, %v763
    %v812 = vpack.c.b16 %v768, %v764
    %v813 = vpack.c.b16 %v769, %v765
    %v814 = vpack.c.b16 %v774, %v770
    %v815 = vpack.c.b16 %v775, %v771
    %v816 = vpack.c.b16 %v776, %v772
    %v817 = vpack.c.b16 %v777, %v773
    %v818 = vpack.c.b16 %v782, %v778
    %v819 = vpack.c.b16 %v783, %v779
    %v820 = vpack.c.b16 %v784, %v780
    %v821 = vpack.c.b16 %v785, %v781
    %v822 = vpack.c.b16 %v790, %v786
    %v823 = vpack.c.b16 %v791, %v787
    %v824 = vpack.c.b16 %v792, %v788
    %v825 = vpack.c.b16 %v793, %v789
    %858 = vmatpush.bf16.msra.mxu0 %v822
    %859 = vmatpush.bf16.msra.mxu0 %v818
    %860 = vmatpush.bf16.msra.mxu0 %v814
    %861 = vmatpush.bf16.msra.mxu0 %v810
    %862 = vmatpush.bf16.msra.mxu0 %v806
    %863 = vmatpush.bf16.msra.mxu0 %v802
    %864 = vmatpush.bf16.msra.mxu0 %v798
    %865 = vmatpush.bf16.msra.mxu0 %v794
    %866 = vmatmul.bf16.gmra.mxu0 %v697
    %v867 = vpop.f32.mrf.mxu0
    %v868 = vadd.f32 0.0, %v867
    %v869 = vpop.f32.mrf.mxu0
    %870 = vdwg.mxu0
    %871 = vmatpush.bf16.msra.mxu0 %v823
    %872 = vmatpush.bf16.msra.mxu0 %v819
    %873 = vmatpush.bf16.msra.mxu0 %v815
    %874 = vmatpush.bf16.msra.mxu0 %v811
    %875 = vmatpush.bf16.msra.mxu0 %v807
    %876 = vmatpush.bf16.msra.mxu0 %v803
    %877 = vmatpush.bf16.msra.mxu0 %v799
    %878 = vmatpush.bf16.msra.mxu0 %v795
    %879 = vmatmul.bf16.gmra.mxu0 %v697
    %v880 = vpop.f32.mrf.mxu0
    %v881 = vadd.f32 0.0, %v880
    %v882 = vpop.f32.mrf.mxu0
    %883 = vdwg.mxu0
    %884 = vmatpush.bf16.msra.mxu0 %v824
    %885 = vmatpush.bf16.msra.mxu0 %v820
    %886 = vmatpush.bf16.msra.mxu0 %v816
    %887 = vmatpush.bf16.msra.mxu0 %v812
    %888 = vmatpush.bf16.msra.mxu0 %v808
    %889 = vmatpush.bf16.msra.mxu0 %v804
    %890 = vmatpush.bf16.msra.mxu0 %v800
    %891 = vmatpush.bf16.msra.mxu0 %v796
    %892 = vmatmul.bf16.gmra.mxu0 %v697
    %v893 = vpop.f32.mrf.mxu0
    %v894 = vadd.f32 0.0, %v893
    %v895 = vpop.f32.mrf.mxu0
    %896 = vdwg.mxu0
    %897 = vmatpush.bf16.msra.mxu0 %v825
    %898 = vmatpush.bf16.msra.mxu0 %v821
    %899 = vmatpush.bf16.msra.mxu0 %v817
    %900 = vmatpush.bf16.msra.mxu0 %v813
    %901 = vmatpush.bf16.msra.mxu0 %v809
    %902 = vmatpush.bf16.msra.mxu0 %v805
    %903 = vmatpush.bf16.msra.mxu0 %v801
    %904 = vmatpush.bf16.msra.mxu0 %v797
    %905 = vmatmul.bf16.gmra.mxu0 %v697
    %v906 = vpop.f32.mrf.mxu0
    %v907 = vadd.f32 0.0, %v906
    %v908 = vpop.f32.mrf.mxu0
    %909 = vdwg.mxu0
    %v910 = vadd.f32 %v693, %v868
    %v911 = vadd.f32 %v694, %v881
    %v912 = vadd.f32 %v695, %v894
    %v913 = vadd.f32 %v696, %v907
    %v914 = vmul.f32 %v910, 0.5
    %v915 = vmul.f32 %v911, 0.5
    %v916 = vmul.f32 %v912, 0.5
    %v917 = vtanh.pop %v914
    %v918 = vtanh.pop %v915
    %v919 = vtanh.pop %v916
    %v920 = vmul.f32 %v917, 0.5
    %v921 = vmul.f32 %v918, 0.5
    %v922 = vmul.f32 %v919, 0.5
    %v923 = vadd.f32 %v920, 0.5
    %v924 = vadd.f32 %v921, 0.5
    %v925 = vadd.f32 %v922, 0.5
    %v926 = vtanh.pop %v913
    %v927 = vmul.f32 %v924, %v689
    %v928 = vmul.f32 %v923, %v926
    %v929 = vadd.f32 %v927, %v928
    %v930 = vtanh.pop %v929
    %v931 = vmul.f32 %v925, %v930
    %932 = vst [vmem:[#allocation2] sm:$0xff] %v931
    %s933 = smul.u32 1, 4
    %s934 = smul.addr %s933, 8
    %s935 = scalar_lea.vmem [#allocation3], %s934
    %v936 = vld [vmem:[%s935] sm:$0xff]
    %v937 = vld [vmem:[%s935 + $0x8] sm:$0xff]
    %v938 = vld [vmem:[%s935 + $0x10] sm:$0xff]
    %v939 = vld [vmem:[%s935 + $0x18] sm:$0xff]
    %v940 = vpack.c.bf16 %v931, %v931
    %941 = vmatpush.bf16.msra.mxu0 %v822
    %942 = vmatpush.bf16.msra.mxu0 %v818
    %943 = vmatpush.bf16.msra.mxu0 %v814
    %944 = vmatpush.bf16.msra.mxu0 %v810
    %945 = vmatpush.bf16.msra.mxu0 %v806
    %946 = vmatpush.bf16.msra.mxu0 %v802
    %947 = vmatpush.bf16.msra.mxu0 %v798
    %948 = vmatpush.bf16.msra.mxu0 %v794
    %949 = vmatmul.bf16.gmra.mxu0 %v940
    %v950 = vpop.f32.mrf.mxu0
    %v951 = vadd.f32 0.0, %v950
    %v952 = vpop.f32.mrf.mxu0
    %953 = vdwg.mxu0
    %954 = vmatpush.bf16.msra.mxu0 %v823
    %955 = vmatpush.bf16.msra.mxu0 %v819
    %956 = vmatpush.bf16.msra.mxu0 %v815
    %957 = vmatpush.bf16.msra.mxu0 %v811
    %958 = vmatpush.bf16.msra.mxu0 %v807
    %959 = vmatpush.bf16.msra.mxu0 %v803
    %960 = vmatpush.bf16.msra.mxu0 %v799
    %961 = vmatpush.bf16.msra.mxu0 %v795
    %962 = vmatmul.bf16.gmra.mxu0 %v940
    %v963 = vpop.f32.mrf.mxu0
    %v964 = vadd.f32 0.0, %v963
    %v965 = vpop.f32.mrf.mxu0
    %966 = vdwg.mxu0
    %967 = vmatpush.bf16.msra.mxu0 %v824
    %968 = vmatpush.bf16.msra.mxu0 %v820
    %969 = vmatpush.bf16.msra.mxu0 %v816
    %970 = vmatpush.bf16.msra.mxu0 %v812
    %971 = vmatpush.bf16.msra.mxu0 %v808
    %972 = vmatpush.bf16.msra.mxu0 %v804
    %973 = vmatpush.bf16.msra.mxu0 %v800
    %974 = vmatpush.bf16.msra.mxu0 %v796
    %975 = vmatmul.bf16.gmra.mxu0 %v940
    %v976 = vpop.f32.mrf.mxu0
    %v977 = vadd.f32 0.0, %v976
    %v978 = vpop.f32.mrf.mxu0
    %979 = vdwg.mxu0
    %980 = vmatpush.bf16.msra.mxu0 %v825
    %981 = vmatpush.bf16.msra.mxu0 %v821
    %982 = vmatpush.bf16.msra.mxu0 %v817
    %983 = vmatpush.bf16.msra.mxu0 %v813
    %984 = vmatpush.bf16.msra.mxu0 %v809
    %985 = vmatpush.bf16.msra.mxu0 %v805
    %986 = vmatpush.bf16.msra.mxu0 %v801
    %987 = vmatpush.bf16.msra.mxu0 %v797
    %988 = vmatmul.bf16.gmra.mxu0 %v940
    %v989 = vpop.f32.mrf.mxu0
    %v990 = vadd.f32 0.0, %v989
    %v991 = vpop.f32.mrf.mxu0
    %992 = vdwg.mxu0
    %v993 = vadd.f32 %v936, %v951
    %v994 = vadd.f32 %v937, %v964
    %v995 = vadd.f32 %v938, %v977
    %v996 = vadd.f32 %v939, %v990
    %v997 = vmul.f32 %v993, 0.5
    %v998 = vmul.f32 %v994, 0.5
    %v999 = vmul.f32 %v995, 0.5
    %v1000 = vtanh.pop %v997
    %v1001 = vtanh.pop %v998
    %v1002 = vtanh.pop %v999
    %v1003 = vmul.f32 %v1000, 0.5
    %v1004 = vmul.f32 %v1001, 0.5
    %v1005 = vmul.f32 %v1002, 0.5
    %v1006 = vadd.f32 %v1003, 0.5
    %v1007 = vadd.f32 %v1004, 0.5
    %v1008 = vadd.f32 %v1005, 0.5
    %v1009 = vtanh.pop %v996
    %v1010 = vmul.f32 %v1007, %v929
    %v1011 = vmul.f32 %v1006, %v1009
    %v1012 = vadd.f32 %v1010, %v1011
    %v1013 = vtanh.pop %v1012
    %v1014 = vmul.f32 %v1008, %v1013
    %s1015 = scalar_lea.vmem [#allocation2], 8
    %1016 = vst [vmem:[%s1015] sm:$0xff] %v1014
    %s1017 = smul.u32 2, 4
    %s1018 = smul.addr %s1017, 8
    %s1019 = scalar_lea.vmem [#allocation3], %s1018
    %v1020 = vld [vmem:[%s1019] sm:$0xff]
    %v1021 = vld [vmem:[%s1019 + $0x8] sm:$0xff]
    %v1022 = vld [vmem:[%s1019 + $0x10] sm:$0xff]
    %v1023 = vld [vmem:[%s1019 + $0x18] sm:$0xff]
    %v1024 = vpack.c.bf16 %v1014, %v1014
    %1025 = vmatpush.bf16.msra.mxu0 %v822
    %1026 = vmatpush.bf16.msra.mxu0 %v818
    %1027 = vmatpush.bf16.msra.mxu0 %v814
    %1028 = vmatpush.bf16.msra.mxu0 %v810
    %1029 = vmatpush.bf16.msra.mxu0 %v806
    %1030 = vmatpush.bf16.msra.mxu0 %v802
    %1031 = vmatpush.bf16.msra.mxu0 %v798
    %1032 = vmatpush.bf16.msra.mxu0 %v794
    %1033 = vmatmul.bf16.gmra.mxu0 %v1024
    %v1034 = vpop.f32.mrf.mxu0
    %v1035 = vadd.f32 0.0, %v1034
    %v1036 = vpop.f32.mrf.mxu0
    %1037 = vdwg.mxu0
    %1038 = vmatpush.bf16.msra.mxu0 %v823
    %1039 = vmatpush.bf16.msra.mxu0 %v819
    %1040 = vmatpush.bf16.msra.mxu0 %v815
    %1041 = vmatpush.bf16.msra.mxu0 %v811
    %1042 = vmatpush.bf16.msra.mxu0 %v807
    %1043 = vmatpush.bf16.msra.mxu0 %v803
    %1044 = vmatpush.bf16.msra.mxu0 %v799
    %1045 = vmatpush.bf16.msra.mxu0 %v795
    %1046 = vmatmul.bf16.gmra.mxu0 %v1024
    %v1047 = vpop.f32.mrf.mxu0
    %v1048 = vadd.f32 0.0, %v1047
    %v1049 = vpop.f32.mrf.mxu0
    %1050 = vdwg.mxu0
    %1051 = vmatpush.bf16.msra.mxu0 %v824
    %1052 = vmatpush.bf16.msra.mxu0 %v820
    %1053 = vmatpush.bf16.msra.mxu0 %v816
    %1054 = vmatpush.bf16.msra.mxu0 %v812
    %1055 = vmatpush.bf16.msra.mxu0 %v808
    %1056 = vmatpush.bf16.msra.mxu0 %v804
    %1057 = vmatpush.bf16.msra.mxu0 %v800
    %1058 = vmatpush.bf16.msra.mxu0 %v796
    %1059 = vmatmul.bf16.gmra.mxu0 %v1024
    %v1060 = vpop.f32.mrf.mxu0
    %v1061 = vadd.f32 0.0, %v1060
    %v1062 = vpop.f32.mrf.mxu0
    %1063 = vdwg.mxu0
    %1064 = vmatpush.bf16.msra.mxu0 %v825
    %1065 = vmatpush.bf16.msra.mxu0 %v821
    %1066 = vmatpush.bf16.msra.mxu0 %v817
    %1067 = vmatpush.bf16.msra.mxu0 %v813
    %1068 = vmatpush.bf16.msra.mxu0 %v809
    %1069 = vmatpush.bf16.msra.mxu0 %v805
    %1070 = vmatpush.bf16.msra.mxu0 %v801
    %1071 = vmatpush.bf16.msra.mxu0 %v797
    %1072 = vmatmul.bf16.gmra.mxu0 %v1024
    %v1073 = vpop.f32.mrf.mxu0
    %v1074 = vadd.f32 0.0, %v1073
    %v1075 = vpop.f32.mrf.mxu0
    %1076 = vdwg.mxu0
    %v1077 = vadd.f32 %v1020, %v1035
    %v1078 = vadd.f32 %v1021, %v1048
    %v1079 = vadd.f32 %v1022, %v1061
    %v1080 = vadd.f32 %v1023, %v1074
    %v1081 = vmul.f32 %v1077, 0.5
    %v1082 = vmul.f32 %v1078, 0.5
    %v1083 = vmul.f32 %v1079, 0.5
    %v1084 = vtanh.pop %v1081
    %v1085 = vtanh.pop %v1082
    %v1086 = vtanh.pop %v1083
    %v1087 = vmul.f32 %v1084, 0.5
    %v1088 = vmul.f32 %v1085, 0.5
    %v1089 = vmul.f32 %v1086, 0.5
    %v1090 = vadd.f32 %v1087, 0.5
    %v1091 = vadd.f32 %v1088, 0.5
    %v1092 = vadd.f32 %v1089, 0.5
    %v1093 = vtanh.pop %v1080
    %v1094 = vmul.f32 %v1091, %v1012
    %v1095 = vmul.f32 %v1090, %v1093
    %v1096 = vadd.f32 %v1094, %v1095
    %v1097 = vtanh.pop %v1096
    %v1098 = vmul.f32 %v1092, %v1097
    %s1099 = scalar_lea.vmem [#allocation2], 16
    %1100 = vst [vmem:[%s1099] sm:$0xff] %v1098
    %s1101 = smul.u32 3, 4
    %s1102 = smul.addr %s1101, 8
    %s1103 = scalar_lea.vmem [#allocation3], %s1102
    %v1104 = vld [vmem:[%s1103] sm:$0xff]
    %v1105 = vld [vmem:[%s1103 + $0x8] sm:$0xff]
    %v1106 = vld [vmem:[%s1103 + $0x10] sm:$0xff]
    %v1107 = vld [vmem:[%s1103 + $0x18] sm:$0xff]
    %v1108 = vpack.c.bf16 %v1098, %v1098
    %1109 = vmatpush.bf16.msra.mxu0 %v822
    %1110 = vmatpush.bf16.msra.mxu0 %v818
    %1111 = vmatpush.bf16.msra.mxu0 %v814
    %1112 = vmatpush.bf16.msra.mxu0 %v810
    %1113 = vmatpush.bf16.msra.mxu0 %v806
    %1114 = vmatpush.bf16.msra.mxu0 %v802
    %1115 = vmatpush.bf16.msra.mxu0 %v798
    %1116 = vmatpush.bf16.msra.mxu0 %v794
    %1117 = vmatmul.bf16.gmra.mxu0 %v1108
    %v1118 = vpop.f32.mrf.mxu0
    %v1119 = vadd.f32 0.0, %v1118
    %v1120 = vpop.f32.mrf.mxu0
    %1121 = vdwg.mxu0
    %1122 = vmatpush.bf16.msra.mxu0 %v823
    %1123 = vmatpush.bf16.msra.mxu0 %v819
    %1124 = vmatpush.bf16.msra.mxu0 %v815
    %1125 = vmatpush.bf16.msra.mxu0 %v811
    %1126 = vmatpush.bf16.msra.mxu0 %v807
    %1127 = vmatpush.bf16.msra.mxu0 %v803
    %1128 = vmatpush.bf16.msra.mxu0 %v799
    %1129 = vmatpush.bf16.msra.mxu0 %v795
    %1130 = vmatmul.bf16.gmra.mxu0 %v1108
    %v1131 = vpop.f32.mrf.mxu0
    %v1132 = vadd.f32 0.0, %v1131
    %v1133 = vpop.f32.mrf.mxu0
    %1134 = vdwg.mxu0
    %1135 = vmatpush.bf16.msra.mxu0 %v824
    %1136 = vmatpush.bf16.msra.mxu0 %v820
    %1137 = vmatpush.bf16.msra.mxu0 %v816
    %1138 = vmatpush.bf16.msra.mxu0 %v812
    %1139 = vmatpush.bf16.msra.mxu0 %v808
    %1140 = vmatpush.bf16.msra.mxu0 %v804
    %1141 = vmatpush.bf16.msra.mxu0 %v800
    %1142 = vmatpush.bf16.msra.mxu0 %v796
    %1143 = vmatmul.bf16.gmra.mxu0 %v1108
    %v1144 = vpop.f32.mrf.mxu0
    %v1145 = vadd.f32 0.0, %v1144
    %v1146 = vpop.f32.mrf.mxu0
    %1147 = vdwg.mxu0
    %1148 = vmatpush.bf16.msra.mxu0 %v825
    %1149 = vmatpush.bf16.msra.mxu0 %v821
    %1150 = vmatpush.bf16.msra.mxu0 %v817
    %1151 = vmatpush.bf16.msra.mxu0 %v813
    %1152 = vmatpush.bf16.msra.mxu0 %v809
    %1153 = vmatpush.bf16.msra.mxu0 %v805
    %1154 = vmatpush.bf16.msra.mxu0 %v801
    %1155 = vmatpush.bf16.msra.mxu0 %v797
    %1156 = vmatmul.bf16.gmra.mxu0 %v1108
    %v1157 = vpop.f32.mrf.mxu0
    %v1158 = vadd.f32 0.0, %v1157
    %v1159 = vpop.f32.mrf.mxu0
    %1160 = vdwg.mxu0
    %v1161 = vadd.f32 %v1104, %v1119
    %v1162 = vadd.f32 %v1105, %v1132
    %v1163 = vadd.f32 %v1106, %v1145
    %v1164 = vadd.f32 %v1107, %v1158
    %v1165 = vmul.f32 %v1161, 0.5
    %v1166 = vmul.f32 %v1162, 0.5
    %v1167 = vmul.f32 %v1163, 0.5
    %v1168 = vtanh.pop %v1165
    %v1169 = vtanh.pop %v1166
    %v1170 = vtanh.pop %v1167
    %v1171 = vmul.f32 %v1168, 0.5
    %v1172 = vmul.f32 %v1169, 0.5
    %v1173 = vmul.f32 %v1170, 0.5
    %v1174 = vadd.f32 %v1171, 0.5
    %v1175 = vadd.f32 %v1172, 0.5
    %v1176 = vadd.f32 %v1173, 0.5
    %v1177 = vtanh.pop %v1164
    %v1178 = vmul.f32 %v1175, %v1096
    %v1179 = vmul.f32 %v1174, %v1177
    %v1180 = vadd.f32 %v1178, %v1179
    %v1181 = vtanh.pop %v1180
    %v1182 = vmul.f32 %v1176, %v1181
    %s1183 = scalar_lea.vmem [#allocation2], 24
    %1184 = vst [vmem:[%s1183] sm:$0xff] %v1182
    %s1185 = smul.u32 4, 4
    %s1186 = smul.addr %s1185, 8
    %s1187 = scalar_lea.vmem [#allocation3], %s1186
    %v1188 = vld [vmem:[%s1187] sm:$0xff]
    %v1189 = vld [vmem:[%s1187 + $0x8] sm:$0xff]
    %v1190 = vld [vmem:[%s1187 + $0x10] sm:$0xff]
    %v1191 = vld [vmem:[%s1187 + $0x18] sm:$0xff]
    %v1192 = vpack.c.bf16 %v1182, %v1182
    %1193 = vmatpush.bf16.msra.mxu0 %v822
    %1194 = vmatpush.bf16.msra.mxu0 %v818
    %1195 = vmatpush.bf16.msra.mxu0 %v814
    %1196 = vmatpush.bf16.msra.mxu0 %v810
    %1197 = vmatpush.bf16.msra.mxu0 %v806
    %1198 = vmatpush.bf16.msra.mxu0 %v802
    %1199 = vmatpush.bf16.msra.mxu0 %v798
    %1200 = vmatpush.bf16.msra.mxu0 %v794
    %1201 = vmatmul.bf16.gmra.mxu0 %v1192
    %v1202 = vpop.f32.mrf.mxu0
    %v1203 = vadd.f32 0.0, %v1202
    %v1204 = vpop.f32.mrf.mxu0
    %1205 = vdwg.mxu0
    %1206 = vmatpush.bf16.msra.mxu0 %v823
    %1207 = vmatpush.bf16.msra.mxu0 %v819
    %1208 = vmatpush.bf16.msra.mxu0 %v815
    %1209 = vmatpush.bf16.msra.mxu0 %v811
    %1210 = vmatpush.bf16.msra.mxu0 %v807
    %1211 = vmatpush.bf16.msra.mxu0 %v803
    %1212 = vmatpush.bf16.msra.mxu0 %v799
    %1213 = vmatpush.bf16.msra.mxu0 %v795
    %1214 = vmatmul.bf16.gmra.mxu0 %v1192
    %v1215 = vpop.f32.mrf.mxu0
    %v1216 = vadd.f32 0.0, %v1215
    %v1217 = vpop.f32.mrf.mxu0
    %1218 = vdwg.mxu0
    %1219 = vmatpush.bf16.msra.mxu0 %v824
    %1220 = vmatpush.bf16.msra.mxu0 %v820
    %1221 = vmatpush.bf16.msra.mxu0 %v816
    %1222 = vmatpush.bf16.msra.mxu0 %v812
    %1223 = vmatpush.bf16.msra.mxu0 %v808
    %1224 = vmatpush.bf16.msra.mxu0 %v804
    %1225 = vmatpush.bf16.msra.mxu0 %v800
    %1226 = vmatpush.bf16.msra.mxu0 %v796
    %1227 = vmatmul.bf16.gmra.mxu0 %v1192
    %v1228 = vpop.f32.mrf.mxu0
    %v1229 = vadd.f32 0.0, %v1228
    %v1230 = vpop.f32.mrf.mxu0
    %1231 = vdwg.mxu0
    %1232 = vmatpush.bf16.msra.mxu0 %v825
    %1233 = vmatpush.bf16.msra.mxu0 %v821
    %1234 = vmatpush.bf16.msra.mxu0 %v817
    %1235 = vmatpush.bf16.msra.mxu0 %v813
    %1236 = vmatpush.bf16.msra.mxu0 %v809
    %1237 = vmatpush.bf16.msra.mxu0 %v805
    %1238 = vmatpush.bf16.msra.mxu0 %v801
    %1239 = vmatpush.bf16.msra.mxu0 %v797
    %1240 = vmatmul.bf16.gmra.mxu0 %v1192
    %v1241 = vpop.f32.mrf.mxu0
    %v1242 = vadd.f32 0.0, %v1241
    %v1243 = vpop.f32.mrf.mxu0
    %1244 = vdwg.mxu0
    %v1245 = vadd.f32 %v1188, %v1203
    %v1246 = vadd.f32 %v1189, %v1216
    %v1247 = vadd.f32 %v1190, %v1229
    %v1248 = vadd.f32 %v1191, %v1242
    %v1249 = vmul.f32 %v1245, 0.5
    %v1250 = vmul.f32 %v1246, 0.5
    %v1251 = vmul.f32 %v1247, 0.5
    %v1252 = vtanh.pop %v1249
    %v1253 = vtanh.pop %v1250
    %v1254 = vtanh.pop %v1251
    %v1255 = vmul.f32 %v1252, 0.5
    %v1256 = vmul.f32 %v1253, 0.5
    %v1257 = vmul.f32 %v1254, 0.5
    %v1258 = vadd.f32 %v1255, 0.5
    %v1259 = vadd.f32 %v1256, 0.5
    %v1260 = vadd.f32 %v1257, 0.5
    %v1261 = vtanh.pop %v1248
    %v1262 = vmul.f32 %v1259, %v1180
    %v1263 = vmul.f32 %v1258, %v1261
    %v1264 = vadd.f32 %v1262, %v1263
    %v1265 = vtanh.pop %v1264
    %v1266 = vmul.f32 %v1260, %v1265
    %s1267 = scalar_lea.vmem [#allocation2], 32
    %1268 = vst [vmem:[%s1267] sm:$0xff] %v1266
    %s1269 = smul.u32 5, 4
    %s1270 = smul.addr %s1269, 8
    %s1271 = scalar_lea.vmem [#allocation3], %s1270
    %v1272 = vld [vmem:[%s1271] sm:$0xff]
    %v1273 = vld [vmem:[%s1271 + $0x8] sm:$0xff]
    %v1274 = vld [vmem:[%s1271 + $0x10] sm:$0xff]
    %v1275 = vld [vmem:[%s1271 + $0x18] sm:$0xff]
    %v1276 = vpack.c.bf16 %v1266, %v1266
    %1277 = vmatpush.bf16.msra.mxu0 %v822
    %1278 = vmatpush.bf16.msra.mxu0 %v818
    %1279 = vmatpush.bf16.msra.mxu0 %v814
    %1280 = vmatpush.bf16.msra.mxu0 %v810
    %1281 = vmatpush.bf16.msra.mxu0 %v806
    %1282 = vmatpush.bf16.msra.mxu0 %v802
    %1283 = vmatpush.bf16.msra.mxu0 %v798
    %1284 = vmatpush.bf16.msra.mxu0 %v794
    %1285 = vmatmul.bf16.gmra.mxu0 %v1276
    %v1286 = vpop.f32.mrf.mxu0
    %v1287 = vadd.f32 0.0, %v1286
    %v1288 = vpop.f32.mrf.mxu0
    %1289 = vdwg.mxu0
    %1290 = vmatpush.bf16.msra.mxu0 %v823
    %1291 = vmatpush.bf16.msra.mxu0 %v819
    %1292 = vmatpush.bf16.msra.mxu0 %v815
    %1293 = vmatpush.bf16.msra.mxu0 %v811
    %1294 = vmatpush.bf16.msra.mxu0 %v807
    %1295 = vmatpush.bf16.msra.mxu0 %v803
    %1296 = vmatpush.bf16.msra.mxu0 %v799
    %1297 = vmatpush.bf16.msra.mxu0 %v795
    %1298 = vmatmul.bf16.gmra.mxu0 %v1276
    %v1299 = vpop.f32.mrf.mxu0
    %v1300 = vadd.f32 0.0, %v1299
    %v1301 = vpop.f32.mrf.mxu0
    %1302 = vdwg.mxu0
    %1303 = vmatpush.bf16.msra.mxu0 %v824
    %1304 = vmatpush.bf16.msra.mxu0 %v820
    %1305 = vmatpush.bf16.msra.mxu0 %v816
    %1306 = vmatpush.bf16.msra.mxu0 %v812
    %1307 = vmatpush.bf16.msra.mxu0 %v808
    %1308 = vmatpush.bf16.msra.mxu0 %v804
    %1309 = vmatpush.bf16.msra.mxu0 %v800
    %1310 = vmatpush.bf16.msra.mxu0 %v796
    %1311 = vmatmul.bf16.gmra.mxu0 %v1276
    %v1312 = vpop.f32.mrf.mxu0
    %v1313 = vadd.f32 0.0, %v1312
    %v1314 = vpop.f32.mrf.mxu0
    %1315 = vdwg.mxu0
    %1316 = vmatpush.bf16.msra.mxu0 %v825
    %1317 = vmatpush.bf16.msra.mxu0 %v821
    %1318 = vmatpush.bf16.msra.mxu0 %v817
    %1319 = vmatpush.bf16.msra.mxu0 %v813
    %1320 = vmatpush.bf16.msra.mxu0 %v809
    %1321 = vmatpush.bf16.msra.mxu0 %v805
    %1322 = vmatpush.bf16.msra.mxu0 %v801
    %1323 = vmatpush.bf16.msra.mxu0 %v797
    %1324 = vmatmul.bf16.gmra.mxu0 %v1276
    %v1325 = vpop.f32.mrf.mxu0
    %v1326 = vadd.f32 0.0, %v1325
    %v1327 = vpop.f32.mrf.mxu0
    %1328 = vdwg.mxu0
    %v1329 = vadd.f32 %v1272, %v1287
    %v1330 = vadd.f32 %v1273, %v1300
    %v1331 = vadd.f32 %v1274, %v1313
    %v1332 = vadd.f32 %v1275, %v1326
    %v1333 = vmul.f32 %v1329, 0.5
    %v1334 = vmul.f32 %v1330, 0.5
    %v1335 = vmul.f32 %v1331, 0.5
    %v1336 = vtanh.pop %v1333
    %v1337 = vtanh.pop %v1334
    %v1338 = vtanh.pop %v1335
    %v1339 = vmul.f32 %v1336, 0.5
    %v1340 = vmul.f32 %v1337, 0.5
    %v1341 = vmul.f32 %v1338, 0.5
    %v1342 = vadd.f32 %v1339, 0.5
    %v1343 = vadd.f32 %v1340, 0.5
    %v1344 = vadd.f32 %v1341, 0.5
    %v1345 = vtanh.pop %v1332
    %v1346 = vmul.f32 %v1343, %v1264
    %v1347 = vmul.f32 %v1342, %v1345
    %v1348 = vadd.f32 %v1346, %v1347
    %v1349 = vtanh.pop %v1348
    %v1350 = vmul.f32 %v1344, %v1349
    %s1351 = scalar_lea.vmem [#allocation2], 40
    %1352 = vst [vmem:[%s1351] sm:$0xff] %v1350
    %s1353 = smul.u32 6, 4
    %s1354 = smul.addr %s1353, 8
    %s1355 = scalar_lea.vmem [#allocation3], %s1354
    %v1356 = vld [vmem:[%s1355] sm:$0xff]
    %v1357 = vld [vmem:[%s1355 + $0x8] sm:$0xff]
    %v1358 = vld [vmem:[%s1355 + $0x10] sm:$0xff]
    %v1359 = vld [vmem:[%s1355 + $0x18] sm:$0xff]
    %v1360 = vpack.c.bf16 %v1350, %v1350
    %1361 = vmatpush.bf16.msra.mxu0 %v822
    %1362 = vmatpush.bf16.msra.mxu0 %v818
    %1363 = vmatpush.bf16.msra.mxu0 %v814
    %1364 = vmatpush.bf16.msra.mxu0 %v810
    %1365 = vmatpush.bf16.msra.mxu0 %v806
    %1366 = vmatpush.bf16.msra.mxu0 %v802
    %1367 = vmatpush.bf16.msra.mxu0 %v798
    %1368 = vmatpush.bf16.msra.mxu0 %v794
    %1369 = vmatmul.bf16.gmra.mxu0 %v1360
    %v1370 = vpop.f32.mrf.mxu0
    %v1371 = vadd.f32 0.0, %v1370
    %v1372 = vpop.f32.mrf.mxu0
    %1373 = vdwg.mxu0
    %1374 = vmatpush.bf16.msra.mxu0 %v823
    %1375 = vmatpush.bf16.msra.mxu0 %v819
    %1376 = vmatpush.bf16.msra.mxu0 %v815
    %1377 = vmatpush.bf16.msra.mxu0 %v811
    %1378 = vmatpush.bf16.msra.mxu0 %v807
    %1379 = vmatpush.bf16.msra.mxu0 %v803
    %1380 = vmatpush.bf16.msra.mxu0 %v799
    %1381 = vmatpush.bf16.msra.mxu0 %v795
    %1382 = vmatmul.bf16.gmra.mxu0 %v1360
    %v1383 = vpop.f32.mrf.mxu0
    %v1384 = vadd.f32 0.0, %v1383
    %v1385 = vpop.f32.mrf.mxu0
    %1386 = vdwg.mxu0
    %1387 = vmatpush.bf16.msra.mxu0 %v824
    %1388 = vmatpush.bf16.msra.mxu0 %v820
    %1389 = vmatpush.bf16.msra.mxu0 %v816
    %1390 = vmatpush.bf16.msra.mxu0 %v812
    %1391 = vmatpush.bf16.msra.mxu0 %v808
    %1392 = vmatpush.bf16.msra.mxu0 %v804
    %1393 = vmatpush.bf16.msra.mxu0 %v800
    %1394 = vmatpush.bf16.msra.mxu0 %v796
    %1395 = vmatmul.bf16.gmra.mxu0 %v1360
    %v1396 = vpop.f32.mrf.mxu0
    %v1397 = vadd.f32 0.0, %v1396
    %v1398 = vpop.f32.mrf.mxu0
    %1399 = vdwg.mxu0
    %1400 = vmatpush.bf16.msra.mxu0 %v825
    %1401 = vmatpush.bf16.msra.mxu0 %v821
    %1402 = vmatpush.bf16.msra.mxu0 %v817
    %1403 = vmatpush.bf16.msra.mxu0 %v813
    %1404 = vmatpush.bf16.msra.mxu0 %v809
    %1405 = vmatpush.bf16.msra.mxu0 %v805
    %1406 = vmatpush.bf16.msra.mxu0 %v801
    %1407 = vmatpush.bf16.msra.mxu0 %v797
    %1408 = vmatmul.bf16.gmra.mxu0 %v1360
    %v1409 = vpop.f32.mrf.mxu0
    %v1410 = vadd.f32 0.0, %v1409
    %v1411 = vpop.f32.mrf.mxu0
    %1412 = vdwg.mxu0
    %v1413 = vadd.f32 %v1356, %v1371
    %v1414 = vadd.f32 %v1357, %v1384
    %v1415 = vadd.f32 %v1358, %v1397
    %v1416 = vadd.f32 %v1359, %v1410
    %v1417 = vmul.f32 %v1413, 0.5
    %v1418 = vmul.f32 %v1414, 0.5
    %v1419 = vmul.f32 %v1415, 0.5
    %v1420 = vtanh.pop %v1417
    %v1421 = vtanh.pop %v1418
    %v1422 = vtanh.pop %v1419
    %v1423 = vmul.f32 %v1420, 0.5
    %v1424 = vmul.f32 %v1421, 0.5
    %v1425 = vmul.f32 %v1422, 0.5
    %v1426 = vadd.f32 %v1423, 0.5
    %v1427 = vadd.f32 %v1424, 0.5
    %v1428 = vadd.f32 %v1425, 0.5
    %v1429 = vtanh.pop %v1416
    %v1430 = vmul.f32 %v1427, %v1348
    %v1431 = vmul.f32 %v1426, %v1429
    %v1432 = vadd.f32 %v1430, %v1431
    %v1433 = vtanh.pop %v1432
    %v1434 = vmul.f32 %v1428, %v1433
    %s1435 = scalar_lea.vmem [#allocation2], 48
    %1436 = vst [vmem:[%s1435] sm:$0xff] %v1434
    %s1437 = smul.u32 7, 4
    %s1438 = smul.addr %s1437, 8
    %s1439 = scalar_lea.vmem [#allocation3], %s1438
    %v1440 = vld [vmem:[%s1439] sm:$0xff]
    %v1441 = vld [vmem:[%s1439 + $0x8] sm:$0xff]
    %v1442 = vld [vmem:[%s1439 + $0x10] sm:$0xff]
    %v1443 = vld [vmem:[%s1439 + $0x18] sm:$0xff]
    %v1444 = vpack.c.bf16 %v1434, %v1434
    %1445 = vmatpush.bf16.msra.mxu0 %v822
    %1446 = vmatpush.bf16.msra.mxu0 %v818
    %1447 = vmatpush.bf16.msra.mxu0 %v814
    %1448 = vmatpush.bf16.msra.mxu0 %v810
    %1449 = vmatpush.bf16.msra.mxu0 %v806
    %1450 = vmatpush.bf16.msra.mxu0 %v802
    %1451 = vmatpush.bf16.msra.mxu0 %v798
    %1452 = vmatpush.bf16.msra.mxu0 %v794
    %1453 = vmatmul.bf16.gmra.mxu0 %v1444
    %v1454 = vpop.f32.mrf.mxu0
    %v1455 = vadd.f32 0.0, %v1454
    %v1456 = vpop.f32.mrf.mxu0
    %1457 = vdwg.mxu0
    %1458 = vmatpush.bf16.msra.mxu0 %v823
    %1459 = vmatpush.bf16.msra.mxu0 %v819
    %1460 = vmatpush.bf16.msra.mxu0 %v815
    %1461 = vmatpush.bf16.msra.mxu0 %v811
    %1462 = vmatpush.bf16.msra.mxu0 %v807
    %1463 = vmatpush.bf16.msra.mxu0 %v803
    %1464 = vmatpush.bf16.msra.mxu0 %v799
    %1465 = vmatpush.bf16.msra.mxu0 %v795
    %1466 = vmatmul.bf16.gmra.mxu0 %v1444
    %v1467 = vpop.f32.mrf.mxu0
    %v1468 = vadd.f32 0.0, %v1467
    %v1469 = vpop.f32.mrf.mxu0
    %1470 = vdwg.mxu0
    %1471 = vmatpush.bf16.msra.mxu0 %v824
    %1472 = vmatpush.bf16.msra.mxu0 %v820
    %1473 = vmatpush.bf16.msra.mxu0 %v816
    %1474 = vmatpush.bf16.msra.mxu0 %v812
    %1475 = vmatpush.bf16.msra.mxu0 %v808
    %1476 = vmatpush.bf16.msra.mxu0 %v804
    %1477 = vmatpush.bf16.msra.mxu0 %v800
    %1478 = vmatpush.bf16.msra.mxu0 %v796
    %1479 = vmatmul.bf16.gmra.mxu0 %v1444
    %v1480 = vpop.f32.mrf.mxu0
    %v1481 = vadd.f32 0.0, %v1480
    %v1482 = vpop.f32.mrf.mxu0
    %1483 = vdwg.mxu0
    %1484 = vmatpush.bf16.msra.mxu0 %v825
    %1485 = vmatpush.bf16.msra.mxu0 %v821
    %1486 = vmatpush.bf16.msra.mxu0 %v817
    %1487 = vmatpush.bf16.msra.mxu0 %v813
    %1488 = vmatpush.bf16.msra.mxu0 %v809
    %1489 = vmatpush.bf16.msra.mxu0 %v805
    %1490 = vmatpush.bf16.msra.mxu0 %v801
    %1491 = vmatpush.bf16.msra.mxu0 %v797
    %1492 = vmatmul.bf16.gmra.mxu0 %v1444
    %v1493 = vpop.f32.mrf.mxu0
    %v1494 = vadd.f32 0.0, %v1493
    %v1495 = vpop.f32.mrf.mxu0
    %1496 = vdwg.mxu0
    %v1497 = vadd.f32 %v1440, %v1455
    %v1498 = vadd.f32 %v1441, %v1468
    %v1499 = vadd.f32 %v1442, %v1481
    %v1500 = vadd.f32 %v1443, %v1494
    %v1501 = vmul.f32 %v1497, 0.5
    %v1502 = vmul.f32 %v1498, 0.5
    %v1503 = vmul.f32 %v1499, 0.5
    %v1504 = vtanh.pop %v1501
    %v1505 = vtanh.pop %v1502
    %v1506 = vtanh.pop %v1503
    %v1507 = vmul.f32 %v1504, 0.5
    %v1508 = vmul.f32 %v1505, 0.5
    %v1509 = vmul.f32 %v1506, 0.5
    %v1510 = vadd.f32 %v1507, 0.5
    %v1511 = vadd.f32 %v1508, 0.5
    %v1512 = vadd.f32 %v1509, 0.5
    %v1513 = vtanh.pop %v1500
    %v1514 = vmul.f32 %v1511, %v1432
    %v1515 = vmul.f32 %v1510, %v1513
    %v1516 = vadd.f32 %v1514, %v1515
    %v1517 = vtanh.pop %v1516
    %v1518 = vmul.f32 %v1512, %v1517
    %s1519 = scalar_lea.vmem [#allocation2], 56
    %1520 = vst [vmem:[%s1519] sm:$0xff] %v1518
    %1521 = vst [vmem:[#allocation16] sm:$0xff] %v1518
    %1522 = vst [vmem:[#allocation18] sm:$0xff] %v1516
    %v1523 = vld [vmem:[#allocation2] sm:$0xff]
    %v1524 = vld [vmem:[#allocation2 + $0x8] sm:$0xff]
    %v1525 = vld [vmem:[#allocation2 + $0x10] sm:$0xff]
    %v1526 = vld [vmem:[#allocation2 + $0x18] sm:$0xff]
    %v1527 = vld [vmem:[#allocation2 + $0x20] sm:$0xff]
    %v1528 = vld [vmem:[#allocation2 + $0x28] sm:$0xff]
    %v1529 = vld [vmem:[#allocation2 + $0x30] sm:$0xff]
    %v1530 = vld [vmem:[#allocation2 + $0x38] sm:$0xff]
    %v1531 = vpack.c.bf16 %v1524, %v1523
    %v1532 = vpack.c.bf16 %v1526, %v1525
    %v1533 = vpack.c.bf16 %v1528, %v1527
    %v1534 = vpack.c.bf16 %v1530, %v1529
    %s1535 = scalar_lea.vmem [#allocation9], 256
    %v1536 = vld [vmem:[%s1535] sm:$0xff]
    %v1537 = vld [vmem:[%s1535 + $0x8] sm:$0xff]
    %v1538 = vld [vmem:[%s1535 + $0x10] sm:$0xff]
    %v1539 = vld [vmem:[%s1535 + $0x18] sm:$0xff]
    %v1540 = vld [vmem:[%s1535 + $0x20] sm:$0xff]
    %v1541 = vld [vmem:[%s1535 + $0x28] sm:$0xff]
    %v1542 = vld [vmem:[%s1535 + $0x30] sm:$0xff]
    %v1543 = vld [vmem:[%s1535 + $0x38] sm:$0xff]
    %v1544 = vld [vmem:[%s1535 + $0x40] sm:$0xff]
    %v1545 = vld [vmem:[%s1535 + $0x48] sm:$0xff]
    %v1546 = vld [vmem:[%s1535 + $0x50] sm:$0xff]
    %v1547 = vld [vmem:[%s1535 + $0x58] sm:$0xff]
    %v1548 = vld [vmem:[%s1535 + $0x60] sm:$0xff]
    %v1549 = vld [vmem:[%s1535 + $0x68] sm:$0xff]
    %v1550 = vld [vmem:[%s1535 + $0x70] sm:$0xff]
    %v1551 = vld [vmem:[%s1535 + $0x78] sm:$0xff]
    %v1552 = vld [vmem:[%s1535 + $0x80] sm:$0xff]
    %v1553 = vld [vmem:[%s1535 + $0x88] sm:$0xff]
    %v1554 = vld [vmem:[%s1535 + $0x90] sm:$0xff]
    %v1555 = vld [vmem:[%s1535 + $0x98] sm:$0xff]
    %v1556 = vld [vmem:[%s1535 + $0xa0] sm:$0xff]
    %v1557 = vld [vmem:[%s1535 + $0xa8] sm:$0xff]
    %v1558 = vld [vmem:[%s1535 + $0xb0] sm:$0xff]
    %v1559 = vld [vmem:[%s1535 + $0xb8] sm:$0xff]
    %v1560 = vld [vmem:[%s1535 + $0xc0] sm:$0xff]
    %v1561 = vld [vmem:[%s1535 + $0xc8] sm:$0xff]
    %v1562 = vld [vmem:[%s1535 + $0xd0] sm:$0xff]
    %v1563 = vld [vmem:[%s1535 + $0xd8] sm:$0xff]
    %v1564 = vld [vmem:[%s1535 + $0xe0] sm:$0xff]
    %v1565 = vld [vmem:[%s1535 + $0xe8] sm:$0xff]
    %v1566 = vld [vmem:[%s1535 + $0xf0] sm:$0xff]
    %v1567 = vld [vmem:[%s1535 + $0xf8] sm:$0xff]
    %s1568 = scalar_lea.vmem [#allocation12], 4
    %v1569 = vld [vmem:[%s1568] sm:$0xf]
    %v1571 = vperm.slane %v1569, 0
    %v1572 = vperm.slane %v1569, 1
    %v1573 = vperm.slane %v1569, 2
    %v1574 = vperm.slane %v1569, 3
    %v1611 = vunpack.c.l.b16 %v1536
    %v1612 = vunpack.c.h.b16 %v1536
    %v1613 = vunpack.c.l.b16 %v1537
    %v1614 = vunpack.c.h.b16 %v1537
    %v1615 = vunpack.c.l.b16 %v1538
    %v1616 = vunpack.c.h.b16 %v1538
    %v1617 = vunpack.c.l.b16 %v1539
    %v1618 = vunpack.c.h.b16 %v1539
    %v1619 = vunpack.c.l.b16 %v1540
    %v1620 = vunpack.c.h.b16 %v1540
    %v1621 = vunpack.c.l.b16 %v1541
    %v1622 = vunpack.c.h.b16 %v1541
    %v1623 = vunpack.c.l.b16 %v1542
    %v1624 = vunpack.c.h.b16 %v1542
    %v1625 = vunpack.c.l.b16 %v1543
    %v1626 = vunpack.c.h.b16 %v1543
    %v1627 = vunpack.c.l.b16 %v1544
    %v1628 = vunpack.c.h.b16 %v1544
    %v1629 = vunpack.c.l.b16 %v1545
    %v1630 = vunpack.c.h.b16 %v1545
    %v1631 = vunpack.c.l.b16 %v1546
    %v1632 = vunpack.c.h.b16 %v1546
    %v1633 = vunpack.c.l.b16 %v1547
    %v1634 = vunpack.c.h.b16 %v1547
    %v1635 = vunpack.c.l.b16 %v1548
    %v1636 = vunpack.c.h.b16 %v1548
    %v1637 = vunpack.c.l.b16 %v1549
    %v1638 = vunpack.c.h.b16 %v1549
    %v1639 = vunpack.c.l.b16 %v1550
    %v1640 = vunpack.c.h.b16 %v1550
    %v1641 = vunpack.c.l.b16 %v1551
    %v1642 = vunpack.c.h.b16 %v1551
    %v1643 = vunpack.c.l.b16 %v1552
    %v1644 = vunpack.c.h.b16 %v1552
    %v1645 = vunpack.c.l.b16 %v1553
    %v1646 = vunpack.c.h.b16 %v1553
    %v1647 = vunpack.c.l.b16 %v1554
    %v1648 = vunpack.c.h.b16 %v1554
    %v1649 = vunpack.c.l.b16 %v1555
    %v1650 = vunpack.c.h.b16 %v1555
    %v1651 = vunpack.c.l.b16 %v1556
    %v1652 = vunpack.c.h.b16 %v1556
    %v1653 = vunpack.c.l.b16 %v1557
    %v1654 = vunpack.c.h.b16 %v1557
    %v1655 = vunpack.c.l.b16 %v1558
    %v1656 = vunpack.c.h.b16 %v1558
    %v1657 = vunpack.c.l.b16 %v1559
    %v1658 = vunpack.c.h.b16 %v1559
    %v1659 = vunpack.c.l.b16 %v1560
    %v1660 = vunpack.c.h.b16 %v1560
    %v1661 = vunpack.c.l.b16 %v1561
    %v1662 = vunpack.c.h.b16 %v1561
    %v1663 = vunpack.c.l.b16 %v1562
    %v1664 = vunpack.c.h.b16 %v1562
    %v1665 = vunpack.c.l.b16 %v1563
    %v1666 = vunpack.c.h.b16 %v1563
    %v1667 = vunpack.c.l.b16 %v1564
    %v1668 = vunpack.c.h.b16 %v1564
    %v1669 = vunpack.c.l.b16 %v1565
    %v1670 = vunpack.c.h.b16 %v1565
    %v1671 = vunpack.c.l.b16 %v1566
    %v1672 = vunpack.c.h.b16 %v1566
    %v1673 = vunpack.c.l.b16 %v1567
    %v1674 = vunpack.c.h.b16 %v1567
    %v1675 = vpack.c.b16 %v1615, %v1611
    %v1676 = vpack.c.b16 %v1616, %v1612
    %v1677 = vpack.c.b16 %v1617, %v1613
    %v1678 = vpack.c.b16 %v1618, %v1614
    %v1679 = vpack.c.b16 %v1623, %v1619
    %v1680 = vpack.c.b16 %v1624, %v1620
    %v1681 = vpack.c.b16 %v1625, %v1621
    %v1682 = vpack.c.b16 %v1626, %v1622
    %v1683 = vpack.c.b16 %v1631, %v1627
    %v1684 = vpack.c.b16 %v1632, %v1628
    %v1685 = vpack.c.b16 %v1633, %v1629
    %v1686 = vpack.c.b16 %v1634, %v1630
    %v1687 = vpack.c.b16 %v1639, %v1635
    %v1688 = vpack.c.b16 %v1640, %v1636
    %v1689 = vpack.c.b16 %v1641, %v1637
    %v1690 = vpack.c.b16 %v1642, %v1638
    %v1691 = vpack.c.b16 %v1647, %v1643
    %v1692 = vpack.c.b16 %v1648, %v1644
    %v1693 = vpack.c.b16 %v1649, %v1645
    %v1694 = vpack.c.b16 %v1650, %v1646
    %v1695 = vpack.c.b16 %v1655, %v1651
    %v1696 = vpack.c.b16 %v1656, %v1652
    %v1697 = vpack.c.b16 %v1657, %v1653
    %v1698 = vpack.c.b16 %v1658, %v1654
    %v1699 = vpack.c.b16 %v1663, %v1659
    %v1700 = vpack.c.b16 %v1664, %v1660
    %v1701 = vpack.c.b16 %v1665, %v1661
    %v1702 = vpack.c.b16 %v1666, %v1662
    %v1703 = vpack.c.b16 %v1671, %v1667
    %v1704 = vpack.c.b16 %v1672, %v1668
    %v1705 = vpack.c.b16 %v1673, %v1669
    %v1706 = vpack.c.b16 %v1674, %v1670
    %1739 = vmatpush.bf16.msra.mxu0 %v1703
    %1740 = vmatpush.bf16.msra.mxu0 %v1699
    %1741 = vmatpush.bf16.msra.mxu0 %v1695
    %1742 = vmatpush.bf16.msra.mxu0 %v1691
    %1743 = vmatpush.bf16.msra.mxu0 %v1687
    %1744 = vmatpush.bf16.msra.mxu0 %v1683
    %1745 = vmatpush.bf16.msra.mxu0 %v1679
    %1746 = vmatpush.bf16.msra.mxu0 %v1675
    %1747 = vmatmul.bf16.gmra.mxu0 %v1531
    %v1748 = vpop.f32.mrf.mxu0
    %v1749 = vadd.f32 %v1571, %v1748
    %v1750 = vpop.f32.mrf.mxu0
    %v1751 = vadd.f32 %v1571, %v1750
    %1752 = vmatmul.bf16.gmra.mxu0 %v1532
    %v1753 = vpop.f32.mrf.mxu0
    %v1754 = vadd.f32 %v1571, %v1753
    %v1755 = vpop.f32.mrf.mxu0
    %v1756 = vadd.f32 %v1571, %v1755
    %1757 = vmatmul.bf16.gmra.mxu0 %v1533
    %v1758 = vpop.f32.mrf.mxu0
    %v1759 = vadd.f32 %v1571, %v1758
    %v1760 = vpop.f32.mrf.mxu0
    %v1761 = vadd.f32 %v1571, %v1760
    %1762 = vmatmul.bf16.gmra.mxu0 %v1534
    %v1763 = vpop.f32.mrf.mxu0
    %v1764 = vadd.f32 %v1571, %v1763
    %v1765 = vpop.f32.mrf.mxu0
    %v1766 = vadd.f32 %v1571, %v1765
    %1767 = vdwg.mxu0
    %1768 = vmatpush.bf16.msra.mxu0 %v1704
    %1769 = vmatpush.bf16.msra.mxu0 %v1700
    %1770 = vmatpush.bf16.msra.mxu0 %v1696
    %1771 = vmatpush.bf16.msra.mxu0 %v1692
    %1772 = vmatpush.bf16.msra.mxu0 %v1688
    %1773 = vmatpush.bf16.msra.mxu0 %v1684
    %1774 = vmatpush.bf16.msra.mxu0 %v1680
    %1775 = vmatpush.bf16.msra.mxu0 %v1676
    %1776 = vmatmul.bf16.gmra.mxu0 %v1531
    %v1777 = vpop.f32.mrf.mxu0
    %v1778 = vadd.f32 %v1572, %v1777
    %v1779 = vpop.f32.mrf.mxu0
    %v1780 = vadd.f32 %v1572, %v1779
    %1781 = vmatmul.bf16.gmra.mxu0 %v1532
    %v1782 = vpop.f32.mrf.mxu0
    %v1783 = vadd.f32 %v1572, %v1782
    %v1784 = vpop.f32.mrf.mxu0
    %v1785 = vadd.f32 %v1572, %v1784
    %1786 = vmatmul.bf16.gmra.mxu0 %v1533
    %v1787 = vpop.f32.mrf.mxu0
    %v1788 = vadd.f32 %v1572, %v1787
    %v1789 = vpop.f32.mrf.mxu0
    %v1790 = vadd.f32 %v1572, %v1789
    %1791 = vmatmul.bf16.gmra.mxu0 %v1534
    %v1792 = vpop.f32.mrf.mxu0
    %v1793 = vadd.f32 %v1572, %v1792
    %v1794 = vpop.f32.mrf.mxu0
    %v1795 = vadd.f32 %v1572, %v1794
    %1796 = vdwg.mxu0
    %1797 = vmatpush.bf16.msra.mxu0 %v1705
    %1798 = vmatpush.bf16.msra.mxu0 %v1701
    %1799 = vmatpush.bf16.msra.mxu0 %v1697
    %1800 = vmatpush.bf16.msra.mxu0 %v1693
    %1801 = vmatpush.bf16.msra.mxu0 %v1689
    %1802 = vmatpush.bf16.msra.mxu0 %v1685
    %1803 = vmatpush.bf16.msra.mxu0 %v1681
    %1804 = vmatpush.bf16.msra.mxu0 %v1677
    %1805 = vmatmul.bf16.gmra.mxu0 %v1531
    %v1806 = vpop.f32.mrf.mxu0
    %v1807 = vadd.f32 %v1573, %v1806
    %v1808 = vpop.f32.mrf.mxu0
    %v1809 = vadd.f32 %v1573, %v1808
    %1810 = vmatmul.bf16.gmra.mxu0 %v1532
    %v1811 = vpop.f32.mrf.mxu0
    %v1812 = vadd.f32 %v1573, %v1811
    %v1813 = vpop.f32.mrf.mxu0
    %v1814 = vadd.f32 %v1573, %v1813
    %1815 = vmatmul.bf16.gmra.mxu0 %v1533
    %v1816 = vpop.f32.mrf.mxu0
    %v1817 = vadd.f32 %v1573, %v1816
    %v1818 = vpop.f32.mrf.mxu0
    %v1819 = vadd.f32 %v1573, %v1818
    %1820 = vmatmul.bf16.gmra.mxu0 %v1534
    %v1821 = vpop.f32.mrf.mxu0
    %v1822 = vadd.f32 %v1573, %v1821
    %v1823 = vpop.f32.mrf.mxu0
    %v1824 = vadd.f32 %v1573, %v1823
    %1825 = vdwg.mxu0
    %1826 = vmatpush.bf16.msra.mxu0 %v1706
    %1827 = vmatpush.bf16.msra.mxu0 %v1702
    %1828 = vmatpush.bf16.msra.mxu0 %v1698
    %1829 = vmatpush.bf16.msra.mxu0 %v1694
    %1830 = vmatpush.bf16.msra.mxu0 %v1690
    %1831 = vmatpush.bf16.msra.mxu0 %v1686
    %1832 = vmatpush.bf16.msra.mxu0 %v1682
    %1833 = vmatpush.bf16.msra.mxu0 %v1678
    %1834 = vmatmul.bf16.gmra.mxu0 %v1531
    %v1835 = vpop.f32.mrf.mxu0
    %v1836 = vadd.f32 %v1574, %v1835
    %v1837 = vpop.f32.mrf.mxu0
    %v1838 = vadd.f32 %v1574, %v1837
    %1839 = vmatmul.bf16.gmra.mxu0 %v1532
    %v1840 = vpop.f32.mrf.mxu0
    %v1841 = vadd.f32 %v1574, %v1840
    %v1842 = vpop.f32.mrf.mxu0
    %v1843 = vadd.f32 %v1574, %v1842
    %1844 = vmatmul.bf16.gmra.mxu0 %v1533
    %v1845 = vpop.f32.mrf.mxu0
    %v1846 = vadd.f32 %v1574, %v1845
    %v1847 = vpop.f32.mrf.mxu0
    %v1848 = vadd.f32 %v1574, %v1847
    %1849 = vmatmul.bf16.gmra.mxu0 %v1534
    %v1850 = vpop.f32.mrf.mxu0
    %v1851 = vadd.f32 %v1574, %v1850
    %v1852 = vpop.f32.mrf.mxu0
    %v1853 = vadd.f32 %v1574, %v1852
    %1854 = vdwg.mxu0
    %1855 = vst [vmem:[#allocation3] sm:$0xff] %v1749
    %1856 = vst [vmem:[#allocation3 + $0x8] sm:$0xff] %v1778
    %1857 = vst [vmem:[#allocation3 + $0x10] sm:$0xff] %v1807
    %1858 = vst [vmem:[#allocation3 + $0x18] sm:$0xff] %v1836
    %1859 = vst [vmem:[#allocation3 + $0x20] sm:$0xff] %v1751
    %1860 = vst [vmem:[#allocation3 + $0x28] sm:$0xff] %v1780
    %1861 = vst [vmem:[#allocation3 + $0x30] sm:$0xff] %v1809
    %1862 = vst [vmem:[#allocation3 + $0x38] sm:$0xff] %v1838
    %1863 = vst [vmem:[#allocation3 + $0x40] sm:$0xff] %v1754
    %1864 = vst [vmem:[#allocation3 + $0x48] sm:$0xff] %v1783
    %1865 = vst [vmem:[#allocation3 + $0x50] sm:$0xff] %v1812
    %1866 = vst [vmem:[#allocation3 + $0x58] sm:$0xff] %v1841
    %1867 = vst [vmem:[#allocation3 + $0x60] sm:$0xff] %v1756
    %1868 = vst [vmem:[#allocation3 + $0x68] sm:$0xff] %v1785
    %1869 = vst [vmem:[#allocation3 + $0x70] sm:$0xff] %v1814
    %1870 = vst [vmem:[#allocation3 + $0x78] sm:$0xff] %v1843
    %1871 = vst [vmem:[#allocation3 + $0x80] sm:$0xff] %v1759
    %1872 = vst [vmem:[#allocation3 + $0x88] sm:$0xff] %v1788
    %1873 = vst [vmem:[#allocation3 + $0x90] sm:$0xff] %v1817
    %1874 = vst [vmem:[#allocation3 + $0x98] sm:$0xff] %v1846
    %1875 = vst [vmem:[#allocation3 + $0xa0] sm:$0xff] %v1761
    %1876 = vst [vmem:[#allocation3 + $0xa8] sm:$0xff] %v1790
    %1877 = vst [vmem:[#allocation3 + $0xb0] sm:$0xff] %v1819
    %1878 = vst [vmem:[#allocation3 + $0xb8] sm:$0xff] %v1848
    %1879 = vst [vmem:[#allocation3 + $0xc0] sm:$0xff] %v1764
    %1880 = vst [vmem:[#allocation3 + $0xc8] sm:$0xff] %v1793
    %1881 = vst [vmem:[#allocation3 + $0xd0] sm:$0xff] %v1822
    %1882 = vst [vmem:[#allocation3 + $0xd8] sm:$0xff] %v1851
    %1883 = vst [vmem:[#allocation3 + $0xe0] sm:$0xff] %v1766
    %1884 = vst [vmem:[#allocation3 + $0xe8] sm:$0xff] %v1795
    %1885 = vst [vmem:[#allocation3 + $0xf0] sm:$0xff] %v1824
    %1886 = vst [vmem:[#allocation3 + $0xf8] sm:$0xff] %v1853
    %s1887 = scalar_lea.vmem [#allocation10], 256
    %v1888 = vld [vmem:[%s1887] sm:$0xff]
    %v1889 = vld [vmem:[%s1887 + $0x8] sm:$0xff]
    %v1890 = vld [vmem:[%s1887 + $0x10] sm:$0xff]
    %v1891 = vld [vmem:[%s1887 + $0x18] sm:$0xff]
    %v1892 = vld [vmem:[%s1887 + $0x20] sm:$0xff]
    %v1893 = vld [vmem:[%s1887 + $0x28] sm:$0xff]
    %v1894 = vld [vmem:[%s1887 + $0x30] sm:$0xff]
    %v1895 = vld [vmem:[%s1887 + $0x38] sm:$0xff]
    %v1896 = vld [vmem:[%s1887 + $0x40] sm:$0xff]
    %v1897 = vld [vmem:[%s1887 + $0x48] sm:$0xff]
    %v1898 = vld [vmem:[%s1887 + $0x50] sm:$0xff]
    %v1899 = vld [vmem:[%s1887 + $0x58] sm:$0xff]
    %v1900 = vld [vmem:[%s1887 + $0x60] sm:$0xff]
    %v1901 = vld [vmem:[%s1887 + $0x68] sm:$0xff]
    %v1902 = vld [vmem:[%s1887 + $0x70] sm:$0xff]
    %v1903 = vld [vmem:[%s1887 + $0x78] sm:$0xff]
    %v1904 = vld [vmem:[%s1887 + $0x80] sm:$0xff]
    %v1905 = vld [vmem:[%s1887 + $0x88] sm:$0xff]
    %v1906 = vld [vmem:[%s1887 + $0x90] sm:$0xff]
    %v1907 = vld [vmem:[%s1887 + $0x98] sm:$0xff]
    %v1908 = vld [vmem:[%s1887 + $0xa0] sm:$0xff]
    %v1909 = vld [vmem:[%s1887 + $0xa8] sm:$0xff]
    %v1910 = vld [vmem:[%s1887 + $0xb0] sm:$0xff]
    %v1911 = vld [vmem:[%s1887 + $0xb8] sm:$0xff]
    %v1912 = vld [vmem:[%s1887 + $0xc0] sm:$0xff]
    %v1913 = vld [vmem:[%s1887 + $0xc8] sm:$0xff]
    %v1914 = vld [vmem:[%s1887 + $0xd0] sm:$0xff]
    %v1915 = vld [vmem:[%s1887 + $0xd8] sm:$0xff]
    %v1916 = vld [vmem:[%s1887 + $0xe0] sm:$0xff]
    %v1917 = vld [vmem:[%s1887 + $0xe8] sm:$0xff]
    %v1918 = vld [vmem:[%s1887 + $0xf0] sm:$0xff]
    %v1919 = vld [vmem:[%s1887 + $0xf8] sm:$0xff]
    %s1920 = scalar_lea.vmem [#allocation4], 8
    %v1921 = vld [vmem:[%s1920] sm:$0xff]
    %s1922 = scalar_lea.vmem [#allocation7], 8
    %v1923 = vld [vmem:[%s1922] sm:$0xff]
    %v1924 = vld [vmem:[%s692] sm:$0xff]
    %v1925 = vld [vmem:[%s692 + $0x8] sm:$0xff]
    %v1926 = vld [vmem:[%s692 + $0x10] sm:$0xff]
    %v1927 = vld [vmem:[%s692 + $0x18] sm:$0xff]
    %v1928 = vpack.c.bf16 %v1921, %v1921
    %v1961 = vunpack.c.l.b16 %v1888
    %v1962 = vunpack.c.h.b16 %v1888
    %v1963 = vunpack.c.l.b16 %v1889
    %v1964 = vunpack.c.h.b16 %v1889
    %v1965 = vunpack.c.l.b16 %v1890
    %v1966 = vunpack.c.h.b16 %v1890
    %v1967 = vunpack.c.l.b16 %v1891
    %v1968 = vunpack.c.h.b16 %v1891
    %v1969 = vunpack.c.l.b16 %v1892
    %v1970 = vunpack.c.h.b16 %v1892
    %v1971 = vunpack.c.l.b16 %v1893
    %v1972 = vunpack.c.h.b16 %v1893
    %v1973 = vunpack.c.l.b16 %v1894
    %v1974 = vunpack.c.h.b16 %v1894
    %v1975 = vunpack.c.l.b16 %v1895
    %v1976 = vunpack.c.h.b16 %v1895
    %v1977 = vunpack.c.l.b16 %v1896
    %v1978 = vunpack.c.h.b16 %v1896
    %v1979 = vunpack.c.l.b16 %v1897
    %v1980 = vunpack.c.h.b16 %v1897
    %v1981 = vunpack.c.l.b16 %v1898
    %v1982 = vunpack.c.h.b16 %v1898
    %v1983 = vunpack.c.l.b16 %v1899
    %v1984 = vunpack.c.h.b16 %v1899
    %v1985 = vunpack.c.l.b16 %v1900
    %v1986 = vunpack.c.h.b16 %v1900
    %v1987 = vunpack.c.l.b16 %v1901
    %v1988 = vunpack.c.h.b16 %v1901
    %v1989 = vunpack.c.l.b16 %v1902
    %v1990 = vunpack.c.h.b16 %v1902
    %v1991 = vunpack.c.l.b16 %v1903
    %v1992 = vunpack.c.h.b16 %v1903
    %v1993 = vunpack.c.l.b16 %v1904
    %v1994 = vunpack.c.h.b16 %v1904
    %v1995 = vunpack.c.l.b16 %v1905
    %v1996 = vunpack.c.h.b16 %v1905
    %v1997 = vunpack.c.l.b16 %v1906
    %v1998 = vunpack.c.h.b16 %v1906
    %v1999 = vunpack.c.l.b16 %v1907
    %v2000 = vunpack.c.h.b16 %v1907
    %v2001 = vunpack.c.l.b16 %v1908
    %v2002 = vunpack.c.h.b16 %v1908
    %v2003 = vunpack.c.l.b16 %v1909
    %v2004 = vunpack.c.h.b16 %v1909
    %v2005 = vunpack.c.l.b16 %v1910
    %v2006 = vunpack.c.h.b16 %v1910
    %v2007 = vunpack.c.l.b16 %v1911
    %v2008 = vunpack.c.h.b16 %v1911
    %v2009 = vunpack.c.l.b16 %v1912
    %v2010 = vunpack.c.h.b16 %v1912
    %v2011 = vunpack.c.l.b16 %v1913
    %v2012 = vunpack.c.h.b16 %v1913
    %v2013 = vunpack.c.l.b16 %v1914
    %v2014 = vunpack.c.h.b16 %v1914
    %v2015 = vunpack.c.l.b16 %v1915
    %v2016 = vunpack.c.h.b16 %v1915
    %v2017 = vunpack.c.l.b16 %v1916
    %v2018 = vunpack.c.h.b16 %v1916
    %v2019 = vunpack.c.l.b16 %v1917
    %v2020 = vunpack.c.h.b16 %v1917
    %v2021 = vunpack.c.l.b16 %v1918
    %v2022 = vunpack.c.h.b16 %v1918
    %v2023 = vunpack.c.l.b16 %v1919
    %v2024 = vunpack.c.h.b16 %v1919
    %v2025 = vpack.c.b16 %v1965, %v1961
    %v2026 = vpack.c.b16 %v1966, %v1962
    %v2027 = vpack.c.b16 %v1967, %v1963
    %v2028 = vpack.c.b16 %v1968, %v1964
    %v2029 = vpack.c.b16 %v1973, %v1969
    %v2030 = vpack.c.b16 %v1974, %v1970
    %v2031 = vpack.c.b16 %v1975, %v1971
    %v2032 = vpack.c.b16 %v1976, %v1972
    %v2033 = vpack.c.b16 %v1981, %v1977
    %v2034 = vpack.c.b16 %v1982, %v1978
    %v2035 = vpack.c.b16 %v1983, %v1979
    %v2036 = vpack.c.b16 %v1984, %v1980
    %v2037 = vpack.c.b16 %v1989, %v1985
    %v2038 = vpack.c.b16 %v1990, %v1986
    %v2039 = vpack.c.b16 %v1991, %v1987
    %v2040 = vpack.c.b16 %v1992, %v1988
    %v2041 = vpack.c.b16 %v1997, %v1993
    %v2042 = vpack.c.b16 %v1998, %v1994
    %v2043 = vpack.c.b16 %v1999, %v1995
    %v2044 = vpack.c.b16 %v2000, %v1996
    %v2045 = vpack.c.b16 %v2005, %v2001
    %v2046 = vpack.c.b16 %v2006, %v2002
    %v2047 = vpack.c.b16 %v2007, %v2003
    %v2048 = vpack.c.b16 %v2008, %v2004
    %v2049 = vpack.c.b16 %v2013, %v2009
    %v2050 = vpack.c.b16 %v2014, %v2010
    %v2051 = vpack.c.b16 %v2015, %v2011
    %v2052 = vpack.c.b16 %v2016, %v2012
    %v2053 = vpack.c.b16 %v2021, %v2017
    %v2054 = vpack.c.b16 %v2022, %v2018
    %v2055 = vpack.c.b16 %v2023, %v2019
    %v2056 = vpack.c.b16 %v2024, %v2020
    %2089 = vmatpush.bf16.msra.mxu0 %v2053
    %2090 = vmatpush.bf16.msra.mxu0 %v2049
    %2091 = vmatpush.bf16.msra.mxu0 %v2045
    %2092 = vmatpush.bf16.msra.mxu0 %v2041
    %2093 = vmatpush.bf16.msra.mxu0 %v2037
    %2094 = vmatpush.bf16.msra.mxu0 %v2033
    %2095 = vmatpush.bf16.msra.mxu0 %v2029
    %2096 = vmatpush.bf16.msra.mxu0 %v2025
    %2097 = vmatmul.bf16.gmra.mxu0 %v1928
    %v2098 = vpop.f32.mrf.mxu0
    %v2099 = vadd.f32 0.0, %v2098
    %v2100 = vpop.f32.mrf.mxu0
    %2101 = vdwg.mxu0
    %2102 = vmatpush.bf16.msra.mxu0 %v2054
    %2103 = vmatpush.bf16.msra.mxu0 %v2050
    %2104 = vmatpush.bf16.msra.mxu0 %v2046
    %2105 = vmatpush.bf16.msra.mxu0 %v2042
    %2106 = vmatpush.bf16.msra.mxu0 %v2038
    %2107 = vmatpush.bf16.msra.mxu0 %v2034
    %2108 = vmatpush.bf16.msra.mxu0 %v2030
    %2109 = vmatpush.bf16.msra.mxu0 %v2026
    %2110 = vmatmul.bf16.gmra.mxu0 %v1928
    %v2111 = vpop.f32.mrf.mxu0
    %v2112 = vadd.f32 0.0, %v2111
    %v2113 = vpop.f32.mrf.mxu0
    %2114 = vdwg.mxu0
    %2115 = vmatpush.bf16.msra.mxu0 %v2055
    %2116 = vmatpush.bf16.msra.mxu0 %v2051
    %2117 = vmatpush.bf16.msra.mxu0 %v2047
    %2118 = vmatpush.bf16.msra.mxu0 %v2043
    %2119 = vmatpush.bf16.msra.mxu0 %v2039
    %2120 = vmatpush.bf16.msra.mxu0 %v2035
    %2121 = vmatpush.bf16.msra.mxu0 %v2031
    %2122 = vmatpush.bf16.msra.mxu0 %v2027
    %2123 = vmatmul.bf16.gmra.mxu0 %v1928
    %v2124 = vpop.f32.mrf.mxu0
    %v2125 = vadd.f32 0.0, %v2124
    %v2126 = vpop.f32.mrf.mxu0
    %2127 = vdwg.mxu0
    %2128 = vmatpush.bf16.msra.mxu0 %v2056
    %2129 = vmatpush.bf16.msra.mxu0 %v2052
    %2130 = vmatpush.bf16.msra.mxu0 %v2048
    %2131 = vmatpush.bf16.msra.mxu0 %v2044
    %2132 = vmatpush.bf16.msra.mxu0 %v2040
    %2133 = vmatpush.bf16.msra.mxu0 %v2036
    %2134 = vmatpush.bf16.msra.mxu0 %v2032
    %2135 = vmatpush.bf16.msra.mxu0 %v2028
    %2136 = vmatmul.bf16.gmra.mxu0 %v1928
    %v2137 = vpop.f32.mrf.mxu0
    %v2138 = vadd.f32 0.0, %v2137
    %v2139 = vpop.f32.mrf.mxu0
    %2140 = vdwg.mxu0
    %v2141 = vadd.f32 %v1924, %v2099
    %v2142 = vadd.f32 %v1925, %v2112
    %v2143 = vadd.f32 %v1926, %v2125
    %v2144 = vadd.f32 %v1927, %v2138
    %v2145 = vmul.f32 %v2141, 0.5
    %v2146 = vmul.f32 %v2142, 0.5
    %v2147 = vmul.f32 %v2143, 0.5
    %v2148 = vtanh.pop %v2145
    %v2149 = vtanh.pop %v2146
    %v2150 = vtanh.pop %v2147
    %v2151 = vmul.f32 %v2148, 0.5
    %v2152 = vmul.f32 %v2149, 0.5
    %v2153 = vmul.f32 %v2150, 0.5
    %v2154 = vadd.f32 %v2151, 0.5
    %v2155 = vadd.f32 %v2152, 0.5
    %v2156 = vadd.f32 %v2153, 0.5
    %v2157 = vtanh.pop %v2144
    %v2158 = vmul.f32 %v2155, %v1923
    %v2159 = vmul.f32 %v2154, %v2157
    %v2160 = vadd.f32 %v2158, %v2159
    %v2161 = vtanh.pop %v2160
    %v2162 = vmul.f32 %v2156, %v2161
    %2163 = vst [vmem:[#allocation2] sm:$0xff] %v2162
    %v2164 = vld [vmem:[%s935] sm:$0xff]
    %v2165 = vld [vmem:[%s935 + $0x8] sm:$0xff]
    %v2166 = vld [vmem:[%s935 + $0x10] sm:$0xff]
    %v2167 = vld [vmem:[%s935 + $0x18] sm:$0xff]
    %v2168 = vpack.c.bf16 %v2162, %v2162
    %2169 = vmatpush.bf16.msra.mxu0 %v2053
    %2170 = vmatpush.bf16.msra.mxu0 %v2049
    %2171 = vmatpush.bf16.msra.mxu0 %v2045
    %2172 = vmatpush.bf16.msra.mxu0 %v2041
    %2173 = vmatpush.bf16.msra.mxu0 %v2037
    %2174 = vmatpush.bf16.msra.mxu0 %v2033
    %2175 = vmatpush.bf16.msra.mxu0 %v2029
    %2176 = vmatpush.bf16.msra.mxu0 %v2025
    %2177 = vmatmul.bf16.gmra.mxu0 %v2168
    %v2178 = vpop.f32.mrf.mxu0
    %v2179 = vadd.f32 0.0, %v2178
    %v2180 = vpop.f32.mrf.mxu0
    %2181 = vdwg.mxu0
    %2182 = vmatpush.bf16.msra.mxu0 %v2054
    %2183 = vmatpush.bf16.msra.mxu0 %v2050
    %2184 = vmatpush.bf16.msra.mxu0 %v2046
    %2185 = vmatpush.bf16.msra.mxu0 %v2042
    %2186 = vmatpush.bf16.msra.mxu0 %v2038
    %2187 = vmatpush.bf16.msra.mxu0 %v2034
    %2188 = vmatpush.bf16.msra.mxu0 %v2030
    %2189 = vmatpush.bf16.msra.mxu0 %v2026
    %2190 = vmatmul.bf16.gmra.mxu0 %v2168
    %v2191 = vpop.f32.mrf.mxu0
    %v2192 = vadd.f32 0.0, %v2191
    %v2193 = vpop.f32.mrf.mxu0
    %2194 = vdwg.mxu0
    %2195 = vmatpush.bf16.msra.mxu0 %v2055
    %2196 = vmatpush.bf16.msra.mxu0 %v2051
    %2197 = vmatpush.bf16.msra.mxu0 %v2047
    %2198 = vmatpush.bf16.msra.mxu0 %v2043
    %2199 = vmatpush.bf16.msra.mxu0 %v2039
    %2200 = vmatpush.bf16.msra.mxu0 %v2035
    %2201 = vmatpush.bf16.msra.mxu0 %v2031
    %2202 = vmatpush.bf16.msra.mxu0 %v2027
    %2203 = vmatmul.bf16.gmra.mxu0 %v2168
    %v2204 = vpop.f32.mrf.mxu0
    %v2205 = vadd.f32 0.0, %v2204
    %v2206 = vpop.f32.mrf.mxu0
    %2207 = vdwg.mxu0
    %2208 = vmatpush.bf16.msra.mxu0 %v2056
    %2209 = vmatpush.bf16.msra.mxu0 %v2052
    %2210 = vmatpush.bf16.msra.mxu0 %v2048
    %2211 = vmatpush.bf16.msra.mxu0 %v2044
    %2212 = vmatpush.bf16.msra.mxu0 %v2040
    %2213 = vmatpush.bf16.msra.mxu0 %v2036
    %2214 = vmatpush.bf16.msra.mxu0 %v2032
    %2215 = vmatpush.bf16.msra.mxu0 %v2028
    %2216 = vmatmul.bf16.gmra.mxu0 %v2168
    %v2217 = vpop.f32.mrf.mxu0
    %v2218 = vadd.f32 0.0, %v2217
    %v2219 = vpop.f32.mrf.mxu0
    %2220 = vdwg.mxu0
    %v2221 = vadd.f32 %v2164, %v2179
    %v2222 = vadd.f32 %v2165, %v2192
    %v2223 = vadd.f32 %v2166, %v2205
    %v2224 = vadd.f32 %v2167, %v2218
    %v2225 = vmul.f32 %v2221, 0.5
    %v2226 = vmul.f32 %v2222, 0.5
    %v2227 = vmul.f32 %v2223, 0.5
    %v2228 = vtanh.pop %v2225
    %v2229 = vtanh.pop %v2226
    %v2230 = vtanh.pop %v2227
    %v2231 = vmul.f32 %v2228, 0.5
    %v2232 = vmul.f32 %v2229, 0.5
    %v2233 = vmul.f32 %v2230, 0.5
    %v2234 = vadd.f32 %v2231, 0.5
    %v2235 = vadd.f32 %v2232, 0.5
    %v2236 = vadd.f32 %v2233, 0.5
    %v2237 = vtanh.pop %v2224
    %v2238 = vmul.f32 %v2235, %v2160
    %v2239 = vmul.f32 %v2234, %v2237
    %v2240 = vadd.f32 %v2238, %v2239
    %v2241 = vtanh.pop %v2240
    %v2242 = vmul.f32 %v2236, %v2241
    %2243 = vst [vmem:[%s1015] sm:$0xff] %v2242
    %v2244 = vld [vmem:[%s1019] sm:$0xff]
    %v2245 = vld [vmem:[%s1019 + $0x8] sm:$0xff]
    %v2246 = vld [vmem:[%s1019 + $0x10] sm:$0xff]
    %v2247 = vld [vmem:[%s1019 + $0x18] sm:$0xff]
    %v2248 = vpack.c.bf16 %v2242, %v2242
    %2249 = vmatpush.bf16.msra.mxu0 %v2053
    %2250 = vmatpush.bf16.msra.mxu0 %v2049
    %2251 = vmatpush.bf16.msra.mxu0 %v2045
    %2252 = vmatpush.bf16.msra.mxu0 %v2041
    %2253 = vmatpush.bf16.msra.mxu0 %v2037
    %2254 = vmatpush.bf16.msra.mxu0 %v2033
    %2255 = vmatpush.bf16.msra.mxu0 %v2029
    %2256 = vmatpush.bf16.msra.mxu0 %v2025
    %2257 = vmatmul.bf16.gmra.mxu0 %v2248
    %v2258 = vpop.f32.mrf.mxu0
    %v2259 = vadd.f32 0.0, %v2258
    %v2260 = vpop.f32.mrf.mxu0
    %2261 = vdwg.mxu0
    %2262 = vmatpush.bf16.msra.mxu0 %v2054
    %2263 = vmatpush.bf16.msra.mxu0 %v2050
    %2264 = vmatpush.bf16.msra.mxu0 %v2046
    %2265 = vmatpush.bf16.msra.mxu0 %v2042
    %2266 = vmatpush.bf16.msra.mxu0 %v2038
    %2267 = vmatpush.bf16.msra.mxu0 %v2034
    %2268 = vmatpush.bf16.msra.mxu0 %v2030
    %2269 = vmatpush.bf16.msra.mxu0 %v2026
    %2270 = vmatmul.bf16.gmra.mxu0 %v2248
    %v2271 = vpop.f32.mrf.mxu0
    %v2272 = vadd.f32 0.0, %v2271
    %v2273 = vpop.f32.mrf.mxu0
    %2274 = vdwg.mxu0
    %2275 = vmatpush.bf16.msra.mxu0 %v2055
    %2276 = vmatpush.bf16.msra.mxu0 %v2051
    %2277 = vmatpush.bf16.msra.mxu0 %v2047
    %2278 = vmatpush.bf16.msra.mxu0 %v2043
    %2279 = vmatpush.bf16.msra.mxu0 %v2039
    %2280 = vmatpush.bf16.msra.mxu0 %v2035
    %2281 = vmatpush.bf16.msra.mxu0 %v2031
    %2282 = vmatpush.bf16.msra.mxu0 %v2027
    %2283 = vmatmul.bf16.gmra.mxu0 %v2248
    %v2284 = vpop.f32.mrf.mxu0
    %v2285 = vadd.f32 0.0, %v2284
    %v2286 = vpop.f32.mrf.mxu0
    %2287 = vdwg.mxu0
    %2288 = vmatpush.bf16.msra.mxu0 %v2056
    %2289 = vmatpush.bf16.msra.mxu0 %v2052
    %2290 = vmatpush.bf16.msra.mxu0 %v2048
    %2291 = vmatpush.bf16.msra.mxu0 %v2044
    %2292 = vmatpush.bf16.msra.mxu0 %v2040
    %2293 = vmatpush.bf16.msra.mxu0 %v2036
    %2294 = vmatpush.bf16.msra.mxu0 %v2032
    %2295 = vmatpush.bf16.msra.mxu0 %v2028
    %2296 = vmatmul.bf16.gmra.mxu0 %v2248
    %v2297 = vpop.f32.mrf.mxu0
    %v2298 = vadd.f32 0.0, %v2297
    %v2299 = vpop.f32.mrf.mxu0
    %2300 = vdwg.mxu0
    %v2301 = vadd.f32 %v2244, %v2259
    %v2302 = vadd.f32 %v2245, %v2272
    %v2303 = vadd.f32 %v2246, %v2285
    %v2304 = vadd.f32 %v2247, %v2298
    %v2305 = vmul.f32 %v2301, 0.5
    %v2306 = vmul.f32 %v2302, 0.5
    %v2307 = vmul.f32 %v2303, 0.5
    %v2308 = vtanh.pop %v2305
    %v2309 = vtanh.pop %v2306
    %v2310 = vtanh.pop %v2307
    %v2311 = vmul.f32 %v2308, 0.5
    %v2312 = vmul.f32 %v2309, 0.5
    %v2313 = vmul.f32 %v2310, 0.5
    %v2314 = vadd.f32 %v2311, 0.5
    %v2315 = vadd.f32 %v2312, 0.5
    %v2316 = vadd.f32 %v2313, 0.5
    %v2317 = vtanh.pop %v2304
    %v2318 = vmul.f32 %v2315, %v2240
    %v2319 = vmul.f32 %v2314, %v2317
    %v2320 = vadd.f32 %v2318, %v2319
    %v2321 = vtanh.pop %v2320
    %v2322 = vmul.f32 %v2316, %v2321
    %2323 = vst [vmem:[%s1099] sm:$0xff] %v2322
    %v2324 = vld [vmem:[%s1103] sm:$0xff]
    %v2325 = vld [vmem:[%s1103 + $0x8] sm:$0xff]
    %v2326 = vld [vmem:[%s1103 + $0x10] sm:$0xff]
    %v2327 = vld [vmem:[%s1103 + $0x18] sm:$0xff]
    %v2328 = vpack.c.bf16 %v2322, %v2322
    %2329 = vmatpush.bf16.msra.mxu0 %v2053
    %2330 = vmatpush.bf16.msra.mxu0 %v2049
    %2331 = vmatpush.bf16.msra.mxu0 %v2045
    %2332 = vmatpush.bf16.msra.mxu0 %v2041
    %2333 = vmatpush.bf16.msra.mxu0 %v2037
    %2334 = vmatpush.bf16.msra.mxu0 %v2033
    %2335 = vmatpush.bf16.msra.mxu0 %v2029
    %2336 = vmatpush.bf16.msra.mxu0 %v2025
    %2337 = vmatmul.bf16.gmra.mxu0 %v2328
    %v2338 = vpop.f32.mrf.mxu0
    %v2339 = vadd.f32 0.0, %v2338
    %v2340 = vpop.f32.mrf.mxu0
    %2341 = vdwg.mxu0
    %2342 = vmatpush.bf16.msra.mxu0 %v2054
    %2343 = vmatpush.bf16.msra.mxu0 %v2050
    %2344 = vmatpush.bf16.msra.mxu0 %v2046
    %2345 = vmatpush.bf16.msra.mxu0 %v2042
    %2346 = vmatpush.bf16.msra.mxu0 %v2038
    %2347 = vmatpush.bf16.msra.mxu0 %v2034
    %2348 = vmatpush.bf16.msra.mxu0 %v2030
    %2349 = vmatpush.bf16.msra.mxu0 %v2026
    %2350 = vmatmul.bf16.gmra.mxu0 %v2328
    %v2351 = vpop.f32.mrf.mxu0
    %v2352 = vadd.f32 0.0, %v2351
    %v2353 = vpop.f32.mrf.mxu0
    %2354 = vdwg.mxu0
    %2355 = vmatpush.bf16.msra.mxu0 %v2055
    %2356 = vmatpush.bf16.msra.mxu0 %v2051
    %2357 = vmatpush.bf16.msra.mxu0 %v2047
    %2358 = vmatpush.bf16.msra.mxu0 %v2043
    %2359 = vmatpush.bf16.msra.mxu0 %v2039
    %2360 = vmatpush.bf16.msra.mxu0 %v2035
    %2361 = vmatpush.bf16.msra.mxu0 %v2031
    %2362 = vmatpush.bf16.msra.mxu0 %v2027
    %2363 = vmatmul.bf16.gmra.mxu0 %v2328
    %v2364 = vpop.f32.mrf.mxu0
    %v2365 = vadd.f32 0.0, %v2364
    %v2366 = vpop.f32.mrf.mxu0
    %2367 = vdwg.mxu0
    %2368 = vmatpush.bf16.msra.mxu0 %v2056
    %2369 = vmatpush.bf16.msra.mxu0 %v2052
    %2370 = vmatpush.bf16.msra.mxu0 %v2048
    %2371 = vmatpush.bf16.msra.mxu0 %v2044
    %2372 = vmatpush.bf16.msra.mxu0 %v2040
    %2373 = vmatpush.bf16.msra.mxu0 %v2036
    %2374 = vmatpush.bf16.msra.mxu0 %v2032
    %2375 = vmatpush.bf16.msra.mxu0 %v2028
    %2376 = vmatmul.bf16.gmra.mxu0 %v2328
    %v2377 = vpop.f32.mrf.mxu0
    %v2378 = vadd.f32 0.0, %v2377
    %v2379 = vpop.f32.mrf.mxu0
    %2380 = vdwg.mxu0
    %v2381 = vadd.f32 %v2324, %v2339
    %v2382 = vadd.f32 %v2325, %v2352
    %v2383 = vadd.f32 %v2326, %v2365
    %v2384 = vadd.f32 %v2327, %v2378
    %v2385 = vmul.f32 %v2381, 0.5
    %v2386 = vmul.f32 %v2382, 0.5
    %v2387 = vmul.f32 %v2383, 0.5
    %v2388 = vtanh.pop %v2385
    %v2389 = vtanh.pop %v2386
    %v2390 = vtanh.pop %v2387
    %v2391 = vmul.f32 %v2388, 0.5
    %v2392 = vmul.f32 %v2389, 0.5
    %v2393 = vmul.f32 %v2390, 0.5
    %v2394 = vadd.f32 %v2391, 0.5
    %v2395 = vadd.f32 %v2392, 0.5
    %v2396 = vadd.f32 %v2393, 0.5
    %v2397 = vtanh.pop %v2384
    %v2398 = vmul.f32 %v2395, %v2320
    %v2399 = vmul.f32 %v2394, %v2397
    %v2400 = vadd.f32 %v2398, %v2399
    %v2401 = vtanh.pop %v2400
    %v2402 = vmul.f32 %v2396, %v2401
    %2403 = vst [vmem:[%s1183] sm:$0xff] %v2402
    %v2404 = vld [vmem:[%s1187] sm:$0xff]
    %v2405 = vld [vmem:[%s1187 + $0x8] sm:$0xff]
    %v2406 = vld [vmem:[%s1187 + $0x10] sm:$0xff]
    %v2407 = vld [vmem:[%s1187 + $0x18] sm:$0xff]
    %v2408 = vpack.c.bf16 %v2402, %v2402
    %2409 = vmatpush.bf16.msra.mxu0 %v2053
    %2410 = vmatpush.bf16.msra.mxu0 %v2049
    %2411 = vmatpush.bf16.msra.mxu0 %v2045
    %2412 = vmatpush.bf16.msra.mxu0 %v2041
    %2413 = vmatpush.bf16.msra.mxu0 %v2037
    %2414 = vmatpush.bf16.msra.mxu0 %v2033
    %2415 = vmatpush.bf16.msra.mxu0 %v2029
    %2416 = vmatpush.bf16.msra.mxu0 %v2025
    %2417 = vmatmul.bf16.gmra.mxu0 %v2408
    %v2418 = vpop.f32.mrf.mxu0
    %v2419 = vadd.f32 0.0, %v2418
    %v2420 = vpop.f32.mrf.mxu0
    %2421 = vdwg.mxu0
    %2422 = vmatpush.bf16.msra.mxu0 %v2054
    %2423 = vmatpush.bf16.msra.mxu0 %v2050
    %2424 = vmatpush.bf16.msra.mxu0 %v2046
    %2425 = vmatpush.bf16.msra.mxu0 %v2042
    %2426 = vmatpush.bf16.msra.mxu0 %v2038
    %2427 = vmatpush.bf16.msra.mxu0 %v2034
    %2428 = vmatpush.bf16.msra.mxu0 %v2030
    %2429 = vmatpush.bf16.msra.mxu0 %v2026
    %2430 = vmatmul.bf16.gmra.mxu0 %v2408
    %v2431 = vpop.f32.mrf.mxu0
    %v2432 = vadd.f32 0.0, %v2431
    %v2433 = vpop.f32.mrf.mxu0
    %2434 = vdwg.mxu0
    %2435 = vmatpush.bf16.msra.mxu0 %v2055
    %2436 = vmatpush.bf16.msra.mxu0 %v2051
    %2437 = vmatpush.bf16.msra.mxu0 %v2047
    %2438 = vmatpush.bf16.msra.mxu0 %v2043
    %2439 = vmatpush.bf16.msra.mxu0 %v2039
    %2440 = vmatpush.bf16.msra.mxu0 %v2035
    %2441 = vmatpush.bf16.msra.mxu0 %v2031
    %2442 = vmatpush.bf16.msra.mxu0 %v2027
    %2443 = vmatmul.bf16.gmra.mxu0 %v2408
    %v2444 = vpop.f32.mrf.mxu0
    %v2445 = vadd.f32 0.0, %v2444
    %v2446 = vpop.f32.mrf.mxu0
    %2447 = vdwg.mxu0
    %2448 = vmatpush.bf16.msra.mxu0 %v2056
    %2449 = vmatpush.bf16.msra.mxu0 %v2052
    %2450 = vmatpush.bf16.msra.mxu0 %v2048
    %2451 = vmatpush.bf16.msra.mxu0 %v2044
    %2452 = vmatpush.bf16.msra.mxu0 %v2040
    %2453 = vmatpush.bf16.msra.mxu0 %v2036
    %2454 = vmatpush.bf16.msra.mxu0 %v2032
    %2455 = vmatpush.bf16.msra.mxu0 %v2028
    %2456 = vmatmul.bf16.gmra.mxu0 %v2408
    %v2457 = vpop.f32.mrf.mxu0
    %v2458 = vadd.f32 0.0, %v2457
    %v2459 = vpop.f32.mrf.mxu0
    %2460 = vdwg.mxu0
    %v2461 = vadd.f32 %v2404, %v2419
    %v2462 = vadd.f32 %v2405, %v2432
    %v2463 = vadd.f32 %v2406, %v2445
    %v2464 = vadd.f32 %v2407, %v2458
    %v2465 = vmul.f32 %v2461, 0.5
    %v2466 = vmul.f32 %v2462, 0.5
    %v2467 = vmul.f32 %v2463, 0.5
    %v2468 = vtanh.pop %v2465
    %v2469 = vtanh.pop %v2466
    %v2470 = vtanh.pop %v2467
    %v2471 = vmul.f32 %v2468, 0.5
    %v2472 = vmul.f32 %v2469, 0.5
    %v2473 = vmul.f32 %v2470, 0.5
    %v2474 = vadd.f32 %v2471, 0.5
    %v2475 = vadd.f32 %v2472, 0.5
    %v2476 = vadd.f32 %v2473, 0.5
    %v2477 = vtanh.pop %v2464
    %v2478 = vmul.f32 %v2475, %v2400
    %v2479 = vmul.f32 %v2474, %v2477
    %v2480 = vadd.f32 %v2478, %v2479
    %v2481 = vtanh.pop %v2480
    %v2482 = vmul.f32 %v2476, %v2481
    %2483 = vst [vmem:[%s1267] sm:$0xff] %v2482
    %v2484 = vld [vmem:[%s1271] sm:$0xff]
    %v2485 = vld [vmem:[%s1271 + $0x8] sm:$0xff]
    %v2486 = vld [vmem:[%s1271 + $0x10] sm:$0xff]
    %v2487 = vld [vmem:[%s1271 + $0x18] sm:$0xff]
    %v2488 = vpack.c.bf16 %v2482, %v2482
    %2489 = vmatpush.bf16.msra.mxu0 %v2053
    %2490 = vmatpush.bf16.msra.mxu0 %v2049
    %2491 = vmatpush.bf16.msra.mxu0 %v2045
    %2492 = vmatpush.bf16.msra.mxu0 %v2041
    %2493 = vmatpush.bf16.msra.mxu0 %v2037
    %2494 = vmatpush.bf16.msra.mxu0 %v2033
    %2495 = vmatpush.bf16.msra.mxu0 %v2029
    %2496 = vmatpush.bf16.msra.mxu0 %v2025
    %2497 = vmatmul.bf16.gmra.mxu0 %v2488
    %v2498 = vpop.f32.mrf.mxu0
    %v2499 = vadd.f32 0.0, %v2498
    %v2500 = vpop.f32.mrf.mxu0
    %2501 = vdwg.mxu0
    %2502 = vmatpush.bf16.msra.mxu0 %v2054
    %2503 = vmatpush.bf16.msra.mxu0 %v2050
    %2504 = vmatpush.bf16.msra.mxu0 %v2046
    %2505 = vmatpush.bf16.msra.mxu0 %v2042
    %2506 = vmatpush.bf16.msra.mxu0 %v2038
    %2507 = vmatpush.bf16.msra.mxu0 %v2034
    %2508 = vmatpush.bf16.msra.mxu0 %v2030
    %2509 = vmatpush.bf16.msra.mxu0 %v2026
    %2510 = vmatmul.bf16.gmra.mxu0 %v2488
    %v2511 = vpop.f32.mrf.mxu0
    %v2512 = vadd.f32 0.0, %v2511
    %v2513 = vpop.f32.mrf.mxu0
    %2514 = vdwg.mxu0
    %2515 = vmatpush.bf16.msra.mxu0 %v2055
    %2516 = vmatpush.bf16.msra.mxu0 %v2051
    %2517 = vmatpush.bf16.msra.mxu0 %v2047
    %2518 = vmatpush.bf16.msra.mxu0 %v2043
    %2519 = vmatpush.bf16.msra.mxu0 %v2039
    %2520 = vmatpush.bf16.msra.mxu0 %v2035
    %2521 = vmatpush.bf16.msra.mxu0 %v2031
    %2522 = vmatpush.bf16.msra.mxu0 %v2027
    %2523 = vmatmul.bf16.gmra.mxu0 %v2488
    %v2524 = vpop.f32.mrf.mxu0
    %v2525 = vadd.f32 0.0, %v2524
    %v2526 = vpop.f32.mrf.mxu0
    %2527 = vdwg.mxu0
    %2528 = vmatpush.bf16.msra.mxu0 %v2056
    %2529 = vmatpush.bf16.msra.mxu0 %v2052
    %2530 = vmatpush.bf16.msra.mxu0 %v2048
    %2531 = vmatpush.bf16.msra.mxu0 %v2044
    %2532 = vmatpush.bf16.msra.mxu0 %v2040
    %2533 = vmatpush.bf16.msra.mxu0 %v2036
    %2534 = vmatpush.bf16.msra.mxu0 %v2032
    %2535 = vmatpush.bf16.msra.mxu0 %v2028
    %2536 = vmatmul.bf16.gmra.mxu0 %v2488
    %v2537 = vpop.f32.mrf.mxu0
    %v2538 = vadd.f32 0.0, %v2537
    %v2539 = vpop.f32.mrf.mxu0
    %2540 = vdwg.mxu0
    %v2541 = vadd.f32 %v2484, %v2499
    %v2542 = vadd.f32 %v2485, %v2512
    %v2543 = vadd.f32 %v2486, %v2525
    %v2544 = vadd.f32 %v2487, %v2538
    %v2545 = vmul.f32 %v2541, 0.5
    %v2546 = vmul.f32 %v2542, 0.5
    %v2547 = vmul.f32 %v2543, 0.5
    %v2548 = vtanh.pop %v2545
    %v2549 = vtanh.pop %v2546
    %v2550 = vtanh.pop %v2547
    %v2551 = vmul.f32 %v2548, 0.5
    %v2552 = vmul.f32 %v2549, 0.5
    %v2553 = vmul.f32 %v2550, 0.5
    %v2554 = vadd.f32 %v2551, 0.5
    %v2555 = vadd.f32 %v2552, 0.5
    %v2556 = vadd.f32 %v2553, 0.5
    %v2557 = vtanh.pop %v2544
    %v2558 = vmul.f32 %v2555, %v2480
    %v2559 = vmul.f32 %v2554, %v2557
    %v2560 = vadd.f32 %v2558, %v2559
    %v2561 = vtanh.pop %v2560
    %v2562 = vmul.f32 %v2556, %v2561
    %2563 = vst [vmem:[%s1351] sm:$0xff] %v2562
    %v2564 = vld [vmem:[%s1355] sm:$0xff]
    %v2565 = vld [vmem:[%s1355 + $0x8] sm:$0xff]
    %v2566 = vld [vmem:[%s1355 + $0x10] sm:$0xff]
    %v2567 = vld [vmem:[%s1355 + $0x18] sm:$0xff]
    %v2568 = vpack.c.bf16 %v2562, %v2562
    %2569 = vmatpush.bf16.msra.mxu0 %v2053
    %2570 = vmatpush.bf16.msra.mxu0 %v2049
    %2571 = vmatpush.bf16.msra.mxu0 %v2045
    %2572 = vmatpush.bf16.msra.mxu0 %v2041
    %2573 = vmatpush.bf16.msra.mxu0 %v2037
    %2574 = vmatpush.bf16.msra.mxu0 %v2033
    %2575 = vmatpush.bf16.msra.mxu0 %v2029
    %2576 = vmatpush.bf16.msra.mxu0 %v2025
    %2577 = vmatmul.bf16.gmra.mxu0 %v2568
    %v2578 = vpop.f32.mrf.mxu0
    %v2579 = vadd.f32 0.0, %v2578
    %v2580 = vpop.f32.mrf.mxu0
    %2581 = vdwg.mxu0
    %2582 = vmatpush.bf16.msra.mxu0 %v2054
    %2583 = vmatpush.bf16.msra.mxu0 %v2050
    %2584 = vmatpush.bf16.msra.mxu0 %v2046
    %2585 = vmatpush.bf16.msra.mxu0 %v2042
    %2586 = vmatpush.bf16.msra.mxu0 %v2038
    %2587 = vmatpush.bf16.msra.mxu0 %v2034
    %2588 = vmatpush.bf16.msra.mxu0 %v2030
    %2589 = vmatpush.bf16.msra.mxu0 %v2026
    %2590 = vmatmul.bf16.gmra.mxu0 %v2568
    %v2591 = vpop.f32.mrf.mxu0
    %v2592 = vadd.f32 0.0, %v2591
    %v2593 = vpop.f32.mrf.mxu0
    %2594 = vdwg.mxu0
    %2595 = vmatpush.bf16.msra.mxu0 %v2055
    %2596 = vmatpush.bf16.msra.mxu0 %v2051
    %2597 = vmatpush.bf16.msra.mxu0 %v2047
    %2598 = vmatpush.bf16.msra.mxu0 %v2043
    %2599 = vmatpush.bf16.msra.mxu0 %v2039
    %2600 = vmatpush.bf16.msra.mxu0 %v2035
    %2601 = vmatpush.bf16.msra.mxu0 %v2031
    %2602 = vmatpush.bf16.msra.mxu0 %v2027
    %2603 = vmatmul.bf16.gmra.mxu0 %v2568
    %v2604 = vpop.f32.mrf.mxu0
    %v2605 = vadd.f32 0.0, %v2604
    %v2606 = vpop.f32.mrf.mxu0
    %2607 = vdwg.mxu0
    %2608 = vmatpush.bf16.msra.mxu0 %v2056
    %2609 = vmatpush.bf16.msra.mxu0 %v2052
    %2610 = vmatpush.bf16.msra.mxu0 %v2048
    %2611 = vmatpush.bf16.msra.mxu0 %v2044
    %2612 = vmatpush.bf16.msra.mxu0 %v2040
    %2613 = vmatpush.bf16.msra.mxu0 %v2036
    %2614 = vmatpush.bf16.msra.mxu0 %v2032
    %2615 = vmatpush.bf16.msra.mxu0 %v2028
    %2616 = vmatmul.bf16.gmra.mxu0 %v2568
    %v2617 = vpop.f32.mrf.mxu0
    %v2618 = vadd.f32 0.0, %v2617
    %v2619 = vpop.f32.mrf.mxu0
    %2620 = vdwg.mxu0
    %v2621 = vadd.f32 %v2564, %v2579
    %v2622 = vadd.f32 %v2565, %v2592
    %v2623 = vadd.f32 %v2566, %v2605
    %v2624 = vadd.f32 %v2567, %v2618
    %v2625 = vmul.f32 %v2621, 0.5
    %v2626 = vmul.f32 %v2622, 0.5
    %v2627 = vmul.f32 %v2623, 0.5
    %v2628 = vtanh.pop %v2625
    %v2629 = vtanh.pop %v2626
    %v2630 = vtanh.pop %v2627
    %v2631 = vmul.f32 %v2628, 0.5
    %v2632 = vmul.f32 %v2629, 0.5
    %v2633 = vmul.f32 %v2630, 0.5
    %v2634 = vadd.f32 %v2631, 0.5
    %v2635 = vadd.f32 %v2632, 0.5
    %v2636 = vadd.f32 %v2633, 0.5
    %v2637 = vtanh.pop %v2624
    %v2638 = vmul.f32 %v2635, %v2560
    %v2639 = vmul.f32 %v2634, %v2637
    %v2640 = vadd.f32 %v2638, %v2639
    %v2641 = vtanh.pop %v2640
    %v2642 = vmul.f32 %v2636, %v2641
    %2643 = vst [vmem:[%s1435] sm:$0xff] %v2642
    %v2644 = vld [vmem:[%s1439] sm:$0xff]
    %v2645 = vld [vmem:[%s1439 + $0x8] sm:$0xff]
    %v2646 = vld [vmem:[%s1439 + $0x10] sm:$0xff]
    %v2647 = vld [vmem:[%s1439 + $0x18] sm:$0xff]
    %v2648 = vpack.c.bf16 %v2642, %v2642
    %2649 = vmatpush.bf16.msra.mxu0 %v2053
    %2650 = vmatpush.bf16.msra.mxu0 %v2049
    %2651 = vmatpush.bf16.msra.mxu0 %v2045
    %2652 = vmatpush.bf16.msra.mxu0 %v2041
    %2653 = vmatpush.bf16.msra.mxu0 %v2037
    %2654 = vmatpush.bf16.msra.mxu0 %v2033
    %2655 = vmatpush.bf16.msra.mxu0 %v2029
    %2656 = vmatpush.bf16.msra.mxu0 %v2025
    %2657 = vmatmul.bf16.gmra.mxu0 %v2648
    %v2658 = vpop.f32.mrf.mxu0
    %v2659 = vadd.f32 0.0, %v2658
    %v2660 = vpop.f32.mrf.mxu0
    %2661 = vdwg.mxu0
    %2662 = vmatpush.bf16.msra.mxu0 %v2054
    %2663 = vmatpush.bf16.msra.mxu0 %v2050
    %2664 = vmatpush.bf16.msra.mxu0 %v2046
    %2665 = vmatpush.bf16.msra.mxu0 %v2042
    %2666 = vmatpush.bf16.msra.mxu0 %v2038
    %2667 = vmatpush.bf16.msra.mxu0 %v2034
    %2668 = vmatpush.bf16.msra.mxu0 %v2030
    %2669 = vmatpush.bf16.msra.mxu0 %v2026
    %2670 = vmatmul.bf16.gmra.mxu0 %v2648
    %v2671 = vpop.f32.mrf.mxu0
    %v2672 = vadd.f32 0.0, %v2671
    %v2673 = vpop.f32.mrf.mxu0
    %2674 = vdwg.mxu0
    %2675 = vmatpush.bf16.msra.mxu0 %v2055
    %2676 = vmatpush.bf16.msra.mxu0 %v2051
    %2677 = vmatpush.bf16.msra.mxu0 %v2047
    %2678 = vmatpush.bf16.msra.mxu0 %v2043
    %2679 = vmatpush.bf16.msra.mxu0 %v2039
    %2680 = vmatpush.bf16.msra.mxu0 %v2035
    %2681 = vmatpush.bf16.msra.mxu0 %v2031
    %2682 = vmatpush.bf16.msra.mxu0 %v2027
    %2683 = vmatmul.bf16.gmra.mxu0 %v2648
    %v2684 = vpop.f32.mrf.mxu0
    %v2685 = vadd.f32 0.0, %v2684
    %v2686 = vpop.f32.mrf.mxu0
    %2687 = vdwg.mxu0
    %2688 = vmatpush.bf16.msra.mxu0 %v2056
    %2689 = vmatpush.bf16.msra.mxu0 %v2052
    %2690 = vmatpush.bf16.msra.mxu0 %v2048
    %2691 = vmatpush.bf16.msra.mxu0 %v2044
    %2692 = vmatpush.bf16.msra.mxu0 %v2040
    %2693 = vmatpush.bf16.msra.mxu0 %v2036
    %2694 = vmatpush.bf16.msra.mxu0 %v2032
    %2695 = vmatpush.bf16.msra.mxu0 %v2028
    %2696 = vmatmul.bf16.gmra.mxu0 %v2648
    %v2697 = vpop.f32.mrf.mxu0
    %v2698 = vadd.f32 0.0, %v2697
    %v2699 = vpop.f32.mrf.mxu0
    %2700 = vdwg.mxu0
    %v2701 = vadd.f32 %v2644, %v2659
    %v2702 = vadd.f32 %v2645, %v2672
    %v2703 = vadd.f32 %v2646, %v2685
    %v2704 = vadd.f32 %v2647, %v2698
    %v2705 = vmul.f32 %v2701, 0.5
    %v2706 = vmul.f32 %v2702, 0.5
    %v2707 = vmul.f32 %v2703, 0.5
    %v2708 = vtanh.pop %v2705
    %v2709 = vtanh.pop %v2706
    %v2710 = vtanh.pop %v2707
    %v2711 = vmul.f32 %v2708, 0.5
    %v2712 = vmul.f32 %v2709, 0.5
    %v2713 = vmul.f32 %v2710, 0.5
    %v2714 = vadd.f32 %v2711, 0.5
    %v2715 = vadd.f32 %v2712, 0.5
    %v2716 = vadd.f32 %v2713, 0.5
    %v2717 = vtanh.pop %v2704
    %v2718 = vmul.f32 %v2715, %v2640
    %v2719 = vmul.f32 %v2714, %v2717
    %v2720 = vadd.f32 %v2718, %v2719
    %v2721 = vtanh.pop %v2720
    %v2722 = vmul.f32 %v2716, %v2721
    %2723 = vst [vmem:[%s1519] sm:$0xff] %v2722
    %s2724 = scalar_lea.vmem [#allocation16], 8
    %2725 = vst [vmem:[%s2724] sm:$0xff] %v2722
    %s2726 = scalar_lea.vmem [#allocation18], 8
    %2727 = vst [vmem:[%s2726] sm:$0xff] %v2720
    %v2728 = vld [vmem:[#allocation2] sm:$0xff]
    %v2729 = vld [vmem:[#allocation2 + $0x8] sm:$0xff]
    %v2730 = vld [vmem:[#allocation2 + $0x10] sm:$0xff]
    %v2731 = vld [vmem:[#allocation2 + $0x18] sm:$0xff]
    %v2732 = vld [vmem:[#allocation2 + $0x20] sm:$0xff]
    %v2733 = vld [vmem:[#allocation2 + $0x28] sm:$0xff]
    %v2734 = vld [vmem:[#allocation2 + $0x30] sm:$0xff]
    %v2735 = vld [vmem:[#allocation2 + $0x38] sm:$0xff]
    %v2736 = vpack.c.bf16 %v2729, %v2728
    %v2737 = vpack.c.bf16 %v2731, %v2730
    %v2738 = vpack.c.bf16 %v2733, %v2732
    %v2739 = vpack.c.bf16 %v2735, %v2734
    %s2740 = scalar_lea.vmem [#allocation9], 512
    %v2741 = vld [vmem:[%s2740] sm:$0xff]
    %v2742 = vld [vmem:[%s2740 + $0x8] sm:$0xff]
    %v2743 = vld [vmem:[%s2740 + $0x10] sm:$0xff]
    %v2744 = vld [vmem:[%s2740 + $0x18] sm:$0xff]
    %v2745 = vld [vmem:[%s2740 + $0x20] sm:$0xff]
    %v2746 = vld [vmem:[%s2740 + $0x28] sm:$0xff]
    %v2747 = vld [vmem:[%s2740 + $0x30] sm:$0xff]
    %v2748 = vld [vmem:[%s2740 + $0x38] sm:$0xff]
    %v2749 = vld [vmem:[%s2740 + $0x40] sm:$0xff]
    %v2750 = vld [vmem:[%s2740 + $0x48] sm:$0xff]
    %v2751 = vld [vmem:[%s2740 + $0x50] sm:$0xff]
    %v2752 = vld [vmem:[%s2740 + $0x58] sm:$0xff]
    %v2753 = vld [vmem:[%s2740 + $0x60] sm:$0xff]
    %v2754 = vld [vmem:[%s2740 + $0x68] sm:$0xff]
    %v2755 = vld [vmem:[%s2740 + $0x70] sm:$0xff]
    %v2756 = vld [vmem:[%s2740 + $0x78] sm:$0xff]
    %v2757 = vld [vmem:[%s2740 + $0x80] sm:$0xff]
    %v2758 = vld [vmem:[%s2740 + $0x88] sm:$0xff]
    %v2759 = vld [vmem:[%s2740 + $0x90] sm:$0xff]
    %v2760 = vld [vmem:[%s2740 + $0x98] sm:$0xff]
    %v2761 = vld [vmem:[%s2740 + $0xa0] sm:$0xff]
    %v2762 = vld [vmem:[%s2740 + $0xa8] sm:$0xff]
    %v2763 = vld [vmem:[%s2740 + $0xb0] sm:$0xff]
    %v2764 = vld [vmem:[%s2740 + $0xb8] sm:$0xff]
    %v2765 = vld [vmem:[%s2740 + $0xc0] sm:$0xff]
    %v2766 = vld [vmem:[%s2740 + $0xc8] sm:$0xff]
    %v2767 = vld [vmem:[%s2740 + $0xd0] sm:$0xff]
    %v2768 = vld [vmem:[%s2740 + $0xd8] sm:$0xff]
    %v2769 = vld [vmem:[%s2740 + $0xe0] sm:$0xff]
    %v2770 = vld [vmem:[%s2740 + $0xe8] sm:$0xff]
    %v2771 = vld [vmem:[%s2740 + $0xf0] sm:$0xff]
    %v2772 = vld [vmem:[%s2740 + $0xf8] sm:$0xff]
    %s2773 = scalar_lea.vmem [#allocation12], 8
    %v2774 = vld [vmem:[%s2773] sm:$0xf]
    %v2776 = vperm.slane %v2774, 0
    %v2777 = vperm.slane %v2774, 1
    %v2778 = vperm.slane %v2774, 2
    %v2779 = vperm.slane %v2774, 3
    %v2816 = vunpack.c.l.b16 %v2741
    %v2817 = vunpack.c.h.b16 %v2741
    %v2818 = vunpack.c.l.b16 %v2742
    %v2819 = vunpack.c.h.b16 %v2742
    %v2820 = vunpack.c.l.b16 %v2743
    %v2821 = vunpack.c.h.b16 %v2743
    %v2822 = vunpack.c.l.b16 %v2744
    %v2823 = vunpack.c.h.b16 %v2744
    %v2824 = vunpack.c.l.b16 %v2745
    %v2825 = vunpack.c.h.b16 %v2745
    %v2826 = vunpack.c.l.b16 %v2746
    %v2827 = vunpack.c.h.b16 %v2746
    %v2828 = vunpack.c.l.b16 %v2747
    %v2829 = vunpack.c.h.b16 %v2747
    %v2830 = vunpack.c.l.b16 %v2748
    %v2831 = vunpack.c.h.b16 %v2748
    %v2832 = vunpack.c.l.b16 %v2749
    %v2833 = vunpack.c.h.b16 %v2749
    %v2834 = vunpack.c.l.b16 %v2750
    %v2835 = vunpack.c.h.b16 %v2750
    %v2836 = vunpack.c.l.b16 %v2751
    %v2837 = vunpack.c.h.b16 %v2751
    %v2838 = vunpack.c.l.b16 %v2752
    %v2839 = vunpack.c.h.b16 %v2752
    %v2840 = vunpack.c.l.b16 %v2753
    %v2841 = vunpack.c.h.b16 %v2753
    %v2842 = vunpack.c.l.b16 %v2754
    %v2843 = vunpack.c.h.b16 %v2754
    %v2844 = vunpack.c.l.b16 %v2755
    %v2845 = vunpack.c.h.b16 %v2755
    %v2846 = vunpack.c.l.b16 %v2756
    %v2847 = vunpack.c.h.b16 %v2756
    %v2848 = vunpack.c.l.b16 %v2757
    %v2849 = vunpack.c.h.b16 %v2757
    %v2850 = vunpack.c.l.b16 %v2758
    %v2851 = vunpack.c.h.b16 %v2758
    %v2852 = vunpack.c.l.b16 %v2759
    %v2853 = vunpack.c.h.b16 %v2759
    %v2854 = vunpack.c.l.b16 %v2760
    %v2855 = vunpack.c.h.b16 %v2760
    %v2856 = vunpack.c.l.b16 %v2761
    %v2857 = vunpack.c.h.b16 %v2761
    %v2858 = vunpack.c.l.b16 %v2762
    %v2859 = vunpack.c.h.b16 %v2762
    %v2860 = vunpack.c.l.b16 %v2763
    %v2861 = vunpack.c.h.b16 %v2763
    %v2862 = vunpack.c.l.b16 %v2764
    %v2863 = vunpack.c.h.b16 %v2764
    %v2864 = vunpack.c.l.b16 %v2765
    %v2865 = vunpack.c.h.b16 %v2765
    %v2866 = vunpack.c.l.b16 %v2766
    %v2867 = vunpack.c.h.b16 %v2766
    %v2868 = vunpack.c.l.b16 %v2767
    %v2869 = vunpack.c.h.b16 %v2767
    %v2870 = vunpack.c.l.b16 %v2768
    %v2871 = vunpack.c.h.b16 %v2768
    %v2872 = vunpack.c.l.b16 %v2769
    %v2873 = vunpack.c.h.b16 %v2769
    %v2874 = vunpack.c.l.b16 %v2770
    %v2875 = vunpack.c.h.b16 %v2770
    %v2876 = vunpack.c.l.b16 %v2771
    %v2877 = vunpack.c.h.b16 %v2771
    %v2878 = vunpack.c.l.b16 %v2772
    %v2879 = vunpack.c.h.b16 %v2772
    %v2880 = vpack.c.b16 %v2820, %v2816
    %v2881 = vpack.c.b16 %v2821, %v2817
    %v2882 = vpack.c.b16 %v2822, %v2818
    %v2883 = vpack.c.b16 %v2823, %v2819
    %v2884 = vpack.c.b16 %v2828, %v2824
    %v2885 = vpack.c.b16 %v2829, %v2825
    %v2886 = vpack.c.b16 %v2830, %v2826
    %v2887 = vpack.c.b16 %v2831, %v2827
    %v2888 = vpack.c.b16 %v2836, %v2832
    %v2889 = vpack.c.b16 %v2837, %v2833
    %v2890 = vpack.c.b16 %v2838, %v2834
    %v2891 = vpack.c.b16 %v2839, %v2835
    %v2892 = vpack.c.b16 %v2844, %v2840
    %v2893 = vpack.c.b16 %v2845, %v2841
    %v2894 = vpack.c.b16 %v2846, %v2842
    %v2895 = vpack.c.b16 %v2847, %v2843
    %v2896 = vpack.c.b16 %v2852, %v2848
    %v2897 = vpack.c.b16 %v2853, %v2849
    %v2898 = vpack.c.b16 %v2854, %v2850
    %v2899 = vpack.c.b16 %v2855, %v2851
    %v2900 = vpack.c.b16 %v2860, %v2856
    %v2901 = vpack.c.b16 %v2861, %v2857
    %v2902 = vpack.c.b16 %v2862, %v2858
    %v2903 = vpack.c.b16 %v2863, %v2859
    %v2904 = vpack.c.b16 %v2868, %v2864
    %v2905 = vpack.c.b16 %v2869, %v2865
    %v2906 = vpack.c.b16 %v2870, %v2866
    %v2907 = vpack.c.b16 %v2871, %v2867
    %v2908 = vpack.c.b16 %v2876, %v2872
    %v2909 = vpack.c.b16 %v2877, %v2873
    %v2910 = vpack.c.b16 %v2878, %v2874
    %v2911 = vpack.c.b16 %v2879, %v2875
    %2944 = vmatpush.bf16.msra.mxu0 %v2908
    %2945 = vmatpush.bf16.msra.mxu0 %v2904
    %2946 = vmatpush.bf16.msra.mxu0 %v2900
    %2947 = vmatpush.bf16.msra.mxu0 %v2896
    %2948 = vmatpush.bf16.msra.mxu0 %v2892
    %2949 = vmatpush.bf16.msra.mxu0 %v2888
    %2950 = vmatpush.bf16.msra.mxu0 %v2884
    %2951 = vmatpush.bf16.msra.mxu0 %v2880
    %2952 = vmatmul.bf16.gmra.mxu0 %v2736
    %v2953 = vpop.f32.mrf.mxu0
    %v2954 = vadd.f32 %v2776, %v2953
    %v2955 = vpop.f32.mrf.mxu0
    %v2956 = vadd.f32 %v2776, %v2955
    %2957 = vmatmul.bf16.gmra.mxu0 %v2737
    %v2958 = vpop.f32.mrf.mxu0
    %v2959 = vadd.f32 %v2776, %v2958
    %v2960 = vpop.f32.mrf.mxu0
    %v2961 = vadd.f32 %v2776, %v2960
    %2962 = vmatmul.bf16.gmra.mxu0 %v2738
    %v2963 = vpop.f32.mrf.mxu0
    %v2964 = vadd.f32 %v2776, %v2963
    %v2965 = vpop.f32.mrf.mxu0
    %v2966 = vadd.f32 %v2776, %v2965
    %2967 = vmatmul.bf16.gmra.mxu0 %v2739
    %v2968 = vpop.f32.mrf.mxu0
    %v2969 = vadd.f32 %v2776, %v2968
    %v2970 = vpop.f32.mrf.mxu0
    %v2971 = vadd.f32 %v2776, %v2970
    %2972 = vdwg.mxu0
    %2973 = vmatpush.bf16.msra.mxu0 %v2909
    %2974 = vmatpush.bf16.msra.mxu0 %v2905
    %2975 = vmatpush.bf16.msra.mxu0 %v2901
    %2976 = vmatpush.bf16.msra.mxu0 %v2897
    %2977 = vmatpush.bf16.msra.mxu0 %v2893
    %2978 = vmatpush.bf16.msra.mxu0 %v2889
    %2979 = vmatpush.bf16.msra.mxu0 %v2885
    %2980 = vmatpush.bf16.msra.mxu0 %v2881
    %2981 = vmatmul.bf16.gmra.mxu0 %v2736
    %v2982 = vpop.f32.mrf.mxu0
    %v2983 = vadd.f32 %v2777, %v2982
    %v2984 = vpop.f32.mrf.mxu0
    %v2985 = vadd.f32 %v2777, %v2984
    %2986 = vmatmul.bf16.gmra.mxu0 %v2737
    %v2987 = vpop.f32.mrf.mxu0
    %v2988 = vadd.f32 %v2777, %v2987
    %v2989 = vpop.f32.mrf.mxu0
    %v2990 = vadd.f32 %v2777, %v2989
    %2991 = vmatmul.bf16.gmra.mxu0 %v2738
    %v2992 = vpop.f32.mrf.mxu0
    %v2993 = vadd.f32 %v2777, %v2992
    %v2994 = vpop.f32.mrf.mxu0
    %v2995 = vadd.f32 %v2777, %v2994
    %2996 = vmatmul.bf16.gmra.mxu0 %v2739
    %v2997 = vpop.f32.mrf.mxu0
    %v2998 = vadd.f32 %v2777, %v2997
    %v2999 = vpop.f32.mrf.mxu0
    %v3000 = vadd.f32 %v2777, %v2999
    %3001 = vdwg.mxu0
    %3002 = vmatpush.bf16.msra.mxu0 %v2910
    %3003 = vmatpush.bf16.msra.mxu0 %v2906
    %3004 = vmatpush.bf16.msra.mxu0 %v2902
    %3005 = vmatpush.bf16.msra.mxu0 %v2898
    %3006 = vmatpush.bf16.msra.mxu0 %v2894
    %3007 = vmatpush.bf16.msra.mxu0 %v2890
    %3008 = vmatpush.bf16.msra.mxu0 %v2886
    %3009 = vmatpush.bf16.msra.mxu0 %v2882
    %3010 = vmatmul.bf16.gmra.mxu0 %v2736
    %v3011 = vpop.f32.mrf.mxu0
    %v3012 = vadd.f32 %v2778, %v3011
    %v3013 = vpop.f32.mrf.mxu0
    %v3014 = vadd.f32 %v2778, %v3013
    %3015 = vmatmul.bf16.gmra.mxu0 %v2737
    %v3016 = vpop.f32.mrf.mxu0
    %v3017 = vadd.f32 %v2778, %v3016
    %v3018 = vpop.f32.mrf.mxu0
    %v3019 = vadd.f32 %v2778, %v3018
    %3020 = vmatmul.bf16.gmra.mxu0 %v2738
    %v3021 = vpop.f32.mrf.mxu0
    %v3022 = vadd.f32 %v2778, %v3021
    %v3023 = vpop.f32.mrf.mxu0
    %v3024 = vadd.f32 %v2778, %v3023
    %3025 = vmatmul.bf16.gmra.mxu0 %v2739
    %v3026 = vpop.f32.mrf.mxu0
    %v3027 = vadd.f32 %v2778, %v3026
    %v3028 = vpop.f32.mrf.mxu0
    %v3029 = vadd.f32 %v2778, %v3028
    %3030 = vdwg.mxu0
    %3031 = vmatpush.bf16.msra.mxu0 %v2911
    %3032 = vmatpush.bf16.msra.mxu0 %v2907
    %3033 = vmatpush.bf16.msra.mxu0 %v2903
    %3034 = vmatpush.bf16.msra.mxu0 %v2899
    %3035 = vmatpush.bf16.msra.mxu0 %v2895
    %3036 = vmatpush.bf16.msra.mxu0 %v2891
    %3037 = vmatpush.bf16.msra.mxu0 %v2887
    %3038 = vmatpush.bf16.msra.mxu0 %v2883
    %3039 = vmatmul.bf16.gmra.mxu0 %v2736
    %v3040 = vpop.f32.mrf.mxu0
    %v3041 = vadd.f32 %v2779, %v3040
    %v3042 = vpop.f32.mrf.mxu0
    %v3043 = vadd.f32 %v2779, %v3042
    %3044 = vmatmul.bf16.gmra.mxu0 %v2737
    %v3045 = vpop.f32.mrf.mxu0
    %v3046 = vadd.f32 %v2779, %v3045
    %v3047 = vpop.f32.mrf.mxu0
    %v3048 = vadd.f32 %v2779, %v3047
    %3049 = vmatmul.bf16.gmra.mxu0 %v2738
    %v3050 = vpop.f32.mrf.mxu0
    %v3051 = vadd.f32 %v2779, %v3050
    %v3052 = vpop.f32.mrf.mxu0
    %v3053 = vadd.f32 %v2779, %v3052
    %3054 = vmatmul.bf16.gmra.mxu0 %v2739
    %v3055 = vpop.f32.mrf.mxu0
    %v3056 = vadd.f32 %v2779, %v3055
    %v3057 = vpop.f32.mrf.mxu0
    %v3058 = vadd.f32 %v2779, %v3057
    %3059 = vdwg.mxu0
    %3060 = vst [vmem:[#allocation3] sm:$0xff] %v2954
    %3061 = vst [vmem:[#allocation3 + $0x8] sm:$0xff] %v2983
    %3062 = vst [vmem:[#allocation3 + $0x10] sm:$0xff] %v3012
    %3063 = vst [vmem:[#allocation3 + $0x18] sm:$0xff] %v3041
    %3064 = vst [vmem:[#allocation3 + $0x20] sm:$0xff] %v2956
    %3065 = vst [vmem:[#allocation3 + $0x28] sm:$0xff] %v2985
    %3066 = vst [vmem:[#allocation3 + $0x30] sm:$0xff] %v3014
    %3067 = vst [vmem:[#allocation3 + $0x38] sm:$0xff] %v3043
    %3068 = vst [vmem:[#allocation3 + $0x40] sm:$0xff] %v2959
    %3069 = vst [vmem:[#allocation3 + $0x48] sm:$0xff] %v2988
    %3070 = vst [vmem:[#allocation3 + $0x50] sm:$0xff] %v3017
    %3071 = vst [vmem:[#allocation3 + $0x58] sm:$0xff] %v3046
    %3072 = vst [vmem:[#allocation3 + $0x60] sm:$0xff] %v2961
    %3073 = vst [vmem:[#allocation3 + $0x68] sm:$0xff] %v2990
    %3074 = vst [vmem:[#allocation3 + $0x70] sm:$0xff] %v3019
    %3075 = vst [vmem:[#allocation3 + $0x78] sm:$0xff] %v3048
    %3076 = vst [vmem:[#allocation3 + $0x80] sm:$0xff] %v2964
    %3077 = vst [vmem:[#allocation3 + $0x88] sm:$0xff] %v2993
    %3078 = vst [vmem:[#allocation3 + $0x90] sm:$0xff] %v3022
    %3079 = vst [vmem:[#allocation3 + $0x98] sm:$0xff] %v3051
    %3080 = vst [vmem:[#allocation3 + $0xa0] sm:$0xff] %v2966
    %3081 = vst [vmem:[#allocation3 + $0xa8] sm:$0xff] %v2995
    %3082 = vst [vmem:[#allocation3 + $0xb0] sm:$0xff] %v3024
    %3083 = vst [vmem:[#allocation3 + $0xb8] sm:$0xff] %v3053
    %3084 = vst [vmem:[#allocation3 + $0xc0] sm:$0xff] %v2969
    %3085 = vst [vmem:[#allocation3 + $0xc8] sm:$0xff] %v2998
    %3086 = vst [vmem:[#allocation3 + $0xd0] sm:$0xff] %v3027
    %3087 = vst [vmem:[#allocation3 + $0xd8] sm:$0xff] %v3056
    %3088 = vst [vmem:[#allocation3 + $0xe0] sm:$0xff] %v2971
    %3089 = vst [vmem:[#allocation3 + $0xe8] sm:$0xff] %v3000
    %3090 = vst [vmem:[#allocation3 + $0xf0] sm:$0xff] %v3029
    %3091 = vst [vmem:[#allocation3 + $0xf8] sm:$0xff] %v3058
    %s3092 = scalar_lea.vmem [#allocation10], 512
    %v3093 = vld [vmem:[%s3092] sm:$0xff]
    %v3094 = vld [vmem:[%s3092 + $0x8] sm:$0xff]
    %v3095 = vld [vmem:[%s3092 + $0x10] sm:$0xff]
    %v3096 = vld [vmem:[%s3092 + $0x18] sm:$0xff]
    %v3097 = vld [vmem:[%s3092 + $0x20] sm:$0xff]
    %v3098 = vld [vmem:[%s3092 + $0x28] sm:$0xff]
    %v3099 = vld [vmem:[%s3092 + $0x30] sm:$0xff]
    %v3100 = vld [vmem:[%s3092 + $0x38] sm:$0xff]
    %v3101 = vld [vmem:[%s3092 + $0x40] sm:$0xff]
    %v3102 = vld [vmem:[%s3092 + $0x48] sm:$0xff]
    %v3103 = vld [vmem:[%s3092 + $0x50] sm:$0xff]
    %v3104 = vld [vmem:[%s3092 + $0x58] sm:$0xff]
    %v3105 = vld [vmem:[%s3092 + $0x60] sm:$0xff]
    %v3106 = vld [vmem:[%s3092 + $0x68] sm:$0xff]
    %v3107 = vld [vmem:[%s3092 + $0x70] sm:$0xff]
    %v3108 = vld [vmem:[%s3092 + $0x78] sm:$0xff]
    %v3109 = vld [vmem:[%s3092 + $0x80] sm:$0xff]
    %v3110 = vld [vmem:[%s3092 + $0x88] sm:$0xff]
    %v3111 = vld [vmem:[%s3092 + $0x90] sm:$0xff]
    %v3112 = vld [vmem:[%s3092 + $0x98] sm:$0xff]
    %v3113 = vld [vmem:[%s3092 + $0xa0] sm:$0xff]
    %v3114 = vld [vmem:[%s3092 + $0xa8] sm:$0xff]
    %v3115 = vld [vmem:[%s3092 + $0xb0] sm:$0xff]
    %v3116 = vld [vmem:[%s3092 + $0xb8] sm:$0xff]
    %v3117 = vld [vmem:[%s3092 + $0xc0] sm:$0xff]
    %v3118 = vld [vmem:[%s3092 + $0xc8] sm:$0xff]
    %v3119 = vld [vmem:[%s3092 + $0xd0] sm:$0xff]
    %v3120 = vld [vmem:[%s3092 + $0xd8] sm:$0xff]
    %v3121 = vld [vmem:[%s3092 + $0xe0] sm:$0xff]
    %v3122 = vld [vmem:[%s3092 + $0xe8] sm:$0xff]
    %v3123 = vld [vmem:[%s3092 + $0xf0] sm:$0xff]
    %v3124 = vld [vmem:[%s3092 + $0xf8] sm:$0xff]
    %s3125 = scalar_lea.vmem [#allocation4], 16
    %v3126 = vld [vmem:[%s3125] sm:$0xff]
    %s3127 = scalar_lea.vmem [#allocation7], 16
    %v3128 = vld [vmem:[%s3127] sm:$0xff]
    %v3129 = vld [vmem:[%s692] sm:$0xff]
    %v3130 = vld [vmem:[%s692 + $0x8] sm:$0xff]
    %v3131 = vld [vmem:[%s692 + $0x10] sm:$0xff]
    %v3132 = vld [vmem:[%s692 + $0x18] sm:$0xff]
    %v3133 = vpack.c.bf16 %v3126, %v3126
    %v3166 = vunpack.c.l.b16 %v3093
    %v3167 = vunpack.c.h.b16 %v3093
    %v3168 = vunpack.c.l.b16 %v3094
    %v3169 = vunpack.c.h.b16 %v3094
    %v3170 = vunpack.c.l.b16 %v3095
    %v3171 = vunpack.c.h.b16 %v3095
    %v3172 = vunpack.c.l.b16 %v3096
    %v3173 = vunpack.c.h.b16 %v3096
    %v3174 = vunpack.c.l.b16 %v3097
    %v3175 = vunpack.c.h.b16 %v3097
    %v3176 = vunpack.c.l.b16 %v3098
    %v3177 = vunpack.c.h.b16 %v3098
    %v3178 = vunpack.c.l.b16 %v3099
    %v3179 = vunpack.c.h.b16 %v3099
    %v3180 = vunpack.c.l.b16 %v3100
    %v3181 = vunpack.c.h.b16 %v3100
    %v3182 = vunpack.c.l.b16 %v3101
    %v3183 = vunpack.c.h.b16 %v3101
    %v3184 = vunpack.c.l.b16 %v3102
    %v3185 = vunpack.c.h.b16 %v3102
    %v3186 = vunpack.c.l.b16 %v3103
    %v3187 = vunpack.c.h.b16 %v3103
    %v3188 = vunpack.c.l.b16 %v3104
    %v3189 = vunpack.c.h.b16 %v3104
    %v3190 = vunpack.c.l.b16 %v3105
    %v3191 = vunpack.c.h.b16 %v3105
    %v3192 = vunpack.c.l.b16 %v3106
    %v3193 = vunpack.c.h.b16 %v3106
    %v3194 = vunpack.c.l.b16 %v3107
    %v3195 = vunpack.c.h.b16 %v3107
    %v3196 = vunpack.c.l.b16 %v3108
    %v3197 = vunpack.c.h.b16 %v3108
    %v3198 = vunpack.c.l.b16 %v3109
    %v3199 = vunpack.c.h.b16 %v3109
    %v3200 = vunpack.c.l.b16 %v3110
    %v3201 = vunpack.c.h.b16 %v3110
    %v3202 = vunpack.c.l.b16 %v3111
    %v3203 = vunpack.c.h.b16 %v3111
    %v3204 = vunpack.c.l.b16 %v3112
    %v3205 = vunpack.c.h.b16 %v3112
    %v3206 = vunpack.c.l.b16 %v3113
    %v3207 = vunpack.c.h.b16 %v3113
    %v3208 = vunpack.c.l.b16 %v3114
    %v3209 = vunpack.c.h.b16 %v3114
    %v3210 = vunpack.c.l.b16 %v3115
    %v3211 = vunpack.c.h.b16 %v3115
    %v3212 = vunpack.c.l.b16 %v3116
    %v3213 = vunpack.c.h.b16 %v3116
    %v3214 = vunpack.c.l.b16 %v3117
    %v3215 = vunpack.c.h.b16 %v3117
    %v3216 = vunpack.c.l.b16 %v3118
    %v3217 = vunpack.c.h.b16 %v3118
    %v3218 = vunpack.c.l.b16 %v3119
    %v3219 = vunpack.c.h.b16 %v3119
    %v3220 = vunpack.c.l.b16 %v3120
    %v3221 = vunpack.c.h.b16 %v3120
    %v3222 = vunpack.c.l.b16 %v3121
    %v3223 = vunpack.c.h.b16 %v3121
    %v3224 = vunpack.c.l.b16 %v3122
    %v3225 = vunpack.c.h.b16 %v3122
    %v3226 = vunpack.c.l.b16 %v3123
    %v3227 = vunpack.c.h.b16 %v3123
    %v3228 = vunpack.c.l.b16 %v3124
    %v3229 = vunpack.c.h.b16 %v3124
    %v3230 = vpack.c.b16 %v3170, %v3166
    %v3231 = vpack.c.b16 %v3171, %v3167
    %v3232 = vpack.c.b16 %v3172, %v3168
    %v3233 = vpack.c.b16 %v3173, %v3169
    %v3234 = vpack.c.b16 %v3178, %v3174
    %v3235 = vpack.c.b16 %v3179, %v3175
    %v3236 = vpack.c.b16 %v3180, %v3176
    %v3237 = vpack.c.b16 %v3181, %v3177
    %v3238 = vpack.c.b16 %v3186, %v3182
    %v3239 = vpack.c.b16 %v3187, %v3183
    %v3240 = vpack.c.b16 %v3188, %v3184
    %v3241 = vpack.c.b16 %v3189, %v3185
    %v3242 = vpack.c.b16 %v3194, %v3190
    %v3243 = vpack.c.b16 %v3195, %v3191
    %v3244 = vpack.c.b16 %v3196, %v3192
    %v3245 = vpack.c.b16 %v3197, %v3193
    %v3246 = vpack.c.b16 %v3202, %v3198
    %v3247 = vpack.c.b16 %v3203, %v3199
    %v3248 = vpack.c.b16 %v3204, %v3200
    %v3249 = vpack.c.b16 %v3205, %v3201
    %v3250 = vpack.c.b16 %v3210, %v3206
    %v3251 = vpack.c.b16 %v3211, %v3207
    %v3252 = vpack.c.b16 %v3212, %v3208
    %v3253 = vpack.c.b16 %v3213, %v3209
    %v3254 = vpack.c.b16 %v3218, %v3214
    %v3255 = vpack.c.b16 %v3219, %v3215
    %v3256 = vpack.c.b16 %v3220, %v3216
    %v3257 = vpack.c.b16 %v3221, %v3217
    %v3258 = vpack.c.b16 %v3226, %v3222
    %v3259 = vpack.c.b16 %v3227, %v3223
    %v3260 = vpack.c.b16 %v3228, %v3224
    %v3261 = vpack.c.b16 %v3229, %v3225
    %3294 = vmatpush.bf16.msra.mxu0 %v3258
    %3295 = vmatpush.bf16.msra.mxu0 %v3254
    %3296 = vmatpush.bf16.msra.mxu0 %v3250
    %3297 = vmatpush.bf16.msra.mxu0 %v3246
    %3298 = vmatpush.bf16.msra.mxu0 %v3242
    %3299 = vmatpush.bf16.msra.mxu0 %v3238
    %3300 = vmatpush.bf16.msra.mxu0 %v3234
    %3301 = vmatpush.bf16.msra.mxu0 %v3230
    %3302 = vmatmul.bf16.gmra.mxu0 %v3133
    %v3303 = vpop.f32.mrf.mxu0
    %v3304 = vadd.f32 0.0, %v3303
    %v3305 = vpop.f32.mrf.mxu0
    %3306 = vdwg.mxu0
    %3307 = vmatpush.bf16.msra.mxu0 %v3259
    %3308 = vmatpush.bf16.msra.mxu0 %v3255
    %3309 = vmatpush.bf16.msra.mxu0 %v3251
    %3310 = vmatpush.bf16.msra.mxu0 %v3247
    %3311 = vmatpush.bf16.msra.mxu0 %v3243
    %3312 = vmatpush.bf16.msra.mxu0 %v3239
    %3313 = vmatpush.bf16.msra.mxu0 %v3235
    %3314 = vmatpush.bf16.msra.mxu0 %v3231
    %3315 = vmatmul.bf16.gmra.mxu0 %v3133
    %v3316 = vpop.f32.mrf.mxu0
    %v3317 = vadd.f32 0.0, %v3316
    %v3318 = vpop.f32.mrf.mxu0
    %3319 = vdwg.mxu0
    %3320 = vmatpush.bf16.msra.mxu0 %v3260
    %3321 = vmatpush.bf16.msra.mxu0 %v3256
    %3322 = vmatpush.bf16.msra.mxu0 %v3252
    %3323 = vmatpush.bf16.msra.mxu0 %v3248
    %3324 = vmatpush.bf16.msra.mxu0 %v3244
    %3325 = vmatpush.bf16.msra.mxu0 %v3240
    %3326 = vmatpush.bf16.msra.mxu0 %v3236
    %3327 = vmatpush.bf16.msra.mxu0 %v3232
    %3328 = vmatmul.bf16.gmra.mxu0 %v3133
    %v3329 = vpop.f32.mrf.mxu0
    %v3330 = vadd.f32 0.0, %v3329
    %v3331 = vpop.f32.mrf.mxu0
    %3332 = vdwg.mxu0
    %3333 = vmatpush.bf16.msra.mxu0 %v3261
    %3334 = vmatpush.bf16.msra.mxu0 %v3257
    %3335 = vmatpush.bf16.msra.mxu0 %v3253
    %3336 = vmatpush.bf16.msra.mxu0 %v3249
    %3337 = vmatpush.bf16.msra.mxu0 %v3245
    %3338 = vmatpush.bf16.msra.mxu0 %v3241
    %3339 = vmatpush.bf16.msra.mxu0 %v3237
    %3340 = vmatpush.bf16.msra.mxu0 %v3233
    %3341 = vmatmul.bf16.gmra.mxu0 %v3133
    %v3342 = vpop.f32.mrf.mxu0
    %v3343 = vadd.f32 0.0, %v3342
    %v3344 = vpop.f32.mrf.mxu0
    %3345 = vdwg.mxu0
    %v3346 = vadd.f32 %v3129, %v3304
    %v3347 = vadd.f32 %v3130, %v3317
    %v3348 = vadd.f32 %v3131, %v3330
    %v3349 = vadd.f32 %v3132, %v3343
    %v3350 = vmul.f32 %v3346, 0.5
    %v3351 = vmul.f32 %v3347, 0.5
    %v3352 = vmul.f32 %v3348, 0.5
    %v3353 = vtanh.pop %v3350
    %v3354 = vtanh.pop %v3351
    %v3355 = vtanh.pop %v3352
    %v3356 = vmul.f32 %v3353, 0.5
    %v3357 = vmul.f32 %v3354, 0.5
    %v3358 = vmul.f32 %v3355, 0.5
    %v3359 = vadd.f32 %v3356, 0.5
    %v3360 = vadd.f32 %v3357, 0.5
    %v3361 = vadd.f32 %v3358, 0.5
    %v3362 = vtanh.pop %v3349
    %v3363 = vmul.f32 %v3360, %v3128
    %v3364 = vmul.f32 %v3359, %v3362
    %v3365 = vadd.f32 %v3363, %v3364
    %v3366 = vtanh.pop %v3365
    %v3367 = vmul.f32 %v3361, %v3366
    %3368 = vst [vmem:[#allocation2] sm:$0xff] %v3367
    %v3369 = vld [vmem:[%s935] sm:$0xff]
    %v3370 = vld [vmem:[%s935 + $0x8] sm:$0xff]
    %v3371 = vld [vmem:[%s935 + $0x10] sm:$0xff]
    %v3372 = vld [vmem:[%s935 + $0x18] sm:$0xff]
    %v3373 = vpack.c.bf16 %v3367, %v3367
    %3374 = vmatpush.bf16.msra.mxu0 %v3258
    %3375 = vmatpush.bf16.msra.mxu0 %v3254
    %3376 = vmatpush.bf16.msra.mxu0 %v3250
    %3377 = vmatpush.bf16.msra.mxu0 %v3246
    %3378 = vmatpush.bf16.msra.mxu0 %v3242
    %3379 = vmatpush.bf16.msra.mxu0 %v3238
    %3380 = vmatpush.bf16.msra.mxu0 %v3234
    %3381 = vmatpush.bf16.msra.mxu0 %v3230
    %3382 = vmatmul.bf16.gmra.mxu0 %v3373
    %v3383 = vpop.f32.mrf.mxu0
    %v3384 = vadd.f32 0.0, %v3383
    %v3385 = vpop.f32.mrf.mxu0
    %3386 = vdwg.mxu0
    %3387 = vmatpush.bf16.msra.mxu0 %v3259
    %3388 = vmatpush.bf16.msra.mxu0 %v3255
    %3389 = vmatpush.bf16.msra.mxu0 %v3251
    %3390 = vmatpush.bf16.msra.mxu0 %v3247
    %3391 = vmatpush.bf16.msra.mxu0 %v3243
    %3392 = vmatpush.bf16.msra.mxu0 %v3239
    %3393 = vmatpush.bf16.msra.mxu0 %v3235
    %3394 = vmatpush.bf16.msra.mxu0 %v3231
    %3395 = vmatmul.bf16.gmra.mxu0 %v3373
    %v3396 = vpop.f32.mrf.mxu0
    %v3397 = vadd.f32 0.0, %v3396
    %v3398 = vpop.f32.mrf.mxu0
    %3399 = vdwg.mxu0
    %3400 = vmatpush.bf16.msra.mxu0 %v3260
    %3401 = vmatpush.bf16.msra.mxu0 %v3256
    %3402 = vmatpush.bf16.msra.mxu0 %v3252
    %3403 = vmatpush.bf16.msra.mxu0 %v3248
    %3404 = vmatpush.bf16.msra.mxu0 %v3244
    %3405 = vmatpush.bf16.msra.mxu0 %v3240
    %3406 = vmatpush.bf16.msra.mxu0 %v3236
    %3407 = vmatpush.bf16.msra.mxu0 %v3232
    %3408 = vmatmul.bf16.gmra.mxu0 %v3373
    %v3409 = vpop.f32.mrf.mxu0
    %v3410 = vadd.f32 0.0, %v3409
    %v3411 = vpop.f32.mrf.mxu0
    %3412 = vdwg.mxu0
    %3413 = vmatpush.bf16.msra.mxu0 %v3261
    %3414 = vmatpush.bf16.msra.mxu0 %v3257
    %3415 = vmatpush.bf16.msra.mxu0 %v3253
    %3416 = vmatpush.bf16.msra.mxu0 %v3249
    %3417 = vmatpush.bf16.msra.mxu0 %v3245
    %3418 = vmatpush.bf16.msra.mxu0 %v3241
    %3419 = vmatpush.bf16.msra.mxu0 %v3237
    %3420 = vmatpush.bf16.msra.mxu0 %v3233
    %3421 = vmatmul.bf16.gmra.mxu0 %v3373
    %v3422 = vpop.f32.mrf.mxu0
    %v3423 = vadd.f32 0.0, %v3422
    %v3424 = vpop.f32.mrf.mxu0
    %3425 = vdwg.mxu0
    %v3426 = vadd.f32 %v3369, %v3384
    %v3427 = vadd.f32 %v3370, %v3397
    %v3428 = vadd.f32 %v3371, %v3410
    %v3429 = vadd.f32 %v3372, %v3423
    %v3430 = vmul.f32 %v3426, 0.5
    %v3431 = vmul.f32 %v3427, 0.5
    %v3432 = vmul.f32 %v3428, 0.5
    %v3433 = vtanh.pop %v3430
    %v3434 = vtanh.pop %v3431
    %v3435 = vtanh.pop %v3432
    %v3436 = vmul.f32 %v3433, 0.5
    %v3437 = vmul.f32 %v3434, 0.5
    %v3438 = vmul.f32 %v3435, 0.5
    %v3439 = vadd.f32 %v3436, 0.5
    %v3440 = vadd.f32 %v3437, 0.5
    %v3441 = vadd.f32 %v3438, 0.5
    %v3442 = vtanh.pop %v3429
    %v3443 = vmul.f32 %v3440, %v3365
    %v3444 = vmul.f32 %v3439, %v3442
    %v3445 = vadd.f32 %v3443, %v3444
    %v3446 = vtanh.pop %v3445
    %v3447 = vmul.f32 %v3441, %v3446
    %3448 = vst [vmem:[%s1015] sm:$0xff] %v3447
    %v3449 = vld [vmem:[%s1019] sm:$0xff]
    %v3450 = vld [vmem:[%s1019 + $0x8] sm:$0xff]
    %v3451 = vld [vmem:[%s1019 + $0x10] sm:$0xff]
    %v3452 = vld [vmem:[%s1019 + $0x18] sm:$0xff]
    %v3453 = vpack.c.bf16 %v3447, %v3447
    %3454 = vmatpush.bf16.msra.mxu0 %v3258
    %3455 = vmatpush.bf16.msra.mxu0 %v3254
    %3456 = vmatpush.bf16.msra.mxu0 %v3250
    %3457 = vmatpush.bf16.msra.mxu0 %v3246
    %3458 = vmatpush.bf16.msra.mxu0 %v3242
    %3459 = vmatpush.bf16.msra.mxu0 %v3238
    %3460 = vmatpush.bf16.msra.mxu0 %v3234
    %3461 = vmatpush.bf16.msra.mxu0 %v3230
    %3462 = vmatmul.bf16.gmra.mxu0 %v3453
    %v3463 = vpop.f32.mrf.mxu0
    %v3464 = vadd.f32 0.0, %v3463
    %v3465 = vpop.f32.mrf.mxu0
    %3466 = vdwg.mxu0
    %3467 = vmatpush.bf16.msra.mxu0 %v3259
    %3468 = vmatpush.bf16.msra.mxu0 %v3255
    %3469 = vmatpush.bf16.msra.mxu0 %v3251
    %3470 = vmatpush.bf16.msra.mxu0 %v3247
    %3471 = vmatpush.bf16.msra.mxu0 %v3243
    %3472 = vmatpush.bf16.msra.mxu0 %v3239
    %3473 = vmatpush.bf16.msra.mxu0 %v3235
    %3474 = vmatpush.bf16.msra.mxu0 %v3231
    %3475 = vmatmul.bf16.gmra.mxu0 %v3453
    %v3476 = vpop.f32.mrf.mxu0
    %v3477 = vadd.f32 0.0, %v3476
    %v3478 = vpop.f32.mrf.mxu0
    %3479 = vdwg.mxu0
    %3480 = vmatpush.bf16.msra.mxu0 %v3260
    %3481 = vmatpush.bf16.msra.mxu0 %v3256
    %3482 = vmatpush.bf16.msra.mxu0 %v3252
    %3483 = vmatpush.bf16.msra.mxu0 %v3248
    %3484 = vmatpush.bf16.msra.mxu0 %v3244
    %3485 = vmatpush.bf16.msra.mxu0 %v3240
    %3486 = vmatpush.bf16.msra.mxu0 %v3236
    %3487 = vmatpush.bf16.msra.mxu0 %v3232
    %3488 = vmatmul.bf16.gmra.mxu0 %v3453
    %v3489 = vpop.f32.mrf.mxu0
    %v3490 = vadd.f32 0.0, %v3489
    %v3491 = vpop.f32.mrf.mxu0
    %3492 = vdwg.mxu0
    %3493 = vmatpush.bf16.msra.mxu0 %v3261
    %3494 = vmatpush.bf16.msra.mxu0 %v3257
    %3495 = vmatpush.bf16.msra.mxu0 %v3253
    %3496 = vmatpush.bf16.msra.mxu0 %v3249
    %3497 = vmatpush.bf16.msra.mxu0 %v3245
    %3498 = vmatpush.bf16.msra.mxu0 %v3241
    %3499 = vmatpush.bf16.msra.mxu0 %v3237
    %3500 = vmatpush.bf16.msra.mxu0 %v3233
    %3501 = vmatmul.bf16.gmra.mxu0 %v3453
    %v3502 = vpop.f32.mrf.mxu0
    %v3503 = vadd.f32 0.0, %v3502
    %v3504 = vpop.f32.mrf.mxu0
    %3505 = vdwg.mxu0
    %v3506 = vadd.f32 %v3449, %v3464
    %v3507 = vadd.f32 %v3450, %v3477
    %v3508 = vadd.f32 %v3451, %v3490
    %v3509 = vadd.f32 %v3452, %v3503
    %v3510 = vmul.f32 %v3506, 0.5
    %v3511 = vmul.f32 %v3507, 0.5
    %v3512 = vmul.f32 %v3508, 0.5
    %v3513 = vtanh.pop %v3510
    %v3514 = vtanh.pop %v3511
    %v3515 = vtanh.pop %v3512
    %v3516 = vmul.f32 %v3513, 0.5
    %v3517 = vmul.f32 %v3514, 0.5
    %v3518 = vmul.f32 %v3515, 0.5
    %v3519 = vadd.f32 %v3516, 0.5
    %v3520 = vadd.f32 %v3517, 0.5
    %v3521 = vadd.f32 %v3518, 0.5
    %v3522 = vtanh.pop %v3509
    %v3523 = vmul.f32 %v3520, %v3445
    %v3524 = vmul.f32 %v3519, %v3522
    %v3525 = vadd.f32 %v3523, %v3524
    %v3526 = vtanh.pop %v3525
    %v3527 = vmul.f32 %v3521, %v3526
    %3528 = vst [vmem:[%s1099] sm:$0xff] %v3527
    %v3529 = vld [vmem:[%s1103] sm:$0xff]
    %v3530 = vld [vmem:[%s1103 + $0x8] sm:$0xff]
    %v3531 = vld [vmem:[%s1103 + $0x10] sm:$0xff]
    %v3532 = vld [vmem:[%s1103 + $0x18] sm:$0xff]
    %v3533 = vpack.c.bf16 %v3527, %v3527
    %3534 = vmatpush.bf16.msra.mxu0 %v3258
    %3535 = vmatpush.bf16.msra.mxu0 %v3254
    %3536 = vmatpush.bf16.msra.mxu0 %v3250
    %3537 = vmatpush.bf16.msra.mxu0 %v3246
    %3538 = vmatpush.bf16.msra.mxu0 %v3242
    %3539 = vmatpush.bf16.msra.mxu0 %v3238
    %3540 = vmatpush.bf16.msra.mxu0 %v3234
    %3541 = vmatpush.bf16.msra.mxu0 %v3230
    %3542 = vmatmul.bf16.gmra.mxu0 %v3533
    %v3543 = vpop.f32.mrf.mxu0
    %v3544 = vadd.f32 0.0, %v3543
    %v3545 = vpop.f32.mrf.mxu0
    %3546 = vdwg.mxu0
    %3547 = vmatpush.bf16.msra.mxu0 %v3259
    %3548 = vmatpush.bf16.msra.mxu0 %v3255
    %3549 = vmatpush.bf16.msra.mxu0 %v3251
    %3550 = vmatpush.bf16.msra.mxu0 %v3247
    %3551 = vmatpush.bf16.msra.mxu0 %v3243
    %3552 = vmatpush.bf16.msra.mxu0 %v3239
    %3553 = vmatpush.bf16.msra.mxu0 %v3235
    %3554 = vmatpush.bf16.msra.mxu0 %v3231
    %3555 = vmatmul.bf16.gmra.mxu0 %v3533
    %v3556 = vpop.f32.mrf.mxu0
    %v3557 = vadd.f32 0.0, %v3556
    %v3558 = vpop.f32.mrf.mxu0
    %3559 = vdwg.mxu0
    %3560 = vmatpush.bf16.msra.mxu0 %v3260
    %3561 = vmatpush.bf16.msra.mxu0 %v3256
    %3562 = vmatpush.bf16.msra.mxu0 %v3252
    %3563 = vmatpush.bf16.msra.mxu0 %v3248
    %3564 = vmatpush.bf16.msra.mxu0 %v3244
    %3565 = vmatpush.bf16.msra.mxu0 %v3240
    %3566 = vmatpush.bf16.msra.mxu0 %v3236
    %3567 = vmatpush.bf16.msra.mxu0 %v3232
    %3568 = vmatmul.bf16.gmra.mxu0 %v3533
    %v3569 = vpop.f32.mrf.mxu0
    %v3570 = vadd.f32 0.0, %v3569
    %v3571 = vpop.f32.mrf.mxu0
    %3572 = vdwg.mxu0
    %3573 = vmatpush.bf16.msra.mxu0 %v3261
    %3574 = vmatpush.bf16.msra.mxu0 %v3257
    %3575 = vmatpush.bf16.msra.mxu0 %v3253
    %3576 = vmatpush.bf16.msra.mxu0 %v3249
    %3577 = vmatpush.bf16.msra.mxu0 %v3245
    %3578 = vmatpush.bf16.msra.mxu0 %v3241
    %3579 = vmatpush.bf16.msra.mxu0 %v3237
    %3580 = vmatpush.bf16.msra.mxu0 %v3233
    %3581 = vmatmul.bf16.gmra.mxu0 %v3533
    %v3582 = vpop.f32.mrf.mxu0
    %v3583 = vadd.f32 0.0, %v3582
    %v3584 = vpop.f32.mrf.mxu0
    %3585 = vdwg.mxu0
    %v3586 = vadd.f32 %v3529, %v3544
    %v3587 = vadd.f32 %v3530, %v3557
    %v3588 = vadd.f32 %v3531, %v3570
    %v3589 = vadd.f32 %v3532, %v3583
    %v3590 = vmul.f32 %v3586, 0.5
    %v3591 = vmul.f32 %v3587, 0.5
    %v3592 = vmul.f32 %v3588, 0.5
    %v3593 = vtanh.pop %v3590
    %v3594 = vtanh.pop %v3591
    %v3595 = vtanh.pop %v3592
    %v3596 = vmul.f32 %v3593, 0.5
    %v3597 = vmul.f32 %v3594, 0.5
    %v3598 = vmul.f32 %v3595, 0.5
    %v3599 = vadd.f32 %v3596, 0.5
    %v3600 = vadd.f32 %v3597, 0.5
    %v3601 = vadd.f32 %v3598, 0.5
    %v3602 = vtanh.pop %v3589
    %v3603 = vmul.f32 %v3600, %v3525
    %v3604 = vmul.f32 %v3599, %v3602
    %v3605 = vadd.f32 %v3603, %v3604
    %v3606 = vtanh.pop %v3605
    %v3607 = vmul.f32 %v3601, %v3606
    %3608 = vst [vmem:[%s1183] sm:$0xff] %v3607
    %v3609 = vld [vmem:[%s1187] sm:$0xff]
    %v3610 = vld [vmem:[%s1187 + $0x8] sm:$0xff]
    %v3611 = vld [vmem:[%s1187 + $0x10] sm:$0xff]
    %v3612 = vld [vmem:[%s1187 + $0x18] sm:$0xff]
    %v3613 = vpack.c.bf16 %v3607, %v3607
    %3614 = vmatpush.bf16.msra.mxu0 %v3258
    %3615 = vmatpush.bf16.msra.mxu0 %v3254
    %3616 = vmatpush.bf16.msra.mxu0 %v3250
    %3617 = vmatpush.bf16.msra.mxu0 %v3246
    %3618 = vmatpush.bf16.msra.mxu0 %v3242
    %3619 = vmatpush.bf16.msra.mxu0 %v3238
    %3620 = vmatpush.bf16.msra.mxu0 %v3234
    %3621 = vmatpush.bf16.msra.mxu0 %v3230
    %3622 = vmatmul.bf16.gmra.mxu0 %v3613
    %v3623 = vpop.f32.mrf.mxu0
    %v3624 = vadd.f32 0.0, %v3623
    %v3625 = vpop.f32.mrf.mxu0
    %3626 = vdwg.mxu0
    %3627 = vmatpush.bf16.msra.mxu0 %v3259
    %3628 = vmatpush.bf16.msra.mxu0 %v3255
    %3629 = vmatpush.bf16.msra.mxu0 %v3251
    %3630 = vmatpush.bf16.msra.mxu0 %v3247
    %3631 = vmatpush.bf16.msra.mxu0 %v3243
    %3632 = vmatpush.bf16.msra.mxu0 %v3239
    %3633 = vmatpush.bf16.msra.mxu0 %v3235
    %3634 = vmatpush.bf16.msra.mxu0 %v3231
    %3635 = vmatmul.bf16.gmra.mxu0 %v3613
    %v3636 = vpop.f32.mrf.mxu0
    %v3637 = vadd.f32 0.0, %v3636
    %v3638 = vpop.f32.mrf.mxu0
    %3639 = vdwg.mxu0
    %3640 = vmatpush.bf16.msra.mxu0 %v3260
    %3641 = vmatpush.bf16.msra.mxu0 %v3256
    %3642 = vmatpush.bf16.msra.mxu0 %v3252
    %3643 = vmatpush.bf16.msra.mxu0 %v3248
    %3644 = vmatpush.bf16.msra.mxu0 %v3244
    %3645 = vmatpush.bf16.msra.mxu0 %v3240
    %3646 = vmatpush.bf16.msra.mxu0 %v3236
    %3647 = vmatpush.bf16.msra.mxu0 %v3232
    %3648 = vmatmul.bf16.gmra.mxu0 %v3613
    %v3649 = vpop.f32.mrf.mxu0
    %v3650 = vadd.f32 0.0, %v3649
    %v3651 = vpop.f32.mrf.mxu0
    %3652 = vdwg.mxu0
    %3653 = vmatpush.bf16.msra.mxu0 %v3261
    %3654 = vmatpush.bf16.msra.mxu0 %v3257
    %3655 = vmatpush.bf16.msra.mxu0 %v3253
    %3656 = vmatpush.bf16.msra.mxu0 %v3249
    %3657 = vmatpush.bf16.msra.mxu0 %v3245
    %3658 = vmatpush.bf16.msra.mxu0 %v3241
    %3659 = vmatpush.bf16.msra.mxu0 %v3237
    %3660 = vmatpush.bf16.msra.mxu0 %v3233
    %3661 = vmatmul.bf16.gmra.mxu0 %v3613
    %v3662 = vpop.f32.mrf.mxu0
    %v3663 = vadd.f32 0.0, %v3662
    %v3664 = vpop.f32.mrf.mxu0
    %3665 = vdwg.mxu0
    %v3666 = vadd.f32 %v3609, %v3624
    %v3667 = vadd.f32 %v3610, %v3637
    %v3668 = vadd.f32 %v3611, %v3650
    %v3669 = vadd.f32 %v3612, %v3663
    %v3670 = vmul.f32 %v3666, 0.5
    %v3671 = vmul.f32 %v3667, 0.5
    %v3672 = vmul.f32 %v3668, 0.5
    %v3673 = vtanh.pop %v3670
    %v3674 = vtanh.pop %v3671
    %v3675 = vtanh.pop %v3672
    %v3676 = vmul.f32 %v3673, 0.5
    %v3677 = vmul.f32 %v3674, 0.5
    %v3678 = vmul.f32 %v3675, 0.5
    %v3679 = vadd.f32 %v3676, 0.5
    %v3680 = vadd.f32 %v3677, 0.5
    %v3681 = vadd.f32 %v3678, 0.5
    %v3682 = vtanh.pop %v3669
    %v3683 = vmul.f32 %v3680, %v3605
    %v3684 = vmul.f32 %v3679, %v3682
    %v3685 = vadd.f32 %v3683, %v3684
    %v3686 = vtanh.pop %v3685
    %v3687 = vmul.f32 %v3681, %v3686
    %3688 = vst [vmem:[%s1267] sm:$0xff] %v3687
    %v3689 = vld [vmem:[%s1271] sm:$0xff]
    %v3690 = vld [vmem:[%s1271 + $0x8] sm:$0xff]
    %v3691 = vld [vmem:[%s1271 + $0x10] sm:$0xff]
    %v3692 = vld [vmem:[%s1271 + $0x18] sm:$0xff]
    %v3693 = vpack.c.bf16 %v3687, %v3687
    %3694 = vmatpush.bf16.msra.mxu0 %v3258
    %3695 = vmatpush.bf16.msra.mxu0 %v3254
    %3696 = vmatpush.bf16.msra.mxu0 %v3250
    %3697 = vmatpush.bf16.msra.mxu0 %v3246
    %3698 = vmatpush.bf16.msra.mxu0 %v3242
    %3699 = vmatpush.bf16.msra.mxu0 %v3238
    %3700 = vmatpush.bf16.msra.mxu0 %v3234
    %3701 = vmatpush.bf16.msra.mxu0 %v3230
    %3702 = vmatmul.bf16.gmra.mxu0 %v3693
    %v3703 = vpop.f32.mrf.mxu0
    %v3704 = vadd.f32 0.0, %v3703
    %v3705 = vpop.f32.mrf.mxu0
    %3706 = vdwg.mxu0
    %3707 = vmatpush.bf16.msra.mxu0 %v3259
    %3708 = vmatpush.bf16.msra.mxu0 %v3255
    %3709 = vmatpush.bf16.msra.mxu0 %v3251
    %3710 = vmatpush.bf16.msra.mxu0 %v3247
    %3711 = vmatpush.bf16.msra.mxu0 %v3243
    %3712 = vmatpush.bf16.msra.mxu0 %v3239
    %3713 = vmatpush.bf16.msra.mxu0 %v3235
    %3714 = vmatpush.bf16.msra.mxu0 %v3231
    %3715 = vmatmul.bf16.gmra.mxu0 %v3693
    %v3716 = vpop.f32.mrf.mxu0
    %v3717 = vadd.f32 0.0, %v3716
    %v3718 = vpop.f32.mrf.mxu0
    %3719 = vdwg.mxu0
    %3720 = vmatpush.bf16.msra.mxu0 %v3260
    %3721 = vmatpush.bf16.msra.mxu0 %v3256
    %3722 = vmatpush.bf16.msra.mxu0 %v3252
    %3723 = vmatpush.bf16.msra.mxu0 %v3248
    %3724 = vmatpush.bf16.msra.mxu0 %v3244
    %3725 = vmatpush.bf16.msra.mxu0 %v3240
    %3726 = vmatpush.bf16.msra.mxu0 %v3236
    %3727 = vmatpush.bf16.msra.mxu0 %v3232
    %3728 = vmatmul.bf16.gmra.mxu0 %v3693
    %v3729 = vpop.f32.mrf.mxu0
    %v3730 = vadd.f32 0.0, %v3729
    %v3731 = vpop.f32.mrf.mxu0
    %3732 = vdwg.mxu0
    %3733 = vmatpush.bf16.msra.mxu0 %v3261
    %3734 = vmatpush.bf16.msra.mxu0 %v3257
    %3735 = vmatpush.bf16.msra.mxu0 %v3253
    %3736 = vmatpush.bf16.msra.mxu0 %v3249
    %3737 = vmatpush.bf16.msra.mxu0 %v3245
    %3738 = vmatpush.bf16.msra.mxu0 %v3241
    %3739 = vmatpush.bf16.msra.mxu0 %v3237
    %3740 = vmatpush.bf16.msra.mxu0 %v3233
    %3741 = vmatmul.bf16.gmra.mxu0 %v3693
    %v3742 = vpop.f32.mrf.mxu0
    %v3743 = vadd.f32 0.0, %v3742
    %v3744 = vpop.f32.mrf.mxu0
    %3745 = vdwg.mxu0
    %v3746 = vadd.f32 %v3689, %v3704
    %v3747 = vadd.f32 %v3690, %v3717
    %v3748 = vadd.f32 %v3691, %v3730
    %v3749 = vadd.f32 %v3692, %v3743
    %v3750 = vmul.f32 %v3746, 0.5
    %v3751 = vmul.f32 %v3747, 0.5
    %v3752 = vmul.f32 %v3748, 0.5
    %v3753 = vtanh.pop %v3750
    %v3754 = vtanh.pop %v3751
    %v3755 = vtanh.pop %v3752
    %v3756 = vmul.f32 %v3753, 0.5
    %v3757 = vmul.f32 %v3754, 0.5
    %v3758 = vmul.f32 %v3755, 0.5
    %v3759 = vadd.f32 %v3756, 0.5
    %v3760 = vadd.f32 %v3757, 0.5
    %v3761 = vadd.f32 %v3758, 0.5
    %v3762 = vtanh.pop %v3749
    %v3763 = vmul.f32 %v3760, %v3685
    %v3764 = vmul.f32 %v3759, %v3762
    %v3765 = vadd.f32 %v3763, %v3764
    %v3766 = vtanh.pop %v3765
    %v3767 = vmul.f32 %v3761, %v3766
    %3768 = vst [vmem:[%s1351] sm:$0xff] %v3767
    %v3769 = vld [vmem:[%s1355] sm:$0xff]
    %v3770 = vld [vmem:[%s1355 + $0x8] sm:$0xff]
    %v3771 = vld [vmem:[%s1355 + $0x10] sm:$0xff]
    %v3772 = vld [vmem:[%s1355 + $0x18] sm:$0xff]
    %v3773 = vpack.c.bf16 %v3767, %v3767
    %3774 = vmatpush.bf16.msra.mxu0 %v3258
    %3775 = vmatpush.bf16.msra.mxu0 %v3254
    %3776 = vmatpush.bf16.msra.mxu0 %v3250
    %3777 = vmatpush.bf16.msra.mxu0 %v3246
    %3778 = vmatpush.bf16.msra.mxu0 %v3242
    %3779 = vmatpush.bf16.msra.mxu0 %v3238
    %3780 = vmatpush.bf16.msra.mxu0 %v3234
    %3781 = vmatpush.bf16.msra.mxu0 %v3230
    %3782 = vmatmul.bf16.gmra.mxu0 %v3773
    %v3783 = vpop.f32.mrf.mxu0
    %v3784 = vadd.f32 0.0, %v3783
    %v3785 = vpop.f32.mrf.mxu0
    %3786 = vdwg.mxu0
    %3787 = vmatpush.bf16.msra.mxu0 %v3259
    %3788 = vmatpush.bf16.msra.mxu0 %v3255
    %3789 = vmatpush.bf16.msra.mxu0 %v3251
    %3790 = vmatpush.bf16.msra.mxu0 %v3247
    %3791 = vmatpush.bf16.msra.mxu0 %v3243
    %3792 = vmatpush.bf16.msra.mxu0 %v3239
    %3793 = vmatpush.bf16.msra.mxu0 %v3235
    %3794 = vmatpush.bf16.msra.mxu0 %v3231
    %3795 = vmatmul.bf16.gmra.mxu0 %v3773
    %v3796 = vpop.f32.mrf.mxu0
    %v3797 = vadd.f32 0.0, %v3796
    %v3798 = vpop.f32.mrf.mxu0
    %3799 = vdwg.mxu0
    %3800 = vmatpush.bf16.msra.mxu0 %v3260
    %3801 = vmatpush.bf16.msra.mxu0 %v3256
    %3802 = vmatpush.bf16.msra.mxu0 %v3252
    %3803 = vmatpush.bf16.msra.mxu0 %v3248
    %3804 = vmatpush.bf16.msra.mxu0 %v3244
    %3805 = vmatpush.bf16.msra.mxu0 %v3240
    %3806 = vmatpush.bf16.msra.mxu0 %v3236
    %3807 = vmatpush.bf16.msra.mxu0 %v3232
    %3808 = vmatmul.bf16.gmra.mxu0 %v3773
    %v3809 = vpop.f32.mrf.mxu0
    %v3810 = vadd.f32 0.0, %v3809
    %v3811 = vpop.f32.mrf.mxu0
    %3812 = vdwg.mxu0
    %3813 = vmatpush.bf16.msra.mxu0 %v3261
    %3814 = vmatpush.bf16.msra.mxu0 %v3257
    %3815 = vmatpush.bf16.msra.mxu0 %v3253
    %3816 = vmatpush.bf16.msra.mxu0 %v3249
    %3817 = vmatpush.bf16.msra.mxu0 %v3245
    %3818 = vmatpush.bf16.msra.mxu0 %v3241
    %3819 = vmatpush.bf16.msra.mxu0 %v3237
    %3820 = vmatpush.bf16.msra.mxu0 %v3233
    %3821 = vmatmul.bf16.gmra.mxu0 %v3773
    %v3822 = vpop.f32.mrf.mxu0
    %v3823 = vadd.f32 0.0, %v3822
    %v3824 = vpop.f32.mrf.mxu0
    %3825 = vdwg.mxu0
    %v3826 = vadd.f32 %v3769, %v3784
    %v3827 = vadd.f32 %v3770, %v3797
    %v3828 = vadd.f32 %v3771, %v3810
    %v3829 = vadd.f32 %v3772, %v3823
    %v3830 = vmul.f32 %v3826, 0.5
    %v3831 = vmul.f32 %v3827, 0.5
    %v3832 = vmul.f32 %v3828, 0.5
    %v3833 = vtanh.pop %v3830
    %v3834 = vtanh.pop %v3831
    %v3835 = vtanh.pop %v3832
    %v3836 = vmul.f32 %v3833, 0.5
    %v3837 = vmul.f32 %v3834, 0.5
    %v3838 = vmul.f32 %v3835, 0.5
    %v3839 = vadd.f32 %v3836, 0.5
    %v3840 = vadd.f32 %v3837, 0.5
    %v3841 = vadd.f32 %v3838, 0.5
    %v3842 = vtanh.pop %v3829
    %v3843 = vmul.f32 %v3840, %v3765
    %v3844 = vmul.f32 %v3839, %v3842
    %v3845 = vadd.f32 %v3843, %v3844
    %v3846 = vtanh.pop %v3845
    %v3847 = vmul.f32 %v3841, %v3846
    %3848 = vst [vmem:[%s1435] sm:$0xff] %v3847
    %v3849 = vld [vmem:[%s1439] sm:$0xff]
    %v3850 = vld [vmem:[%s1439 + $0x8] sm:$0xff]
    %v3851 = vld [vmem:[%s1439 + $0x10] sm:$0xff]
    %v3852 = vld [vmem:[%s1439 + $0x18] sm:$0xff]
    %v3853 = vpack.c.bf16 %v3847, %v3847
    %3854 = vmatpush.bf16.msra.mxu0 %v3258
    %3855 = vmatpush.bf16.msra.mxu0 %v3254
    %3856 = vmatpush.bf16.msra.mxu0 %v3250
    %3857 = vmatpush.bf16.msra.mxu0 %v3246
    %3858 = vmatpush.bf16.msra.mxu0 %v3242
    %3859 = vmatpush.bf16.msra.mxu0 %v3238
    %3860 = vmatpush.bf16.msra.mxu0 %v3234
    %3861 = vmatpush.bf16.msra.mxu0 %v3230
    %3862 = vmatmul.bf16.gmra.mxu0 %v3853
    %v3863 = vpop.f32.mrf.mxu0
    %v3864 = vadd.f32 0.0, %v3863
    %v3865 = vpop.f32.mrf.mxu0
    %3866 = vdwg.mxu0
    %3867 = vmatpush.bf16.msra.mxu0 %v3259
    %3868 = vmatpush.bf16.msra.mxu0 %v3255
    %3869 = vmatpush.bf16.msra.mxu0 %v3251
    %3870 = vmatpush.bf16.msra.mxu0 %v3247
    %3871 = vmatpush.bf16.msra.mxu0 %v3243
    %3872 = vmatpush.bf16.msra.mxu0 %v3239
    %3873 = vmatpush.bf16.msra.mxu0 %v3235
    %3874 = vmatpush.bf16.msra.mxu0 %v3231
    %3875 = vmatmul.bf16.gmra.mxu0 %v3853
    %v3876 = vpop.f32.mrf.mxu0
    %v3877 = vadd.f32 0.0, %v3876
    %v3878 = vpop.f32.mrf.mxu0
    %3879 = vdwg.mxu0
    %3880 = vmatpush.bf16.msra.mxu0 %v3260
    %3881 = vmatpush.bf16.msra.mxu0 %v3256
    %3882 = vmatpush.bf16.msra.mxu0 %v3252
    %3883 = vmatpush.bf16.msra.mxu0 %v3248
    %3884 = vmatpush.bf16.msra.mxu0 %v3244
    %3885 = vmatpush.bf16.msra.mxu0 %v3240
    %3886 = vmatpush.bf16.msra.mxu0 %v3236
    %3887 = vmatpush.bf16.msra.mxu0 %v3232
    %3888 = vmatmul.bf16.gmra.mxu0 %v3853
    %v3889 = vpop.f32.mrf.mxu0
    %v3890 = vadd.f32 0.0, %v3889
    %v3891 = vpop.f32.mrf.mxu0
    %3892 = vdwg.mxu0
    %3893 = vmatpush.bf16.msra.mxu0 %v3261
    %3894 = vmatpush.bf16.msra.mxu0 %v3257
    %3895 = vmatpush.bf16.msra.mxu0 %v3253
    %3896 = vmatpush.bf16.msra.mxu0 %v3249
    %3897 = vmatpush.bf16.msra.mxu0 %v3245
    %3898 = vmatpush.bf16.msra.mxu0 %v3241
    %3899 = vmatpush.bf16.msra.mxu0 %v3237
    %3900 = vmatpush.bf16.msra.mxu0 %v3233
    %3901 = vmatmul.bf16.gmra.mxu0 %v3853
    %v3902 = vpop.f32.mrf.mxu0
    %v3903 = vadd.f32 0.0, %v3902
    %v3904 = vpop.f32.mrf.mxu0
    %3905 = vdwg.mxu0
    %v3906 = vadd.f32 %v3849, %v3864
    %v3907 = vadd.f32 %v3850, %v3877
    %v3908 = vadd.f32 %v3851, %v3890
    %v3909 = vadd.f32 %v3852, %v3903
    %v3910 = vmul.f32 %v3906, 0.5
    %v3911 = vmul.f32 %v3907, 0.5
    %v3912 = vmul.f32 %v3908, 0.5
    %v3913 = vtanh.pop %v3910
    %v3914 = vtanh.pop %v3911
    %v3915 = vtanh.pop %v3912
    %v3916 = vmul.f32 %v3913, 0.5
    %v3917 = vmul.f32 %v3914, 0.5
    %v3918 = vmul.f32 %v3915, 0.5
    %v3919 = vadd.f32 %v3916, 0.5
    %v3920 = vadd.f32 %v3917, 0.5
    %v3921 = vadd.f32 %v3918, 0.5
    %v3922 = vtanh.pop %v3909
    %v3923 = vmul.f32 %v3920, %v3845
    %v3924 = vmul.f32 %v3919, %v3922
    %v3925 = vadd.f32 %v3923, %v3924
    %v3926 = vtanh.pop %v3925
    %v3927 = vmul.f32 %v3921, %v3926
    %3928 = vst [vmem:[%s1519] sm:$0xff] %v3927
    %s3929 = scalar_lea.vmem [#allocation16], 16
    %3930 = vst [vmem:[%s3929] sm:$0xff] %v3927
    %s3931 = scalar_lea.vmem [#allocation18], 16
    %3932 = vst [vmem:[%s3931] sm:$0xff] %v3925
    %v3933 = vld [vmem:[#allocation2] sm:$0xff]
    %v3934 = vld [vmem:[#allocation2 + $0x8] sm:$0xff]
    %v3935 = vld [vmem:[#allocation2 + $0x10] sm:$0xff]
    %v3936 = vld [vmem:[#allocation2 + $0x18] sm:$0xff]
    %v3937 = vld [vmem:[#allocation2 + $0x20] sm:$0xff]
    %v3938 = vld [vmem:[#allocation2 + $0x28] sm:$0xff]
    %v3939 = vld [vmem:[#allocation2 + $0x30] sm:$0xff]
    %v3940 = vld [vmem:[#allocation2 + $0x38] sm:$0xff]
    %v3941 = vpack.c.bf16 %v3934, %v3933
    %v3942 = vpack.c.bf16 %v3936, %v3935
    %v3943 = vpack.c.bf16 %v3938, %v3937
    %v3944 = vpack.c.bf16 %v3940, %v3939
    %s3945 = scalar_lea.vmem [#allocation9], 768
    %v3946 = vld [vmem:[%s3945] sm:$0xff]
    %v3947 = vld [vmem:[%s3945 + $0x8] sm:$0xff]
    %v3948 = vld [vmem:[%s3945 + $0x10] sm:$0xff]
    %v3949 = vld [vmem:[%s3945 + $0x18] sm:$0xff]
    %v3950 = vld [vmem:[%s3945 + $0x20] sm:$0xff]
    %v3951 = vld [vmem:[%s3945 + $0x28] sm:$0xff]
    %v3952 = vld [vmem:[%s3945 + $0x30] sm:$0xff]
    %v3953 = vld [vmem:[%s3945 + $0x38] sm:$0xff]
    %v3954 = vld [vmem:[%s3945 + $0x40] sm:$0xff]
    %v3955 = vld [vmem:[%s3945 + $0x48] sm:$0xff]
    %v3956 = vld [vmem:[%s3945 + $0x50] sm:$0xff]
    %v3957 = vld [vmem:[%s3945 + $0x58] sm:$0xff]
    %v3958 = vld [vmem:[%s3945 + $0x60] sm:$0xff]
    %v3959 = vld [vmem:[%s3945 + $0x68] sm:$0xff]
    %v3960 = vld [vmem:[%s3945 + $0x70] sm:$0xff]
    %v3961 = vld [vmem:[%s3945 + $0x78] sm:$0xff]
    %v3962 = vld [vmem:[%s3945 + $0x80] sm:$0xff]
    %v3963 = vld [vmem:[%s3945 + $0x88] sm:$0xff]
    %v3964 = vld [vmem:[%s3945 + $0x90] sm:$0xff]
    %v3965 = vld [vmem:[%s3945 + $0x98] sm:$0xff]
    %v3966 = vld [vmem:[%s3945 + $0xa0] sm:$0xff]
    %v3967 = vld [vmem:[%s3945 + $0xa8] sm:$0xff]
    %v3968 = vld [vmem:[%s3945 + $0xb0] sm:$0xff]
    %v3969 = vld [vmem:[%s3945 + $0xb8] sm:$0xff]
    %v3970 = vld [vmem:[%s3945 + $0xc0] sm:$0xff]
    %v3971 = vld [vmem:[%s3945 + $0xc8] sm:$0xff]
    %v3972 = vld [vmem:[%s3945 + $0xd0] sm:$0xff]
    %v3973 = vld [vmem:[%s3945 + $0xd8] sm:$0xff]
    %v3974 = vld [vmem:[%s3945 + $0xe0] sm:$0xff]
    %v3975 = vld [vmem:[%s3945 + $0xe8] sm:$0xff]
    %v3976 = vld [vmem:[%s3945 + $0xf0] sm:$0xff]
    %v3977 = vld [vmem:[%s3945 + $0xf8] sm:$0xff]
    %s3978 = scalar_lea.vmem [#allocation12], 12
    %v3979 = vld [vmem:[%s3978] sm:$0xf]
    %v3981 = vperm.slane %v3979, 0
    %v3982 = vperm.slane %v3979, 1
    %v3983 = vperm.slane %v3979, 2
    %v3984 = vperm.slane %v3979, 3
    %v4021 = vunpack.c.l.b16 %v3946
    %v4022 = vunpack.c.h.b16 %v3946
    %v4023 = vunpack.c.l.b16 %v3947
    %v4024 = vunpack.c.h.b16 %v3947
    %v4025 = vunpack.c.l.b16 %v3948
    %v4026 = vunpack.c.h.b16 %v3948
    %v4027 = vunpack.c.l.b16 %v3949
    %v4028 = vunpack.c.h.b16 %v3949
    %v4029 = vunpack.c.l.b16 %v3950
    %v4030 = vunpack.c.h.b16 %v3950
    %v4031 = vunpack.c.l.b16 %v3951
    %v4032 = vunpack.c.h.b16 %v3951
    %v4033 = vunpack.c.l.b16 %v3952
    %v4034 = vunpack.c.h.b16 %v3952
    %v4035 = vunpack.c.l.b16 %v3953
    %v4036 = vunpack.c.h.b16 %v3953
    %v4037 = vunpack.c.l.b16 %v3954
    %v4038 = vunpack.c.h.b16 %v3954
    %v4039 = vunpack.c.l.b16 %v3955
    %v4040 = vunpack.c.h.b16 %v3955
    %v4041 = vunpack.c.l.b16 %v3956
    %v4042 = vunpack.c.h.b16 %v3956
    %v4043 = vunpack.c.l.b16 %v3957
    %v4044 = vunpack.c.h.b16 %v3957
    %v4045 = vunpack.c.l.b16 %v3958
    %v4046 = vunpack.c.h.b16 %v3958
    %v4047 = vunpack.c.l.b16 %v3959
    %v4048 = vunpack.c.h.b16 %v3959
    %v4049 = vunpack.c.l.b16 %v3960
    %v4050 = vunpack.c.h.b16 %v3960
    %v4051 = vunpack.c.l.b16 %v3961
    %v4052 = vunpack.c.h.b16 %v3961
    %v4053 = vunpack.c.l.b16 %v3962
    %v4054 = vunpack.c.h.b16 %v3962
    %v4055 = vunpack.c.l.b16 %v3963
    %v4056 = vunpack.c.h.b16 %v3963
    %v4057 = vunpack.c.l.b16 %v3964
    %v4058 = vunpack.c.h.b16 %v3964
    %v4059 = vunpack.c.l.b16 %v3965
    %v4060 = vunpack.c.h.b16 %v3965
    %v4061 = vunpack.c.l.b16 %v3966
    %v4062 = vunpack.c.h.b16 %v3966
    %v4063 = vunpack.c.l.b16 %v3967
    %v4064 = vunpack.c.h.b16 %v3967
    %v4065 = vunpack.c.l.b16 %v3968
    %v4066 = vunpack.c.h.b16 %v3968
    %v4067 = vunpack.c.l.b16 %v3969
    %v4068 = vunpack.c.h.b16 %v3969
    %v4069 = vunpack.c.l.b16 %v3970
    %v4070 = vunpack.c.h.b16 %v3970
    %v4071 = vunpack.c.l.b16 %v3971
    %v4072 = vunpack.c.h.b16 %v3971
    %v4073 = vunpack.c.l.b16 %v3972
    %v4074 = vunpack.c.h.b16 %v3972
    %v4075 = vunpack.c.l.b16 %v3973
    %v4076 = vunpack.c.h.b16 %v3973
    %v4077 = vunpack.c.l.b16 %v3974
    %v4078 = vunpack.c.h.b16 %v3974
    %v4079 = vunpack.c.l.b16 %v3975
    %v4080 = vunpack.c.h.b16 %v3975
    %v4081 = vunpack.c.l.b16 %v3976
    %v4082 = vunpack.c.h.b16 %v3976
    %v4083 = vunpack.c.l.b16 %v3977
    %v4084 = vunpack.c.h.b16 %v3977
    %v4085 = vpack.c.b16 %v4025, %v4021
    %v4086 = vpack.c.b16 %v4026, %v4022
    %v4087 = vpack.c.b16 %v4027, %v4023
    %v4088 = vpack.c.b16 %v4028, %v4024
    %v4089 = vpack.c.b16 %v4033, %v4029
    %v4090 = vpack.c.b16 %v4034, %v4030
    %v4091 = vpack.c.b16 %v4035, %v4031
    %v4092 = vpack.c.b16 %v4036, %v4032
    %v4093 = vpack.c.b16 %v4041, %v4037
    %v4094 = vpack.c.b16 %v4042, %v4038
    %v4095 = vpack.c.b16 %v4043, %v4039
    %v4096 = vpack.c.b16 %v4044, %v4040
    %v4097 = vpack.c.b16 %v4049, %v4045
    %v4098 = vpack.c.b16 %v4050, %v4046
    %v4099 = vpack.c.b16 %v4051, %v4047
    %v4100 = vpack.c.b16 %v4052, %v4048
    %v4101 = vpack.c.b16 %v4057, %v4053
    %v4102 = vpack.c.b16 %v4058, %v4054
    %v4103 = vpack.c.b16 %v4059, %v4055
    %v4104 = vpack.c.b16 %v4060, %v4056
    %v4105 = vpack.c.b16 %v4065, %v4061
    %v4106 = vpack.c.b16 %v4066, %v4062
    %v4107 = vpack.c.b16 %v4067, %v4063
    %v4108 = vpack.c.b16 %v4068, %v4064
    %v4109 = vpack.c.b16 %v4073, %v4069
    %v4110 = vpack.c.b16 %v4074, %v4070
    %v4111 = vpack.c.b16 %v4075, %v4071
    %v4112 = vpack.c.b16 %v4076, %v4072
    %v4113 = vpack.c.b16 %v4081, %v4077
    %v4114 = vpack.c.b16 %v4082, %v4078
    %v4115 = vpack.c.b16 %v4083, %v4079
    %v4116 = vpack.c.b16 %v4084, %v4080
    %4149 = vmatpush.bf16.msra.mxu0 %v4113
    %4150 = vmatpush.bf16.msra.mxu0 %v4109
    %4151 = vmatpush.bf16.msra.mxu0 %v4105
    %4152 = vmatpush.bf16.msra.mxu0 %v4101
    %4153 = vmatpush.bf16.msra.mxu0 %v4097
    %4154 = vmatpush.bf16.msra.mxu0 %v4093
    %4155 = vmatpush.bf16.msra.mxu0 %v4089
    %4156 = vmatpush.bf16.msra.mxu0 %v4085
    %4157 = vmatmul.bf16.gmra.mxu0 %v3941
    %v4158 = vpop.f32.mrf.mxu0
    %v4159 = vadd.f32 %v3981, %v4158
    %v4160 = vpop.f32.mrf.mxu0
    %v4161 = vadd.f32 %v3981, %v4160
    %4162 = vmatmul.bf16.gmra.mxu0 %v3942
    %v4163 = vpop.f32.mrf.mxu0
    %v4164 = vadd.f32 %v3981, %v4163
    %v4165 = vpop.f32.mrf.mxu0
    %v4166 = vadd.f32 %v3981, %v4165
    %4167 = vmatmul.bf16.gmra.mxu0 %v3943
    %v4168 = vpop.f32.mrf.mxu0
    %v4169 = vadd.f32 %v3981, %v4168
    %v4170 = vpop.f32.mrf.mxu0
    %v4171 = vadd.f32 %v3981, %v4170
    %4172 = vmatmul.bf16.gmra.mxu0 %v3944
    %v4173 = vpop.f32.mrf.mxu0
    %v4174 = vadd.f32 %v3981, %v4173
    %v4175 = vpop.f32.mrf.mxu0
    %v4176 = vadd.f32 %v3981, %v4175
    %4177 = vdwg.mxu0
    %4178 = vmatpush.bf16.msra.mxu0 %v4114
    %4179 = vmatpush.bf16.msra.mxu0 %v4110
    %4180 = vmatpush.bf16.msra.mxu0 %v4106
    %4181 = vmatpush.bf16.msra.mxu0 %v4102
    %4182 = vmatpush.bf16.msra.mxu0 %v4098
    %4183 = vmatpush.bf16.msra.mxu0 %v4094
    %4184 = vmatpush.bf16.msra.mxu0 %v4090
    %4185 = vmatpush.bf16.msra.mxu0 %v4086
    %4186 = vmatmul.bf16.gmra.mxu0 %v3941
    %v4187 = vpop.f32.mrf.mxu0
    %v4188 = vadd.f32 %v3982, %v4187
    %v4189 = vpop.f32.mrf.mxu0
    %v4190 = vadd.f32 %v3982, %v4189
    %4191 = vmatmul.bf16.gmra.mxu0 %v3942
    %v4192 = vpop.f32.mrf.mxu0
    %v4193 = vadd.f32 %v3982, %v4192
    %v4194 = vpop.f32.mrf.mxu0
    %v4195 = vadd.f32 %v3982, %v4194
    %4196 = vmatmul.bf16.gmra.mxu0 %v3943
    %v4197 = vpop.f32.mrf.mxu0
    %v4198 = vadd.f32 %v3982, %v4197
    %v4199 = vpop.f32.mrf.mxu0
    %v4200 = vadd.f32 %v3982, %v4199
    %4201 = vmatmul.bf16.gmra.mxu0 %v3944
    %v4202 = vpop.f32.mrf.mxu0
    %v4203 = vadd.f32 %v3982, %v4202
    %v4204 = vpop.f32.mrf.mxu0
    %v4205 = vadd.f32 %v3982, %v4204
    %4206 = vdwg.mxu0
    %4207 = vmatpush.bf16.msra.mxu0 %v4115
    %4208 = vmatpush.bf16.msra.mxu0 %v4111
    %4209 = vmatpush.bf16.msra.mxu0 %v4107
    %4210 = vmatpush.bf16.msra.mxu0 %v4103
    %4211 = vmatpush.bf16.msra.mxu0 %v4099
    %4212 = vmatpush.bf16.msra.mxu0 %v4095
    %4213 = vmatpush.bf16.msra.mxu0 %v4091
    %4214 = vmatpush.bf16.msra.mxu0 %v4087
    %4215 = vmatmul.bf16.gmra.mxu0 %v3941
    %v4216 = vpop.f32.mrf.mxu0
    %v4217 = vadd.f32 %v3983, %v4216
    %v4218 = vpop.f32.mrf.mxu0
    %v4219 = vadd.f32 %v3983, %v4218
    %4220 = vmatmul.bf16.gmra.mxu0 %v3942
    %v4221 = vpop.f32.mrf.mxu0
    %v4222 = vadd.f32 %v3983, %v4221
    %v4223 = vpop.f32.mrf.mxu0
    %v4224 = vadd.f32 %v3983, %v4223
    %4225 = vmatmul.bf16.gmra.mxu0 %v3943
    %v4226 = vpop.f32.mrf.mxu0
    %v4227 = vadd.f32 %v3983, %v4226
    %v4228 = vpop.f32.mrf.mxu0
    %v4229 = vadd.f32 %v3983, %v4228
    %4230 = vmatmul.bf16.gmra.mxu0 %v3944
    %v4231 = vpop.f32.mrf.mxu0
    %v4232 = vadd.f32 %v3983, %v4231
    %v4233 = vpop.f32.mrf.mxu0
    %v4234 = vadd.f32 %v3983, %v4233
    %4235 = vdwg.mxu0
    %4236 = vmatpush.bf16.msra.mxu0 %v4116
    %4237 = vmatpush.bf16.msra.mxu0 %v4112
    %4238 = vmatpush.bf16.msra.mxu0 %v4108
    %4239 = vmatpush.bf16.msra.mxu0 %v4104
    %4240 = vmatpush.bf16.msra.mxu0 %v4100
    %4241 = vmatpush.bf16.msra.mxu0 %v4096
    %4242 = vmatpush.bf16.msra.mxu0 %v4092
    %4243 = vmatpush.bf16.msra.mxu0 %v4088
    %4244 = vmatmul.bf16.gmra.mxu0 %v3941
    %v4245 = vpop.f32.mrf.mxu0
    %v4246 = vadd.f32 %v3984, %v4245
    %v4247 = vpop.f32.mrf.mxu0
    %v4248 = vadd.f32 %v3984, %v4247
    %4249 = vmatmul.bf16.gmra.mxu0 %v3942
    %v4250 = vpop.f32.mrf.mxu0
    %v4251 = vadd.f32 %v3984, %v4250
    %v4252 = vpop.f32.mrf.mxu0
    %v4253 = vadd.f32 %v3984, %v4252
    %4254 = vmatmul.bf16.gmra.mxu0 %v3943
    %v4255 = vpop.f32.mrf.mxu0
    %v4256 = vadd.f32 %v3984, %v4255
    %v4257 = vpop.f32.mrf.mxu0
    %v4258 = vadd.f32 %v3984, %v4257
    %4259 = vmatmul.bf16.gmra.mxu0 %v3944
    %v4260 = vpop.f32.mrf.mxu0
    %v4261 = vadd.f32 %v3984, %v4260
    %v4262 = vpop.f32.mrf.mxu0
    %v4263 = vadd.f32 %v3984, %v4262
    %4264 = vdwg.mxu0
    %4265 = vst [vmem:[#allocation3] sm:$0xff] %v4159
    %4266 = vst [vmem:[#allocation3 + $0x8] sm:$0xff] %v4188
    %4267 = vst [vmem:[#allocation3 + $0x10] sm:$0xff] %v4217
    %4268 = vst [vmem:[#allocation3 + $0x18] sm:$0xff] %v4246
    %4269 = vst [vmem:[#allocation3 + $0x20] sm:$0xff] %v4161
    %4270 = vst [vmem:[#allocation3 + $0x28] sm:$0xff] %v4190
    %4271 = vst [vmem:[#allocation3 + $0x30] sm:$0xff] %v4219
    %4272 = vst [vmem:[#allocation3 + $0x38] sm:$0xff] %v4248
    %4273 = vst [vmem:[#allocation3 + $0x40] sm:$0xff] %v4164
    %4274 = vst [vmem:[#allocation3 + $0x48] sm:$0xff] %v4193
    %4275 = vst [vmem:[#allocation3 + $0x50] sm:$0xff] %v4222
    %4276 = vst [vmem:[#allocation3 + $0x58] sm:$0xff] %v4251
    %4277 = vst [vmem:[#allocation3 + $0x60] sm:$0xff] %v4166
    %4278 = vst [vmem:[#allocation3 + $0x68] sm:$0xff] %v4195
    %4279 = vst [vmem:[#allocation3 + $0x70] sm:$0xff] %v4224
    %4280 = vst [vmem:[#allocation3 + $0x78] sm:$0xff] %v4253
    %4281 = vst [vmem:[#allocation3 + $0x80] sm:$0xff] %v4169
    %4282 = vst [vmem:[#allocation3 + $0x88] sm:$0xff] %v4198
    %4283 = vst [vmem:[#allocation3 + $0x90] sm:$0xff] %v4227
    %4284 = vst [vmem:[#allocation3 + $0x98] sm:$0xff] %v4256
    %4285 = vst [vmem:[#allocation3 + $0xa0] sm:$0xff] %v4171
    %4286 = vst [vmem:[#allocation3 + $0xa8] sm:$0xff] %v4200
    %4287 = vst [vmem:[#allocation3 + $0xb0] sm:$0xff] %v4229
    %4288 = vst [vmem:[#allocation3 + $0xb8] sm:$0xff] %v4258
    %4289 = vst [vmem:[#allocation3 + $0xc0] sm:$0xff] %v4174
    %4290 = vst [vmem:[#allocation3 + $0xc8] sm:$0xff] %v4203
    %4291 = vst [vmem:[#allocation3 + $0xd0] sm:$0xff] %v4232
    %4292 = vst [vmem:[#allocation3 + $0xd8] sm:$0xff] %v4261
    %4293 = vst [vmem:[#allocation3 + $0xe0] sm:$0xff] %v4176
    %4294 = vst [vmem:[#allocation3 + $0xe8] sm:$0xff] %v4205
    %4295 = vst [vmem:[#allocation3 + $0xf0] sm:$0xff] %v4234
    %4296 = vst [vmem:[#allocation3 + $0xf8] sm:$0xff] %v4263
    %s4297 = scalar_lea.vmem [#allocation10], 768
    %v4298 = vld [vmem:[%s4297] sm:$0xff]
    %v4299 = vld [vmem:[%s4297 + $0x8] sm:$0xff]
    %v4300 = vld [vmem:[%s4297 + $0x10] sm:$0xff]
    %v4301 = vld [vmem:[%s4297 + $0x18] sm:$0xff]
    %v4302 = vld [vmem:[%s4297 + $0x20] sm:$0xff]
    %v4303 = vld [vmem:[%s4297 + $0x28] sm:$0xff]
    %v4304 = vld [vmem:[%s4297 + $0x30] sm:$0xff]
    %v4305 = vld [vmem:[%s4297 + $0x38] sm:$0xff]
    %v4306 = vld [vmem:[%s4297 + $0x40] sm:$0xff]
    %v4307 = vld [vmem:[%s4297 + $0x48] sm:$0xff]
    %v4308 = vld [vmem:[%s4297 + $0x50] sm:$0xff]
    %v4309 = vld [vmem:[%s4297 + $0x58] sm:$0xff]
    %v4310 = vld [vmem:[%s4297 + $0x60] sm:$0xff]
    %v4311 = vld [vmem:[%s4297 + $0x68] sm:$0xff]
    %v4312 = vld [vmem:[%s4297 + $0x70] sm:$0xff]
    %v4313 = vld [vmem:[%s4297 + $0x78] sm:$0xff]
    %v4314 = vld [vmem:[%s4297 + $0x80] sm:$0xff]
    %v4315 = vld [vmem:[%s4297 + $0x88] sm:$0xff]
    %v4316 = vld [vmem:[%s4297 + $0x90] sm:$0xff]
    %v4317 = vld [vmem:[%s4297 + $0x98] sm:$0xff]
    %v4318 = vld [vmem:[%s4297 + $0xa0] sm:$0xff]
    %v4319 = vld [vmem:[%s4297 + $0xa8] sm:$0xff]
    %v4320 = vld [vmem:[%s4297 + $0xb0] sm:$0xff]
    %v4321 = vld [vmem:[%s4297 + $0xb8] sm:$0xff]
    %v4322 = vld [vmem:[%s4297 + $0xc0] sm:$0xff]
    %v4323 = vld [vmem:[%s4297 + $0xc8] sm:$0xff]
    %v4324 = vld [vmem:[%s4297 + $0xd0] sm:$0xff]
    %v4325 = vld [vmem:[%s4297 + $0xd8] sm:$0xff]
    %v4326 = vld [vmem:[%s4297 + $0xe0] sm:$0xff]
    %v4327 = vld [vmem:[%s4297 + $0xe8] sm:$0xff]
    %v4328 = vld [vmem:[%s4297 + $0xf0] sm:$0xff]
    %v4329 = vld [vmem:[%s4297 + $0xf8] sm:$0xff]
    %s4330 = scalar_lea.vmem [#allocation4], 24
    %v4331 = vld [vmem:[%s4330] sm:$0xff]
    %s4332 = scalar_lea.vmem [#allocation7], 24
    %v4333 = vld [vmem:[%s4332] sm:$0xff]
    %v4334 = vld [vmem:[%s692] sm:$0xff]
    %v4335 = vld [vmem:[%s692 + $0x8] sm:$0xff]
    %v4336 = vld [vmem:[%s692 + $0x10] sm:$0xff]
    %v4337 = vld [vmem:[%s692 + $0x18] sm:$0xff]
    %v4338 = vpack.c.bf16 %v4331, %v4331
    %v4371 = vunpack.c.l.b16 %v4298
    %v4372 = vunpack.c.h.b16 %v4298
    %v4373 = vunpack.c.l.b16 %v4299
    %v4374 = vunpack.c.h.b16 %v4299
    %v4375 = vunpack.c.l.b16 %v4300
    %v4376 = vunpack.c.h.b16 %v4300
    %v4377 = vunpack.c.l.b16 %v4301
    %v4378 = vunpack.c.h.b16 %v4301
    %v4379 = vunpack.c.l.b16 %v4302
    %v4380 = vunpack.c.h.b16 %v4302
    %v4381 = vunpack.c.l.b16 %v4303
    %v4382 = vunpack.c.h.b16 %v4303
    %v4383 = vunpack.c.l.b16 %v4304
    %v4384 = vunpack.c.h.b16 %v4304
    %v4385 = vunpack.c.l.b16 %v4305
    %v4386 = vunpack.c.h.b16 %v4305
    %v4387 = vunpack.c.l.b16 %v4306
    %v4388 = vunpack.c.h.b16 %v4306
    %v4389 = vunpack.c.l.b16 %v4307
    %v4390 = vunpack.c.h.b16 %v4307
    %v4391 = vunpack.c.l.b16 %v4308
    %v4392 = vunpack.c.h.b16 %v4308
    %v4393 = vunpack.c.l.b16 %v4309
    %v4394 = vunpack.c.h.b16 %v4309
    %v4395 = vunpack.c.l.b16 %v4310
    %v4396 = vunpack.c.h.b16 %v4310
    %v4397 = vunpack.c.l.b16 %v4311
    %v4398 = vunpack.c.h.b16 %v4311
    %v4399 = vunpack.c.l.b16 %v4312
    %v4400 = vunpack.c.h.b16 %v4312
    %v4401 = vunpack.c.l.b16 %v4313
    %v4402 = vunpack.c.h.b16 %v4313
    %v4403 = vunpack.c.l.b16 %v4314
    %v4404 = vunpack.c.h.b16 %v4314
    %v4405 = vunpack.c.l.b16 %v4315
    %v4406 = vunpack.c.h.b16 %v4315
    %v4407 = vunpack.c.l.b16 %v4316
    %v4408 = vunpack.c.h.b16 %v4316
    %v4409 = vunpack.c.l.b16 %v4317
    %v4410 = vunpack.c.h.b16 %v4317
    %v4411 = vunpack.c.l.b16 %v4318
    %v4412 = vunpack.c.h.b16 %v4318
    %v4413 = vunpack.c.l.b16 %v4319
    %v4414 = vunpack.c.h.b16 %v4319
    %v4415 = vunpack.c.l.b16 %v4320
    %v4416 = vunpack.c.h.b16 %v4320
    %v4417 = vunpack.c.l.b16 %v4321
    %v4418 = vunpack.c.h.b16 %v4321
    %v4419 = vunpack.c.l.b16 %v4322
    %v4420 = vunpack.c.h.b16 %v4322
    %v4421 = vunpack.c.l.b16 %v4323
    %v4422 = vunpack.c.h.b16 %v4323
    %v4423 = vunpack.c.l.b16 %v4324
    %v4424 = vunpack.c.h.b16 %v4324
    %v4425 = vunpack.c.l.b16 %v4325
    %v4426 = vunpack.c.h.b16 %v4325
    %v4427 = vunpack.c.l.b16 %v4326
    %v4428 = vunpack.c.h.b16 %v4326
    %v4429 = vunpack.c.l.b16 %v4327
    %v4430 = vunpack.c.h.b16 %v4327
    %v4431 = vunpack.c.l.b16 %v4328
    %v4432 = vunpack.c.h.b16 %v4328
    %v4433 = vunpack.c.l.b16 %v4329
    %v4434 = vunpack.c.h.b16 %v4329
    %v4435 = vpack.c.b16 %v4375, %v4371
    %v4436 = vpack.c.b16 %v4376, %v4372
    %v4437 = vpack.c.b16 %v4377, %v4373
    %v4438 = vpack.c.b16 %v4378, %v4374
    %v4439 = vpack.c.b16 %v4383, %v4379
    %v4440 = vpack.c.b16 %v4384, %v4380
    %v4441 = vpack.c.b16 %v4385, %v4381
    %v4442 = vpack.c.b16 %v4386, %v4382
    %v4443 = vpack.c.b16 %v4391, %v4387
    %v4444 = vpack.c.b16 %v4392, %v4388
    %v4445 = vpack.c.b16 %v4393, %v4389
    %v4446 = vpack.c.b16 %v4394, %v4390
    %v4447 = vpack.c.b16 %v4399, %v4395
    %v4448 = vpack.c.b16 %v4400, %v4396
    %v4449 = vpack.c.b16 %v4401, %v4397
    %v4450 = vpack.c.b16 %v4402, %v4398
    %v4451 = vpack.c.b16 %v4407, %v4403
    %v4452 = vpack.c.b16 %v4408, %v4404
    %v4453 = vpack.c.b16 %v4409, %v4405
    %v4454 = vpack.c.b16 %v4410, %v4406
    %v4455 = vpack.c.b16 %v4415, %v4411
    %v4456 = vpack.c.b16 %v4416, %v4412
    %v4457 = vpack.c.b16 %v4417, %v4413
    %v4458 = vpack.c.b16 %v4418, %v4414
    %v4459 = vpack.c.b16 %v4423, %v4419
    %v4460 = vpack.c.b16 %v4424, %v4420
    %v4461 = vpack.c.b16 %v4425, %v4421
    %v4462 = vpack.c.b16 %v4426, %v4422
    %v4463 = vpack.c.b16 %v4431, %v4427
    %v4464 = vpack.c.b16 %v4432, %v4428
    %v4465 = vpack.c.b16 %v4433, %v4429
    %v4466 = vpack.c.b16 %v4434, %v4430
    %4499 = vmatpush.bf16.msra.mxu0 %v4463
    %4500 = vmatpush.bf16.msra.mxu0 %v4459
    %4501 = vmatpush.bf16.msra.mxu0 %v4455
    %4502 = vmatpush.bf16.msra.mxu0 %v4451
    %4503 = vmatpush.bf16.msra.mxu0 %v4447
    %4504 = vmatpush.bf16.msra.mxu0 %v4443
    %4505 = vmatpush.bf16.msra.mxu0 %v4439
    %4506 = vmatpush.bf16.msra.mxu0 %v4435
    %4507 = vmatmul.bf16.gmra.mxu0 %v4338
    %v4508 = vpop.f32.mrf.mxu0
    %v4509 = vadd.f32 0.0, %v4508
    %v4510 = vpop.f32.mrf.mxu0
    %4511 = vdwg.mxu0
    %4512 = vmatpush.bf16.msra.mxu0 %v4464
    %4513 = vmatpush.bf16.msra.mxu0 %v4460
    %4514 = vmatpush.bf16.msra.mxu0 %v4456
    %4515 = vmatpush.bf16.msra.mxu0 %v4452
    %4516 = vmatpush.bf16.msra.mxu0 %v4448
    %4517 = vmatpush.bf16.msra.mxu0 %v4444
    %4518 = vmatpush.bf16.msra.mxu0 %v4440
    %4519 = vmatpush.bf16.msra.mxu0 %v4436
    %4520 = vmatmul.bf16.gmra.mxu0 %v4338
    %v4521 = vpop.f32.mrf.mxu0
    %v4522 = vadd.f32 0.0, %v4521
    %v4523 = vpop.f32.mrf.mxu0
    %4524 = vdwg.mxu0
    %4525 = vmatpush.bf16.msra.mxu0 %v4465
    %4526 = vmatpush.bf16.msra.mxu0 %v4461
    %4527 = vmatpush.bf16.msra.mxu0 %v4457
    %4528 = vmatpush.bf16.msra.mxu0 %v4453
    %4529 = vmatpush.bf16.msra.mxu0 %v4449
    %4530 = vmatpush.bf16.msra.mxu0 %v4445
    %4531 = vmatpush.bf16.msra.mxu0 %v4441
    %4532 = vmatpush.bf16.msra.mxu0 %v4437
    %4533 = vmatmul.bf16.gmra.mxu0 %v4338
    %v4534 = vpop.f32.mrf.mxu0
    %v4535 = vadd.f32 0.0, %v4534
    %v4536 = vpop.f32.mrf.mxu0
    %4537 = vdwg.mxu0
    %4538 = vmatpush.bf16.msra.mxu0 %v4466
    %4539 = vmatpush.bf16.msra.mxu0 %v4462
    %4540 = vmatpush.bf16.msra.mxu0 %v4458
    %4541 = vmatpush.bf16.msra.mxu0 %v4454
    %4542 = vmatpush.bf16.msra.mxu0 %v4450
    %4543 = vmatpush.bf16.msra.mxu0 %v4446
    %4544 = vmatpush.bf16.msra.mxu0 %v4442
    %4545 = vmatpush.bf16.msra.mxu0 %v4438
    %4546 = vmatmul.bf16.gmra.mxu0 %v4338
    %v4547 = vpop.f32.mrf.mxu0
    %v4548 = vadd.f32 0.0, %v4547
    %v4549 = vpop.f32.mrf.mxu0
    %4550 = vdwg.mxu0
    %v4551 = vadd.f32 %v4334, %v4509
    %v4552 = vadd.f32 %v4335, %v4522
    %v4553 = vadd.f32 %v4336, %v4535
    %v4554 = vadd.f32 %v4337, %v4548
    %v4555 = vmul.f32 %v4551, 0.5
    %v4556 = vmul.f32 %v4552, 0.5
    %v4557 = vmul.f32 %v4553, 0.5
    %v4558 = vtanh.pop %v4555
    %v4559 = vtanh.pop %v4556
    %v4560 = vtanh.pop %v4557
    %v4561 = vmul.f32 %v4558, 0.5
    %v4562 = vmul.f32 %v4559, 0.5
    %v4563 = vmul.f32 %v4560, 0.5
    %v4564 = vadd.f32 %v4561, 0.5
    %v4565 = vadd.f32 %v4562, 0.5
    %v4566 = vadd.f32 %v4563, 0.5
    %v4567 = vtanh.pop %v4554
    %v4568 = vmul.f32 %v4565, %v4333
    %v4569 = vmul.f32 %v4564, %v4567
    %v4570 = vadd.f32 %v4568, %v4569
    %v4571 = vtanh.pop %v4570
    %v4572 = vmul.f32 %v4566, %v4571
    %4573 = vst [vmem:[#allocation2] sm:$0xff] %v4572
    %v4574 = vld [vmem:[%s935] sm:$0xff]
    %v4575 = vld [vmem:[%s935 + $0x8] sm:$0xff]
    %v4576 = vld [vmem:[%s935 + $0x10] sm:$0xff]
    %v4577 = vld [vmem:[%s935 + $0x18] sm:$0xff]
    %v4578 = vpack.c.bf16 %v4572, %v4572
    %4579 = vmatpush.bf16.msra.mxu0 %v4463
    %4580 = vmatpush.bf16.msra.mxu0 %v4459
    %4581 = vmatpush.bf16.msra.mxu0 %v4455
    %4582 = vmatpush.bf16.msra.mxu0 %v4451
    %4583 = vmatpush.bf16.msra.mxu0 %v4447
    %4584 = vmatpush.bf16.msra.mxu0 %v4443
    %4585 = vmatpush.bf16.msra.mxu0 %v4439
    %4586 = vmatpush.bf16.msra.mxu0 %v4435
    %4587 = vmatmul.bf16.gmra.mxu0 %v4578
    %v4588 = vpop.f32.mrf.mxu0
    %v4589 = vadd.f32 0.0, %v4588
    %v4590 = vpop.f32.mrf.mxu0
    %4591 = vdwg.mxu0
    %4592 = vmatpush.bf16.msra.mxu0 %v4464
    %4593 = vmatpush.bf16.msra.mxu0 %v4460
    %4594 = vmatpush.bf16.msra.mxu0 %v4456
    %4595 = vmatpush.bf16.msra.mxu0 %v4452
    %4596 = vmatpush.bf16.msra.mxu0 %v4448
    %4597 = vmatpush.bf16.msra.mxu0 %v4444
    %4598 = vmatpush.bf16.msra.mxu0 %v4440
    %4599 = vmatpush.bf16.msra.mxu0 %v4436
    %4600 = vmatmul.bf16.gmra.mxu0 %v4578
    %v4601 = vpop.f32.mrf.mxu0
    %v4602 = vadd.f32 0.0, %v4601
    %v4603 = vpop.f32.mrf.mxu0
    %4604 = vdwg.mxu0
    %4605 = vmatpush.bf16.msra.mxu0 %v4465
    %4606 = vmatpush.bf16.msra.mxu0 %v4461
    %4607 = vmatpush.bf16.msra.mxu0 %v4457
    %4608 = vmatpush.bf16.msra.mxu0 %v4453
    %4609 = vmatpush.bf16.msra.mxu0 %v4449
    %4610 = vmatpush.bf16.msra.mxu0 %v4445
    %4611 = vmatpush.bf16.msra.mxu0 %v4441
    %4612 = vmatpush.bf16.msra.mxu0 %v4437
    %4613 = vmatmul.bf16.gmra.mxu0 %v4578
    %v4614 = vpop.f32.mrf.mxu0
    %v4615 = vadd.f32 0.0, %v4614
    %v4616 = vpop.f32.mrf.mxu0
    %4617 = vdwg.mxu0
    %4618 = vmatpush.bf16.msra.mxu0 %v4466
    %4619 = vmatpush.bf16.msra.mxu0 %v4462
    %4620 = vmatpush.bf16.msra.mxu0 %v4458
    %4621 = vmatpush.bf16.msra.mxu0 %v4454
    %4622 = vmatpush.bf16.msra.mxu0 %v4450
    %4623 = vmatpush.bf16.msra.mxu0 %v4446
    %4624 = vmatpush.bf16.msra.mxu0 %v4442
    %4625 = vmatpush.bf16.msra.mxu0 %v4438
    %4626 = vmatmul.bf16.gmra.mxu0 %v4578
    %v4627 = vpop.f32.mrf.mxu0
    %v4628 = vadd.f32 0.0, %v4627
    %v4629 = vpop.f32.mrf.mxu0
    %4630 = vdwg.mxu0
    %v4631 = vadd.f32 %v4574, %v4589
    %v4632 = vadd.f32 %v4575, %v4602
    %v4633 = vadd.f32 %v4576, %v4615
    %v4634 = vadd.f32 %v4577, %v4628
    %v4635 = vmul.f32 %v4631, 0.5
    %v4636 = vmul.f32 %v4632, 0.5
    %v4637 = vmul.f32 %v4633, 0.5
    %v4638 = vtanh.pop %v4635
    %v4639 = vtanh.pop %v4636
    %v4640 = vtanh.pop %v4637
    %v4641 = vmul.f32 %v4638, 0.5
    %v4642 = vmul.f32 %v4639, 0.5
    %v4643 = vmul.f32 %v4640, 0.5
    %v4644 = vadd.f32 %v4641, 0.5
    %v4645 = vadd.f32 %v4642, 0.5
    %v4646 = vadd.f32 %v4643, 0.5
    %v4647 = vtanh.pop %v4634
    %v4648 = vmul.f32 %v4645, %v4570
    %v4649 = vmul.f32 %v4644, %v4647
    %v4650 = vadd.f32 %v4648, %v4649
    %v4651 = vtanh.pop %v4650
    %v4652 = vmul.f32 %v4646, %v4651
    %4653 = vst [vmem:[%s1015] sm:$0xff] %v4652
    %v4654 = vld [vmem:[%s1019] sm:$0xff]
    %v4655 = vld [vmem:[%s1019 + $0x8] sm:$0xff]
    %v4656 = vld [vmem:[%s1019 + $0x10] sm:$0xff]
    %v4657 = vld [vmem:[%s1019 + $0x18] sm:$0xff]
    %v4658 = vpack.c.bf16 %v4652, %v4652
    %4659 = vmatpush.bf16.msra.mxu0 %v4463
    %4660 = vmatpush.bf16.msra.mxu0 %v4459
    %4661 = vmatpush.bf16.msra.mxu0 %v4455
    %4662 = vmatpush.bf16.msra.mxu0 %v4451
    %4663 = vmatpush.bf16.msra.mxu0 %v4447
    %4664 = vmatpush.bf16.msra.mxu0 %v4443
    %4665 = vmatpush.bf16.msra.mxu0 %v4439
    %4666 = vmatpush.bf16.msra.mxu0 %v4435
    %4667 = vmatmul.bf16.gmra.mxu0 %v4658
    %v4668 = vpop.f32.mrf.mxu0
    %v4669 = vadd.f32 0.0, %v4668
    %v4670 = vpop.f32.mrf.mxu0
    %4671 = vdwg.mxu0
    %4672 = vmatpush.bf16.msra.mxu0 %v4464
    %4673 = vmatpush.bf16.msra.mxu0 %v4460
    %4674 = vmatpush.bf16.msra.mxu0 %v4456
    %4675 = vmatpush.bf16.msra.mxu0 %v4452
    %4676 = vmatpush.bf16.msra.mxu0 %v4448
    %4677 = vmatpush.bf16.msra.mxu0 %v4444
    %4678 = vmatpush.bf16.msra.mxu0 %v4440
    %4679 = vmatpush.bf16.msra.mxu0 %v4436
    %4680 = vmatmul.bf16.gmra.mxu0 %v4658
    %v4681 = vpop.f32.mrf.mxu0
    %v4682 = vadd.f32 0.0, %v4681
    %v4683 = vpop.f32.mrf.mxu0
    %4684 = vdwg.mxu0
    %4685 = vmatpush.bf16.msra.mxu0 %v4465
    %4686 = vmatpush.bf16.msra.mxu0 %v4461
    %4687 = vmatpush.bf16.msra.mxu0 %v4457
    %4688 = vmatpush.bf16.msra.mxu0 %v4453
    %4689 = vmatpush.bf16.msra.mxu0 %v4449
    %4690 = vmatpush.bf16.msra.mxu0 %v4445
    %4691 = vmatpush.bf16.msra.mxu0 %v4441
    %4692 = vmatpush.bf16.msra.mxu0 %v4437
    %4693 = vmatmul.bf16.gmra.mxu0 %v4658
    %v4694 = vpop.f32.mrf.mxu0
    %v4695 = vadd.f32 0.0, %v4694
    %v4696 = vpop.f32.mrf.mxu0
    %4697 = vdwg.mxu0
    %4698 = vmatpush.bf16.msra.mxu0 %v4466
    %4699 = vmatpush.bf16.msra.mxu0 %v4462
    %4700 = vmatpush.bf16.msra.mxu0 %v4458
    %4701 = vmatpush.bf16.msra.mxu0 %v4454
    %4702 = vmatpush.bf16.msra.mxu0 %v4450
    %4703 = vmatpush.bf16.msra.mxu0 %v4446
    %4704 = vmatpush.bf16.msra.mxu0 %v4442
    %4705 = vmatpush.bf16.msra.mxu0 %v4438
    %4706 = vmatmul.bf16.gmra.mxu0 %v4658
    %v4707 = vpop.f32.mrf.mxu0
    %v4708 = vadd.f32 0.0, %v4707
    %v4709 = vpop.f32.mrf.mxu0
    %4710 = vdwg.mxu0
    %v4711 = vadd.f32 %v4654, %v4669
    %v4712 = vadd.f32 %v4655, %v4682
    %v4713 = vadd.f32 %v4656, %v4695
    %v4714 = vadd.f32 %v4657, %v4708
    %v4715 = vmul.f32 %v4711, 0.5
    %v4716 = vmul.f32 %v4712, 0.5
    %v4717 = vmul.f32 %v4713, 0.5
    %v4718 = vtanh.pop %v4715
    %v4719 = vtanh.pop %v4716
    %v4720 = vtanh.pop %v4717
    %v4721 = vmul.f32 %v4718, 0.5
    %v4722 = vmul.f32 %v4719, 0.5
    %v4723 = vmul.f32 %v4720, 0.5
    %v4724 = vadd.f32 %v4721, 0.5
    %v4725 = vadd.f32 %v4722, 0.5
    %v4726 = vadd.f32 %v4723, 0.5
    %v4727 = vtanh.pop %v4714
    %v4728 = vmul.f32 %v4725, %v4650
    %v4729 = vmul.f32 %v4724, %v4727
    %v4730 = vadd.f32 %v4728, %v4729
    %v4731 = vtanh.pop %v4730
    %v4732 = vmul.f32 %v4726, %v4731
    %4733 = vst [vmem:[%s1099] sm:$0xff] %v4732
    %v4734 = vld [vmem:[%s1103] sm:$0xff]
    %v4735 = vld [vmem:[%s1103 + $0x8] sm:$0xff]
    %v4736 = vld [vmem:[%s1103 + $0x10] sm:$0xff]
    %v4737 = vld [vmem:[%s1103 + $0x18] sm:$0xff]
    %v4738 = vpack.c.bf16 %v4732, %v4732
    %4739 = vmatpush.bf16.msra.mxu0 %v4463
    %4740 = vmatpush.bf16.msra.mxu0 %v4459
    %4741 = vmatpush.bf16.msra.mxu0 %v4455
    %4742 = vmatpush.bf16.msra.mxu0 %v4451
    %4743 = vmatpush.bf16.msra.mxu0 %v4447
    %4744 = vmatpush.bf16.msra.mxu0 %v4443
    %4745 = vmatpush.bf16.msra.mxu0 %v4439
    %4746 = vmatpush.bf16.msra.mxu0 %v4435
    %4747 = vmatmul.bf16.gmra.mxu0 %v4738
    %v4748 = vpop.f32.mrf.mxu0
    %v4749 = vadd.f32 0.0, %v4748
    %v4750 = vpop.f32.mrf.mxu0
    %4751 = vdwg.mxu0
    %4752 = vmatpush.bf16.msra.mxu0 %v4464
    %4753 = vmatpush.bf16.msra.mxu0 %v4460
    %4754 = vmatpush.bf16.msra.mxu0 %v4456
    %4755 = vmatpush.bf16.msra.mxu0 %v4452
    %4756 = vmatpush.bf16.msra.mxu0 %v4448
    %4757 = vmatpush.bf16.msra.mxu0 %v4444
    %4758 = vmatpush.bf16.msra.mxu0 %v4440
    %4759 = vmatpush.bf16.msra.mxu0 %v4436
    %4760 = vmatmul.bf16.gmra.mxu0 %v4738
    %v4761 = vpop.f32.mrf.mxu0
    %v4762 = vadd.f32 0.0, %v4761
    %v4763 = vpop.f32.mrf.mxu0
    %4764 = vdwg.mxu0
    %4765 = vmatpush.bf16.msra.mxu0 %v4465
    %4766 = vmatpush.bf16.msra.mxu0 %v4461
    %4767 = vmatpush.bf16.msra.mxu0 %v4457
    %4768 = vmatpush.bf16.msra.mxu0 %v4453
    %4769 = vmatpush.bf16.msra.mxu0 %v4449
    %4770 = vmatpush.bf16.msra.mxu0 %v4445
    %4771 = vmatpush.bf16.msra.mxu0 %v4441
    %4772 = vmatpush.bf16.msra.mxu0 %v4437
    %4773 = vmatmul.bf16.gmra.mxu0 %v4738
    %v4774 = vpop.f32.mrf.mxu0
    %v4775 = vadd.f32 0.0, %v4774
    %v4776 = vpop.f32.mrf.mxu0
    %4777 = vdwg.mxu0
    %4778 = vmatpush.bf16.msra.mxu0 %v4466
    %4779 = vmatpush.bf16.msra.mxu0 %v4462
    %4780 = vmatpush.bf16.msra.mxu0 %v4458
    %4781 = vmatpush.bf16.msra.mxu0 %v4454
    %4782 = vmatpush.bf16.msra.mxu0 %v4450
    %4783 = vmatpush.bf16.msra.mxu0 %v4446
    %4784 = vmatpush.bf16.msra.mxu0 %v4442
    %4785 = vmatpush.bf16.msra.mxu0 %v4438
    %4786 = vmatmul.bf16.gmra.mxu0 %v4738
    %v4787 = vpop.f32.mrf.mxu0
    %v4788 = vadd.f32 0.0, %v4787
    %v4789 = vpop.f32.mrf.mxu0
    %4790 = vdwg.mxu0
    %v4791 = vadd.f32 %v4734, %v4749
    %v4792 = vadd.f32 %v4735, %v4762
    %v4793 = vadd.f32 %v4736, %v4775
    %v4794 = vadd.f32 %v4737, %v4788
    %v4795 = vmul.f32 %v4791, 0.5
    %v4796 = vmul.f32 %v4792, 0.5
    %v4797 = vmul.f32 %v4793, 0.5
    %v4798 = vtanh.pop %v4795
    %v4799 = vtanh.pop %v4796
    %v4800 = vtanh.pop %v4797
    %v4801 = vmul.f32 %v4798, 0.5
    %v4802 = vmul.f32 %v4799, 0.5
    %v4803 = vmul.f32 %v4800, 0.5
    %v4804 = vadd.f32 %v4801, 0.5
    %v4805 = vadd.f32 %v4802, 0.5
    %v4806 = vadd.f32 %v4803, 0.5
    %v4807 = vtanh.pop %v4794
    %v4808 = vmul.f32 %v4805, %v4730
    %v4809 = vmul.f32 %v4804, %v4807
    %v4810 = vadd.f32 %v4808, %v4809
    %v4811 = vtanh.pop %v4810
    %v4812 = vmul.f32 %v4806, %v4811
    %4813 = vst [vmem:[%s1183] sm:$0xff] %v4812
    %v4814 = vld [vmem:[%s1187] sm:$0xff]
    %v4815 = vld [vmem:[%s1187 + $0x8] sm:$0xff]
    %v4816 = vld [vmem:[%s1187 + $0x10] sm:$0xff]
    %v4817 = vld [vmem:[%s1187 + $0x18] sm:$0xff]
    %v4818 = vpack.c.bf16 %v4812, %v4812
    %4819 = vmatpush.bf16.msra.mxu0 %v4463
    %4820 = vmatpush.bf16.msra.mxu0 %v4459
    %4821 = vmatpush.bf16.msra.mxu0 %v4455
    %4822 = vmatpush.bf16.msra.mxu0 %v4451
    %4823 = vmatpush.bf16.msra.mxu0 %v4447
    %4824 = vmatpush.bf16.msra.mxu0 %v4443
    %4825 = vmatpush.bf16.msra.mxu0 %v4439
    %4826 = vmatpush.bf16.msra.mxu0 %v4435
    %4827 = vmatmul.bf16.gmra.mxu0 %v4818
    %v4828 = vpop.f32.mrf.mxu0
    %v4829 = vadd.f32 0.0, %v4828
    %v4830 = vpop.f32.mrf.mxu0
    %4831 = vdwg.mxu0
    %4832 = vmatpush.bf16.msra.mxu0 %v4464
    %4833 = vmatpush.bf16.msra.mxu0 %v4460
    %4834 = vmatpush.bf16.msra.mxu0 %v4456
    %4835 = vmatpush.bf16.msra.mxu0 %v4452
    %4836 = vmatpush.bf16.msra.mxu0 %v4448
    %4837 = vmatpush.bf16.msra.mxu0 %v4444
    %4838 = vmatpush.bf16.msra.mxu0 %v4440
    %4839 = vmatpush.bf16.msra.mxu0 %v4436
    %4840 = vmatmul.bf16.gmra.mxu0 %v4818
    %v4841 = vpop.f32.mrf.mxu0
    %v4842 = vadd.f32 0.0, %v4841
    %v4843 = vpop.f32.mrf.mxu0
    %4844 = vdwg.mxu0
    %4845 = vmatpush.bf16.msra.mxu0 %v4465
    %4846 = vmatpush.bf16.msra.mxu0 %v4461
    %4847 = vmatpush.bf16.msra.mxu0 %v4457
    %4848 = vmatpush.bf16.msra.mxu0 %v4453
    %4849 = vmatpush.bf16.msra.mxu0 %v4449
    %4850 = vmatpush.bf16.msra.mxu0 %v4445
    %4851 = vmatpush.bf16.msra.mxu0 %v4441
    %4852 = vmatpush.bf16.msra.mxu0 %v4437
    %4853 = vmatmul.bf16.gmra.mxu0 %v4818
    %v4854 = vpop.f32.mrf.mxu0
    %v4855 = vadd.f32 0.0, %v4854
    %v4856 = vpop.f32.mrf.mxu0
    %4857 = vdwg.mxu0
    %4858 = vmatpush.bf16.msra.mxu0 %v4466
    %4859 = vmatpush.bf16.msra.mxu0 %v4462
    %4860 = vmatpush.bf16.msra.mxu0 %v4458
    %4861 = vmatpush.bf16.msra.mxu0 %v4454
    %4862 = vmatpush.bf16.msra.mxu0 %v4450
    %4863 = vmatpush.bf16.msra.mxu0 %v4446
    %4864 = vmatpush.bf16.msra.mxu0 %v4442
    %4865 = vmatpush.bf16.msra.mxu0 %v4438
    %4866 = vmatmul.bf16.gmra.mxu0 %v4818
    %v4867 = vpop.f32.mrf.mxu0
    %v4868 = vadd.f32 0.0, %v4867
    %v4869 = vpop.f32.mrf.mxu0
    %4870 = vdwg.mxu0
    %v4871 = vadd.f32 %v4814, %v4829
    %v4872 = vadd.f32 %v4815, %v4842
    %v4873 = vadd.f32 %v4816, %v4855
    %v4874 = vadd.f32 %v4817, %v4868
    %v4875 = vmul.f32 %v4871, 0.5
    %v4876 = vmul.f32 %v4872, 0.5
    %v4877 = vmul.f32 %v4873, 0.5
    %v4878 = vtanh.pop %v4875
    %v4879 = vtanh.pop %v4876
    %v4880 = vtanh.pop %v4877
    %v4881 = vmul.f32 %v4878, 0.5
    %v4882 = vmul.f32 %v4879, 0.5
    %v4883 = vmul.f32 %v4880, 0.5
    %v4884 = vadd.f32 %v4881, 0.5
    %v4885 = vadd.f32 %v4882, 0.5
    %v4886 = vadd.f32 %v4883, 0.5
    %v4887 = vtanh.pop %v4874
    %v4888 = vmul.f32 %v4885, %v4810
    %v4889 = vmul.f32 %v4884, %v4887
    %v4890 = vadd.f32 %v4888, %v4889
    %v4891 = vtanh.pop %v4890
    %v4892 = vmul.f32 %v4886, %v4891
    %4893 = vst [vmem:[%s1267] sm:$0xff] %v4892
    %v4894 = vld [vmem:[%s1271] sm:$0xff]
    %v4895 = vld [vmem:[%s1271 + $0x8] sm:$0xff]
    %v4896 = vld [vmem:[%s1271 + $0x10] sm:$0xff]
    %v4897 = vld [vmem:[%s1271 + $0x18] sm:$0xff]
    %v4898 = vpack.c.bf16 %v4892, %v4892
    %4899 = vmatpush.bf16.msra.mxu0 %v4463
    %4900 = vmatpush.bf16.msra.mxu0 %v4459
    %4901 = vmatpush.bf16.msra.mxu0 %v4455
    %4902 = vmatpush.bf16.msra.mxu0 %v4451
    %4903 = vmatpush.bf16.msra.mxu0 %v4447
    %4904 = vmatpush.bf16.msra.mxu0 %v4443
    %4905 = vmatpush.bf16.msra.mxu0 %v4439
    %4906 = vmatpush.bf16.msra.mxu0 %v4435
    %4907 = vmatmul.bf16.gmra.mxu0 %v4898
    %v4908 = vpop.f32.mrf.mxu0
    %v4909 = vadd.f32 0.0, %v4908
    %v4910 = vpop.f32.mrf.mxu0
    %4911 = vdwg.mxu0
    %4912 = vmatpush.bf16.msra.mxu0 %v4464
    %4913 = vmatpush.bf16.msra.mxu0 %v4460
    %4914 = vmatpush.bf16.msra.mxu0 %v4456
    %4915 = vmatpush.bf16.msra.mxu0 %v4452
    %4916 = vmatpush.bf16.msra.mxu0 %v4448
    %4917 = vmatpush.bf16.msra.mxu0 %v4444
    %4918 = vmatpush.bf16.msra.mxu0 %v4440
    %4919 = vmatpush.bf16.msra.mxu0 %v4436
    %4920 = vmatmul.bf16.gmra.mxu0 %v4898
    %v4921 = vpop.f32.mrf.mxu0
    %v4922 = vadd.f32 0.0, %v4921
    %v4923 = vpop.f32.mrf.mxu0
    %4924 = vdwg.mxu0
    %4925 = vmatpush.bf16.msra.mxu0 %v4465
    %4926 = vmatpush.bf16.msra.mxu0 %v4461
    %4927 = vmatpush.bf16.msra.mxu0 %v4457
    %4928 = vmatpush.bf16.msra.mxu0 %v4453
    %4929 = vmatpush.bf16.msra.mxu0 %v4449
    %4930 = vmatpush.bf16.msra.mxu0 %v4445
    %4931 = vmatpush.bf16.msra.mxu0 %v4441
    %4932 = vmatpush.bf16.msra.mxu0 %v4437
    %4933 = vmatmul.bf16.gmra.mxu0 %v4898
    %v4934 = vpop.f32.mrf.mxu0
    %v4935 = vadd.f32 0.0, %v4934
    %v4936 = vpop.f32.mrf.mxu0
    %4937 = vdwg.mxu0
    %4938 = vmatpush.bf16.msra.mxu0 %v4466
    %4939 = vmatpush.bf16.msra.mxu0 %v4462
    %4940 = vmatpush.bf16.msra.mxu0 %v4458
    %4941 = vmatpush.bf16.msra.mxu0 %v4454
    %4942 = vmatpush.bf16.msra.mxu0 %v4450
    %4943 = vmatpush.bf16.msra.mxu0 %v4446
    %4944 = vmatpush.bf16.msra.mxu0 %v4442
    %4945 = vmatpush.bf16.msra.mxu0 %v4438
    %4946 = vmatmul.bf16.gmra.mxu0 %v4898
    %v4947 = vpop.f32.mrf.mxu0
    %v4948 = vadd.f32 0.0, %v4947
    %v4949 = vpop.f32.mrf.mxu0
    %4950 = vdwg.mxu0
    %v4951 = vadd.f32 %v4894, %v4909
    %v4952 = vadd.f32 %v4895, %v4922
    %v4953 = vadd.f32 %v4896, %v4935
    %v4954 = vadd.f32 %v4897, %v4948
    %v4955 = vmul.f32 %v4951, 0.5
    %v4956 = vmul.f32 %v4952, 0.5
    %v4957 = vmul.f32 %v4953, 0.5
    %v4958 = vtanh.pop %v4955
    %v4959 = vtanh.pop %v4956
    %v4960 = vtanh.pop %v4957
    %v4961 = vmul.f32 %v4958, 0.5
    %v4962 = vmul.f32 %v4959, 0.5
    %v4963 = vmul.f32 %v4960, 0.5
    %v4964 = vadd.f32 %v4961, 0.5
    %v4965 = vadd.f32 %v4962, 0.5
    %v4966 = vadd.f32 %v4963, 0.5
    %v4967 = vtanh.pop %v4954
    %v4968 = vmul.f32 %v4965, %v4890
    %v4969 = vmul.f32 %v4964, %v4967
    %v4970 = vadd.f32 %v4968, %v4969
    %v4971 = vtanh.pop %v4970
    %v4972 = vmul.f32 %v4966, %v4971
    %4973 = vst [vmem:[%s1351] sm:$0xff] %v4972
    %v4974 = vld [vmem:[%s1355] sm:$0xff]
    %v4975 = vld [vmem:[%s1355 + $0x8] sm:$0xff]
    %v4976 = vld [vmem:[%s1355 + $0x10] sm:$0xff]
    %v4977 = vld [vmem:[%s1355 + $0x18] sm:$0xff]
    %v4978 = vpack.c.bf16 %v4972, %v4972
    %4979 = vmatpush.bf16.msra.mxu0 %v4463
    %4980 = vmatpush.bf16.msra.mxu0 %v4459
    %4981 = vmatpush.bf16.msra.mxu0 %v4455
    %4982 = vmatpush.bf16.msra.mxu0 %v4451
    %4983 = vmatpush.bf16.msra.mxu0 %v4447
    %4984 = vmatpush.bf16.msra.mxu0 %v4443
    %4985 = vmatpush.bf16.msra.mxu0 %v4439
    %4986 = vmatpush.bf16.msra.mxu0 %v4435
    %4987 = vmatmul.bf16.gmra.mxu0 %v4978
    %v4988 = vpop.f32.mrf.mxu0
    %v4989 = vadd.f32 0.0, %v4988
    %v4990 = vpop.f32.mrf.mxu0
    %4991 = vdwg.mxu0
    %4992 = vmatpush.bf16.msra.mxu0 %v4464
    %4993 = vmatpush.bf16.msra.mxu0 %v4460
    %4994 = vmatpush.bf16.msra.mxu0 %v4456
    %4995 = vmatpush.bf16.msra.mxu0 %v4452
    %4996 = vmatpush.bf16.msra.mxu0 %v4448
    %4997 = vmatpush.bf16.msra.mxu0 %v4444
    %4998 = vmatpush.bf16.msra.mxu0 %v4440
    %4999 = vmatpush.bf16.msra.mxu0 %v4436
    %5000 = vmatmul.bf16.gmra.mxu0 %v4978
    %v5001 = vpop.f32.mrf.mxu0
    %v5002 = vadd.f32 0.0, %v5001
    %v5003 = vpop.f32.mrf.mxu0
    %5004 = vdwg.mxu0
    %5005 = vmatpush.bf16.msra.mxu0 %v4465
    %5006 = vmatpush.bf16.msra.mxu0 %v4461
    %5007 = vmatpush.bf16.msra.mxu0 %v4457
    %5008 = vmatpush.bf16.msra.mxu0 %v4453
    %5009 = vmatpush.bf16.msra.mxu0 %v4449
    %5010 = vmatpush.bf16.msra.mxu0 %v4445
    %5011 = vmatpush.bf16.msra.mxu0 %v4441
    %5012 = vmatpush.bf16.msra.mxu0 %v4437
    %5013 = vmatmul.bf16.gmra.mxu0 %v4978
    %v5014 = vpop.f32.mrf.mxu0
    %v5015 = vadd.f32 0.0, %v5014
    %v5016 = vpop.f32.mrf.mxu0
    %5017 = vdwg.mxu0
    %5018 = vmatpush.bf16.msra.mxu0 %v4466
    %5019 = vmatpush.bf16.msra.mxu0 %v4462
    %5020 = vmatpush.bf16.msra.mxu0 %v4458
    %5021 = vmatpush.bf16.msra.mxu0 %v4454
    %5022 = vmatpush.bf16.msra.mxu0 %v4450
    %5023 = vmatpush.bf16.msra.mxu0 %v4446
    %5024 = vmatpush.bf16.msra.mxu0 %v4442
    %5025 = vmatpush.bf16.msra.mxu0 %v4438
    %5026 = vmatmul.bf16.gmra.mxu0 %v4978
    %v5027 = vpop.f32.mrf.mxu0
    %v5028 = vadd.f32 0.0, %v5027
    %v5029 = vpop.f32.mrf.mxu0
    %5030 = vdwg.mxu0
    %v5031 = vadd.f32 %v4974, %v4989
    %v5032 = vadd.f32 %v4975, %v5002
    %v5033 = vadd.f32 %v4976, %v5015
    %v5034 = vadd.f32 %v4977, %v5028
    %v5035 = vmul.f32 %v5031, 0.5
    %v5036 = vmul.f32 %v5032, 0.5
    %v5037 = vmul.f32 %v5033, 0.5
    %v5038 = vtanh.pop %v5035
    %v5039 = vtanh.pop %v5036
    %v5040 = vtanh.pop %v5037
    %v5041 = vmul.f32 %v5038, 0.5
    %v5042 = vmul.f32 %v5039, 0.5
    %v5043 = vmul.f32 %v5040, 0.5
    %v5044 = vadd.f32 %v5041, 0.5
    %v5045 = vadd.f32 %v5042, 0.5
    %v5046 = vadd.f32 %v5043, 0.5
    %v5047 = vtanh.pop %v5034
    %v5048 = vmul.f32 %v5045, %v4970
    %v5049 = vmul.f32 %v5044, %v5047
    %v5050 = vadd.f32 %v5048, %v5049
    %v5051 = vtanh.pop %v5050
    %v5052 = vmul.f32 %v5046, %v5051
    %5053 = vst [vmem:[%s1435] sm:$0xff] %v5052
    %v5054 = vld [vmem:[%s1439] sm:$0xff]
    %v5055 = vld [vmem:[%s1439 + $0x8] sm:$0xff]
    %v5056 = vld [vmem:[%s1439 + $0x10] sm:$0xff]
    %v5057 = vld [vmem:[%s1439 + $0x18] sm:$0xff]
    %v5058 = vpack.c.bf16 %v5052, %v5052
    %5059 = vmatpush.bf16.msra.mxu0 %v4463
    %5060 = vmatpush.bf16.msra.mxu0 %v4459
    %5061 = vmatpush.bf16.msra.mxu0 %v4455
    %5062 = vmatpush.bf16.msra.mxu0 %v4451
    %5063 = vmatpush.bf16.msra.mxu0 %v4447
    %5064 = vmatpush.bf16.msra.mxu0 %v4443
    %5065 = vmatpush.bf16.msra.mxu0 %v4439
    %5066 = vmatpush.bf16.msra.mxu0 %v4435
    %5067 = vmatmul.bf16.gmra.mxu0 %v5058
    %v5068 = vpop.f32.mrf.mxu0
    %v5069 = vadd.f32 0.0, %v5068
    %v5070 = vpop.f32.mrf.mxu0
    %5071 = vdwg.mxu0
    %5072 = vmatpush.bf16.msra.mxu0 %v4464
    %5073 = vmatpush.bf16.msra.mxu0 %v4460
    %5074 = vmatpush.bf16.msra.mxu0 %v4456
    %5075 = vmatpush.bf16.msra.mxu0 %v4452
    %5076 = vmatpush.bf16.msra.mxu0 %v4448
    %5077 = vmatpush.bf16.msra.mxu0 %v4444
    %5078 = vmatpush.bf16.msra.mxu0 %v4440
    %5079 = vmatpush.bf16.msra.mxu0 %v4436
    %5080 = vmatmul.bf16.gmra.mxu0 %v5058
    %v5081 = vpop.f32.mrf.mxu0
    %v5082 = vadd.f32 0.0, %v5081
    %v5083 = vpop.f32.mrf.mxu0
    %5084 = vdwg.mxu0
    %5085 = vmatpush.bf16.msra.mxu0 %v4465
    %5086 = vmatpush.bf16.msra.mxu0 %v4461
    %5087 = vmatpush.bf16.msra.mxu0 %v4457
    %5088 = vmatpush.bf16.msra.mxu0 %v4453
    %5089 = vmatpush.bf16.msra.mxu0 %v4449
    %5090 = vmatpush.bf16.msra.mxu0 %v4445
    %5091 = vmatpush.bf16.msra.mxu0 %v4441
    %5092 = vmatpush.bf16.msra.mxu0 %v4437
    %5093 = vmatmul.bf16.gmra.mxu0 %v5058
    %v5094 = vpop.f32.mrf.mxu0
    %v5095 = vadd.f32 0.0, %v5094
    %v5096 = vpop.f32.mrf.mxu0
    %5097 = vdwg.mxu0
    %5098 = vmatpush.bf16.msra.mxu0 %v4466
    %5099 = vmatpush.bf16.msra.mxu0 %v4462
    %5100 = vmatpush.bf16.msra.mxu0 %v4458
    %5101 = vmatpush.bf16.msra.mxu0 %v4454
    %5102 = vmatpush.bf16.msra.mxu0 %v4450
    %5103 = vmatpush.bf16.msra.mxu0 %v4446
    %5104 = vmatpush.bf16.msra.mxu0 %v4442
    %5105 = vmatpush.bf16.msra.mxu0 %v4438
    %5106 = vmatmul.bf16.gmra.mxu0 %v5058
    %v5107 = vpop.f32.mrf.mxu0
    %v5108 = vadd.f32 0.0, %v5107
    %v5109 = vpop.f32.mrf.mxu0
    %5110 = vdwg.mxu0
    %v5111 = vadd.f32 %v5054, %v5069
    %v5112 = vadd.f32 %v5055, %v5082
    %v5113 = vadd.f32 %v5056, %v5095
    %v5114 = vadd.f32 %v5057, %v5108
    %v5115 = vmul.f32 %v5111, 0.5
    %v5116 = vmul.f32 %v5112, 0.5
    %v5117 = vmul.f32 %v5113, 0.5
    %v5118 = vtanh.pop %v5115
    %v5119 = vtanh.pop %v5116
    %v5120 = vtanh.pop %v5117
    %v5121 = vmul.f32 %v5118, 0.5
    %v5122 = vmul.f32 %v5119, 0.5
    %v5123 = vmul.f32 %v5120, 0.5
    %v5124 = vadd.f32 %v5121, 0.5
    %v5125 = vadd.f32 %v5122, 0.5
    %v5126 = vadd.f32 %v5123, 0.5
    %v5127 = vtanh.pop %v5114
    %v5128 = vmul.f32 %v5125, %v5050
    %v5129 = vmul.f32 %v5124, %v5127
    %v5130 = vadd.f32 %v5128, %v5129
    %v5131 = vtanh.pop %v5130
    %v5132 = vmul.f32 %v5126, %v5131
    %5133 = vst [vmem:[%s1519] sm:$0xff] %v5132
    %s5134 = scalar_lea.vmem [#allocation16], 24
    %5135 = vst [vmem:[%s5134] sm:$0xff] %v5132
    %s5136 = scalar_lea.vmem [#allocation18], 24
    %5137 = vst [vmem:[%s5136] sm:$0xff] %v5130
    %v5138 = vld [vmem:[#allocation2] sm:$0xff]
    %v5139 = vld [vmem:[#allocation2 + $0x8] sm:$0xff]
    %v5140 = vld [vmem:[#allocation2 + $0x10] sm:$0xff]
    %v5141 = vld [vmem:[#allocation2 + $0x18] sm:$0xff]
    %v5142 = vld [vmem:[#allocation2 + $0x20] sm:$0xff]
    %v5143 = vld [vmem:[#allocation2 + $0x28] sm:$0xff]
    %v5144 = vld [vmem:[#allocation2 + $0x30] sm:$0xff]
    %v5145 = vld [vmem:[#allocation2 + $0x38] sm:$0xff]
    %v5146 = vpack.c.bf16 %v5139, %v5138
    %v5147 = vpack.c.bf16 %v5141, %v5140
    %v5148 = vpack.c.bf16 %v5143, %v5142
    %v5149 = vpack.c.bf16 %v5145, %v5144
    %v5150 = vld [vmem:[#allocation13] sm:$0xf]
    %v5151 = vld [vmem:[#allocation13 + $0x4] sm:$0xf]
    %v5152 = vld [vmem:[#allocation13 + $0x8] sm:$0xf]
    %v5153 = vld [vmem:[#allocation13 + $0xc] sm:$0xf]
    %v5154 = vld [vmem:[#allocation13 + $0x10] sm:$0xf]
    %v5155 = vld [vmem:[#allocation13 + $0x14] sm:$0xf]
    %v5156 = vld [vmem:[#allocation13 + $0x18] sm:$0xf]
    %v5157 = vld [vmem:[#allocation13 + $0x1c] sm:$0xf]
    %v5158 = vld [vmem:[#allocation13 + $0x20] sm:$0xf]
    %v5159 = vld [vmem:[#allocation13 + $0x24] sm:$0xf]
    %v5160 = vld [vmem:[#allocation13 + $0x28] sm:$0xf]
    %v5161 = vld [vmem:[#allocation13 + $0x2c] sm:$0xf]
    %v5162 = vld [vmem:[#allocation13 + $0x30] sm:$0xf]
    %v5163 = vld [vmem:[#allocation13 + $0x34] sm:$0xf]
    %v5164 = vld [vmem:[#allocation13 + $0x38] sm:$0xf]
    %v5165 = vld [vmem:[#allocation13 + $0x3c] sm:$0xf]
    %v5166 = vld [vmem:[%s8] sm:$0x1]
    %v5168 = vperm.slane %v5166, 0
    %v5186 = vunpack.c.l.b16 %v5150
    %v5187 = vunpack.c.l.b16 %v5151
    %v5188 = vunpack.c.l.b16 %v5152
    %v5189 = vunpack.c.l.b16 %v5153
    %v5190 = vunpack.c.l.b16 %v5154
    %v5191 = vunpack.c.l.b16 %v5155
    %v5192 = vunpack.c.l.b16 %v5156
    %v5193 = vunpack.c.l.b16 %v5157
    %v5194 = vunpack.c.l.b16 %v5158
    %v5195 = vunpack.c.l.b16 %v5159
    %v5196 = vunpack.c.l.b16 %v5160
    %v5197 = vunpack.c.l.b16 %v5161
    %v5198 = vunpack.c.l.b16 %v5162
    %v5199 = vunpack.c.l.b16 %v5163
    %v5200 = vunpack.c.l.b16 %v5164
    %v5201 = vunpack.c.l.b16 %v5165
    %v5202 = vpack.c.b16 %v5187, %v5186
    %v5203 = vpack.c.b16 %v5189, %v5188
    %v5204 = vpack.c.b16 %v5191, %v5190
    %v5205 = vpack.c.b16 %v5193, %v5192
    %v5206 = vpack.c.b16 %v5195, %v5194
    %v5207 = vpack.c.b16 %v5197, %v5196
    %v5208 = vpack.c.b16 %v5199, %v5198
    %v5209 = vpack.c.b16 %v5201, %v5200
    %5218 = vmatpush.bf16.msra.mxu0 %v5209
    %5219 = vmatpush.bf16.msra.mxu0 %v5208
    %5220 = vmatpush.bf16.msra.mxu0 %v5207
    %5221 = vmatpush.bf16.msra.mxu0 %v5206
    %5222 = vmatpush.bf16.msra.mxu0 %v5205
    %5223 = vmatpush.bf16.msra.mxu0 %v5204
    %5224 = vmatpush.bf16.msra.mxu0 %v5203
    %5225 = vmatpush.bf16.msra.mxu0 %v5202
    %5226 = vmatmul.bf16.gmra.mxu0 %v5146
    %v5227 = vpop.f32.mrf.mxu0
    %v5228 = vadd.f32 %v5168, %v5227
    %v5229 = vpop.f32.mrf.mxu0
    %v5230 = vadd.f32 %v5168, %v5229
    %5231 = vmatmul.bf16.gmra.mxu0 %v5147
    %v5232 = vpop.f32.mrf.mxu0
    %v5233 = vadd.f32 %v5168, %v5232
    %v5234 = vpop.f32.mrf.mxu0
    %v5235 = vadd.f32 %v5168, %v5234
    %5236 = vmatmul.bf16.gmra.mxu0 %v5148
    %v5237 = vpop.f32.mrf.mxu0
    %v5238 = vadd.f32 %v5168, %v5237
    %v5239 = vpop.f32.mrf.mxu0
    %v5240 = vadd.f32 %v5168, %v5239
    %5241 = vmatmul.bf16.gmra.mxu0 %v5149
    %v5242 = vpop.f32.mrf.mxu0
    %v5243 = vadd.f32 %v5168, %v5242
    %v5244 = vpop.f32.mrf.mxu0
    %v5245 = vadd.f32 %v5168, %v5244
    %5246 = vdwg.mxu0
    %5247 = vst [vmem:[#allocation15] sm:$0xff] %v5228
    %5248 = vst [vmem:[#allocation15 + $0x8] sm:$0xff] %v5230
    %5249 = vst [vmem:[#allocation15 + $0x10] sm:$0xff] %v5233
    %5250 = vst [vmem:[#allocation15 + $0x18] sm:$0xff] %v5235
    %5251 = vst [vmem:[#allocation15 + $0x20] sm:$0xff] %v5238
    %5252 = vst [vmem:[#allocation15 + $0x28] sm:$0xff] %v5240
    %5253 = vst [vmem:[#allocation15 + $0x30] sm:$0xff] %v5243
    %5254 = vst [vmem:[#allocation15 + $0x38] sm:$0xff] %v5245
    // Predicated region
    $region62: #{tpu_custom_call.1} parent=1 // pred_check
      _
    $region63: #{tpu_custom_call.1} parent=1 // pred_check_branch
      %5256 = sbr.rel (0) target = $region65
    $region64: #{tpu_custom_call.1} parent=1 // pred_region
      %5258 = vsyncadd [#allocation6], 0
      %s5259 = sshll.u32 [#allocation15], 4
      %s5260 = int_to_ptr.vmem [resolvable:$true] %s5259
      %s5261 = sshll.u32 %s9, 4
      %s5262 = int_to_ptr.hbm [resolvable:$true] %s5261
      %5267 = dma.vmem_to_hbm [thread:$0]  %s5260, 1024, %s5262, [#allocation6], 128, 128, 8
    $region65: #{tpu_custom_call.1} parent=1 // pred_fallthru
      _
    // Predicated region
    $region66: #{tpu_custom_call.1} parent=1 // pred_check
      _
    $region67: #{tpu_custom_call.1} parent=1 // pred_check_branch
      %5269 = sbr.rel (0) target = $region69
    $region68: #{tpu_custom_call.1} parent=1 // pred_region
      %5271 = vsyncadd [#allocation17], 0
      %s5272 = sshll.u32 [#allocation16], 4
      %s5273 = int_to_ptr.vmem [resolvable:$true] %s5272
      %s5274 = sshll.u32 %s10, 4
      %s5275 = int_to_ptr.hbm [resolvable:$true] %s5274
      %5280 = dma.vmem_to_hbm [thread:$0]  %s5273, 512, %s5275, [#allocation17], 128, 128, 8
    $region69: #{tpu_custom_call.1} parent=1 // pred_fallthru
      _
    // Predicated region
    $region70: #{tpu_custom_call.1} parent=1 // pred_check
      _
    $region71: #{tpu_custom_call.1} parent=1 // pred_check_branch
      %5282 = sbr.rel (0) target = $region73
    $region72: #{tpu_custom_call.1} parent=1 // pred_region
      %5284 = vsyncadd [#allocation17], 0
      %s5285 = sshll.u32 [#allocation18], 4
      %s5286 = int_to_ptr.vmem [resolvable:$true] %s5285
      %s5287 = sshll.u32 %s11, 4
      %s5288 = int_to_ptr.hbm [resolvable:$true] %s5287
      %5293 = dma.vmem_to_hbm [thread:$0]  %s5286, 512, %s5288, [#allocation17], 128, 128, 8
    $region73: #{tpu_custom_call.1} parent=1 // pred_fallthru
      _
    // Predicated region
    $region74: #{tpu_custom_call.1} parent=1 // pred_check
      _
    $region75: #{tpu_custom_call.1} parent=1 // pred_check_branch
      %5295 = sbr.rel (0) target = $region77
    $region76: #{tpu_custom_call.1} parent=1 // pred_region
      %5297 = dma.done [#allocation6], 1024
    $region77: #{tpu_custom_call.1} parent=1 // pred_fallthru
      _
    // Predicated region
    $region78: #{tpu_custom_call.1} parent=1 // pred_check
      _
    $region79: #{tpu_custom_call.1} parent=1 // pred_check_branch
      %5299 = sbr.rel (0) target = $region81
    $region80: #{tpu_custom_call.1} parent=1 // pred_region
      %5301 = dma.done [#allocation17], 512
    $region81: #{tpu_custom_call.1} parent=1 // pred_fallthru
      _
    // Predicated region
    $region82: #{tpu_custom_call.1} parent=1 // pred_check
      _
    $region83: #{tpu_custom_call.1} parent=1 // pred_check_branch
      %5303 = sbr.rel (0) target = $region85
    $region84: #{tpu_custom_call.1} parent=1 // pred_region
      %5305 = dma.done [#allocation17], 512
    $region85: #{tpu_custom_call.1} parent=1 // pred_fallthru
      _
    %5306 = vsyncpa [#allocation5], 1
    %5307 = vsyncpa [#allocation8], 1
    %5308 = vsyncpa [#allocation11], 1
    %5309 = vsyncpa [#allocation14], 1
    %5310 = vsyncpa [#allocation6], 1
    %5311 = vsyncpa [#allocation17], 1

</llo_original>
